<compile_context>
chip_gen: v7x
topology: tpu7x:2x2x1
jax: 0.10.0
libtpu: 0.0.40
codegen_flags: <defaults>
</compile_context>

<pallas_src>
import jax
import jax.numpy as jnp
from jax.experimental import pallas as pl
from jax.experimental.pallas import tpu as pltpu


def make_hedger_kernel(tp1, n_asset, n_feat, hidden, bn, n_chunks):
    n_steps = tp1 - 1
    cw = bn // n_chunks                      # chunk width (lanes), multiple of 128
    stride_h = -(-hidden // 8) * 8           # sublane-aligned stride in the scratch

    def kernel(prices_ref, info_ref, w1iT_ref, w1hT_ref, b1_ref, w2T_ref, b2_ref,
               out_ref, pre_ref):
        """One batch tile (batch on lanes); full time recurrence in registers.

        prices_ref : ((T+1)*A, bn)  prices, time-major, batch on lanes
        info_ref   : (Ti*F, bn)     information, time-major, batch on lanes
        w1iT_ref   : (H, F)   W1 rows acting on `information`, transposed
        w1hT_ref   : (H, A)   W1 rows acting on the holding state, transposed
        b1_ref     : (H, 1)
        w2T_ref    : (A, H)
        b2_ref     : (A, 1)
        out_ref    : (T+1, bn)  wealth path (summed over assets), transposed
        pre_ref    : (n_steps*stride_h, bn) f32 scratch for the hoisted info path
        """
        # ---- Pass 1: information-path matmul hoisted off the serial chain. ----
        # pre_i[t] = W1_info^T @ I_t + b1.  Independent across t -> these MXU
        # pushes pipeline freely instead of sitting on the recurrence.
        w1iT = w1iT_ref[...]                                   # (H, F)
        b1 = b1_ref[...]                                       # (H, 1) lane-splat
        for t in range(n_steps):
            info_t = info_ref[pl.ds(t * n_feat, n_feat), :]    # (F, bn)
            pre_ref[pl.ds(t * stride_h, hidden), :] = (
                jnp.dot(w1iT, info_t, preferred_element_type=jnp.float32) + b1)

        # ---- Pass 2: serial recurrence, interleaved over independent chunks. ----
        w1hT = w1hT_ref[...]                                   # (H, A)
        w2T = w2T_ref[...]                                     # (A, H)
        b2 = b2_ref[...]                                       # (A, 1) lane-splat

        holding = [jnp.zeros((n_asset, cw), jnp.float32) for _ in range(n_chunks)]
        wsum = [jnp.zeros((1, cw), jnp.float32) for _ in range(n_chunks)]
        p_now = [prices_ref[pl.ds(0, n_asset), pl.ds(c * cw, cw)]
                 for c in range(n_chunks)]

        # wealth row 0 is identically zero.
        out_ref[pl.ds(0, 1), :] = jnp.zeros((1, bn), out_ref.dtype)

        # Static unroll over time (sequential recurrence: holding feeds back).
        # TODO(synk): switch to lax.fori_loop over 8-step groups if T grows
        # beyond ~32 (compile time / code size of the static unroll).
        for t in range(n_steps):
            for c in range(n_chunks):
                lanes = pl.ds(c * cw, cw)
                # Hoisted info-path result for this step/chunk (single vld).
                pre_i = pre_ref[pl.ds(t * stride_h, hidden), lanes]     # (H, cw)
                pre = pre_i + jnp.dot(w1hT, holding[c],
                                      preferred_element_type=jnp.float32)
                hid = jnp.maximum(pre, 0.0)                             # (H, cw)
                holding[c] = (jnp.dot(w2T, hid,
                                      preferred_element_type=jnp.float32)
                              + b2)                                     # (A, cw)

                # cost_functional defaults to no_cost -> cost = 0.
                p_next = prices_ref[pl.ds((t + 1) * n_asset, n_asset), lanes]
                wsum[c] = wsum[c] + jnp.sum(holding[c] * (p_next - p_now[c]),
                                            axis=0, keepdims=True)      # (1, cw)
                p_now[c] = p_next                                        # reuse

                # TODO(synk): batch these row stores in groups of 8 sublanes for
                # very long horizons; at small T the masked vst is off the
                # critical path and keeping 8 pending rows live would cost vregs.
                out_ref[pl.ds(t + 1, 1), lanes] = wsum[c].astype(out_ref.dtype)

    return kernel


def hedger_forward(prices, information, payoff, params, *, bn=None, n_chunks=None):
    """Pallas implementation of Hedger.forward. Returns (N, T+1, 1)."""
    del payoff  # unused in forward (only used in compute_pnl)
    n, tp1, n_asset = prices.shape
    ti, n_feat = information.shape[1], information.shape[2]
    n_steps = tp1 - 1
    assert ti >= n_steps
    w1i, w1h, b1, w2, b2 = params
    hidden = w1i.shape[1]

    LANE = 128
    stride_h = -(-hidden // 8) * 8

    # --- Tile sizing: bn multiple of 128 lanes, capped by a VMEM budget that
    #     fits every TPU generation (v7x: 64 MiB physical), and >= 2 grid steps
    #     when the batch allows (DMA/compute overlap; both v7x TensorCores).
    per_elem = 4 * (2 * tp1 * n_asset        # prices block, double-buffered
                    + 2 * ti * n_feat        # information block, double-buffered
                    + 2 * tp1                # output block, double-buffered
                    + max(n_steps, 1) * stride_h)   # precompute scratch
    VMEM_LIMIT = 32 * 1024 * 1024
    BUDGET = 24 * 1024 * 1024                # headroom under the scoped limit
    bn_cap = max(LANE, (BUDGET // per_elem) // LANE * LANE)
    n_lane = -(-n // LANE) * LANE
    if bn is None:
        bn = min(n_lane, bn_cap, 1024)
        if n_lane // bn < 2 and n_lane >= 2 * LANE:
            bn = max(LANE, ((n_lane // 2) // LANE) * LANE)
    assert bn % LANE == 0 and bn >= LANE
    n_pad = -(-n // bn) * bn

    if n_chunks is None:
        if bn >= 512 and bn % 512 == 0:
            n_chunks = 4                     # cw >= 128, multiple of 128
        elif bn % 256 == 0:
            n_chunks = 2
        else:
            n_chunks = 1
    assert bn % n_chunks == 0 and (bn // n_chunks) % LANE == 0

    # Pad batch to a multiple of bn (padded lanes compute garbage, discarded).
    if n_pad != n:
        pad = n_pad - n
        prices = jnp.pad(prices, ((0, pad), (0, 0), (0, 0)))
        information = jnp.pad(information, ((0, pad), (0, 0), (0, 0)))

    # Batch -> lanes: flatten (time, feature) onto the sublane axis.
    # TODO(synk): this is an extra HBM pass; produce the data lane-major
    # upstream (or fuse the transpose into the producer) to remove it.
    prices_t = jnp.transpose(prices, (1, 2, 0)).reshape(tp1 * n_asset, n_pad)
    info_t = jnp.transpose(information, (1, 2, 0)).reshape(ti * n_feat, n_pad)
    w1iT = w1i.T     # (H, F)
    w1hT = w1h.T     # (H, A)
    b1T = b1.T       # (H, 1)
    w2T = w2.T       # (A, H)
    b2T = b2.T       # (A, 1)

    grid = (n_pad // bn,)
    kernel = make_hedger_kernel(tp1, n_asset, n_feat, hidden, bn, n_chunks)

    out_t = pl.pallas_call(
        kernel,
        out_shape=jax.ShapeDtypeStruct((tp1, n_pad), prices.dtype),
        grid_spec=pltpu.PrefetchScalarGridSpec(
            num_scalar_prefetch=0,
            grid=grid,
            in_specs=[
                pl.BlockSpec((tp1 * n_asset, bn), lambda i: (0, i)),
                pl.BlockSpec((ti * n_feat, bn), lambda i: (0, i)),
                pl.BlockSpec((hidden, n_feat), lambda i: (0, 0)),
                pl.BlockSpec((hidden, n_asset), lambda i: (0, 0)),
                pl.BlockSpec((hidden, 1), lambda i: (0, 0)),
                pl.BlockSpec((n_asset, hidden), lambda i: (0, 0)),
                pl.BlockSpec((n_asset, 1), lambda i: (0, 0)),
            ],
            out_specs=pl.BlockSpec((tp1, bn), lambda i: (0, i)),
            scratch_shapes=[
                pltpu.VMEM((max(n_steps, 1) * stride_h, bn), jnp.float32),
            ],
        ),
        compiler_params=pltpu.CompilerParams(
            dimension_semantics=("parallel",),
            vmem_limit_bytes=VMEM_LIMIT),
    )(prices_t, info_t, w1iT, w1hT, b1T, w2T, b2T)

    # (T+1, n_pad) -> (N, T+1, 1)
    return jnp.transpose(out_t, (1, 0))[:n, :, None]


def hedger_reference(prices, information, params):
    """Pure-JAX mirror of the PyTorch forward (for correctness check)."""
    w1i, w1h, b1, w2, b2 = params
    w1 = jnp.concatenate([w1i, w1h], axis=0)        # (F+A, H) == torch weight.T
    n, tp1, n_asset = prices.shape
    holding = jnp.zeros((n, n_asset), prices.dtype)
    wealth = jnp.zeros((n, n_asset), prices.dtype)
    out = [jnp.zeros((n, 1), prices.dtype)]
    for t in range(tp1 - 1):
        x = jnp.concatenate([information[:, t, :], holding], axis=-1)
        h = jnp.maximum(x @ w1 + b1, 0.0)
        holding = h @ w2 + b2
        wealth = wealth + holding * (prices[:, t + 1, :] - prices[:, t, :])
        out.append(jnp.sum(wealth, axis=-1, keepdims=True))
    return jnp.stack(out, axis=1)


def init_params(key, n_feat, n_asset, hidden):
    k1, k2, k3, k4 = jax.random.split(key, 4)
    in_dim = n_feat + n_asset
    s1 = (1.0 / in_dim) ** 0.5
    s2 = (1.0 / hidden) ** 0.5
    w1 = jax.random.uniform(k1, (in_dim, hidden), jnp.float32, -s1, s1)
    b1 = jax.random.uniform(k2, (1, hidden), jnp.float32, -s1, s1)
    w2 = jax.random.uniform(k3, (hidden, n_asset), jnp.float32, -s2, s2)
    b2 = jax.random.uniform(k4, (1, n_asset), jnp.float32, -s2, s2)
    return (w1[:n_feat], w1[n_feat:], b1, w2, b2)


if __name__ == "__main__":
    # n_samples, n_steps, n_assets, n_features, hidden
    # N=1000 exercises batch padding (->1024 lanes), 2 "parallel" grid steps
    # (bn=512) and 4 interleaved 128-lane chunks, while staying small.
    N, T, A, F, H = 1000, 8, 2, 3, 32
    key = jax.random.PRNGKey(0)
    kp, ki, ky, kw = jax.random.split(key, 4)

    # Synthetic market data (deterministic).
    log_incr = 0.05 * jax.random.normal(kp, (N, T + 1, A), jnp.float32)
    prices = jnp.exp(jnp.cumsum(log_incr, axis=1))                   # (N, T+1, A)
    information = jax.random.normal(ki, (N, T + 1, F), jnp.float32)  # (N, T+1, F)
    payoff = jax.random.normal(ky, (N, 1), jnp.float32)              # unused in forward

    params = init_params(kw, F, A, H)

    out = hedger_forward(prices, information, payoff, params)
    out = jax.block_until_ready(out)

    ref = hedger_reference(prices, information, params)
    assert out.shape == (N, T + 1, 1)
    assert jnp.allclose(out, ref, rtol=1e-4, atol=1e-4), "mismatch vs reference"

    # TODO(synk): criterion / fit / pricer are training-loop utilities (not forward).
    print("KERNEL_OK")
</pallas_src>

<mosaic_0001>
module attributes {stable_mosaic.version = 11 : i64} {
  func.func @kernel(%arg0: i32, %arg1: memref<18x512xf32, #tpu.memory_space<vmem>>, %arg2: memref<27x512xf32, #tpu.memory_space<vmem>>, %arg3: memref<32x3xf32, #tpu.memory_space<vmem>>, %arg4: memref<32x2xf32, #tpu.memory_space<vmem>>, %arg5: memref<32x1xf32, #tpu.memory_space<vmem>>, %arg6: memref<2x32xf32, #tpu.memory_space<vmem>>, %arg7: memref<2x1xf32, #tpu.memory_space<vmem>>, %arg8: memref<9x512xf32, #tpu.memory_space<vmem>>, %arg9: memref<256x512xf32, #tpu.memory_space<vmem>>) attributes {dimension_semantics = [#tpu.dimension_semantics<parallel>], iteration_bounds = array<i64: 2>, scalar_prefetch = 0 : i64, scratch_operands = 1 : i64, tpu.core_type = #tpu.core_type<tc>, window_params = [{transform_indices = @transform_0, window_bounds = array<i64: 18, 512>}, {transform_indices = @transform_1, window_bounds = array<i64: 27, 512>}, {pipeline_mode = #tpu.pipeline_mode<synchronous>, transform_indices = @transform_2, window_bounds = array<i64: 32, 3>}, {pipeline_mode = #tpu.pipeline_mode<synchronous>, transform_indices = @transform_3, window_bounds = array<i64: 32, 2>}, {pipeline_mode = #tpu.pipeline_mode<synchronous>, transform_indices = @transform_4, window_bounds = array<i64: 32, 1>}, {pipeline_mode = #tpu.pipeline_mode<synchronous>, transform_indices = @transform_5, window_bounds = array<i64: 2, 32>}, {pipeline_mode = #tpu.pipeline_mode<synchronous>, transform_indices = @transform_6, window_bounds = array<i64: 2, 1>}, {transform_indices = @transform_7, window_bounds = array<i64: 9, 512>}]} {
    %c0 = arith.constant 0 : index
    %c0_0 = arith.constant 0 : index
    %0 = vector.load %arg3[%c0, %c0_0] : memref<32x3xf32, #tpu.memory_space<vmem>>, vector<32x3xf32>
    %c0_1 = arith.constant 0 : index
    %c0_2 = arith.constant 0 : index
    %1 = vector.load %arg5[%c0_1, %c0_2] : memref<32x1xf32, #tpu.memory_space<vmem>>, vector<32x1xf32>
    %c0_3 = arith.constant 0 : index
    %c0_4 = arith.constant 0 : index
    %2 = vector.load %arg2[%c0_3, %c0_4] : memref<27x512xf32, #tpu.memory_space<vmem>>, vector<3x512xf32>
    %cst = arith.constant dense<0.000000e+00> : vector<32x512xf32>
    %3 = tpu.matmul %0, %2, %cst {dimension_numbers = #tpu.dot_dimension_numbers<[1], [0], [0], [1], [0, 0, 1, 1], [], []>} : vector<32x3xf32>, vector<3x512xf32>, vector<32x512xf32> -> vector<32x512xf32>
    %4 = vector.broadcast %1 : vector<32x1xf32> to vector<32x512xf32>
    %5 = arith.addf %3, %4 : vector<32x512xf32>
    %c0_5 = arith.constant 0 : index
    %c0_6 = arith.constant 0 : index
    %6 = vector.load %arg9[%c0_5, %c0_6] : memref<256x512xf32, #tpu.memory_space<vmem>>, vector<32x512xf32>
    tpu.vector_store %arg9[%c0_5, %c0_6], %5 {strides = array<i32>} : memref<256x512xf32, #tpu.memory_space<vmem>>, vector<32x512xf32>,
    %c3 = arith.constant 3 : index
    %c0_7 = arith.constant 0 : index
    %7 = vector.load %arg2[%c3, %c0_7] : memref<27x512xf32, #tpu.memory_space<vmem>>, vector<3x512xf32>
    %cst_8 = arith.constant dense<0.000000e+00> : vector<32x512xf32>
    %8 = tpu.matmul %0, %7, %cst_8 {dimension_numbers = #tpu.dot_dimension_numbers<[1], [0], [0], [1], [0, 0, 1, 1], [], []>} : vector<32x3xf32>, vector<3x512xf32>, vector<32x512xf32> -> vector<32x512xf32>
    %9 = vector.broadcast %1 : vector<32x1xf32> to vector<32x512xf32>
    %10 = arith.addf %8, %9 : vector<32x512xf32>
    %c32 = arith.constant 32 : index
    %c0_9 = arith.constant 0 : index
    %11 = vector.load %arg9[%c32, %c0_9] : memref<256x512xf32, #tpu.memory_space<vmem>>, vector<32x512xf32>
    tpu.vector_store %arg9[%c32, %c0_9], %10 {strides = array<i32>} : memref<256x512xf32, #tpu.memory_space<vmem>>, vector<32x512xf32>,
    %c6 = arith.constant 6 : index
    %c0_10 = arith.constant 0 : index
    %12 = vector.load %arg2[%c6, %c0_10] : memref<27x512xf32, #tpu.memory_space<vmem>>, vector<3x512xf32>
    %cst_11 = arith.constant dense<0.000000e+00> : vector<32x512xf32>
    %13 = tpu.matmul %0, %12, %cst_11 {dimension_numbers = #tpu.dot_dimension_numbers<[1], [0], [0], [1], [0, 0, 1, 1], [], []>} : vector<32x3xf32>, vector<3x512xf32>, vector<32x512xf32> -> vector<32x512xf32>
    %14 = vector.broadcast %1 : vector<32x1xf32> to vector<32x512xf32>
    %15 = arith.addf %13, %14 : vector<32x512xf32>
    %c64 = arith.constant 64 : index
    %c0_12 = arith.constant 0 : index
    %16 = vector.load %arg9[%c64, %c0_12] : memref<256x512xf32, #tpu.memory_space<vmem>>, vector<32x512xf32>
    tpu.vector_store %arg9[%c64, %c0_12], %15 {strides = array<i32>} : memref<256x512xf32, #tpu.memory_space<vmem>>, vector<32x512xf32>,
    %c9 = arith.constant 9 : index
    %c0_13 = arith.constant 0 : index
    %17 = vector.load %arg2[%c9, %c0_13] : memref<27x512xf32, #tpu.memory_space<vmem>>, vector<3x512xf32>
    %cst_14 = arith.constant dense<0.000000e+00> : vector<32x512xf32>
    %18 = tpu.matmul %0, %17, %cst_14 {dimension_numbers = #tpu.dot_dimension_numbers<[1], [0], [0], [1], [0, 0, 1, 1], [], []>} : vector<32x3xf32>, vector<3x512xf32>, vector<32x512xf32> -> vector<32x512xf32>
    %19 = vector.broadcast %1 : vector<32x1xf32> to vector<32x512xf32>
    %20 = arith.addf %18, %19 : vector<32x512xf32>
    %c96 = arith.constant 96 : index
    %c0_15 = arith.constant 0 : index
    %21 = vector.load %arg9[%c96, %c0_15] : memref<256x512xf32, #tpu.memory_space<vmem>>, vector<32x512xf32>
    tpu.vector_store %arg9[%c96, %c0_15], %20 {strides = array<i32>} : memref<256x512xf32, #tpu.memory_space<vmem>>, vector<32x512xf32>,
    %c12 = arith.constant 12 : index
    %c0_16 = arith.constant 0 : index
    %22 = vector.load %arg2[%c12, %c0_16] : memref<27x512xf32, #tpu.memory_space<vmem>>, vector<3x512xf32>
    %cst_17 = arith.constant dense<0.000000e+00> : vector<32x512xf32>
    %23 = tpu.matmul %0, %22, %cst_17 {dimension_numbers = #tpu.dot_dimension_numbers<[1], [0], [0], [1], [0, 0, 1, 1], [], []>} : vector<32x3xf32>, vector<3x512xf32>, vector<32x512xf32> -> vector<32x512xf32>
    %24 = vector.broadcast %1 : vector<32x1xf32> to vector<32x512xf32>
    %25 = arith.addf %23, %24 : vector<32x512xf32>
    %c128 = arith.constant 128 : index
    %c0_18 = arith.constant 0 : index
    %26 = vector.load %arg9[%c128, %c0_18] : memref<256x512xf32, #tpu.memory_space<vmem>>, vector<32x512xf32>
    tpu.vector_store %arg9[%c128, %c0_18], %25 {strides = array<i32>} : memref<256x512xf32, #tpu.memory_space<vmem>>, vector<32x512xf32>,
    %c15 = arith.constant 15 : index
    %c0_19 = arith.constant 0 : index
    %27 = vector.load %arg2[%c15, %c0_19] : memref<27x512xf32, #tpu.memory_space<vmem>>, vector<3x512xf32>
    %cst_20 = arith.constant dense<0.000000e+00> : vector<32x512xf32>
    %28 = tpu.matmul %0, %27, %cst_20 {dimension_numbers = #tpu.dot_dimension_numbers<[1], [0], [0], [1], [0, 0, 1, 1], [], []>} : vector<32x3xf32>, vector<3x512xf32>, vector<32x512xf32> -> vector<32x512xf32>
    %29 = vector.broadcast %1 : vector<32x1xf32> to vector<32x512xf32>
    %30 = arith.addf %28, %29 : vector<32x512xf32>
    %c160 = arith.constant 160 : index
    %c0_21 = arith.constant 0 : index
    %31 = vector.load %arg9[%c160, %c0_21] : memref<256x512xf32, #tpu.memory_space<vmem>>, vector<32x512xf32>
    tpu.vector_store %arg9[%c160, %c0_21], %30 {strides = array<i32>} : memref<256x512xf32, #tpu.memory_space<vmem>>, vector<32x512xf32>,
    %c18 = arith.constant 18 : index
    %c0_22 = arith.constant 0 : index
    %32 = vector.load %arg2[%c18, %c0_22] : memref<27x512xf32, #tpu.memory_space<vmem>>, vector<3x512xf32>
    %cst_23 = arith.constant dense<0.000000e+00> : vector<32x512xf32>
    %33 = tpu.matmul %0, %32, %cst_23 {dimension_numbers = #tpu.dot_dimension_numbers<[1], [0], [0], [1], [0, 0, 1, 1], [], []>} : vector<32x3xf32>, vector<3x512xf32>, vector<32x512xf32> -> vector<32x512xf32>
    %34 = vector.broadcast %1 : vector<32x1xf32> to vector<32x512xf32>
    %35 = arith.addf %33, %34 : vector<32x512xf32>
    %c192 = arith.constant 192 : index
    %c0_24 = arith.constant 0 : index
    %36 = vector.load %arg9[%c192, %c0_24] : memref<256x512xf32, #tpu.memory_space<vmem>>, vector<32x512xf32>
    tpu.vector_store %arg9[%c192, %c0_24], %35 {strides = array<i32>} : memref<256x512xf32, #tpu.memory_space<vmem>>, vector<32x512xf32>,
    %c21 = arith.constant 21 : index
    %c0_25 = arith.constant 0 : index
    %37 = vector.load %arg2[%c21, %c0_25] : memref<27x512xf32, #tpu.memory_space<vmem>>, vector<3x512xf32>
    %cst_26 = arith.constant dense<0.000000e+00> : vector<32x512xf32>
    %38 = tpu.matmul %0, %37, %cst_26 {dimension_numbers = #tpu.dot_dimension_numbers<[1], [0], [0], [1], [0, 0, 1, 1], [], []>} : vector<32x3xf32>, vector<3x512xf32>, vector<32x512xf32> -> vector<32x512xf32>
    %39 = vector.broadcast %1 : vector<32x1xf32> to vector<32x512xf32>
    %40 = arith.addf %38, %39 : vector<32x512xf32>
    %c224 = arith.constant 224 : index
    %c0_27 = arith.constant 0 : index
    %41 = vector.load %arg9[%c224, %c0_27] : memref<256x512xf32, #tpu.memory_space<vmem>>, vector<32x512xf32>
    tpu.vector_store %arg9[%c224, %c0_27], %40 {strides = array<i32>} : memref<256x512xf32, #tpu.memory_space<vmem>>, vector<32x512xf32>,
    %c0_28 = arith.constant 0 : index
    %c0_29 = arith.constant 0 : index
    %42 = vector.load %arg4[%c0_28, %c0_29] : memref<32x2xf32, #tpu.memory_space<vmem>>, vector<32x2xf32>
    %c0_30 = arith.constant 0 : index
    %c0_31 = arith.constant 0 : index
    %43 = vector.load %arg6[%c0_30, %c0_31] : memref<2x32xf32, #tpu.memory_space<vmem>>, vector<2x32xf32>
    %c0_32 = arith.constant 0 : index
    %c0_33 = arith.constant 0 : index
    %44 = vector.load %arg7[%c0_32, %c0_33] : memref<2x1xf32, #tpu.memory_space<vmem>>, vector<2x1xf32>
    %cst_34 = arith.constant 0.000000e+00 : f32
    %45 = vector.broadcast %cst_34 : f32 to vector<2x128xf32>
    %cst_35 = arith.constant 0.000000e+00 : f32
    %46 = vector.broadcast %cst_35 : f32 to vector<2x128xf32>
    %cst_36 = arith.constant 0.000000e+00 : f32
    %47 = vector.broadcast %cst_36 : f32 to vector<2x128xf32>
    %cst_37 = arith.constant 0.000000e+00 : f32
    %48 = vector.broadcast %cst_37 : f32 to vector<2x128xf32>
    %cst_38 = arith.constant 0.000000e+00 : f32
    %49 = vector.broadcast %cst_38 : f32 to vector<1x128xf32>
    %cst_39 = arith.constant 0.000000e+00 : f32
    %50 = vector.broadcast %cst_39 : f32 to vector<1x128xf32>
    %cst_40 = arith.constant 0.000000e+00 : f32
    %51 = vector.broadcast %cst_40 : f32 to vector<1x128xf32>
    %cst_41 = arith.constant 0.000000e+00 : f32
    %52 = vector.broadcast %cst_41 : f32 to vector<1x128xf32>
    %c0_42 = arith.constant 0 : index
    %c0_43 = arith.constant 0 : index
    %53 = vector.load %arg1[%c0_42, %c0_43] : memref<18x512xf32, #tpu.memory_space<vmem>>, vector<2x128xf32>
    %c0_44 = arith.constant 0 : index
    %c128_45 = arith.constant 128 : index
    %54 = vector.load %arg1[%c0_44, %c128_45] : memref<18x512xf32, #tpu.memory_space<vmem>>, vector<2x128xf32>
    %c0_46 = arith.constant 0 : index
    %c256 = arith.constant 256 : index
    %55 = vector.load %arg1[%c0_46, %c256] : memref<18x512xf32, #tpu.memory_space<vmem>>, vector<2x128xf32>
    %c0_47 = arith.constant 0 : index
    %c384 = arith.constant 384 : index
    %56 = vector.load %arg1[%c0_47, %c384] : memref<18x512xf32, #tpu.memory_space<vmem>>, vector<2x128xf32>
    %cst_48 = arith.constant 0.000000e+00 : f32
    %57 = vector.broadcast %cst_48 : f32 to vector<1x512xf32>
    %c0_49 = arith.constant 0 : index
    %c0_50 = arith.constant 0 : index
    %58 = vector.load %arg8[%c0_49, %c0_50] : memref<9x512xf32, #tpu.memory_space<vmem>>, vector<1x512xf32>
    tpu.vector_store %arg8[%c0_49, %c0_50], %57 {strides = array<i32>} : memref<9x512xf32, #tpu.memory_space<vmem>>, vector<1x512xf32>,
    %c0_51 = arith.constant 0 : index
    %c0_52 = arith.constant 0 : index
    %59 = vector.load %arg9[%c0_51, %c0_52] : memref<256x512xf32, #tpu.memory_space<vmem>>, vector<32x128xf32>
    %cst_53 = arith.constant dense<0.000000e+00> : vector<32x128xf32>
    %60 = tpu.matmul %42, %45, %cst_53 {dimension_numbers = #tpu.dot_dimension_numbers<[1], [0], [0], [1], [0, 0, 1, 1], [], []>} : vector<32x2xf32>, vector<2x128xf32>, vector<32x128xf32> -> vector<32x128xf32>
    %61 = arith.addf %59, %60 : vector<32x128xf32>
    %cst_54 = arith.constant 0.000000e+00 : f32
    %62 = vector.broadcast %cst_54 : f32 to vector<32x128xf32>
    %63 = arith.maximumf %61, %62 : vector<32x128xf32>
    %cst_55 = arith.constant dense<0.000000e+00> : vector<2x128xf32>
    %64 = tpu.matmul %43, %63, %cst_55 {dimension_numbers = #tpu.dot_dimension_numbers<[1], [0], [0], [1], [0, 0, 1, 1], [], []>} : vector<2x32xf32>, vector<32x128xf32>, vector<2x128xf32> -> vector<2x128xf32>
    %65 = vector.broadcast %44 : vector<2x1xf32> to vector<2x128xf32>
    %66 = arith.addf %64, %65 : vector<2x128xf32>
    %c2 = arith.constant 2 : index
    %c0_56 = arith.constant 0 : index
    %67 = vector.load %arg1[%c2, %c0_56] : memref<18x512xf32, #tpu.memory_space<vmem>>, vector<2x128xf32>
    %68 = arith.subf %67, %53 : vector<2x128xf32>
    %69 = arith.mulf %66, %68 : vector<2x128xf32>
    %cst_57 = arith.constant dense<0.000000e+00> : vector<128xf32>
    %70 = vector.multi_reduction <add>, %69, %cst_57 [0] : vector<2x128xf32> to vector<128xf32>
    %71 = vector.shape_cast %70 : vector<128xf32> to vector<1x128xf32>
    %72 = arith.addf %49, %71 : vector<1x128xf32>
    %c1 = arith.constant 1 : index
    %c0_58 = arith.constant 0 : index
    %73 = vector.load %arg8[%c1, %c0_58] : memref<9x512xf32, #tpu.memory_space<vmem>>, vector<1x128xf32>
    tpu.vector_store %arg8[%c1, %c0_58], %72 {strides = array<i32>} : memref<9x512xf32, #tpu.memory_space<vmem>>, vector<1x128xf32>,
    %c0_59 = arith.constant 0 : index
    %c128_60 = arith.constant 128 : index
    %74 = vector.load %arg9[%c0_59, %c128_60] : memref<256x512xf32, #tpu.memory_space<vmem>>, vector<32x128xf32>
    %cst_61 = arith.constant dense<0.000000e+00> : vector<32x128xf32>
    %75 = tpu.matmul %42, %46, %cst_61 {dimension_numbers = #tpu.dot_dimension_numbers<[1], [0], [0], [1], [0, 0, 1, 1], [], []>} : vector<32x2xf32>, vector<2x128xf32>, vector<32x128xf32> -> vector<32x128xf32>
    %76 = arith.addf %74, %75 : vector<32x128xf32>
    %cst_62 = arith.constant 0.000000e+00 : f32
    %77 = vector.broadcast %cst_62 : f32 to vector<32x128xf32>
    %78 = arith.maximumf %76, %77 : vector<32x128xf32>
    %cst_63 = arith.constant dense<0.000000e+00> : vector<2x128xf32>
    %79 = tpu.matmul %43, %78, %cst_63 {dimension_numbers = #tpu.dot_dimension_numbers<[1], [0], [0], [1], [0, 0, 1, 1], [], []>} : vector<2x32xf32>, vector<32x128xf32>, vector<2x128xf32> -> vector<2x128xf32>
    %80 = vector.broadcast %44 : vector<2x1xf32> to vector<2x128xf32>
    %81 = arith.addf %79, %80 : vector<2x128xf32>
    %c2_64 = arith.constant 2 : index
    %c128_65 = arith.constant 128 : index
    %82 = vector.load %arg1[%c2_64, %c128_65] : memref<18x512xf32, #tpu.memory_space<vmem>>, vector<2x128xf32>
    %83 = arith.subf %82, %54 : vector<2x128xf32>
    %84 = arith.mulf %81, %83 : vector<2x128xf32>
    %cst_66 = arith.constant dense<0.000000e+00> : vector<128xf32>
    %85 = vector.multi_reduction <add>, %84, %cst_66 [0] : vector<2x128xf32> to vector<128xf32>
    %86 = vector.shape_cast %85 : vector<128xf32> to vector<1x128xf32>
    %87 = arith.addf %50, %86 : vector<1x128xf32>
    %c1_67 = arith.constant 1 : index
    %c128_68 = arith.constant 128 : index
    %88 = vector.load %arg8[%c1_67, %c128_68] : memref<9x512xf32, #tpu.memory_space<vmem>>, vector<1x128xf32>
    tpu.vector_store %arg8[%c1_67, %c128_68], %87 {strides = array<i32>} : memref<9x512xf32, #tpu.memory_space<vmem>>, vector<1x128xf32>,
    %c0_69 = arith.constant 0 : index
    %c256_70 = arith.constant 256 : index
    %89 = vector.load %arg9[%c0_69, %c256_70] : memref<256x512xf32, #tpu.memory_space<vmem>>, vector<32x128xf32>
    %cst_71 = arith.constant dense<0.000000e+00> : vector<32x128xf32>
    %90 = tpu.matmul %42, %47, %cst_71 {dimension_numbers = #tpu.dot_dimension_numbers<[1], [0], [0], [1], [0, 0, 1, 1], [], []>} : vector<32x2xf32>, vector<2x128xf32>, vector<32x128xf32> -> vector<32x128xf32>
    %91 = arith.addf %89, %90 : vector<32x128xf32>
    %cst_72 = arith.constant 0.000000e+00 : f32
    %92 = vector.broadcast %cst_72 : f32 to vector<32x128xf32>
    %93 = arith.maximumf %91, %92 : vector<32x128xf32>
    %cst_73 = arith.constant dense<0.000000e+00> : vector<2x128xf32>
    %94 = tpu.matmul %43, %93, %cst_73 {dimension_numbers = #tpu.dot_dimension_numbers<[1], [0], [0], [1], [0, 0, 1, 1], [], []>} : vector<2x32xf32>, vector<32x128xf32>, vector<2x128xf32> -> vector<2x128xf32>
    %95 = vector.broadcast %44 : vector<2x1xf32> to vector<2x128xf32>
    %96 = arith.addf %94, %95 : vector<2x128xf32>
    %c2_74 = arith.constant 2 : index
    %c256_75 = arith.constant 256 : index
    %97 = vector.load %arg1[%c2_74, %c256_75] : memref<18x512xf32, #tpu.memory_space<vmem>>, vector<2x128xf32>
    %98 = arith.subf %97, %55 : vector<2x128xf32>
    %99 = arith.mulf %96, %98 : vector<2x128xf32>
    %cst_76 = arith.constant dense<0.000000e+00> : vector<128xf32>
    %100 = vector.multi_reduction <add>, %99, %cst_76 [0] : vector<2x128xf32> to vector<128xf32>
    %101 = vector.shape_cast %100 : vector<128xf32> to vector<1x128xf32>
    %102 = arith.addf %51, %101 : vector<1x128xf32>
    %c1_77 = arith.constant 1 : index
    %c256_78 = arith.constant 256 : index
    %103 = vector.load %arg8[%c1_77, %c256_78] : memref<9x512xf32, #tpu.memory_space<vmem>>, vector<1x128xf32>
    tpu.vector_store %arg8[%c1_77, %c256_78], %102 {strides = array<i32>} : memref<9x512xf32, #tpu.memory_space<vmem>>, vector<1x128xf32>,
    %c0_79 = arith.constant 0 : index
    %c384_80 = arith.constant 384 : index
    %104 = vector.load %arg9[%c0_79, %c384_80] : memref<256x512xf32, #tpu.memory_space<vmem>>, vector<32x128xf32>
    %cst_81 = arith.constant dense<0.000000e+00> : vector<32x128xf32>
    %105 = tpu.matmul %42, %48, %cst_81 {dimension_numbers = #tpu.dot_dimension_numbers<[1], [0], [0], [1], [0, 0, 1, 1], [], []>} : vector<32x2xf32>, vector<2x128xf32>, vector<32x128xf32> -> vector<32x128xf32>
    %106 = arith.addf %104, %105 : vector<32x128xf32>
    %cst_82 = arith.constant 0.000000e+00 : f32
    %107 = vector.broadcast %cst_82 : f32 to vector<32x128xf32>
    %108 = arith.maximumf %106, %107 : vector<32x128xf32>
    %cst_83 = arith.constant dense<0.000000e+00> : vector<2x128xf32>
    %109 = tpu.matmul %43, %108, %cst_83 {dimension_numbers = #tpu.dot_dimension_numbers<[1], [0], [0], [1], [0, 0, 1, 1], [], []>} : vector<2x32xf32>, vector<32x128xf32>, vector<2x128xf32> -> vector<2x128xf32>
    %110 = vector.broadcast %44 : vector<2x1xf32> to vector<2x128xf32>
    %111 = arith.addf %109, %110 : vector<2x128xf32>
    %c2_84 = arith.constant 2 : index
    %c384_85 = arith.constant 384 : index
    %112 = vector.load %arg1[%c2_84, %c384_85] : memref<18x512xf32, #tpu.memory_space<vmem>>, vector<2x128xf32>
    %113 = arith.subf %112, %56 : vector<2x128xf32>
    %114 = arith.mulf %111, %113 : vector<2x128xf32>
    %cst_86 = arith.constant dense<0.000000e+00> : vector<128xf32>
    %115 = vector.multi_reduction <add>, %114, %cst_86 [0] : vector<2x128xf32> to vector<128xf32>
    %116 = vector.shape_cast %115 : vector<128xf32> to vector<1x128xf32>
    %117 = arith.addf %52, %116 : vector<1x128xf32>
    %c1_87 = arith.constant 1 : index
    %c384_88 = arith.constant 384 : index
    %118 = vector.load %arg8[%c1_87, %c384_88] : memref<9x512xf32, #tpu.memory_space<vmem>>, vector<1x128xf32>
    tpu.vector_store %arg8[%c1_87, %c384_88], %117 {strides = array<i32>} : memref<9x512xf32, #tpu.memory_space<vmem>>, vector<1x128xf32>,
    %c32_89 = arith.constant 32 : index
    %c0_90 = arith.constant 0 : index
    %119 = vector.load %arg9[%c32_89, %c0_90] : memref<256x512xf32, #tpu.memory_space<vmem>>, vector<32x128xf32>
    %cst_91 = arith.constant dense<0.000000e+00> : vector<32x128xf32>
    %120 = tpu.matmul %42, %66, %cst_91 {dimension_numbers = #tpu.dot_dimension_numbers<[1], [0], [0], [1], [0, 0, 1, 1], [], []>} : vector<32x2xf32>, vector<2x128xf32>, vector<32x128xf32> -> vector<32x128xf32>
    %121 = arith.addf %119, %120 : vector<32x128xf32>
    %cst_92 = arith.constant 0.000000e+00 : f32
    %122 = vector.broadcast %cst_92 : f32 to vector<32x128xf32>
    %123 = arith.maximumf %121, %122 : vector<32x128xf32>
    %cst_93 = arith.constant dense<0.000000e+00> : vector<2x128xf32>
    %124 = tpu.matmul %43, %123, %cst_93 {dimension_numbers = #tpu.dot_dimension_numbers<[1], [0], [0], [1], [0, 0, 1, 1], [], []>} : vector<2x32xf32>, vector<32x128xf32>, vector<2x128xf32> -> vector<2x128xf32>
    %125 = vector.broadcast %44 : vector<2x1xf32> to vector<2x128xf32>
    %126 = arith.addf %124, %125 : vector<2x128xf32>
    %c4 = arith.constant 4 : index
    %c0_94 = arith.constant 0 : index
    %127 = vector.load %arg1[%c4, %c0_94] : memref<18x512xf32, #tpu.memory_space<vmem>>, vector<2x128xf32>
    %128 = arith.subf %127, %67 : vector<2x128xf32>
    %129 = arith.mulf %126, %128 : vector<2x128xf32>
    %cst_95 = arith.constant dense<0.000000e+00> : vector<128xf32>
    %130 = vector.multi_reduction <add>, %129, %cst_95 [0] : vector<2x128xf32> to vector<128xf32>
    %131 = vector.shape_cast %130 : vector<128xf32> to vector<1x128xf32>
    %132 = arith.addf %72, %131 : vector<1x128xf32>
    %c2_96 = arith.constant 2 : index
    %c0_97 = arith.constant 0 : index
    %133 = vector.load %arg8[%c2_96, %c0_97] : memref<9x512xf32, #tpu.memory_space<vmem>>, vector<1x128xf32>
    tpu.vector_store %arg8[%c2_96, %c0_97], %132 {strides = array<i32>} : memref<9x512xf32, #tpu.memory_space<vmem>>, vector<1x128xf32>,
    %c32_98 = arith.constant 32 : index
    %c128_99 = arith.constant 128 : index
    %134 = vector.load %arg9[%c32_98, %c128_99] : memref<256x512xf32, #tpu.memory_space<vmem>>, vector<32x128xf32>
    %cst_100 = arith.constant dense<0.000000e+00> : vector<32x128xf32>
    %135 = tpu.matmul %42, %81, %cst_100 {dimension_numbers = #tpu.dot_dimension_numbers<[1], [0], [0], [1], [0, 0, 1, 1], [], []>} : vector<32x2xf32>, vector<2x128xf32>, vector<32x128xf32> -> vector<32x128xf32>
    %136 = arith.addf %134, %135 : vector<32x128xf32>
    %cst_101 = arith.constant 0.000000e+00 : f32
    %137 = vector.broadcast %cst_101 : f32 to vector<32x128xf32>
    %138 = arith.maximumf %136, %137 : vector<32x128xf32>
    %cst_102 = arith.constant dense<0.000000e+00> : vector<2x128xf32>
    %139 = tpu.matmul %43, %138, %cst_102 {dimension_numbers = #tpu.dot_dimension_numbers<[1], [0], [0], [1], [0, 0, 1, 1], [], []>} : vector<2x32xf32>, vector<32x128xf32>, vector<2x128xf32> -> vector<2x128xf32>
    %140 = vector.broadcast %44 : vector<2x1xf32> to vector<2x128xf32>
    %141 = arith.addf %139, %140 : vector<2x128xf32>
    %c4_103 = arith.constant 4 : index
    %c128_104 = arith.constant 128 : index
    %142 = vector.load %arg1[%c4_103, %c128_104] : memref<18x512xf32, #tpu.memory_space<vmem>>, vector<2x128xf32>
    %143 = arith.subf %142, %82 : vector<2x128xf32>
    %144 = arith.mulf %141, %143 : vector<2x128xf32>
    %cst_105 = arith.constant dense<0.000000e+00> : vector<128xf32>
    %145 = vector.multi_reduction <add>, %144, %cst_105 [0] : vector<2x128xf32> to vector<128xf32>
    %146 = vector.shape_cast %145 : vector<128xf32> to vector<1x128xf32>
    %147 = arith.addf %87, %146 : vector<1x128xf32>
    %c2_106 = arith.constant 2 : index
    %c128_107 = arith.constant 128 : index
    %148 = vector.load %arg8[%c2_106, %c128_107] : memref<9x512xf32, #tpu.memory_space<vmem>>, vector<1x128xf32>
    tpu.vector_store %arg8[%c2_106, %c128_107], %147 {strides = array<i32>} : memref<9x512xf32, #tpu.memory_space<vmem>>, vector<1x128xf32>,
    %c32_108 = arith.constant 32 : index
    %c256_109 = arith.constant 256 : index
    %149 = vector.load %arg9[%c32_108, %c256_109] : memref<256x512xf32, #tpu.memory_space<vmem>>, vector<32x128xf32>
    %cst_110 = arith.constant dense<0.000000e+00> : vector<32x128xf32>
    %150 = tpu.matmul %42, %96, %cst_110 {dimension_numbers = #tpu.dot_dimension_numbers<[1], [0], [0], [1], [0, 0, 1, 1], [], []>} : vector<32x2xf32>, vector<2x128xf32>, vector<32x128xf32> -> vector<32x128xf32>
    %151 = arith.addf %149, %150 : vector<32x128xf32>
    %cst_111 = arith.constant 0.000000e+00 : f32
    %152 = vector.broadcast %cst_111 : f32 to vector<32x128xf32>
    %153 = arith.maximumf %151, %152 : vector<32x128xf32>
    %cst_112 = arith.constant dense<0.000000e+00> : vector<2x128xf32>
    %154 = tpu.matmul %43, %153, %cst_112 {dimension_numbers = #tpu.dot_dimension_numbers<[1], [0], [0], [1], [0, 0, 1, 1], [], []>} : vector<2x32xf32>, vector<32x128xf32>, vector<2x128xf32> -> vector<2x128xf32>
    %155 = vector.broadcast %44 : vector<2x1xf32> to vector<2x128xf32>
    %156 = arith.addf %154, %155 : vector<2x128xf32>
    %c4_113 = arith.constant 4 : index
    %c256_114 = arith.constant 256 : index
    %157 = vector.load %arg1[%c4_113, %c256_114] : memref<18x512xf32, #tpu.memory_space<vmem>>, vector<2x128xf32>
    %158 = arith.subf %157, %97 : vector<2x128xf32>
    %159 = arith.mulf %156, %158 : vector<2x128xf32>
    %cst_115 = arith.constant dense<0.000000e+00> : vector<128xf32>
    %160 = vector.multi_reduction <add>, %159, %cst_115 [0] : vector<2x128xf32> to vector<128xf32>
    %161 = vector.shape_cast %160 : vector<128xf32> to vector<1x128xf32>
    %162 = arith.addf %102, %161 : vector<1x128xf32>
    %c2_116 = arith.constant 2 : index
    %c256_117 = arith.constant 256 : index
    %163 = vector.load %arg8[%c2_116, %c256_117] : memref<9x512xf32, #tpu.memory_space<vmem>>, vector<1x128xf32>
    tpu.vector_store %arg8[%c2_116, %c256_117], %162 {strides = array<i32>} : memref<9x512xf32, #tpu.memory_space<vmem>>, vector<1x128xf32>,
    %c32_118 = arith.constant 32 : index
    %c384_119 = arith.constant 384 : index
    %164 = vector.load %arg9[%c32_118, %c384_119] : memref<256x512xf32, #tpu.memory_space<vmem>>, vector<32x128xf32>
    %cst_120 = arith.constant dense<0.000000e+00> : vector<32x128xf32>
    %165 = tpu.matmul %42, %111, %cst_120 {dimension_numbers = #tpu.dot_dimension_numbers<[1], [0], [0], [1], [0, 0, 1, 1], [], []>} : vector<32x2xf32>, vector<2x128xf32>, vector<32x128xf32> -> vector<32x128xf32>
    %166 = arith.addf %164, %165 : vector<32x128xf32>
    %cst_121 = arith.constant 0.000000e+00 : f32
    %167 = vector.broadcast %cst_121 : f32 to vector<32x128xf32>
    %168 = arith.maximumf %166, %167 : vector<32x128xf32>
    %cst_122 = arith.constant dense<0.000000e+00> : vector<2x128xf32>
    %169 = tpu.matmul %43, %168, %cst_122 {dimension_numbers = #tpu.dot_dimension_numbers<[1], [0], [0], [1], [0, 0, 1, 1], [], []>} : vector<2x32xf32>, vector<32x128xf32>, vector<2x128xf32> -> vector<2x128xf32>
    %170 = vector.broadcast %44 : vector<2x1xf32> to vector<2x128xf32>
    %171 = arith.addf %169, %170 : vector<2x128xf32>
    %c4_123 = arith.constant 4 : index
    %c384_124 = arith.constant 384 : index
    %172 = vector.load %arg1[%c4_123, %c384_124] : memref<18x512xf32, #tpu.memory_space<vmem>>, vector<2x128xf32>
    %173 = arith.subf %172, %112 : vector<2x128xf32>
    %174 = arith.mulf %171, %173 : vector<2x128xf32>
    %cst_125 = arith.constant dense<0.000000e+00> : vector<128xf32>
    %175 = vector.multi_reduction <add>, %174, %cst_125 [0] : vector<2x128xf32> to vector<128xf32>
    %176 = vector.shape_cast %175 : vector<128xf32> to vector<1x128xf32>
    %177 = arith.addf %117, %176 : vector<1x128xf32>
    %c2_126 = arith.constant 2 : index
    %c384_127 = arith.constant 384 : index
    %178 = vector.load %arg8[%c2_126, %c384_127] : memref<9x512xf32, #tpu.memory_space<vmem>>, vector<1x128xf32>
    tpu.vector_store %arg8[%c2_126, %c384_127], %177 {strides = array<i32>} : memref<9x512xf32, #tpu.memory_space<vmem>>, vector<1x128xf32>,
    %c64_128 = arith.constant 64 : index
    %c0_129 = arith.constant 0 : index
    %179 = vector.load %arg9[%c64_128, %c0_129] : memref<256x512xf32, #tpu.memory_space<vmem>>, vector<32x128xf32>
    %cst_130 = arith.constant dense<0.000000e+00> : vector<32x128xf32>
    %180 = tpu.matmul %42, %126, %cst_130 {dimension_numbers = #tpu.dot_dimension_numbers<[1], [0], [0], [1], [0, 0, 1, 1], [], []>} : vector<32x2xf32>, vector<2x128xf32>, vector<32x128xf32> -> vector<32x128xf32>
    %181 = arith.addf %179, %180 : vector<32x128xf32>
    %cst_131 = arith.constant 0.000000e+00 : f32
    %182 = vector.broadcast %cst_131 : f32 to vector<32x128xf32>
    %183 = arith.maximumf %181, %182 : vector<32x128xf32>
    %cst_132 = arith.constant dense<0.000000e+00> : vector<2x128xf32>
    %184 = tpu.matmul %43, %183, %cst_132 {dimension_numbers = #tpu.dot_dimension_numbers<[1], [0], [0], [1], [0, 0, 1, 1], [], []>} : vector<2x32xf32>, vector<32x128xf32>, vector<2x128xf32> -> vector<2x128xf32>
    %185 = vector.broadcast %44 : vector<2x1xf32> to vector<2x128xf32>
    %186 = arith.addf %184, %185 : vector<2x128xf32>
    %c6_133 = arith.constant 6 : index
    %c0_134 = arith.constant 0 : index
    %187 = vector.load %arg1[%c6_133, %c0_134] : memref<18x512xf32, #tpu.memory_space<vmem>>, vector<2x128xf32>
    %188 = arith.subf %187, %127 : vector<2x128xf32>
    %189 = arith.mulf %186, %188 : vector<2x128xf32>
    %cst_135 = arith.constant dense<0.000000e+00> : vector<128xf32>
    %190 = vector.multi_reduction <add>, %189, %cst_135 [0] : vector<2x128xf32> to vector<128xf32>
    %191 = vector.shape_cast %190 : vector<128xf32> to vector<1x128xf32>
    %192 = arith.addf %132, %191 : vector<1x128xf32>
    %c3_136 = arith.constant 3 : index
    %c0_137 = arith.constant 0 : index
    %193 = vector.load %arg8[%c3_136, %c0_137] : memref<9x512xf32, #tpu.memory_space<vmem>>, vector<1x128xf32>
    tpu.vector_store %arg8[%c3_136, %c0_137], %192 {strides = array<i32>} : memref<9x512xf32, #tpu.memory_space<vmem>>, vector<1x128xf32>,
    %c64_138 = arith.constant 64 : index
    %c128_139 = arith.constant 128 : index
    %194 = vector.load %arg9[%c64_138, %c128_139] : memref<256x512xf32, #tpu.memory_space<vmem>>, vector<32x128xf32>
    %cst_140 = arith.constant dense<0.000000e+00> : vector<32x128xf32>
    %195 = tpu.matmul %42, %141, %cst_140 {dimension_numbers = #tpu.dot_dimension_numbers<[1], [0], [0], [1], [0, 0, 1, 1], [], []>} : vector<32x2xf32>, vector<2x128xf32>, vector<32x128xf32> -> vector<32x128xf32>
    %196 = arith.addf %194, %195 : vector<32x128xf32>
    %cst_141 = arith.constant 0.000000e+00 : f32
    %197 = vector.broadcast %cst_141 : f32 to vector<32x128xf32>
    %198 = arith.maximumf %196, %197 : vector<32x128xf32>
    %cst_142 = arith.constant dense<0.000000e+00> : vector<2x128xf32>
    %199 = tpu.matmul %43, %198, %cst_142 {dimension_numbers = #tpu.dot_dimension_numbers<[1], [0], [0], [1], [0, 0, 1, 1], [], []>} : vector<2x32xf32>, vector<32x128xf32>, vector<2x128xf32> -> vector<2x128xf32>
    %200 = vector.broadcast %44 : vector<2x1xf32> to vector<2x128xf32>
    %201 = arith.addf %199, %200 : vector<2x128xf32>
    %c6_143 = arith.constant 6 : index
    %c128_144 = arith.constant 128 : index
    %202 = vector.load %arg1[%c6_143, %c128_144] : memref<18x512xf32, #tpu.memory_space<vmem>>, vector<2x128xf32>
    %203 = arith.subf %202, %142 : vector<2x128xf32>
    %204 = arith.mulf %201, %203 : vector<2x128xf32>
    %cst_145 = arith.constant dense<0.000000e+00> : vector<128xf32>
    %205 = vector.multi_reduction <add>, %204, %cst_145 [0] : vector<2x128xf32> to vector<128xf32>
    %206 = vector.shape_cast %205 : vector<128xf32> to vector<1x128xf32>
    %207 = arith.addf %147, %206 : vector<1x128xf32>
    %c3_146 = arith.constant 3 : index
    %c128_147 = arith.constant 128 : index
    %208 = vector.load %arg8[%c3_146, %c128_147] : memref<9x512xf32, #tpu.memory_space<vmem>>, vector<1x128xf32>
    tpu.vector_store %arg8[%c3_146, %c128_147], %207 {strides = array<i32>} : memref<9x512xf32, #tpu.memory_space<vmem>>, vector<1x128xf32>,
    %c64_148 = arith.constant 64 : index
    %c256_149 = arith.constant 256 : index
    %209 = vector.load %arg9[%c64_148, %c256_149] : memref<256x512xf32, #tpu.memory_space<vmem>>, vector<32x128xf32>
    %cst_150 = arith.constant dense<0.000000e+00> : vector<32x128xf32>
    %210 = tpu.matmul %42, %156, %cst_150 {dimension_numbers = #tpu.dot_dimension_numbers<[1], [0], [0], [1], [0, 0, 1, 1], [], []>} : vector<32x2xf32>, vector<2x128xf32>, vector<32x128xf32> -> vector<32x128xf32>
    %211 = arith.addf %209, %210 : vector<32x128xf32>
    %cst_151 = arith.constant 0.000000e+00 : f32
    %212 = vector.broadcast %cst_151 : f32 to vector<32x128xf32>
    %213 = arith.maximumf %211, %212 : vector<32x128xf32>
    %cst_152 = arith.constant dense<0.000000e+00> : vector<2x128xf32>
    %214 = tpu.matmul %43, %213, %cst_152 {dimension_numbers = #tpu.dot_dimension_numbers<[1], [0], [0], [1], [0, 0, 1, 1], [], []>} : vector<2x32xf32>, vector<32x128xf32>, vector<2x128xf32> -> vector<2x128xf32>
    %215 = vector.broadcast %44 : vector<2x1xf32> to vector<2x128xf32>
    %216 = arith.addf %214, %215 : vector<2x128xf32>
    %c6_153 = arith.constant 6 : index
    %c256_154 = arith.constant 256 : index
    %217 = vector.load %arg1[%c6_153, %c256_154] : memref<18x512xf32, #tpu.memory_space<vmem>>, vector<2x128xf32>
    %218 = arith.subf %217, %157 : vector<2x128xf32>
    %219 = arith.mulf %216, %218 : vector<2x128xf32>
    %cst_155 = arith.constant dense<0.000000e+00> : vector<128xf32>
    %220 = vector.multi_reduction <add>, %219, %cst_155 [0] : vector<2x128xf32> to vector<128xf32>
    %221 = vector.shape_cast %220 : vector<128xf32> to vector<1x128xf32>
    %222 = arith.addf %162, %221 : vector<1x128xf32>
    %c3_156 = arith.constant 3 : index
    %c256_157 = arith.constant 256 : index
    %223 = vector.load %arg8[%c3_156, %c256_157] : memref<9x512xf32, #tpu.memory_space<vmem>>, vector<1x128xf32>
    tpu.vector_store %arg8[%c3_156, %c256_157], %222 {strides = array<i32>} : memref<9x512xf32, #tpu.memory_space<vmem>>, vector<1x128xf32>,
    %c64_158 = arith.constant 64 : index
    %c384_159 = arith.constant 384 : index
    %224 = vector.load %arg9[%c64_158, %c384_159] : memref<256x512xf32, #tpu.memory_space<vmem>>, vector<32x128xf32>
    %cst_160 = arith.constant dense<0.000000e+00> : vector<32x128xf32>
    %225 = tpu.matmul %42, %171, %cst_160 {dimension_numbers = #tpu.dot_dimension_numbers<[1], [0], [0], [1], [0, 0, 1, 1], [], []>} : vector<32x2xf32>, vector<2x128xf32>, vector<32x128xf32> -> vector<32x128xf32>
    %226 = arith.addf %224, %225 : vector<32x128xf32>
    %cst_161 = arith.constant 0.000000e+00 : f32
    %227 = vector.broadcast %cst_161 : f32 to vector<32x128xf32>
    %228 = arith.maximumf %226, %227 : vector<32x128xf32>
    %cst_162 = arith.constant dense<0.000000e+00> : vector<2x128xf32>
    %229 = tpu.matmul %43, %228, %cst_162 {dimension_numbers = #tpu.dot_dimension_numbers<[1], [0], [0], [1], [0, 0, 1, 1], [], []>} : vector<2x32xf32>, vector<32x128xf32>, vector<2x128xf32> -> vector<2x128xf32>
    %230 = vector.broadcast %44 : vector<2x1xf32> to vector<2x128xf32>
    %231 = arith.addf %229, %230 : vector<2x128xf32>
    %c6_163 = arith.constant 6 : index
    %c384_164 = arith.constant 384 : index
    %232 = vector.load %arg1[%c6_163, %c384_164] : memref<18x512xf32, #tpu.memory_space<vmem>>, vector<2x128xf32>
    %233 = arith.subf %232, %172 : vector<2x128xf32>
    %234 = arith.mulf %231, %233 : vector<2x128xf32>
    %cst_165 = arith.constant dense<0.000000e+00> : vector<128xf32>
    %235 = vector.multi_reduction <add>, %234, %cst_165 [0] : vector<2x128xf32> to vector<128xf32>
    %236 = vector.shape_cast %235 : vector<128xf32> to vector<1x128xf32>
    %237 = arith.addf %177, %236 : vector<1x128xf32>
    %c3_166 = arith.constant 3 : index
    %c384_167 = arith.constant 384 : index
    %238 = vector.load %arg8[%c3_166, %c384_167] : memref<9x512xf32, #tpu.memory_space<vmem>>, vector<1x128xf32>
    tpu.vector_store %arg8[%c3_166, %c384_167], %237 {strides = array<i32>} : memref<9x512xf32, #tpu.memory_space<vmem>>, vector<1x128xf32>,
    %c96_168 = arith.constant 96 : index
    %c0_169 = arith.constant 0 : index
    %239 = vector.load %arg9[%c96_168, %c0_169] : memref<256x512xf32, #tpu.memory_space<vmem>>, vector<32x128xf32>
    %cst_170 = arith.constant dense<0.000000e+00> : vector<32x128xf32>
    %240 = tpu.matmul %42, %186, %cst_170 {dimension_numbers = #tpu.dot_dimension_numbers<[1], [0], [0], [1], [0, 0, 1, 1], [], []>} : vector<32x2xf32>, vector<2x128xf32>, vector<32x128xf32> -> vector<32x128xf32>
    %241 = arith.addf %239, %240 : vector<32x128xf32>
    %cst_171 = arith.constant 0.000000e+00 : f32
    %242 = vector.broadcast %cst_171 : f32 to vector<32x128xf32>
    %243 = arith.maximumf %241, %242 : vector<32x128xf32>
    %cst_172 = arith.constant dense<0.000000e+00> : vector<2x128xf32>
    %244 = tpu.matmul %43, %243, %cst_172 {dimension_numbers = #tpu.dot_dimension_numbers<[1], [0], [0], [1], [0, 0, 1, 1], [], []>} : vector<2x32xf32>, vector<32x128xf32>, vector<2x128xf32> -> vector<2x128xf32>
    %245 = vector.broadcast %44 : vector<2x1xf32> to vector<2x128xf32>
    %246 = arith.addf %244, %245 : vector<2x128xf32>
    %c8 = arith.constant 8 : index
    %c0_173 = arith.constant 0 : index
    %247 = vector.load %arg1[%c8, %c0_173] : memref<18x512xf32, #tpu.memory_space<vmem>>, vector<2x128xf32>
    %248 = arith.subf %247, %187 : vector<2x128xf32>
    %249 = arith.mulf %246, %248 : vector<2x128xf32>
    %cst_174 = arith.constant dense<0.000000e+00> : vector<128xf32>
    %250 = vector.multi_reduction <add>, %249, %cst_174 [0] : vector<2x128xf32> to vector<128xf32>
    %251 = vector.shape_cast %250 : vector<128xf32> to vector<1x128xf32>
    %252 = arith.addf %192, %251 : vector<1x128xf32>
    %c4_175 = arith.constant 4 : index
    %c0_176 = arith.constant 0 : index
    %253 = vector.load %arg8[%c4_175, %c0_176] : memref<9x512xf32, #tpu.memory_space<vmem>>, vector<1x128xf32>
    tpu.vector_store %arg8[%c4_175, %c0_176], %252 {strides = array<i32>} : memref<9x512xf32, #tpu.memory_space<vmem>>, vector<1x128xf32>,
    %c96_177 = arith.constant 96 : index
    %c128_178 = arith.constant 128 : index
    %254 = vector.load %arg9[%c96_177, %c128_178] : memref<256x512xf32, #tpu.memory_space<vmem>>, vector<32x128xf32>
    %cst_179 = arith.constant dense<0.000000e+00> : vector<32x128xf32>
    %255 = tpu.matmul %42, %201, %cst_179 {dimension_numbers = #tpu.dot_dimension_numbers<[1], [0], [0], [1], [0, 0, 1, 1], [], []>} : vector<32x2xf32>, vector<2x128xf32>, vector<32x128xf32> -> vector<32x128xf32>
    %256 = arith.addf %254, %255 : vector<32x128xf32>
    %cst_180 = arith.constant 0.000000e+00 : f32
    %257 = vector.broadcast %cst_180 : f32 to vector<32x128xf32>
    %258 = arith.maximumf %256, %257 : vector<32x128xf32>
    %cst_181 = arith.constant dense<0.000000e+00> : vector<2x128xf32>
    %259 = tpu.matmul %43, %258, %cst_181 {dimension_numbers = #tpu.dot_dimension_numbers<[1], [0], [0], [1], [0, 0, 1, 1], [], []>} : vector<2x32xf32>, vector<32x128xf32>, vector<2x128xf32> -> vector<2x128xf32>
    %260 = vector.broadcast %44 : vector<2x1xf32> to vector<2x128xf32>
    %261 = arith.addf %259, %260 : vector<2x128xf32>
    %c8_182 = arith.constant 8 : index
    %c128_183 = arith.constant 128 : index
    %262 = vector.load %arg1[%c8_182, %c128_183] : memref<18x512xf32, #tpu.memory_space<vmem>>, vector<2x128xf32>
    %263 = arith.subf %262, %202 : vector<2x128xf32>
    %264 = arith.mulf %261, %263 : vector<2x128xf32>
    %cst_184 = arith.constant dense<0.000000e+00> : vector<128xf32>
    %265 = vector.multi_reduction <add>, %264, %cst_184 [0] : vector<2x128xf32> to vector<128xf32>
    %266 = vector.shape_cast %265 : vector<128xf32> to vector<1x128xf32>
    %267 = arith.addf %207, %266 : vector<1x128xf32>
    %c4_185 = arith.constant 4 : index
    %c128_186 = arith.constant 128 : index
    %268 = vector.load %arg8[%c4_185, %c128_186] : memref<9x512xf32, #tpu.memory_space<vmem>>, vector<1x128xf32>
    tpu.vector_store %arg8[%c4_185, %c128_186], %267 {strides = array<i32>} : memref<9x512xf32, #tpu.memory_space<vmem>>, vector<1x128xf32>,
    %c96_187 = arith.constant 96 : index
    %c256_188 = arith.constant 256 : index
    %269 = vector.load %arg9[%c96_187, %c256_188] : memref<256x512xf32, #tpu.memory_space<vmem>>, vector<32x128xf32>
    %cst_189 = arith.constant dense<0.000000e+00> : vector<32x128xf32>
    %270 = tpu.matmul %42, %216, %cst_189 {dimension_numbers = #tpu.dot_dimension_numbers<[1], [0], [0], [1], [0, 0, 1, 1], [], []>} : vector<32x2xf32>, vector<2x128xf32>, vector<32x128xf32> -> vector<32x128xf32>
    %271 = arith.addf %269, %270 : vector<32x128xf32>
    %cst_190 = arith.constant 0.000000e+00 : f32
    %272 = vector.broadcast %cst_190 : f32 to vector<32x128xf32>
    %273 = arith.maximumf %271, %272 : vector<32x128xf32>
    %cst_191 = arith.constant dense<0.000000e+00> : vector<2x128xf32>
    %274 = tpu.matmul %43, %273, %cst_191 {dimension_numbers = #tpu.dot_dimension_numbers<[1], [0], [0], [1], [0, 0, 1, 1], [], []>} : vector<2x32xf32>, vector<32x128xf32>, vector<2x128xf32> -> vector<2x128xf32>
    %275 = vector.broadcast %44 : vector<2x1xf32> to vector<2x128xf32>
    %276 = arith.addf %274, %275 : vector<2x128xf32>
    %c8_192 = arith.constant 8 : index
    %c256_193 = arith.constant 256 : index
    %277 = vector.load %arg1[%c8_192, %c256_193] : memref<18x512xf32, #tpu.memory_space<vmem>>, vector<2x128xf32>
    %278 = arith.subf %277, %217 : vector<2x128xf32>
    %279 = arith.mulf %276, %278 : vector<2x128xf32>
    %cst_194 = arith.constant dense<0.000000e+00> : vector<128xf32>
    %280 = vector.multi_reduction <add>, %279, %cst_194 [0] : vector<2x128xf32> to vector<128xf32>
    %281 = vector.shape_cast %280 : vector<128xf32> to vector<1x128xf32>
    %282 = arith.addf %222, %281 : vector<1x128xf32>
    %c4_195 = arith.constant 4 : index
    %c256_196 = arith.constant 256 : index
    %283 = vector.load %arg8[%c4_195, %c256_196] : memref<9x512xf32, #tpu.memory_space<vmem>>, vector<1x128xf32>
    tpu.vector_store %arg8[%c4_195, %c256_196], %282 {strides = array<i32>} : memref<9x512xf32, #tpu.memory_space<vmem>>, vector<1x128xf32>,
    %c96_197 = arith.constant 96 : index
    %c384_198 = arith.constant 384 : index
    %284 = vector.load %arg9[%c96_197, %c384_198] : memref<256x512xf32, #tpu.memory_space<vmem>>, vector<32x128xf32>
    %cst_199 = arith.constant dense<0.000000e+00> : vector<32x128xf32>
    %285 = tpu.matmul %42, %231, %cst_199 {dimension_numbers = #tpu.dot_dimension_numbers<[1], [0], [0], [1], [0, 0, 1, 1], [], []>} : vector<32x2xf32>, vector<2x128xf32>, vector<32x128xf32> -> vector<32x128xf32>
    %286 = arith.addf %284, %285 : vector<32x128xf32>
    %cst_200 = arith.constant 0.000000e+00 : f32
    %287 = vector.broadcast %cst_200 : f32 to vector<32x128xf32>
    %288 = arith.maximumf %286, %287 : vector<32x128xf32>
    %cst_201 = arith.constant dense<0.000000e+00> : vector<2x128xf32>
    %289 = tpu.matmul %43, %288, %cst_201 {dimension_numbers = #tpu.dot_dimension_numbers<[1], [0], [0], [1], [0, 0, 1, 1], [], []>} : vector<2x32xf32>, vector<32x128xf32>, vector<2x128xf32> -> vector<2x128xf32>
    %290 = vector.broadcast %44 : vector<2x1xf32> to vector<2x128xf32>
    %291 = arith.addf %289, %290 : vector<2x128xf32>
    %c8_202 = arith.constant 8 : index
    %c384_203 = arith.constant 384 : index
    %292 = vector.load %arg1[%c8_202, %c384_203] : memref<18x512xf32, #tpu.memory_space<vmem>>, vector<2x128xf32>
    %293 = arith.subf %292, %232 : vector<2x128xf32>
    %294 = arith.mulf %291, %293 : vector<2x128xf32>
    %cst_204 = arith.constant dense<0.000000e+00> : vector<128xf32>
    %295 = vector.multi_reduction <add>, %294, %cst_204 [0] : vector<2x128xf32> to vector<128xf32>
    %296 = vector.shape_cast %295 : vector<128xf32> to vector<1x128xf32>
    %297 = arith.addf %237, %296 : vector<1x128xf32>
    %c4_205 = arith.constant 4 : index
    %c384_206 = arith.constant 384 : index
    %298 = vector.load %arg8[%c4_205, %c384_206] : memref<9x512xf32, #tpu.memory_space<vmem>>, vector<1x128xf32>
    tpu.vector_store %arg8[%c4_205, %c384_206], %297 {strides = array<i32>} : memref<9x512xf32, #tpu.memory_space<vmem>>, vector<1x128xf32>,
    %c128_207 = arith.constant 128 : index
    %c0_208 = arith.constant 0 : index
    %299 = vector.load %arg9[%c128_207, %c0_208] : memref<256x512xf32, #tpu.memory_space<vmem>>, vector<32x128xf32>
    %cst_209 = arith.constant dense<0.000000e+00> : vector<32x128xf32>
    %300 = tpu.matmul %42, %246, %cst_209 {dimension_numbers = #tpu.dot_dimension_numbers<[1], [0], [0], [1], [0, 0, 1, 1], [], []>} : vector<32x2xf32>, vector<2x128xf32>, vector<32x128xf32> -> vector<32x128xf32>
    %301 = arith.addf %299, %300 : vector<32x128xf32>
    %cst_210 = arith.constant 0.000000e+00 : f32
    %302 = vector.broadcast %cst_210 : f32 to vector<32x128xf32>
    %303 = arith.maximumf %301, %302 : vector<32x128xf32>
    %cst_211 = arith.constant dense<0.000000e+00> : vector<2x128xf32>
    %304 = tpu.matmul %43, %303, %cst_211 {dimension_numbers = #tpu.dot_dimension_numbers<[1], [0], [0], [1], [0, 0, 1, 1], [], []>} : vector<2x32xf32>, vector<32x128xf32>, vector<2x128xf32> -> vector<2x128xf32>
    %305 = vector.broadcast %44 : vector<2x1xf32> to vector<2x128xf32>
    %306 = arith.addf %304, %305 : vector<2x128xf32>
    %c10 = arith.constant 10 : index
    %c0_212 = arith.constant 0 : index
    %307 = vector.load %arg1[%c10, %c0_212] : memref<18x512xf32, #tpu.memory_space<vmem>>, vector<2x128xf32>
    %308 = arith.subf %307, %247 : vector<2x128xf32>
    %309 = arith.mulf %306, %308 : vector<2x128xf32>
    %cst_213 = arith.constant dense<0.000000e+00> : vector<128xf32>
    %310 = vector.multi_reduction <add>, %309, %cst_213 [0] : vector<2x128xf32> to vector<128xf32>
    %311 = vector.shape_cast %310 : vector<128xf32> to vector<1x128xf32>
    %312 = arith.addf %252, %311 : vector<1x128xf32>
    %c5 = arith.constant 5 : index
    %c0_214 = arith.constant 0 : index
    %313 = vector.load %arg8[%c5, %c0_214] : memref<9x512xf32, #tpu.memory_space<vmem>>, vector<1x128xf32>
    tpu.vector_store %arg8[%c5, %c0_214], %312 {strides = array<i32>} : memref<9x512xf32, #tpu.memory_space<vmem>>, vector<1x128xf32>,
    %c128_215 = arith.constant 128 : index
    %c128_216 = arith.constant 128 : index
    %314 = vector.load %arg9[%c128_215, %c128_216] : memref<256x512xf32, #tpu.memory_space<vmem>>, vector<32x128xf32>
    %cst_217 = arith.constant dense<0.000000e+00> : vector<32x128xf32>
    %315 = tpu.matmul %42, %261, %cst_217 {dimension_numbers = #tpu.dot_dimension_numbers<[1], [0], [0], [1], [0, 0, 1, 1], [], []>} : vector<32x2xf32>, vector<2x128xf32>, vector<32x128xf32> -> vector<32x128xf32>
    %316 = arith.addf %314, %315 : vector<32x128xf32>
    %cst_218 = arith.constant 0.000000e+00 : f32
    %317 = vector.broadcast %cst_218 : f32 to vector<32x128xf32>
    %318 = arith.maximumf %316, %317 : vector<32x128xf32>
    %cst_219 = arith.constant dense<0.000000e+00> : vector<2x128xf32>
    %319 = tpu.matmul %43, %318, %cst_219 {dimension_numbers = #tpu.dot_dimension_numbers<[1], [0], [0], [1], [0, 0, 1, 1], [], []>} : vector<2x32xf32>, vector<32x128xf32>, vector<2x128xf32> -> vector<2x128xf32>
    %320 = vector.broadcast %44 : vector<2x1xf32> to vector<2x128xf32>
    %321 = arith.addf %319, %320 : vector<2x128xf32>
    %c10_220 = arith.constant 10 : index
    %c128_221 = arith.constant 128 : index
    %322 = vector.load %arg1[%c10_220, %c128_221] : memref<18x512xf32, #tpu.memory_space<vmem>>, vector<2x128xf32>
    %323 = arith.subf %322, %262 : vector<2x128xf32>
    %324 = arith.mulf %321, %323 : vector<2x128xf32>
    %cst_222 = arith.constant dense<0.000000e+00> : vector<128xf32>
    %325 = vector.multi_reduction <add>, %324, %cst_222 [0] : vector<2x128xf32> to vector<128xf32>
    %326 = vector.shape_cast %325 : vector<128xf32> to vector<1x128xf32>
    %327 = arith.addf %267, %326 : vector<1x128xf32>
    %c5_223 = arith.constant 5 : index
    %c128_224 = arith.constant 128 : index
    %328 = vector.load %arg8[%c5_223, %c128_224] : memref<9x512xf32, #tpu.memory_space<vmem>>, vector<1x128xf32>
    tpu.vector_store %arg8[%c5_223, %c128_224], %327 {strides = array<i32>} : memref<9x512xf32, #tpu.memory_space<vmem>>, vector<1x128xf32>,
    %c128_225 = arith.constant 128 : index
    %c256_226 = arith.constant 256 : index
    %329 = vector.load %arg9[%c128_225, %c256_226] : memref<256x512xf32, #tpu.memory_space<vmem>>, vector<32x128xf32>
    %cst_227 = arith.constant dense<0.000000e+00> : vector<32x128xf32>
    %330 = tpu.matmul %42, %276, %cst_227 {dimension_numbers = #tpu.dot_dimension_numbers<[1], [0], [0], [1], [0, 0, 1, 1], [], []>} : vector<32x2xf32>, vector<2x128xf32>, vector<32x128xf32> -> vector<32x128xf32>
    %331 = arith.addf %329, %330 : vector<32x128xf32>
    %cst_228 = arith.constant 0.000000e+00 : f32
    %332 = vector.broadcast %cst_228 : f32 to vector<32x128xf32>
    %333 = arith.maximumf %331, %332 : vector<32x128xf32>
    %cst_229 = arith.constant dense<0.000000e+00> : vector<2x128xf32>
    %334 = tpu.matmul %43, %333, %cst_229 {dimension_numbers = #tpu.dot_dimension_numbers<[1], [0], [0], [1], [0, 0, 1, 1], [], []>} : vector<2x32xf32>, vector<32x128xf32>, vector<2x128xf32> -> vector<2x128xf32>
    %335 = vector.broadcast %44 : vector<2x1xf32> to vector<2x128xf32>
    %336 = arith.addf %334, %335 : vector<2x128xf32>
    %c10_230 = arith.constant 10 : index
    %c256_231 = arith.constant 256 : index
    %337 = vector.load %arg1[%c10_230, %c256_231] : memref<18x512xf32, #tpu.memory_space<vmem>>, vector<2x128xf32>
    %338 = arith.subf %337, %277 : vector<2x128xf32>
    %339 = arith.mulf %336, %338 : vector<2x128xf32>
    %cst_232 = arith.constant dense<0.000000e+00> : vector<128xf32>
    %340 = vector.multi_reduction <add>, %339, %cst_232 [0] : vector<2x128xf32> to vector<128xf32>
    %341 = vector.shape_cast %340 : vector<128xf32> to vector<1x128xf32>
    %342 = arith.addf %282, %341 : vector<1x128xf32>
    %c5_233 = arith.constant 5 : index
    %c256_234 = arith.constant 256 : index
    %343 = vector.load %arg8[%c5_233, %c256_234] : memref<9x512xf32, #tpu.memory_space<vmem>>, vector<1x128xf32>
    tpu.vector_store %arg8[%c5_233, %c256_234], %342 {strides = array<i32>} : memref<9x512xf32, #tpu.memory_space<vmem>>, vector<1x128xf32>,
    %c128_235 = arith.constant 128 : index
    %c384_236 = arith.constant 384 : index
    %344 = vector.load %arg9[%c128_235, %c384_236] : memref<256x512xf32, #tpu.memory_space<vmem>>, vector<32x128xf32>
    %cst_237 = arith.constant dense<0.000000e+00> : vector<32x128xf32>
    %345 = tpu.matmul %42, %291, %cst_237 {dimension_numbers = #tpu.dot_dimension_numbers<[1], [0], [0], [1], [0, 0, 1, 1], [], []>} : vector<32x2xf32>, vector<2x128xf32>, vector<32x128xf32> -> vector<32x128xf32>
    %346 = arith.addf %344, %345 : vector<32x128xf32>
    %cst_238 = arith.constant 0.000000e+00 : f32
    %347 = vector.broadcast %cst_238 : f32 to vector<32x128xf32>
    %348 = arith.maximumf %346, %347 : vector<32x128xf32>
    %cst_239 = arith.constant dense<0.000000e+00> : vector<2x128xf32>
    %349 = tpu.matmul %43, %348, %cst_239 {dimension_numbers = #tpu.dot_dimension_numbers<[1], [0], [0], [1], [0, 0, 1, 1], [], []>} : vector<2x32xf32>, vector<32x128xf32>, vector<2x128xf32> -> vector<2x128xf32>
    %350 = vector.broadcast %44 : vector<2x1xf32> to vector<2x128xf32>
    %351 = arith.addf %349, %350 : vector<2x128xf32>
    %c10_240 = arith.constant 10 : index
    %c384_241 = arith.constant 384 : index
    %352 = vector.load %arg1[%c10_240, %c384_241] : memref<18x512xf32, #tpu.memory_space<vmem>>, vector<2x128xf32>
    %353 = arith.subf %352, %292 : vector<2x128xf32>
    %354 = arith.mulf %351, %353 : vector<2x128xf32>
    %cst_242 = arith.constant dense<0.000000e+00> : vector<128xf32>
    %355 = vector.multi_reduction <add>, %354, %cst_242 [0] : vector<2x128xf32> to vector<128xf32>
    %356 = vector.shape_cast %355 : vector<128xf32> to vector<1x128xf32>
    %357 = arith.addf %297, %356 : vector<1x128xf32>
    %c5_243 = arith.constant 5 : index
    %c384_244 = arith.constant 384 : index
    %358 = vector.load %arg8[%c5_243, %c384_244] : memref<9x512xf32, #tpu.memory_space<vmem>>, vector<1x128xf32>
    tpu.vector_store %arg8[%c5_243, %c384_244], %357 {strides = array<i32>} : memref<9x512xf32, #tpu.memory_space<vmem>>, vector<1x128xf32>,
    %c160_245 = arith.constant 160 : index
    %c0_246 = arith.constant 0 : index
    %359 = vector.load %arg9[%c160_245, %c0_246] : memref<256x512xf32, #tpu.memory_space<vmem>>, vector<32x128xf32>
    %cst_247 = arith.constant dense<0.000000e+00> : vector<32x128xf32>
    %360 = tpu.matmul %42, %306, %cst_247 {dimension_numbers = #tpu.dot_dimension_numbers<[1], [0], [0], [1], [0, 0, 1, 1], [], []>} : vector<32x2xf32>, vector<2x128xf32>, vector<32x128xf32> -> vector<32x128xf32>
    %361 = arith.addf %359, %360 : vector<32x128xf32>
    %cst_248 = arith.constant 0.000000e+00 : f32
    %362 = vector.broadcast %cst_248 : f32 to vector<32x128xf32>
    %363 = arith.maximumf %361, %362 : vector<32x128xf32>
    %cst_249 = arith.constant dense<0.000000e+00> : vector<2x128xf32>
    %364 = tpu.matmul %43, %363, %cst_249 {dimension_numbers = #tpu.dot_dimension_numbers<[1], [0], [0], [1], [0, 0, 1, 1], [], []>} : vector<2x32xf32>, vector<32x128xf32>, vector<2x128xf32> -> vector<2x128xf32>
    %365 = vector.broadcast %44 : vector<2x1xf32> to vector<2x128xf32>
    %366 = arith.addf %364, %365 : vector<2x128xf32>
    %c12_250 = arith.constant 12 : index
    %c0_251 = arith.constant 0 : index
    %367 = vector.load %arg1[%c12_250, %c0_251] : memref<18x512xf32, #tpu.memory_space<vmem>>, vector<2x128xf32>
    %368 = arith.subf %367, %307 : vector<2x128xf32>
    %369 = arith.mulf %366, %368 : vector<2x128xf32>
    %cst_252 = arith.constant dense<0.000000e+00> : vector<128xf32>
    %370 = vector.multi_reduction <add>, %369, %cst_252 [0] : vector<2x128xf32> to vector<128xf32>
    %371 = vector.shape_cast %370 : vector<128xf32> to vector<1x128xf32>
    %372 = arith.addf %312, %371 : vector<1x128xf32>
    %c6_253 = arith.constant 6 : index
    %c0_254 = arith.constant 0 : index
    %373 = vector.load %arg8[%c6_253, %c0_254] : memref<9x512xf32, #tpu.memory_space<vmem>>, vector<1x128xf32>
    tpu.vector_store %arg8[%c6_253, %c0_254], %372 {strides = array<i32>} : memref<9x512xf32, #tpu.memory_space<vmem>>, vector<1x128xf32>,
    %c160_255 = arith.constant 160 : index
    %c128_256 = arith.constant 128 : index
    %374 = vector.load %arg9[%c160_255, %c128_256] : memref<256x512xf32, #tpu.memory_space<vmem>>, vector<32x128xf32>
    %cst_257 = arith.constant dense<0.000000e+00> : vector<32x128xf32>
    %375 = tpu.matmul %42, %321, %cst_257 {dimension_numbers = #tpu.dot_dimension_numbers<[1], [0], [0], [1], [0, 0, 1, 1], [], []>} : vector<32x2xf32>, vector<2x128xf32>, vector<32x128xf32> -> vector<32x128xf32>
    %376 = arith.addf %374, %375 : vector<32x128xf32>
    %cst_258 = arith.constant 0.000000e+00 : f32
    %377 = vector.broadcast %cst_258 : f32 to vector<32x128xf32>
    %378 = arith.maximumf %376, %377 : vector<32x128xf32>
    %cst_259 = arith.constant dense<0.000000e+00> : vector<2x128xf32>
    %379 = tpu.matmul %43, %378, %cst_259 {dimension_numbers = #tpu.dot_dimension_numbers<[1], [0], [0], [1], [0, 0, 1, 1], [], []>} : vector<2x32xf32>, vector<32x128xf32>, vector<2x128xf32> -> vector<2x128xf32>
    %380 = vector.broadcast %44 : vector<2x1xf32> to vector<2x128xf32>
    %381 = arith.addf %379, %380 : vector<2x128xf32>
    %c12_260 = arith.constant 12 : index
    %c128_261 = arith.constant 128 : index
    %382 = vector.load %arg1[%c12_260, %c128_261] : memref<18x512xf32, #tpu.memory_space<vmem>>, vector<2x128xf32>
    %383 = arith.subf %382, %322 : vector<2x128xf32>
    %384 = arith.mulf %381, %383 : vector<2x128xf32>
    %cst_262 = arith.constant dense<0.000000e+00> : vector<128xf32>
    %385 = vector.multi_reduction <add>, %384, %cst_262 [0] : vector<2x128xf32> to vector<128xf32>
    %386 = vector.shape_cast %385 : vector<128xf32> to vector<1x128xf32>
    %387 = arith.addf %327, %386 : vector<1x128xf32>
    %c6_263 = arith.constant 6 : index
    %c128_264 = arith.constant 128 : index
    %388 = vector.load %arg8[%c6_263, %c128_264] : memref<9x512xf32, #tpu.memory_space<vmem>>, vector<1x128xf32>
    tpu.vector_store %arg8[%c6_263, %c128_264], %387 {strides = array<i32>} : memref<9x512xf32, #tpu.memory_space<vmem>>, vector<1x128xf32>,
    %c160_265 = arith.constant 160 : index
    %c256_266 = arith.constant 256 : index
    %389 = vector.load %arg9[%c160_265, %c256_266] : memref<256x512xf32, #tpu.memory_space<vmem>>, vector<32x128xf32>
    %cst_267 = arith.constant dense<0.000000e+00> : vector<32x128xf32>
    %390 = tpu.matmul %42, %336, %cst_267 {dimension_numbers = #tpu.dot_dimension_numbers<[1], [0], [0], [1], [0, 0, 1, 1], [], []>} : vector<32x2xf32>, vector<2x128xf32>, vector<32x128xf32> -> vector<32x128xf32>
    %391 = arith.addf %389, %390 : vector<32x128xf32>
    %cst_268 = arith.constant 0.000000e+00 : f32
    %392 = vector.broadcast %cst_268 : f32 to vector<32x128xf32>
    %393 = arith.maximumf %391, %392 : vector<32x128xf32>
    %cst_269 = arith.constant dense<0.000000e+00> : vector<2x128xf32>
    %394 = tpu.matmul %43, %393, %cst_269 {dimension_numbers = #tpu.dot_dimension_numbers<[1], [0], [0], [1], [0, 0, 1, 1], [], []>} : vector<2x32xf32>, vector<32x128xf32>, vector<2x128xf32> -> vector<2x128xf32>
    %395 = vector.broadcast %44 : vector<2x1xf32> to vector<2x128xf32>
    %396 = arith.addf %394, %395 : vector<2x128xf32>
    %c12_270 = arith.constant 12 : index
    %c256_271 = arith.constant 256 : index
    %397 = vector.load %arg1[%c12_270, %c256_271] : memref<18x512xf32, #tpu.memory_space<vmem>>, vector<2x128xf32>
    %398 = arith.subf %397, %337 : vector<2x128xf32>
    %399 = arith.mulf %396, %398 : vector<2x128xf32>
    %cst_272 = arith.constant dense<0.000000e+00> : vector<128xf32>
    %400 = vector.multi_reduction <add>, %399, %cst_272 [0] : vector<2x128xf32> to vector<128xf32>
    %401 = vector.shape_cast %400 : vector<128xf32> to vector<1x128xf32>
    %402 = arith.addf %342, %401 : vector<1x128xf32>
    %c6_273 = arith.constant 6 : index
    %c256_274 = arith.constant 256 : index
    %403 = vector.load %arg8[%c6_273, %c256_274] : memref<9x512xf32, #tpu.memory_space<vmem>>, vector<1x128xf32>
    tpu.vector_store %arg8[%c6_273, %c256_274], %402 {strides = array<i32>} : memref<9x512xf32, #tpu.memory_space<vmem>>, vector<1x128xf32>,
    %c160_275 = arith.constant 160 : index
    %c384_276 = arith.constant 384 : index
    %404 = vector.load %arg9[%c160_275, %c384_276] : memref<256x512xf32, #tpu.memory_space<vmem>>, vector<32x128xf32>
    %cst_277 = arith.constant dense<0.000000e+00> : vector<32x128xf32>
    %405 = tpu.matmul %42, %351, %cst_277 {dimension_numbers = #tpu.dot_dimension_numbers<[1], [0], [0], [1], [0, 0, 1, 1], [], []>} : vector<32x2xf32>, vector<2x128xf32>, vector<32x128xf32> -> vector<32x128xf32>
    %406 = arith.addf %404, %405 : vector<32x128xf32>
    %cst_278 = arith.constant 0.000000e+00 : f32
    %407 = vector.broadcast %cst_278 : f32 to vector<32x128xf32>
    %408 = arith.maximumf %406, %407 : vector<32x128xf32>
    %cst_279 = arith.constant dense<0.000000e+00> : vector<2x128xf32>
    %409 = tpu.matmul %43, %408, %cst_279 {dimension_numbers = #tpu.dot_dimension_numbers<[1], [0], [0], [1], [0, 0, 1, 1], [], []>} : vector<2x32xf32>, vector<32x128xf32>, vector<2x128xf32> -> vector<2x128xf32>
    %410 = vector.broadcast %44 : vector<2x1xf32> to vector<2x128xf32>
    %411 = arith.addf %409, %410 : vector<2x128xf32>
    %c12_280 = arith.constant 12 : index
    %c384_281 = arith.constant 384 : index
    %412 = vector.load %arg1[%c12_280, %c384_281] : memref<18x512xf32, #tpu.memory_space<vmem>>, vector<2x128xf32>
    %413 = arith.subf %412, %352 : vector<2x128xf32>
    %414 = arith.mulf %411, %413 : vector<2x128xf32>
    %cst_282 = arith.constant dense<0.000000e+00> : vector<128xf32>
    %415 = vector.multi_reduction <add>, %414, %cst_282 [0] : vector<2x128xf32> to vector<128xf32>
    %416 = vector.shape_cast %415 : vector<128xf32> to vector<1x128xf32>
    %417 = arith.addf %357, %416 : vector<1x128xf32>
    %c6_283 = arith.constant 6 : index
    %c384_284 = arith.constant 384 : index
    %418 = vector.load %arg8[%c6_283, %c384_284] : memref<9x512xf32, #tpu.memory_space<vmem>>, vector<1x128xf32>
    tpu.vector_store %arg8[%c6_283, %c384_284], %417 {strides = array<i32>} : memref<9x512xf32, #tpu.memory_space<vmem>>, vector<1x128xf32>,
    %c192_285 = arith.constant 192 : index
    %c0_286 = arith.constant 0 : index
    %419 = vector.load %arg9[%c192_285, %c0_286] : memref<256x512xf32, #tpu.memory_space<vmem>>, vector<32x128xf32>
    %cst_287 = arith.constant dense<0.000000e+00> : vector<32x128xf32>
    %420 = tpu.matmul %42, %366, %cst_287 {dimension_numbers = #tpu.dot_dimension_numbers<[1], [0], [0], [1], [0, 0, 1, 1], [], []>} : vector<32x2xf32>, vector<2x128xf32>, vector<32x128xf32> -> vector<32x128xf32>
    %421 = arith.addf %419, %420 : vector<32x128xf32>
    %cst_288 = arith.constant 0.000000e+00 : f32
    %422 = vector.broadcast %cst_288 : f32 to vector<32x128xf32>
    %423 = arith.maximumf %421, %422 : vector<32x128xf32>
    %cst_289 = arith.constant dense<0.000000e+00> : vector<2x128xf32>
    %424 = tpu.matmul %43, %423, %cst_289 {dimension_numbers = #tpu.dot_dimension_numbers<[1], [0], [0], [1], [0, 0, 1, 1], [], []>} : vector<2x32xf32>, vector<32x128xf32>, vector<2x128xf32> -> vector<2x128xf32>
    %425 = vector.broadcast %44 : vector<2x1xf32> to vector<2x128xf32>
    %426 = arith.addf %424, %425 : vector<2x128xf32>
    %c14 = arith.constant 14 : index
    %c0_290 = arith.constant 0 : index
    %427 = vector.load %arg1[%c14, %c0_290] : memref<18x512xf32, #tpu.memory_space<vmem>>, vector<2x128xf32>
    %428 = arith.subf %427, %367 : vector<2x128xf32>
    %429 = arith.mulf %426, %428 : vector<2x128xf32>
    %cst_291 = arith.constant dense<0.000000e+00> : vector<128xf32>
    %430 = vector.multi_reduction <add>, %429, %cst_291 [0] : vector<2x128xf32> to vector<128xf32>
    %431 = vector.shape_cast %430 : vector<128xf32> to vector<1x128xf32>
    %432 = arith.addf %372, %431 : vector<1x128xf32>
    %c7 = arith.constant 7 : index
    %c0_292 = arith.constant 0 : index
    %433 = vector.load %arg8[%c7, %c0_292] : memref<9x512xf32, #tpu.memory_space<vmem>>, vector<1x128xf32>
    tpu.vector_store %arg8[%c7, %c0_292], %432 {strides = array<i32>} : memref<9x512xf32, #tpu.memory_space<vmem>>, vector<1x128xf32>,
    %c192_293 = arith.constant 192 : index
    %c128_294 = arith.constant 128 : index
    %434 = vector.load %arg9[%c192_293, %c128_294] : memref<256x512xf32, #tpu.memory_space<vmem>>, vector<32x128xf32>
    %cst_295 = arith.constant dense<0.000000e+00> : vector<32x128xf32>
    %435 = tpu.matmul %42, %381, %cst_295 {dimension_numbers = #tpu.dot_dimension_numbers<[1], [0], [0], [1], [0, 0, 1, 1], [], []>} : vector<32x2xf32>, vector<2x128xf32>, vector<32x128xf32> -> vector<32x128xf32>
    %436 = arith.addf %434, %435 : vector<32x128xf32>
    %cst_296 = arith.constant 0.000000e+00 : f32
    %437 = vector.broadcast %cst_296 : f32 to vector<32x128xf32>
    %438 = arith.maximumf %436, %437 : vector<32x128xf32>
    %cst_297 = arith.constant dense<0.000000e+00> : vector<2x128xf32>
    %439 = tpu.matmul %43, %438, %cst_297 {dimension_numbers = #tpu.dot_dimension_numbers<[1], [0], [0], [1], [0, 0, 1, 1], [], []>} : vector<2x32xf32>, vector<32x128xf32>, vector<2x128xf32> -> vector<2x128xf32>
    %440 = vector.broadcast %44 : vector<2x1xf32> to vector<2x128xf32>
    %441 = arith.addf %439, %440 : vector<2x128xf32>
    %c14_298 = arith.constant 14 : index
    %c128_299 = arith.constant 128 : index
    %442 = vector.load %arg1[%c14_298, %c128_299] : memref<18x512xf32, #tpu.memory_space<vmem>>, vector<2x128xf32>
    %443 = arith.subf %442, %382 : vector<2x128xf32>
    %444 = arith.mulf %441, %443 : vector<2x128xf32>
    %cst_300 = arith.constant dense<0.000000e+00> : vector<128xf32>
    %445 = vector.multi_reduction <add>, %444, %cst_300 [0] : vector<2x128xf32> to vector<128xf32>
    %446 = vector.shape_cast %445 : vector<128xf32> to vector<1x128xf32>
    %447 = arith.addf %387, %446 : vector<1x128xf32>
    %c7_301 = arith.constant 7 : index
    %c128_302 = arith.constant 128 : index
    %448 = vector.load %arg8[%c7_301, %c128_302] : memref<9x512xf32, #tpu.memory_space<vmem>>, vector<1x128xf32>
    tpu.vector_store %arg8[%c7_301, %c128_302], %447 {strides = array<i32>} : memref<9x512xf32, #tpu.memory_space<vmem>>, vector<1x128xf32>,
    %c192_303 = arith.constant 192 : index
    %c256_304 = arith.constant 256 : index
    %449 = vector.load %arg9[%c192_303, %c256_304] : memref<256x512xf32, #tpu.memory_space<vmem>>, vector<32x128xf32>
    %cst_305 = arith.constant dense<0.000000e+00> : vector<32x128xf32>
    %450 = tpu.matmul %42, %396, %cst_305 {dimension_numbers = #tpu.dot_dimension_numbers<[1], [0], [0], [1], [0, 0, 1, 1], [], []>} : vector<32x2xf32>, vector<2x128xf32>, vector<32x128xf32> -> vector<32x128xf32>
    %451 = arith.addf %449, %450 : vector<32x128xf32>
    %cst_306 = arith.constant 0.000000e+00 : f32
    %452 = vector.broadcast %cst_306 : f32 to vector<32x128xf32>
    %453 = arith.maximumf %451, %452 : vector<32x128xf32>
    %cst_307 = arith.constant dense<0.000000e+00> : vector<2x128xf32>
    %454 = tpu.matmul %43, %453, %cst_307 {dimension_numbers = #tpu.dot_dimension_numbers<[1], [0], [0], [1], [0, 0, 1, 1], [], []>} : vector<2x32xf32>, vector<32x128xf32>, vector<2x128xf32> -> vector<2x128xf32>
    %455 = vector.broadcast %44 : vector<2x1xf32> to vector<2x128xf32>
    %456 = arith.addf %454, %455 : vector<2x128xf32>
    %c14_308 = arith.constant 14 : index
    %c256_309 = arith.constant 256 : index
    %457 = vector.load %arg1[%c14_308, %c256_309] : memref<18x512xf32, #tpu.memory_space<vmem>>, vector<2x128xf32>
    %458 = arith.subf %457, %397 : vector<2x128xf32>
    %459 = arith.mulf %456, %458 : vector<2x128xf32>
    %cst_310 = arith.constant dense<0.000000e+00> : vector<128xf32>
    %460 = vector.multi_reduction <add>, %459, %cst_310 [0] : vector<2x128xf32> to vector<128xf32>
    %461 = vector.shape_cast %460 : vector<128xf32> to vector<1x128xf32>
    %462 = arith.addf %402, %461 : vector<1x128xf32>
    %c7_311 = arith.constant 7 : index
    %c256_312 = arith.constant 256 : index
    %463 = vector.load %arg8[%c7_311, %c256_312] : memref<9x512xf32, #tpu.memory_space<vmem>>, vector<1x128xf32>
    tpu.vector_store %arg8[%c7_311, %c256_312], %462 {strides = array<i32>} : memref<9x512xf32, #tpu.memory_space<vmem>>, vector<1x128xf32>,
    %c192_313 = arith.constant 192 : index
    %c384_314 = arith.constant 384 : index
    %464 = vector.load %arg9[%c192_313, %c384_314] : memref<256x512xf32, #tpu.memory_space<vmem>>, vector<32x128xf32>
    %cst_315 = arith.constant dense<0.000000e+00> : vector<32x128xf32>
    %465 = tpu.matmul %42, %411, %cst_315 {dimension_numbers = #tpu.dot_dimension_numbers<[1], [0], [0], [1], [0, 0, 1, 1], [], []>} : vector<32x2xf32>, vector<2x128xf32>, vector<32x128xf32> -> vector<32x128xf32>
    %466 = arith.addf %464, %465 : vector<32x128xf32>
    %cst_316 = arith.constant 0.000000e+00 : f32
    %467 = vector.broadcast %cst_316 : f32 to vector<32x128xf32>
    %468 = arith.maximumf %466, %467 : vector<32x128xf32>
    %cst_317 = arith.constant dense<0.000000e+00> : vector<2x128xf32>
    %469 = tpu.matmul %43, %468, %cst_317 {dimension_numbers = #tpu.dot_dimension_numbers<[1], [0], [0], [1], [0, 0, 1, 1], [], []>} : vector<2x32xf32>, vector<32x128xf32>, vector<2x128xf32> -> vector<2x128xf32>
    %470 = vector.broadcast %44 : vector<2x1xf32> to vector<2x128xf32>
    %471 = arith.addf %469, %470 : vector<2x128xf32>
    %c14_318 = arith.constant 14 : index
    %c384_319 = arith.constant 384 : index
    %472 = vector.load %arg1[%c14_318, %c384_319] : memref<18x512xf32, #tpu.memory_space<vmem>>, vector<2x128xf32>
    %473 = arith.subf %472, %412 : vector<2x128xf32>
    %474 = arith.mulf %471, %473 : vector<2x128xf32>
    %cst_320 = arith.constant dense<0.000000e+00> : vector<128xf32>
    %475 = vector.multi_reduction <add>, %474, %cst_320 [0] : vector<2x128xf32> to vector<128xf32>
    %476 = vector.shape_cast %475 : vector<128xf32> to vector<1x128xf32>
    %477 = arith.addf %417, %476 : vector<1x128xf32>
    %c7_321 = arith.constant 7 : index
    %c384_322 = arith.constant 384 : index
    %478 = vector.load %arg8[%c7_321, %c384_322] : memref<9x512xf32, #tpu.memory_space<vmem>>, vector<1x128xf32>
    tpu.vector_store %arg8[%c7_321, %c384_322], %477 {strides = array<i32>} : memref<9x512xf32, #tpu.memory_space<vmem>>, vector<1x128xf32>,
    %c224_323 = arith.constant 224 : index
    %c0_324 = arith.constant 0 : index
    %479 = vector.load %arg9[%c224_323, %c0_324] : memref<256x512xf32, #tpu.memory_space<vmem>>, vector<32x128xf32>
    %cst_325 = arith.constant dense<0.000000e+00> : vector<32x128xf32>
    %480 = tpu.matmul %42, %426, %cst_325 {dimension_numbers = #tpu.dot_dimension_numbers<[1], [0], [0], [1], [0, 0, 1, 1], [], []>} : vector<32x2xf32>, vector<2x128xf32>, vector<32x128xf32> -> vector<32x128xf32>
    %481 = arith.addf %479, %480 : vector<32x128xf32>
    %cst_326 = arith.constant 0.000000e+00 : f32
    %482 = vector.broadcast %cst_326 : f32 to vector<32x128xf32>
    %483 = arith.maximumf %481, %482 : vector<32x128xf32>
    %cst_327 = arith.constant dense<0.000000e+00> : vector<2x128xf32>
    %484 = tpu.matmul %43, %483, %cst_327 {dimension_numbers = #tpu.dot_dimension_numbers<[1], [0], [0], [1], [0, 0, 1, 1], [], []>} : vector<2x32xf32>, vector<32x128xf32>, vector<2x128xf32> -> vector<2x128xf32>
    %485 = vector.broadcast %44 : vector<2x1xf32> to vector<2x128xf32>
    %486 = arith.addf %484, %485 : vector<2x128xf32>
    %c16 = arith.constant 16 : index
    %c0_328 = arith.constant 0 : index
    %487 = vector.load %arg1[%c16, %c0_328] : memref<18x512xf32, #tpu.memory_space<vmem>>, vector<2x128xf32>
    %488 = arith.subf %487, %427 : vector<2x128xf32>
    %489 = arith.mulf %486, %488 : vector<2x128xf32>
    %cst_329 = arith.constant dense<0.000000e+00> : vector<128xf32>
    %490 = vector.multi_reduction <add>, %489, %cst_329 [0] : vector<2x128xf32> to vector<128xf32>
    %491 = vector.shape_cast %490 : vector<128xf32> to vector<1x128xf32>
    %492 = arith.addf %432, %491 : vector<1x128xf32>
    %c8_330 = arith.constant 8 : index
    %c0_331 = arith.constant 0 : index
    %493 = vector.load %arg8[%c8_330, %c0_331] : memref<9x512xf32, #tpu.memory_space<vmem>>, vector<1x128xf32>
    tpu.vector_store %arg8[%c8_330, %c0_331], %492 {strides = array<i32>} : memref<9x512xf32, #tpu.memory_space<vmem>>, vector<1x128xf32>,
    %c224_332 = arith.constant 224 : index
    %c128_333 = arith.constant 128 : index
    %494 = vector.load %arg9[%c224_332, %c128_333] : memref<256x512xf32, #tpu.memory_space<vmem>>, vector<32x128xf32>
    %cst_334 = arith.constant dense<0.000000e+00> : vector<32x128xf32>
    %495 = tpu.matmul %42, %441, %cst_334 {dimension_numbers = #tpu.dot_dimension_numbers<[1], [0], [0], [1], [0, 0, 1, 1], [], []>} : vector<32x2xf32>, vector<2x128xf32>, vector<32x128xf32> -> vector<32x128xf32>
    %496 = arith.addf %494, %495 : vector<32x128xf32>
    %cst_335 = arith.constant 0.000000e+00 : f32
    %497 = vector.broadcast %cst_335 : f32 to vector<32x128xf32>
    %498 = arith.maximumf %496, %497 : vector<32x128xf32>
    %cst_336 = arith.constant dense<0.000000e+00> : vector<2x128xf32>
    %499 = tpu.matmul %43, %498, %cst_336 {dimension_numbers = #tpu.dot_dimension_numbers<[1], [0], [0], [1], [0, 0, 1, 1], [], []>} : vector<2x32xf32>, vector<32x128xf32>, vector<2x128xf32> -> vector<2x128xf32>
    %500 = vector.broadcast %44 : vector<2x1xf32> to vector<2x128xf32>
    %501 = arith.addf %499, %500 : vector<2x128xf32>
    %c16_337 = arith.constant 16 : index
    %c128_338 = arith.constant 128 : index
    %502 = vector.load %arg1[%c16_337, %c128_338] : memref<18x512xf32, #tpu.memory_space<vmem>>, vector<2x128xf32>
    %503 = arith.subf %502, %442 : vector<2x128xf32>
    %504 = arith.mulf %501, %503 : vector<2x128xf32>
    %cst_339 = arith.constant dense<0.000000e+00> : vector<128xf32>
    %505 = vector.multi_reduction <add>, %504, %cst_339 [0] : vector<2x128xf32> to vector<128xf32>
    %506 = vector.shape_cast %505 : vector<128xf32> to vector<1x128xf32>
    %507 = arith.addf %447, %506 : vector<1x128xf32>
    %c8_340 = arith.constant 8 : index
    %c128_341 = arith.constant 128 : index
    %508 = vector.load %arg8[%c8_340, %c128_341] : memref<9x512xf32, #tpu.memory_space<vmem>>, vector<1x128xf32>
    tpu.vector_store %arg8[%c8_340, %c128_341], %507 {strides = array<i32>} : memref<9x512xf32, #tpu.memory_space<vmem>>, vector<1x128xf32>,
    %c224_342 = arith.constant 224 : index
    %c256_343 = arith.constant 256 : index
    %509 = vector.load %arg9[%c224_342, %c256_343] : memref<256x512xf32, #tpu.memory_space<vmem>>, vector<32x128xf32>
    %cst_344 = arith.constant dense<0.000000e+00> : vector<32x128xf32>
    %510 = tpu.matmul %42, %456, %cst_344 {dimension_numbers = #tpu.dot_dimension_numbers<[1], [0], [0], [1], [0, 0, 1, 1], [], []>} : vector<32x2xf32>, vector<2x128xf32>, vector<32x128xf32> -> vector<32x128xf32>
    %511 = arith.addf %509, %510 : vector<32x128xf32>
    %cst_345 = arith.constant 0.000000e+00 : f32
    %512 = vector.broadcast %cst_345 : f32 to vector<32x128xf32>
    %513 = arith.maximumf %511, %512 : vector<32x128xf32>
    %cst_346 = arith.constant dense<0.000000e+00> : vector<2x128xf32>
    %514 = tpu.matmul %43, %513, %cst_346 {dimension_numbers = #tpu.dot_dimension_numbers<[1], [0], [0], [1], [0, 0, 1, 1], [], []>} : vector<2x32xf32>, vector<32x128xf32>, vector<2x128xf32> -> vector<2x128xf32>
    %515 = vector.broadcast %44 : vector<2x1xf32> to vector<2x128xf32>
    %516 = arith.addf %514, %515 : vector<2x128xf32>
    %c16_347 = arith.constant 16 : index
    %c256_348 = arith.constant 256 : index
    %517 = vector.load %arg1[%c16_347, %c256_348] : memref<18x512xf32, #tpu.memory_space<vmem>>, vector<2x128xf32>
    %518 = arith.subf %517, %457 : vector<2x128xf32>
    %519 = arith.mulf %516, %518 : vector<2x128xf32>
    %cst_349 = arith.constant dense<0.000000e+00> : vector<128xf32>
    %520 = vector.multi_reduction <add>, %519, %cst_349 [0] : vector<2x128xf32> to vector<128xf32>
    %521 = vector.shape_cast %520 : vector<128xf32> to vector<1x128xf32>
    %522 = arith.addf %462, %521 : vector<1x128xf32>
    %c8_350 = arith.constant 8 : index
    %c256_351 = arith.constant 256 : index
    %523 = vector.load %arg8[%c8_350, %c256_351] : memref<9x512xf32, #tpu.memory_space<vmem>>, vector<1x128xf32>
    tpu.vector_store %arg8[%c8_350, %c256_351], %522 {strides = array<i32>} : memref<9x512xf32, #tpu.memory_space<vmem>>, vector<1x128xf32>,
    %c224_352 = arith.constant 224 : index
    %c384_353 = arith.constant 384 : index
    %524 = vector.load %arg9[%c224_352, %c384_353] : memref<256x512xf32, #tpu.memory_space<vmem>>, vector<32x128xf32>
    %cst_354 = arith.constant dense<0.000000e+00> : vector<32x128xf32>
    %525 = tpu.matmul %42, %471, %cst_354 {dimension_numbers = #tpu.dot_dimension_numbers<[1], [0], [0], [1], [0, 0, 1, 1], [], []>} : vector<32x2xf32>, vector<2x128xf32>, vector<32x128xf32> -> vector<32x128xf32>
    %526 = arith.addf %524, %525 : vector<32x128xf32>
    %cst_355 = arith.constant 0.000000e+00 : f32
    %527 = vector.broadcast %cst_355 : f32 to vector<32x128xf32>
    %528 = arith.maximumf %526, %527 : vector<32x128xf32>
    %cst_356 = arith.constant dense<0.000000e+00> : vector<2x128xf32>
    %529 = tpu.matmul %43, %528, %cst_356 {dimension_numbers = #tpu.dot_dimension_numbers<[1], [0], [0], [1], [0, 0, 1, 1], [], []>} : vector<2x32xf32>, vector<32x128xf32>, vector<2x128xf32> -> vector<2x128xf32>
    %530 = vector.broadcast %44 : vector<2x1xf32> to vector<2x128xf32>
    %531 = arith.addf %529, %530 : vector<2x128xf32>
    %c16_357 = arith.constant 16 : index
    %c384_358 = arith.constant 384 : index
    %532 = vector.load %arg1[%c16_357, %c384_358] : memref<18x512xf32, #tpu.memory_space<vmem>>, vector<2x128xf32>
    %533 = arith.subf %532, %472 : vector<2x128xf32>
    %534 = arith.mulf %531, %533 : vector<2x128xf32>
    %cst_359 = arith.constant dense<0.000000e+00> : vector<128xf32>
    %535 = vector.multi_reduction <add>, %534, %cst_359 [0] : vector<2x128xf32> to vector<128xf32>
    %536 = vector.shape_cast %535 : vector<128xf32> to vector<1x128xf32>
    %537 = arith.addf %477, %536 : vector<1x128xf32>
    %c8_360 = arith.constant 8 : index
    %c384_361 = arith.constant 384 : index
    %538 = vector.load %arg8[%c8_360, %c384_361] : memref<9x512xf32, #tpu.memory_space<vmem>>, vector<1x128xf32>
    tpu.vector_store %arg8[%c8_360, %c384_361], %537 {strides = array<i32>} : memref<9x512xf32, #tpu.memory_space<vmem>>, vector<1x128xf32>,
    return
  }
  func.func @transform_0(%arg0: i32) -> (i32, i32) {
    %c0_i32 = arith.constant 0 : i32
    %c0_i32_0 = arith.constant 0 : i32
    return %c0_i32, %arg0 : i32, i32
  }
  func.func @transform_1(%arg0: i32) -> (i32, i32) {
    %c0_i32 = arith.constant 0 : i32
    %c0_i32_0 = arith.constant 0 : i32
    return %c0_i32, %arg0 : i32, i32
  }
  func.func @transform_2(%arg0: i32) -> (i32, i32) {
    %c0_i32 = arith.constant 0 : i32
    %c0_i32_0 = arith.constant 0 : i32
    %c0_i32_1 = arith.constant 0 : i32
    return %c0_i32, %c0_i32_0 : i32, i32
  }
  func.func @transform_3(%arg0: i32) -> (i32, i32) {
    %c0_i32 = arith.constant 0 : i32
    %c0_i32_0 = arith.constant 0 : i32
    %c0_i32_1 = arith.constant 0 : i32
    return %c0_i32, %c0_i32_0 : i32, i32
  }
  func.func @transform_4(%arg0: i32) -> (i32, i32) {
    %c0_i32 = arith.constant 0 : i32
    %c0_i32_0 = arith.constant 0 : i32
    %c0_i32_1 = arith.constant 0 : i32
    return %c0_i32, %c0_i32_0 : i32, i32
  }
  func.func @transform_5(%arg0: i32) -> (i32, i32) {
    %c0_i32 = arith.constant 0 : i32
    %c0_i32_0 = arith.constant 0 : i32
    %c0_i32_1 = arith.constant 0 : i32
    return %c0_i32, %c0_i32_0 : i32, i32
  }
  func.func @transform_6(%arg0: i32) -> (i32, i32) {
    %c0_i32 = arith.constant 0 : i32
    %c0_i32_0 = arith.constant 0 : i32
    %c0_i32_1 = arith.constant 0 : i32
    return %c0_i32, %c0_i32_0 : i32, i32
  }
  func.func @transform_7(%arg0: i32) -> (i32, i32) {
    %c0_i32 = arith.constant 0 : i32
    %c0_i32_0 = arith.constant 0 : i32
    return %c0_i32, %arg0 : i32, i32
  }
}

</mosaic_0001>

<llo_original>
// kernel: tpu_custom_call.1
$region0: #{tpu_custom_call.1}
  #allocation0 [shape = 'u32[]', space=smem, size = 0x4, offset = 0x4, fixed_abs, tag = 'smem constant byte address 0x4 - core index']
  #allocation1 [shape = 'u32[144,128]{1,0:T(1,128)}', space=vmem, size = 0x12000, scoped, tag = 'internal scratch']
  #allocation2 [shape = 'f32[256,512]{1,0:T(8,128)}', space=vmem, size = 0x80000, scoped, tag = 'scratch operand']
  %s0 = inlined_call_operand.hbm [shape: f32[18,1024], index: 0, kind: input, shape index: {}]
  %s1 = inlined_call_operand.hbm [shape: f32[27,1024], index: 1, kind: input, shape index: {}]
  %s2 = inlined_call_operand.vmem [shape: f32[32,3], index: 2, kind: input, shape index: {}]
  %s3 = inlined_call_operand.vmem [shape: f32[32,2], index: 3, kind: input, shape index: {}]
  %s4 = inlined_call_operand.vmem [shape: f32[32,1], index: 4, kind: input, shape index: {}]
  %s5 = inlined_call_operand.vmem [shape: f32[2,32], index: 5, kind: input, shape index: {}]
  %s6 = inlined_call_operand.vmem [shape: f32[2,1], index: 6, kind: input, shape index: {}]
  %s7 = inlined_call_operand.hbm [shape: f32[9,1024], index: 7, kind: output, shape index: {}]
  %s8 = sld [smem:[#allocation0]]
  $region69: #{tpu_custom_call.1} parent=0
    _
  %s10 = ssub.s32 1, %s8
  %s11 = scalar_select 0, %s10, %s8
  $region1: #{tpu_custom_call.1} parent=0
    #allocation3 [shape = 'u8[98304]{0}', space=vmem, size = 0x18000, scoped, tag = 'input window, operand 0']
    #allocation4 [shape = 's32[2]{0}', space=sflag, size = 0x8, scoped, tag = 'scoped memory for tpu_custom_call.1']
    #allocation5 [shape = 's32[2]{0}', space=sflag, size = 0x8, scoped, tag = 'scoped memory for tpu_custom_call.1']
    #allocation6 [shape = 'u8[131072]{0}', space=vmem, size = 0x20000, scoped, tag = 'input window, operand 1']
    #allocation7 [shape = 's32[2]{0}', space=sflag, size = 0x8, scoped, tag = 'scoped memory for tpu_custom_call.1']
    #allocation8 [shape = 'u8[65536]{0}', space=vmem, size = 0x10000, scoped, tag = 'output window, operand 0']
    %12 = vsyncpa [#allocation4], 0
    %s13 = scalar_lea.sflag [#allocation4], 1
    %14 = vsyncpa %s13, 0
    %15 = vsyncpa [#allocation7], 0
    %s16 = scalar_lea.sflag [#allocation7], 1
    %17 = vsyncpa %s16, 0
    %18 = vsyncpa [#allocation5], 0
    %s19 = scalar_lea.sflag [#allocation5], 1
    %20 = vsyncpa %s19, 0
    loop: start=0, step=1, limit=4
    $region2: #{tpu_custom_call.1} parent=1 // loop_pre_header
      _
    $region3: #{tpu_custom_call.1} parent=1 // loop_header
      %s22 = sphi 0, %s26
      %p23 = scmp.ge.s32.totalorder %s22, 4
      %s32 = sphi 0, %s34
      %s35 = sphi 0, %s32
      %s36 = sphi 0, %s35
      %s52 = sphi 0, %s36
      %s58 = sphi 0, %s60
      %s61 = sphi 0, %s58
      %s62 = sphi 0, %s61
      %s78 = sphi 0, %s62
      %s82 = sphi 0, %s82
      %s84 = sphi 0, %s82
      %s85 = sphi 0, %s84
      %s99 = sphi 0, %s85
      %s103 = sphi 0, %s103
      %s105 = sphi 0, %s103
      %s106 = sphi 0, %s105
      %s120 = sphi 0, %s106
      %s124 = sphi 0, %s124
      %s126 = sphi 0, %s124
      %s127 = sphi 0, %s126
      %s141 = sphi 0, %s127
      %s145 = sphi 0, %s145
      %s147 = sphi 0, %s145
      %s148 = sphi 0, %s147
      %s162 = sphi 0, %s148
      %s166 = sphi 0, %s166
      %s168 = sphi 0, %s166
      %s169 = sphi 0, %s168
      %s183 = sphi 0, %s169
      %s189 = sphi 0, %s191
      %s192 = sphi 0, %s189
      %s193 = sphi 0, %s192
      %s209 = sphi 0, %s193
    $region4: #{tpu_custom_call.1} parent=1 // loop_header_branch
      %25 = sbr.rel (%p23) target = $region8
    $region5: #{tpu_custom_call.1} parent=1 // loop_body
      %s27 = ssub.s32 %s22, 1
      %s28 = ssub.s32 %s22, 2
      %s29 = sadd.s32 %s22, 1
      %s30 = ssub.s32 %s22, %s29
      %p31 = scmp.eq.s32.totalorder %s30, 0
      %s33 = sadd.s32 %s32, 1
      %s34 = scalar_select %p31, %s32, %s33
      %p37 = pneg %p31
      %p38 = scmp.eq.s32.totalorder %s22, 1
      %p39 = por %p37, %p38
      %p40 = scmp.ne.s32.totalorder %s32, %s35
      %p41 = scmp.eq.s32.totalorder %s22, 0
      %p42 = por %p40, %p41
      %p43 = scmp.ne.s32.totalorder %s32, %s35
      %p44 = scmp.eq.s32.totalorder %s27, 1
      %p45 = por %p43, %p44
      %p46 = scmp.ne.s32.totalorder %s35, %s36
      %p47 = scmp.eq.s32.totalorder %s27, 0
      %p48 = por %p46, %p47
      %p49 = scmp.ne.s32.totalorder %s35, %s36
      %p50 = scmp.eq.s32.totalorder %s28, 1
      %p51 = por %p49, %p50
      %p53 = scmp.ne.s32.totalorder %s36, %s52
      %p54 = scmp.eq.s32.totalorder %s28, 0
      %p55 = por %p53, %p54
      %s56 = ssub.s32 %s22, %s29
      %p57 = scmp.eq.s32.totalorder %s56, 0
      %s59 = sadd.s32 %s58, 1
      %s60 = scalar_select %p57, %s58, %s59
      %p63 = pneg %p57
      %p64 = scmp.eq.s32.totalorder %s22, 1
      %p65 = por %p63, %p64
      %p66 = scmp.ne.s32.totalorder %s58, %s61
      %p67 = scmp.eq.s32.totalorder %s22, 0
      %p68 = por %p66, %p67
      %p69 = scmp.ne.s32.totalorder %s58, %s61
      %p70 = scmp.eq.s32.totalorder %s27, 1
      %p71 = por %p69, %p70
      %p72 = scmp.ne.s32.totalorder %s61, %s62
      %p73 = scmp.eq.s32.totalorder %s27, 0
      %p74 = por %p72, %p73
      %p75 = scmp.ne.s32.totalorder %s61, %s62
      %p76 = scmp.eq.s32.totalorder %s28, 1
      %p77 = por %p75, %p76
      %p79 = scmp.ne.s32.totalorder %s62, %s78
      %p80 = scmp.eq.s32.totalorder %s28, 0
      %p81 = por %p79, %p80
      %s83 = sadd.s32 %s82, 1
      %p86 = scmp.eq.s32.totalorder %s22, 1
      %p87 = scmp.ne.s32.totalorder %s82, %s84
      %p88 = scmp.eq.s32.totalorder %s22, 0
      %p89 = por %p87, %p88
      %p90 = scmp.ne.s32.totalorder %s82, %s84
      %p91 = scmp.eq.s32.totalorder %s27, 1
      %p92 = por %p90, %p91
      %p93 = scmp.ne.s32.totalorder %s84, %s85
      %p94 = scmp.eq.s32.totalorder %s27, 0
      %p95 = por %p93, %p94
      %p96 = scmp.ne.s32.totalorder %s84, %s85
      %p97 = scmp.eq.s32.totalorder %s28, 1
      %p98 = por %p96, %p97
      %p100 = scmp.ne.s32.totalorder %s85, %s99
      %p101 = scmp.eq.s32.totalorder %s28, 0
      %p102 = por %p100, %p101
      %s104 = sadd.s32 %s103, 1
      %p107 = scmp.eq.s32.totalorder %s22, 1
      %p108 = scmp.ne.s32.totalorder %s103, %s105
      %p109 = scmp.eq.s32.totalorder %s22, 0
      %p110 = por %p108, %p109
      %p111 = scmp.ne.s32.totalorder %s103, %s105
      %p112 = scmp.eq.s32.totalorder %s27, 1
      %p113 = por %p111, %p112
      %p114 = scmp.ne.s32.totalorder %s105, %s106
      %p115 = scmp.eq.s32.totalorder %s27, 0
      %p116 = por %p114, %p115
      %p117 = scmp.ne.s32.totalorder %s105, %s106
      %p118 = scmp.eq.s32.totalorder %s28, 1
      %p119 = por %p117, %p118
      %p121 = scmp.ne.s32.totalorder %s106, %s120
      %p122 = scmp.eq.s32.totalorder %s28, 0
      %p123 = por %p121, %p122
      %s125 = sadd.s32 %s124, 1
      %p128 = scmp.eq.s32.totalorder %s22, 1
      %p129 = scmp.ne.s32.totalorder %s124, %s126
      %p130 = scmp.eq.s32.totalorder %s22, 0
      %p131 = por %p129, %p130
      %p132 = scmp.ne.s32.totalorder %s124, %s126
      %p133 = scmp.eq.s32.totalorder %s27, 1
      %p134 = por %p132, %p133
      %p135 = scmp.ne.s32.totalorder %s126, %s127
      %p136 = scmp.eq.s32.totalorder %s27, 0
      %p137 = por %p135, %p136
      %p138 = scmp.ne.s32.totalorder %s126, %s127
      %p139 = scmp.eq.s32.totalorder %s28, 1
      %p140 = por %p138, %p139
      %p142 = scmp.ne.s32.totalorder %s127, %s141
      %p143 = scmp.eq.s32.totalorder %s28, 0
      %p144 = por %p142, %p143
      %s146 = sadd.s32 %s145, 1
      %p149 = scmp.eq.s32.totalorder %s22, 1
      %p150 = scmp.ne.s32.totalorder %s145, %s147
      %p151 = scmp.eq.s32.totalorder %s22, 0
      %p152 = por %p150, %p151
      %p153 = scmp.ne.s32.totalorder %s145, %s147
      %p154 = scmp.eq.s32.totalorder %s27, 1
      %p155 = por %p153, %p154
      %p156 = scmp.ne.s32.totalorder %s147, %s148
      %p157 = scmp.eq.s32.totalorder %s27, 0
      %p158 = por %p156, %p157
      %p159 = scmp.ne.s32.totalorder %s147, %s148
      %p160 = scmp.eq.s32.totalorder %s28, 1
      %p161 = por %p159, %p160
      %p163 = scmp.ne.s32.totalorder %s148, %s162
      %p164 = scmp.eq.s32.totalorder %s28, 0
      %p165 = por %p163, %p164
      %s167 = sadd.s32 %s166, 1
      %p170 = scmp.eq.s32.totalorder %s22, 1
      %p171 = scmp.ne.s32.totalorder %s166, %s168
      %p172 = scmp.eq.s32.totalorder %s22, 0
      %p173 = por %p171, %p172
      %p174 = scmp.ne.s32.totalorder %s166, %s168
      %p175 = scmp.eq.s32.totalorder %s27, 1
      %p176 = por %p174, %p175
      %p177 = scmp.ne.s32.totalorder %s168, %s169
      %p178 = scmp.eq.s32.totalorder %s27, 0
      %p179 = por %p177, %p178
      %p180 = scmp.ne.s32.totalorder %s168, %s169
      %p181 = scmp.eq.s32.totalorder %s28, 1
      %p182 = por %p180, %p181
      %p184 = scmp.ne.s32.totalorder %s169, %s183
      %p185 = scmp.eq.s32.totalorder %s28, 0
      %p186 = por %p184, %p185
      %s187 = ssub.s32 %s22, %s29
      %p188 = scmp.eq.s32.totalorder %s187, 0
      %s190 = sadd.s32 %s189, 1
      %s191 = scalar_select %p188, %s189, %s190
      %p194 = pneg %p188
      %p195 = scmp.eq.s32.totalorder %s22, 1
      %p196 = por %p194, %p195
      %p197 = scmp.ne.s32.totalorder %s189, %s192
      %p198 = scmp.eq.s32.totalorder %s22, 0
      %p199 = por %p197, %p198
      %p200 = scmp.ne.s32.totalorder %s189, %s192
      %p201 = scmp.eq.s32.totalorder %s27, 1
      %p202 = por %p200, %p201
      %p203 = scmp.ne.s32.totalorder %s192, %s193
      %p204 = scmp.eq.s32.totalorder %s27, 0
      %p205 = por %p203, %p204
      %p206 = scmp.ne.s32.totalorder %s192, %s193
      %p207 = scmp.eq.s32.totalorder %s28, 1
      %p208 = por %p206, %p207
      %p210 = scmp.ne.s32.totalorder %s193, %s209
      %p211 = scmp.eq.s32.totalorder %s28, 0
      %p212 = por %p210, %p211
      %p213 = scmp.le.s32.totalorder 1, %s22
      %p214 = scmp.lt.s32.totalorder %s22, 3
      %p215 = pnand %p213, %p214
      %p216 = pneg %p215
      // Predicated region
      $region9: #{tpu_custom_call.1} parent=5 // pred_check
        _
      $region10: #{tpu_custom_call.1} parent=5 // pred_check_branch
        %218 = sbr.rel (%p215) target = $region12
      $region11: #{tpu_custom_call.1} parent=5 // pred_region
        %s219 = ssub.s32 %s22, 1
        // Predicated region
        $region13: #{tpu_custom_call.1} parent=11 // pred_check
          %p220 = pneg %p95
        $region14: #{tpu_custom_call.1} parent=11 // pred_check_branch
          %222 = sbr.rel (%p220) target = $region16
        $region15: #{tpu_custom_call.1} parent=11 // pred_region
          _
        $region16: #{tpu_custom_call.1} parent=11 // pred_fallthru
          _
        // Predicated region
        $region17: #{tpu_custom_call.1} parent=11 // pred_check
          %p223 = pneg %p116
        $region18: #{tpu_custom_call.1} parent=11 // pred_check_branch
          %225 = sbr.rel (%p223) target = $region20
        $region19: #{tpu_custom_call.1} parent=11 // pred_region
          _
        $region20: #{tpu_custom_call.1} parent=11 // pred_fallthru
          _
        // Predicated region
        $region21: #{tpu_custom_call.1} parent=11 // pred_check
          %p226 = pneg %p137
        $region22: #{tpu_custom_call.1} parent=11 // pred_check_branch
          %228 = sbr.rel (%p226) target = $region24
        $region23: #{tpu_custom_call.1} parent=11 // pred_region
          _
        $region24: #{tpu_custom_call.1} parent=11 // pred_fallthru
          _
        // Predicated region
        $region25: #{tpu_custom_call.1} parent=11 // pred_check
          %p229 = pneg %p158
        $region26: #{tpu_custom_call.1} parent=11 // pred_check_branch
          %231 = sbr.rel (%p229) target = $region28
        $region27: #{tpu_custom_call.1} parent=11 // pred_region
          _
        $region28: #{tpu_custom_call.1} parent=11 // pred_fallthru
          _
        // Predicated region
        $region29: #{tpu_custom_call.1} parent=11 // pred_check
          %p232 = pneg %p179
        $region30: #{tpu_custom_call.1} parent=11 // pred_check_branch
          %234 = sbr.rel (%p232) target = $region32
        $region31: #{tpu_custom_call.1} parent=11 // pred_region
          _
        $region32: #{tpu_custom_call.1} parent=11 // pred_fallthru
          _
      $region12: #{tpu_custom_call.1} parent=5 // pred_fallthru
        _
      %p235 = scmp.lt.s32.totalorder %s22, 2
      // Predicated region
      $region33: #{tpu_custom_call.1} parent=5 // pred_check
        %p236 = pneg %p235
      $region34: #{tpu_custom_call.1} parent=5 // pred_check_branch
        %238 = sbr.rel (%p236) target = $region36
      $region35: #{tpu_custom_call.1} parent=5 // pred_region
        // Predicated region
        $region37: #{tpu_custom_call.1} parent=35 // pred_check
          %p239 = pneg %p42
        $region38: #{tpu_custom_call.1} parent=35 // pred_check_branch
          %241 = sbr.rel (%p239) target = $region40
        $region39: #{tpu_custom_call.1} parent=35 // pred_region
          %s242 = sand.u32 %s32, 1
          %s243 = scalar_lea.sflag [#allocation4], %s242
          %s244 = sand.u32 %s32, 1
          %s245 = smul.addr %s244, 96
          %s246 = scalar_lea.vmem [#allocation3], %s245
          %s247 = smul.u32 4, %s22
          %s249 = ssub.s32 1536, 1536
          %250 = vsyncadd %s243, %s249
          %s251 = smul.addr %s247, 128
          %s252 = scalar_lea.hbm %s0, %s251
          %s253 = sshll.u32 %s246, 4
          %s254 = int_to_ptr.vmem [resolvable:$true] %s253
          %259 = dma.hbm_to_vmem [thread:$0]  %s252, 1536, %s254, %s243, 1024, 512, 32
        $region40: #{tpu_custom_call.1} parent=35 // pred_fallthru
          _
        // Predicated region
        $region41: #{tpu_custom_call.1} parent=35 // pred_check
          %p260 = pneg %p68
        $region42: #{tpu_custom_call.1} parent=35 // pred_check_branch
          %262 = sbr.rel (%p260) target = $region44
        $region43: #{tpu_custom_call.1} parent=35 // pred_region
          %s263 = sand.u32 %s58, 1
          %s264 = scalar_lea.sflag [#allocation7], %s263
          %s265 = sand.u32 %s58, 1
          %s266 = smul.addr %s265, 128
          %s267 = scalar_lea.vmem [#allocation6], %s266
          %s268 = smul.u32 4, %s22
          %s270 = ssub.s32 2048, 2048
          %271 = vsyncadd %s264, %s270
          %s272 = smul.addr %s268, 128
          %s273 = scalar_lea.hbm %s1, %s272
          %s274 = sshll.u32 %s267, 4
          %s275 = int_to_ptr.vmem [resolvable:$true] %s274
          %280 = dma.hbm_to_vmem [thread:$0]  %s273, 2048, %s275, %s264, 1024, 512, 32
        $region44: #{tpu_custom_call.1} parent=35 // pred_fallthru
          _
      $region36: #{tpu_custom_call.1} parent=5 // pred_fallthru
        _
      %p281 = scmp.le.s32.totalorder 1, %s22
      %p282 = scmp.lt.s32.totalorder %s22, 3
      %p283 = pnand %p281, %p282
      %p284 = pneg %p283
      // Predicated region
      $region45: #{tpu_custom_call.1} parent=5 // pred_check
        _
      $region46: #{tpu_custom_call.1} parent=5 // pred_check_branch
        %286 = sbr.rel (%p283) target = $region48
      $region47: #{tpu_custom_call.1} parent=5 // pred_region
        %s287 = ssub.s32 %s22, 1
        %s288 = sand.u32 %s35, 1
        %s289 = scalar_lea.sflag [#allocation4], %s288
        %s290 = sand.u32 %s35, 1
        %s291 = smul.addr %s290, 96
        %s292 = scalar_lea.vmem [#allocation3], %s291
        // Predicated region
        $region49: #{tpu_custom_call.1} parent=47 // pred_check
          %p293 = pneg %p48
        $region50: #{tpu_custom_call.1} parent=47 // pred_check_branch
          %295 = sbr.rel (%p293) target = $region52
        $region51: #{tpu_custom_call.1} parent=47 // pred_region
          %296 = dma.done %s289, 1536
        $region52: #{tpu_custom_call.1} parent=47 // pred_fallthru
          _
        %s297 = sand.u32 %s61, 1
        %s298 = scalar_lea.sflag [#allocation7], %s297
        %s299 = sand.u32 %s61, 1
        %s300 = smul.addr %s299, 128
        %s301 = scalar_lea.vmem [#allocation6], %s300
        // Predicated region
        $region53: #{tpu_custom_call.1} parent=47 // pred_check
          %p302 = pneg %p74
        $region54: #{tpu_custom_call.1} parent=47 // pred_check_branch
          %304 = sbr.rel (%p302) target = $region56
        $region55: #{tpu_custom_call.1} parent=47 // pred_region
          %305 = dma.done %s298, 2048
        $region56: #{tpu_custom_call.1} parent=47 // pred_fallthru
          _
        %s306 = sand.u32 %s35, 1
        %s307 = scalar_lea.sflag [#allocation4], %s306
        %s308 = sand.u32 %s35, 1
        %s309 = smul.addr %s308, 96
        %s310 = scalar_lea.vmem [#allocation3], %s309
        %p311 = pneg %p48
        %p312 = pneg %p45
        %s313 = sand.u32 %s61, 1
        %s314 = scalar_lea.sflag [#allocation7], %s313
        %s315 = sand.u32 %s61, 1
        %s316 = smul.addr %s315, 128
        %s317 = scalar_lea.vmem [#allocation6], %s316
        %p318 = pneg %p74
        %p319 = pneg %p71
        %p320 = pneg %p95
        %p321 = pneg %p92
        %p322 = pneg %p116
        %p323 = pneg %p113
        %p324 = pneg %p137
        %p325 = pneg %p134
        %p326 = pneg %p158
        %p327 = pneg %p155
        %p328 = pneg %p179
        %p329 = pneg %p176
        %p330 = pneg %p205
        %p331 = pneg %p202
        %s332 = sand.u32 %s192, 1
        %s333 = scalar_lea.sflag [#allocation5], %s332
        %s334 = sand.u32 %s192, 1
        %s335 = smul.addr %s334, 64
        %s336 = scalar_lea.vmem [#allocation8], %s335
        %s337 = smul.u32 4, %s27
        %s338 = smul.u32 4, %s27
        %s339 = smul.u32 4, %s27
        %v340 = vld [vmem:[%s2] sm:$0xff]
        %v341 = vld [vmem:[%s2 + $0x8] sm:$0xff]
        %v342 = vld [vmem:[%s2 + $0x10] sm:$0xff]
        %v343 = vld [vmem:[%s2 + $0x18] sm:$0xff]
        %v344 = vld [vmem:[%s4] sm:$0xff]
        %v345 = vld [vmem:[%s4 + $0x8] sm:$0xff]
        %v346 = vld [vmem:[%s4 + $0x10] sm:$0xff]
        %v347 = vld [vmem:[%s4 + $0x18] sm:$0xff]
        %v348 = vld [vmem:[%s301] sm:$0x7]
        %v349 = vld [vmem:[%s301 + $0x8] sm:$0x7]
        %v350 = vld [vmem:[%s301 + $0x10] sm:$0x7]
        %v351 = vld [vmem:[%s301 + $0x18] sm:$0x7]
        %353 = vset.pattern.permute.xlu0 0
        %354 = vperm.xlu0 %353, %v344
        %v355 = vpop.permute.xlu0 %354
        %358 = vset.pattern.permute.xlu0 0
        %359 = vperm.xlu0 %358, %v345
        %v360 = vpop.permute.xlu0 %359
        %363 = vset.pattern.permute.xlu0 0
        %364 = vperm.xlu0 %363, %v346
        %v365 = vpop.permute.xlu0 %364
        %368 = vset.pattern.permute.xlu0 0
        %369 = vperm.xlu0 %368, %v347
        %v370 = vpop.permute.xlu0 %369
        %vm372 = vcmask 23552
        %v374 = vsel %vm372, %v340, 0
        %v377 = vsel %vm372, %v341, 0
        %v380 = vsel %vm372, %v342, 0
        %v383 = vsel %vm372, %v343, 0
        %vm385 = vcmask 1042432
        %v387 = vsel %vm385, %v348, 0
        %v390 = vsel %vm385, %v349, 0
        %v393 = vsel %vm385, %v350, 0
        %v396 = vsel %vm385, %v351, 0
        %398 = vmatprep.subr.mxu0 %v390
        %399 = vmatpush1.msra.mxu0 %v387
        %400 = vmatprep.subr.mxu0 0.0
        %401 = vmatpush1.msra.mxu0 0.0
        %402 = vmatprep.subr.mxu0 0.0
        %403 = vmatpush1.msra.mxu0 0.0
        %404 = vmatprep.subr.mxu0 0.0
        %405 = vmatpush1.msra.mxu0 0.0
        %406 = vmatprep.subr.mxu0 0.0
        %407 = vmatpush1.msra.mxu0 0.0
        %408 = vmatprep.subr.mxu0 0.0
        %409 = vmatpush1.msra.mxu0 0.0
        %410 = vmatprep.subr.mxu0 0.0
        %411 = vmatpush1.msra.mxu0 0.0
        %412 = vmatprep.subr.mxu0 0.0
        %413 = vmatpush1.msra.mxu0 0.0
        %414 = vmatprep.subr.mxu0 0.0
        %415 = vmatpush1.msra.mxu0 0.0
        %416 = vmatprep.subr.mxu0 0.0
        %417 = vmatpush1.msra.mxu0 0.0
        %418 = vmatprep.subr.mxu0 0.0
        %419 = vmatpush1.msra.mxu0 0.0
        %420 = vmatprep.subr.mxu0 0.0
        %421 = vmatpush1.msra.mxu0 0.0
        %422 = vmatprep.subr.mxu0 0.0
        %423 = vmatpush1.msra.mxu0 0.0
        %424 = vmatprep.subr.mxu0 0.0
        %425 = vmatpush1.msra.mxu0 0.0
        %426 = vmatprep.subr.mxu0 0.0
        %427 = vmatpush1.msra.mxu0 0.0
        %428 = vmatprep.subr.mxu0 0.0
        %429 = vmatpush1.msra.mxu0 0.0
        %430 = vmatprep.subr.mxu0 0.0
        %431 = vmatpush1.msra.mxu0 0.0
        %432 = vmatprep.subr.mxu0 0.0
        %433 = vmatpush1.msra.mxu0 0.0
        %434 = vmatprep.subr.mxu0 0.0
        %435 = vmatpush1.msra.mxu0 0.0
        %436 = vmatprep.subr.mxu0 0.0
        %437 = vmatpush1.msra.mxu0 0.0
        %438 = vmatprep.subr.mxu0 0.0
        %439 = vmatpush1.msra.mxu0 0.0
        %440 = vmatprep.subr.mxu0 0.0
        %441 = vmatpush1.msra.mxu0 0.0
        %442 = vmatprep.subr.mxu0 0.0
        %443 = vmatpush1.msra.mxu0 0.0
        %444 = vmatprep.subr.mxu0 0.0
        %445 = vmatpush1.msra.mxu0 0.0
        %446 = vmatprep.subr.mxu0 0.0
        %447 = vmatpush1.msra.mxu0 0.0
        %448 = vmatprep.subr.mxu0 0.0
        %449 = vmatpush1.msra.mxu0 0.0
        %450 = vmatprep.subr.mxu0 0.0
        %451 = vmatpush1.msra.mxu0 0.0
        %452 = vmatprep.subr.mxu0 0.0
        %453 = vmatpush1.msra.mxu0 0.0
        %454 = vmatprep.subr.mxu0 0.0
        %455 = vmatpush1.msra.mxu0 0.0
        %456 = vmatprep.subr.mxu0 0.0
        %457 = vmatpush1.msra.mxu0 0.0
        %458 = vmatprep.subr.mxu0 0.0
        %459 = vmatpush1.msra.mxu0 0.0
        %460 = vmatprep.subr.mxu0 0.0
        %461 = vmatpush1.msra.mxu0 0.0
        %462 = vmatprep.mubr.f32.mxu0 0.0
        %463 = vmatmul.mubr.f32.gmra.mrb[0].mxu0 %v374
        %v464 = vpop.f32.mrb[0].mxu0
        %v465 = vadd.f32 %v355, %v464
        %v466 = vpop.f32.mrb[0].mxu0
        %v467 = vadd.f32 %v355, %v466
        %468 = vmatprep.mubr.f32.mxu0 0.0
        %469 = vmatmul.mubr.f32.gmra.mrb[0].mxu0 %v377
        %v470 = vpop.f32.mrb[0].mxu0
        %v471 = vadd.f32 %v360, %v470
        %v472 = vpop.f32.mrb[0].mxu0
        %v473 = vadd.f32 %v360, %v472
        %474 = vmatprep.mubr.f32.mxu0 0.0
        %475 = vmatmul.mubr.f32.gmra.mrb[0].mxu0 %v380
        %v476 = vpop.f32.mrb[0].mxu0
        %v477 = vadd.f32 %v365, %v476
        %v478 = vpop.f32.mrb[0].mxu0
        %v479 = vadd.f32 %v365, %v478
        %480 = vmatprep.mubr.f32.mxu0 0.0
        %481 = vmatmul.mubr.f32.gmra.mrb[0].mxu0 %v383
        %v482 = vpop.f32.mrb[0].mxu0
        %v483 = vadd.f32 %v370, %v482
        %v484 = vpop.f32.mrb[0].mxu0
        %v485 = vadd.f32 %v370, %v484
        %486 = vdwg.mxu0
        %487 = vmatprep.subr.mxu0 %v396
        %488 = vmatpush1.msra.mxu0 %v393
        %489 = vmatprep.subr.mxu0 0.0
        %490 = vmatpush1.msra.mxu0 0.0
        %491 = vmatprep.subr.mxu0 0.0
        %492 = vmatpush1.msra.mxu0 0.0
        %493 = vmatprep.subr.mxu0 0.0
        %494 = vmatpush1.msra.mxu0 0.0
        %495 = vmatprep.subr.mxu0 0.0
        %496 = vmatpush1.msra.mxu0 0.0
        %497 = vmatprep.subr.mxu0 0.0
        %498 = vmatpush1.msra.mxu0 0.0
        %499 = vmatprep.subr.mxu0 0.0
        %500 = vmatpush1.msra.mxu0 0.0
        %501 = vmatprep.subr.mxu0 0.0
        %502 = vmatpush1.msra.mxu0 0.0
        %503 = vmatprep.subr.mxu0 0.0
        %504 = vmatpush1.msra.mxu0 0.0
        %505 = vmatprep.subr.mxu0 0.0
        %506 = vmatpush1.msra.mxu0 0.0
        %507 = vmatprep.subr.mxu0 0.0
        %508 = vmatpush1.msra.mxu0 0.0
        %509 = vmatprep.subr.mxu0 0.0
        %510 = vmatpush1.msra.mxu0 0.0
        %511 = vmatprep.subr.mxu0 0.0
        %512 = vmatpush1.msra.mxu0 0.0
        %513 = vmatprep.subr.mxu0 0.0
        %514 = vmatpush1.msra.mxu0 0.0
        %515 = vmatprep.subr.mxu0 0.0
        %516 = vmatpush1.msra.mxu0 0.0
        %517 = vmatprep.subr.mxu0 0.0
        %518 = vmatpush1.msra.mxu0 0.0
        %519 = vmatprep.subr.mxu0 0.0
        %520 = vmatpush1.msra.mxu0 0.0
        %521 = vmatprep.subr.mxu0 0.0
        %522 = vmatpush1.msra.mxu0 0.0
        %523 = vmatprep.subr.mxu0 0.0
        %524 = vmatpush1.msra.mxu0 0.0
        %525 = vmatprep.subr.mxu0 0.0
        %526 = vmatpush1.msra.mxu0 0.0
        %527 = vmatprep.subr.mxu0 0.0
        %528 = vmatpush1.msra.mxu0 0.0
        %529 = vmatprep.subr.mxu0 0.0
        %530 = vmatpush1.msra.mxu0 0.0
        %531 = vmatprep.subr.mxu0 0.0
        %532 = vmatpush1.msra.mxu0 0.0
        %533 = vmatprep.subr.mxu0 0.0
        %534 = vmatpush1.msra.mxu0 0.0
        %535 = vmatprep.subr.mxu0 0.0
        %536 = vmatpush1.msra.mxu0 0.0
        %537 = vmatprep.subr.mxu0 0.0
        %538 = vmatpush1.msra.mxu0 0.0
        %539 = vmatprep.subr.mxu0 0.0
        %540 = vmatpush1.msra.mxu0 0.0
        %541 = vmatprep.subr.mxu0 0.0
        %542 = vmatpush1.msra.mxu0 0.0
        %543 = vmatprep.subr.mxu0 0.0
        %544 = vmatpush1.msra.mxu0 0.0
        %545 = vmatprep.subr.mxu0 0.0
        %546 = vmatpush1.msra.mxu0 0.0
        %547 = vmatprep.subr.mxu0 0.0
        %548 = vmatpush1.msra.mxu0 0.0
        %549 = vmatprep.subr.mxu0 0.0
        %550 = vmatpush1.msra.mxu0 0.0
        %551 = vmatprep.mubr.f32.mxu0 0.0
        %552 = vmatmul.mubr.f32.gmra.mrb[0].mxu0 %v374
        %v553 = vpop.f32.mrb[0].mxu0
        %v554 = vadd.f32 %v355, %v553
        %v555 = vpop.f32.mrb[0].mxu0
        %v556 = vadd.f32 %v355, %v555
        %557 = vmatprep.mubr.f32.mxu0 0.0
        %558 = vmatmul.mubr.f32.gmra.mrb[0].mxu0 %v377
        %v559 = vpop.f32.mrb[0].mxu0
        %v560 = vadd.f32 %v360, %v559
        %v561 = vpop.f32.mrb[0].mxu0
        %v562 = vadd.f32 %v360, %v561
        %563 = vmatprep.mubr.f32.mxu0 0.0
        %564 = vmatmul.mubr.f32.gmra.mrb[0].mxu0 %v380
        %v565 = vpop.f32.mrb[0].mxu0
        %v566 = vadd.f32 %v365, %v565
        %v567 = vpop.f32.mrb[0].mxu0
        %v568 = vadd.f32 %v365, %v567
        %569 = vmatprep.mubr.f32.mxu0 0.0
        %570 = vmatmul.mubr.f32.gmra.mrb[0].mxu0 %v383
        %v571 = vpop.f32.mrb[0].mxu0
        %v572 = vadd.f32 %v370, %v571
        %v573 = vpop.f32.mrb[0].mxu0
        %v574 = vadd.f32 %v370, %v573
        %575 = vdwg.mxu0
        %576 = vst [vmem:[#allocation2] sm:$0xff] %v465
        %577 = vst [vmem:[#allocation2 + $0x8] sm:$0xff] %v467
        %578 = vst [vmem:[#allocation2 + $0x10] sm:$0xff] %v554
        %579 = vst [vmem:[#allocation2 + $0x18] sm:$0xff] %v556
        %580 = vst [vmem:[#allocation2 + $0x20] sm:$0xff] %v471
        %581 = vst [vmem:[#allocation2 + $0x28] sm:$0xff] %v473
        %582 = vst [vmem:[#allocation2 + $0x30] sm:$0xff] %v560
        %583 = vst [vmem:[#allocation2 + $0x38] sm:$0xff] %v562
        %584 = vst [vmem:[#allocation2 + $0x40] sm:$0xff] %v477
        %585 = vst [vmem:[#allocation2 + $0x48] sm:$0xff] %v479
        %586 = vst [vmem:[#allocation2 + $0x50] sm:$0xff] %v566
        %587 = vst [vmem:[#allocation2 + $0x58] sm:$0xff] %v568
        %588 = vst [vmem:[#allocation2 + $0x60] sm:$0xff] %v483
        %589 = vst [vmem:[#allocation2 + $0x68] sm:$0xff] %v485
        %590 = vst [vmem:[#allocation2 + $0x70] sm:$0xff] %v572
        %591 = vst [vmem:[#allocation2 + $0x78] sm:$0xff] %v574
        %v592 = vld [vmem:[%s301] sm:$0x38]
        %v593 = vld [vmem:[%s301 + $0x8] sm:$0x38]
        %v594 = vld [vmem:[%s301 + $0x10] sm:$0x38]
        %v595 = vld [vmem:[%s301 + $0x18] sm:$0x38]
        %v600 = vrot.slane %v592, 3
        %v601 = vrot.slane %v593, 3
        %v602 = vrot.slane %v594, 3
        %v603 = vrot.slane %v595, 3
        %v604 = vsel %vm385, %v600, 0
        %v606 = vsel %vm385, %v601, 0
        %v608 = vsel %vm385, %v602, 0
        %v610 = vsel %vm385, %v603, 0
        %612 = vmatprep.subr.mxu0 %v606
        %613 = vmatpush1.msra.mxu0 %v604
        %614 = vmatprep.subr.mxu0 0.0
        %615 = vmatpush1.msra.mxu0 0.0
        %616 = vmatprep.subr.mxu0 0.0
        %617 = vmatpush1.msra.mxu0 0.0
        %618 = vmatprep.subr.mxu0 0.0
        %619 = vmatpush1.msra.mxu0 0.0
        %620 = vmatprep.subr.mxu0 0.0
        %621 = vmatpush1.msra.mxu0 0.0
        %622 = vmatprep.subr.mxu0 0.0
        %623 = vmatpush1.msra.mxu0 0.0
        %624 = vmatprep.subr.mxu0 0.0
        %625 = vmatpush1.msra.mxu0 0.0
        %626 = vmatprep.subr.mxu0 0.0
        %627 = vmatpush1.msra.mxu0 0.0
        %628 = vmatprep.subr.mxu0 0.0
        %629 = vmatpush1.msra.mxu0 0.0
        %630 = vmatprep.subr.mxu0 0.0
        %631 = vmatpush1.msra.mxu0 0.0
        %632 = vmatprep.subr.mxu0 0.0
        %633 = vmatpush1.msra.mxu0 0.0
        %634 = vmatprep.subr.mxu0 0.0
        %635 = vmatpush1.msra.mxu0 0.0
        %636 = vmatprep.subr.mxu0 0.0
        %637 = vmatpush1.msra.mxu0 0.0
        %638 = vmatprep.subr.mxu0 0.0
        %639 = vmatpush1.msra.mxu0 0.0
        %640 = vmatprep.subr.mxu0 0.0
        %641 = vmatpush1.msra.mxu0 0.0
        %642 = vmatprep.subr.mxu0 0.0
        %643 = vmatpush1.msra.mxu0 0.0
        %644 = vmatprep.subr.mxu0 0.0
        %645 = vmatpush1.msra.mxu0 0.0
        %646 = vmatprep.subr.mxu0 0.0
        %647 = vmatpush1.msra.mxu0 0.0
        %648 = vmatprep.subr.mxu0 0.0
        %649 = vmatpush1.msra.mxu0 0.0
        %650 = vmatprep.subr.mxu0 0.0
        %651 = vmatpush1.msra.mxu0 0.0
        %652 = vmatprep.subr.mxu0 0.0
        %653 = vmatpush1.msra.mxu0 0.0
        %654 = vmatprep.subr.mxu0 0.0
        %655 = vmatpush1.msra.mxu0 0.0
        %656 = vmatprep.subr.mxu0 0.0
        %657 = vmatpush1.msra.mxu0 0.0
        %658 = vmatprep.subr.mxu0 0.0
        %659 = vmatpush1.msra.mxu0 0.0
        %660 = vmatprep.subr.mxu0 0.0
        %661 = vmatpush1.msra.mxu0 0.0
        %662 = vmatprep.subr.mxu0 0.0
        %663 = vmatpush1.msra.mxu0 0.0
        %664 = vmatprep.subr.mxu0 0.0
        %665 = vmatpush1.msra.mxu0 0.0
        %666 = vmatprep.subr.mxu0 0.0
        %667 = vmatpush1.msra.mxu0 0.0
        %668 = vmatprep.subr.mxu0 0.0
        %669 = vmatpush1.msra.mxu0 0.0
        %670 = vmatprep.subr.mxu0 0.0
        %671 = vmatpush1.msra.mxu0 0.0
        %672 = vmatprep.subr.mxu0 0.0
        %673 = vmatpush1.msra.mxu0 0.0
        %674 = vmatprep.subr.mxu0 0.0
        %675 = vmatpush1.msra.mxu0 0.0
        %676 = vmatprep.mubr.f32.mxu0 0.0
        %677 = vmatmul.mubr.f32.gmra.mrb[0].mxu0 %v374
        %v678 = vpop.f32.mrb[0].mxu0
        %v679 = vadd.f32 %v355, %v678
        %v680 = vpop.f32.mrb[0].mxu0
        %v681 = vadd.f32 %v355, %v680
        %682 = vmatprep.mubr.f32.mxu0 0.0
        %683 = vmatmul.mubr.f32.gmra.mrb[0].mxu0 %v377
        %v684 = vpop.f32.mrb[0].mxu0
        %v685 = vadd.f32 %v360, %v684
        %v686 = vpop.f32.mrb[0].mxu0
        %v687 = vadd.f32 %v360, %v686
        %688 = vmatprep.mubr.f32.mxu0 0.0
        %689 = vmatmul.mubr.f32.gmra.mrb[0].mxu0 %v380
        %v690 = vpop.f32.mrb[0].mxu0
        %v691 = vadd.f32 %v365, %v690
        %v692 = vpop.f32.mrb[0].mxu0
        %v693 = vadd.f32 %v365, %v692
        %694 = vmatprep.mubr.f32.mxu0 0.0
        %695 = vmatmul.mubr.f32.gmra.mrb[0].mxu0 %v383
        %v696 = vpop.f32.mrb[0].mxu0
        %v697 = vadd.f32 %v370, %v696
        %v698 = vpop.f32.mrb[0].mxu0
        %v699 = vadd.f32 %v370, %v698
        %700 = vdwg.mxu0
        %701 = vmatprep.subr.mxu0 %v610
        %702 = vmatpush1.msra.mxu0 %v608
        %703 = vmatprep.subr.mxu0 0.0
        %704 = vmatpush1.msra.mxu0 0.0
        %705 = vmatprep.subr.mxu0 0.0
        %706 = vmatpush1.msra.mxu0 0.0
        %707 = vmatprep.subr.mxu0 0.0
        %708 = vmatpush1.msra.mxu0 0.0
        %709 = vmatprep.subr.mxu0 0.0
        %710 = vmatpush1.msra.mxu0 0.0
        %711 = vmatprep.subr.mxu0 0.0
        %712 = vmatpush1.msra.mxu0 0.0
        %713 = vmatprep.subr.mxu0 0.0
        %714 = vmatpush1.msra.mxu0 0.0
        %715 = vmatprep.subr.mxu0 0.0
        %716 = vmatpush1.msra.mxu0 0.0
        %717 = vmatprep.subr.mxu0 0.0
        %718 = vmatpush1.msra.mxu0 0.0
        %719 = vmatprep.subr.mxu0 0.0
        %720 = vmatpush1.msra.mxu0 0.0
        %721 = vmatprep.subr.mxu0 0.0
        %722 = vmatpush1.msra.mxu0 0.0
        %723 = vmatprep.subr.mxu0 0.0
        %724 = vmatpush1.msra.mxu0 0.0
        %725 = vmatprep.subr.mxu0 0.0
        %726 = vmatpush1.msra.mxu0 0.0
        %727 = vmatprep.subr.mxu0 0.0
        %728 = vmatpush1.msra.mxu0 0.0
        %729 = vmatprep.subr.mxu0 0.0
        %730 = vmatpush1.msra.mxu0 0.0
        %731 = vmatprep.subr.mxu0 0.0
        %732 = vmatpush1.msra.mxu0 0.0
        %733 = vmatprep.subr.mxu0 0.0
        %734 = vmatpush1.msra.mxu0 0.0
        %735 = vmatprep.subr.mxu0 0.0
        %736 = vmatpush1.msra.mxu0 0.0
        %737 = vmatprep.subr.mxu0 0.0
        %738 = vmatpush1.msra.mxu0 0.0
        %739 = vmatprep.subr.mxu0 0.0
        %740 = vmatpush1.msra.mxu0 0.0
        %741 = vmatprep.subr.mxu0 0.0
        %742 = vmatpush1.msra.mxu0 0.0
        %743 = vmatprep.subr.mxu0 0.0
        %744 = vmatpush1.msra.mxu0 0.0
        %745 = vmatprep.subr.mxu0 0.0
        %746 = vmatpush1.msra.mxu0 0.0
        %747 = vmatprep.subr.mxu0 0.0
        %748 = vmatpush1.msra.mxu0 0.0
        %749 = vmatprep.subr.mxu0 0.0
        %750 = vmatpush1.msra.mxu0 0.0
        %751 = vmatprep.subr.mxu0 0.0
        %752 = vmatpush1.msra.mxu0 0.0
        %753 = vmatprep.subr.mxu0 0.0
        %754 = vmatpush1.msra.mxu0 0.0
        %755 = vmatprep.subr.mxu0 0.0
        %756 = vmatpush1.msra.mxu0 0.0
        %757 = vmatprep.subr.mxu0 0.0
        %758 = vmatpush1.msra.mxu0 0.0
        %759 = vmatprep.subr.mxu0 0.0
        %760 = vmatpush1.msra.mxu0 0.0
        %761 = vmatprep.subr.mxu0 0.0
        %762 = vmatpush1.msra.mxu0 0.0
        %763 = vmatprep.subr.mxu0 0.0
        %764 = vmatpush1.msra.mxu0 0.0
        %765 = vmatprep.mubr.f32.mxu0 0.0
        %766 = vmatmul.mubr.f32.gmra.mrb[0].mxu0 %v374
        %v767 = vpop.f32.mrb[0].mxu0
        %v768 = vadd.f32 %v355, %v767
        %v769 = vpop.f32.mrb[0].mxu0
        %v770 = vadd.f32 %v355, %v769
        %771 = vmatprep.mubr.f32.mxu0 0.0
        %772 = vmatmul.mubr.f32.gmra.mrb[0].mxu0 %v377
        %v773 = vpop.f32.mrb[0].mxu0
        %v774 = vadd.f32 %v360, %v773
        %v775 = vpop.f32.mrb[0].mxu0
        %v776 = vadd.f32 %v360, %v775
        %777 = vmatprep.mubr.f32.mxu0 0.0
        %778 = vmatmul.mubr.f32.gmra.mrb[0].mxu0 %v380
        %v779 = vpop.f32.mrb[0].mxu0
        %v780 = vadd.f32 %v365, %v779
        %v781 = vpop.f32.mrb[0].mxu0
        %v782 = vadd.f32 %v365, %v781
        %783 = vmatprep.mubr.f32.mxu0 0.0
        %784 = vmatmul.mubr.f32.gmra.mrb[0].mxu0 %v383
        %v785 = vpop.f32.mrb[0].mxu0
        %v786 = vadd.f32 %v370, %v785
        %v787 = vpop.f32.mrb[0].mxu0
        %v788 = vadd.f32 %v370, %v787
        %789 = vdwg.mxu0
        %790 = vst [vmem:[#allocation2 + $0x80] sm:$0xff] %v679
        %791 = vst [vmem:[#allocation2 + $0x88] sm:$0xff] %v681
        %792 = vst [vmem:[#allocation2 + $0x90] sm:$0xff] %v768
        %793 = vst [vmem:[#allocation2 + $0x98] sm:$0xff] %v770
        %794 = vst [vmem:[#allocation2 + $0xa0] sm:$0xff] %v685
        %795 = vst [vmem:[#allocation2 + $0xa8] sm:$0xff] %v687
        %796 = vst [vmem:[#allocation2 + $0xb0] sm:$0xff] %v774
        %797 = vst [vmem:[#allocation2 + $0xb8] sm:$0xff] %v776
        %798 = vst [vmem:[#allocation2 + $0xc0] sm:$0xff] %v691
        %799 = vst [vmem:[#allocation2 + $0xc8] sm:$0xff] %v693
        %800 = vst [vmem:[#allocation2 + $0xd0] sm:$0xff] %v780
        %801 = vst [vmem:[#allocation2 + $0xd8] sm:$0xff] %v782
        %802 = vst [vmem:[#allocation2 + $0xe0] sm:$0xff] %v697
        %803 = vst [vmem:[#allocation2 + $0xe8] sm:$0xff] %v699
        %804 = vst [vmem:[#allocation2 + $0xf0] sm:$0xff] %v786
        %805 = vst [vmem:[#allocation2 + $0xf8] sm:$0xff] %v788
        %v806 = vld [vmem:[%s301] sm:$0xc0]
        %v807 = vld [vmem:[%s301 + $0x8] sm:$0xc0]
        %v808 = vld [vmem:[%s301 + $0x10] sm:$0xc0]
        %v809 = vld [vmem:[%s301 + $0x18] sm:$0xc0]
        %v810 = vld [vmem:[%s301 + $0x20] sm:$0x1]
        %v811 = vld [vmem:[%s301 + $0x28] sm:$0x1]
        %v812 = vld [vmem:[%s301 + $0x30] sm:$0x1]
        %v813 = vld [vmem:[%s301 + $0x38] sm:$0x1]
        %vm822 = vcmask 1041408
        %v823 = vrot.slane %v806, 6
        %v824 = vrot.slane %v810, 6
        %v825 = vsel %vm822, %v823, %v824
        %v826 = vrot.slane %v807, 6
        %v827 = vrot.slane %v811, 6
        %v828 = vsel %vm822, %v826, %v827
        %v829 = vrot.slane %v808, 6
        %v830 = vrot.slane %v812, 6
        %v831 = vsel %vm822, %v829, %v830
        %v832 = vrot.slane %v809, 6
        %v833 = vrot.slane %v813, 6
        %v834 = vsel %vm822, %v832, %v833
        %v835 = vsel %vm385, %v825, 0
        %v837 = vsel %vm385, %v828, 0
        %v839 = vsel %vm385, %v831, 0
        %v841 = vsel %vm385, %v834, 0
        %843 = vmatprep.subr.mxu0 %v837
        %844 = vmatpush1.msra.mxu0 %v835
        %845 = vmatprep.subr.mxu0 0.0
        %846 = vmatpush1.msra.mxu0 0.0
        %847 = vmatprep.subr.mxu0 0.0
        %848 = vmatpush1.msra.mxu0 0.0
        %849 = vmatprep.subr.mxu0 0.0
        %850 = vmatpush1.msra.mxu0 0.0
        %851 = vmatprep.subr.mxu0 0.0
        %852 = vmatpush1.msra.mxu0 0.0
        %853 = vmatprep.subr.mxu0 0.0
        %854 = vmatpush1.msra.mxu0 0.0
        %855 = vmatprep.subr.mxu0 0.0
        %856 = vmatpush1.msra.mxu0 0.0
        %857 = vmatprep.subr.mxu0 0.0
        %858 = vmatpush1.msra.mxu0 0.0
        %859 = vmatprep.subr.mxu0 0.0
        %860 = vmatpush1.msra.mxu0 0.0
        %861 = vmatprep.subr.mxu0 0.0
        %862 = vmatpush1.msra.mxu0 0.0
        %863 = vmatprep.subr.mxu0 0.0
        %864 = vmatpush1.msra.mxu0 0.0
        %865 = vmatprep.subr.mxu0 0.0
        %866 = vmatpush1.msra.mxu0 0.0
        %867 = vmatprep.subr.mxu0 0.0
        %868 = vmatpush1.msra.mxu0 0.0
        %869 = vmatprep.subr.mxu0 0.0
        %870 = vmatpush1.msra.mxu0 0.0
        %871 = vmatprep.subr.mxu0 0.0
        %872 = vmatpush1.msra.mxu0 0.0
        %873 = vmatprep.subr.mxu0 0.0
        %874 = vmatpush1.msra.mxu0 0.0
        %875 = vmatprep.subr.mxu0 0.0
        %876 = vmatpush1.msra.mxu0 0.0
        %877 = vmatprep.subr.mxu0 0.0
        %878 = vmatpush1.msra.mxu0 0.0
        %879 = vmatprep.subr.mxu0 0.0
        %880 = vmatpush1.msra.mxu0 0.0
        %881 = vmatprep.subr.mxu0 0.0
        %882 = vmatpush1.msra.mxu0 0.0
        %883 = vmatprep.subr.mxu0 0.0
        %884 = vmatpush1.msra.mxu0 0.0
        %885 = vmatprep.subr.mxu0 0.0
        %886 = vmatpush1.msra.mxu0 0.0
        %887 = vmatprep.subr.mxu0 0.0
        %888 = vmatpush1.msra.mxu0 0.0
        %889 = vmatprep.subr.mxu0 0.0
        %890 = vmatpush1.msra.mxu0 0.0
        %891 = vmatprep.subr.mxu0 0.0
        %892 = vmatpush1.msra.mxu0 0.0
        %893 = vmatprep.subr.mxu0 0.0
        %894 = vmatpush1.msra.mxu0 0.0
        %895 = vmatprep.subr.mxu0 0.0
        %896 = vmatpush1.msra.mxu0 0.0
        %897 = vmatprep.subr.mxu0 0.0
        %898 = vmatpush1.msra.mxu0 0.0
        %899 = vmatprep.subr.mxu0 0.0
        %900 = vmatpush1.msra.mxu0 0.0
        %901 = vmatprep.subr.mxu0 0.0
        %902 = vmatpush1.msra.mxu0 0.0
        %903 = vmatprep.subr.mxu0 0.0
        %904 = vmatpush1.msra.mxu0 0.0
        %905 = vmatprep.subr.mxu0 0.0
        %906 = vmatpush1.msra.mxu0 0.0
        %907 = vmatprep.mubr.f32.mxu0 0.0
        %908 = vmatmul.mubr.f32.gmra.mrb[0].mxu0 %v374
        %v909 = vpop.f32.mrb[0].mxu0
        %v910 = vadd.f32 %v355, %v909
        %v911 = vpop.f32.mrb[0].mxu0
        %v912 = vadd.f32 %v355, %v911
        %913 = vmatprep.mubr.f32.mxu0 0.0
        %914 = vmatmul.mubr.f32.gmra.mrb[0].mxu0 %v377
        %v915 = vpop.f32.mrb[0].mxu0
        %v916 = vadd.f32 %v360, %v915
        %v917 = vpop.f32.mrb[0].mxu0
        %v918 = vadd.f32 %v360, %v917
        %919 = vmatprep.mubr.f32.mxu0 0.0
        %920 = vmatmul.mubr.f32.gmra.mrb[0].mxu0 %v380
        %v921 = vpop.f32.mrb[0].mxu0
        %v922 = vadd.f32 %v365, %v921
        %v923 = vpop.f32.mrb[0].mxu0
        %v924 = vadd.f32 %v365, %v923
        %925 = vmatprep.mubr.f32.mxu0 0.0
        %926 = vmatmul.mubr.f32.gmra.mrb[0].mxu0 %v383
        %v927 = vpop.f32.mrb[0].mxu0
        %v928 = vadd.f32 %v370, %v927
        %v929 = vpop.f32.mrb[0].mxu0
        %v930 = vadd.f32 %v370, %v929
        %931 = vdwg.mxu0
        %932 = vmatprep.subr.mxu0 %v841
        %933 = vmatpush1.msra.mxu0 %v839
        %934 = vmatprep.subr.mxu0 0.0
        %935 = vmatpush1.msra.mxu0 0.0
        %936 = vmatprep.subr.mxu0 0.0
        %937 = vmatpush1.msra.mxu0 0.0
        %938 = vmatprep.subr.mxu0 0.0
        %939 = vmatpush1.msra.mxu0 0.0
        %940 = vmatprep.subr.mxu0 0.0
        %941 = vmatpush1.msra.mxu0 0.0
        %942 = vmatprep.subr.mxu0 0.0
        %943 = vmatpush1.msra.mxu0 0.0
        %944 = vmatprep.subr.mxu0 0.0
        %945 = vmatpush1.msra.mxu0 0.0
        %946 = vmatprep.subr.mxu0 0.0
        %947 = vmatpush1.msra.mxu0 0.0
        %948 = vmatprep.subr.mxu0 0.0
        %949 = vmatpush1.msra.mxu0 0.0
        %950 = vmatprep.subr.mxu0 0.0
        %951 = vmatpush1.msra.mxu0 0.0
        %952 = vmatprep.subr.mxu0 0.0
        %953 = vmatpush1.msra.mxu0 0.0
        %954 = vmatprep.subr.mxu0 0.0
        %955 = vmatpush1.msra.mxu0 0.0
        %956 = vmatprep.subr.mxu0 0.0
        %957 = vmatpush1.msra.mxu0 0.0
        %958 = vmatprep.subr.mxu0 0.0
        %959 = vmatpush1.msra.mxu0 0.0
        %960 = vmatprep.subr.mxu0 0.0
        %961 = vmatpush1.msra.mxu0 0.0
        %962 = vmatprep.subr.mxu0 0.0
        %963 = vmatpush1.msra.mxu0 0.0
        %964 = vmatprep.subr.mxu0 0.0
        %965 = vmatpush1.msra.mxu0 0.0
        %966 = vmatprep.subr.mxu0 0.0
        %967 = vmatpush1.msra.mxu0 0.0
        %968 = vmatprep.subr.mxu0 0.0
        %969 = vmatpush1.msra.mxu0 0.0
        %970 = vmatprep.subr.mxu0 0.0
        %971 = vmatpush1.msra.mxu0 0.0
        %972 = vmatprep.subr.mxu0 0.0
        %973 = vmatpush1.msra.mxu0 0.0
        %974 = vmatprep.subr.mxu0 0.0
        %975 = vmatpush1.msra.mxu0 0.0
        %976 = vmatprep.subr.mxu0 0.0
        %977 = vmatpush1.msra.mxu0 0.0
        %978 = vmatprep.subr.mxu0 0.0
        %979 = vmatpush1.msra.mxu0 0.0
        %980 = vmatprep.subr.mxu0 0.0
        %981 = vmatpush1.msra.mxu0 0.0
        %982 = vmatprep.subr.mxu0 0.0
        %983 = vmatpush1.msra.mxu0 0.0
        %984 = vmatprep.subr.mxu0 0.0
        %985 = vmatpush1.msra.mxu0 0.0
        %986 = vmatprep.subr.mxu0 0.0
        %987 = vmatpush1.msra.mxu0 0.0
        %988 = vmatprep.subr.mxu0 0.0
        %989 = vmatpush1.msra.mxu0 0.0
        %990 = vmatprep.subr.mxu0 0.0
        %991 = vmatpush1.msra.mxu0 0.0
        %992 = vmatprep.subr.mxu0 0.0
        %993 = vmatpush1.msra.mxu0 0.0
        %994 = vmatprep.subr.mxu0 0.0
        %995 = vmatpush1.msra.mxu0 0.0
        %996 = vmatprep.mubr.f32.mxu0 0.0
        %997 = vmatmul.mubr.f32.gmra.mrb[0].mxu0 %v374
        %v998 = vpop.f32.mrb[0].mxu0
        %v999 = vadd.f32 %v355, %v998
        %v1000 = vpop.f32.mrb[0].mxu0
        %v1001 = vadd.f32 %v355, %v1000
        %1002 = vmatprep.mubr.f32.mxu0 0.0
        %1003 = vmatmul.mubr.f32.gmra.mrb[0].mxu0 %v377
        %v1004 = vpop.f32.mrb[0].mxu0
        %v1005 = vadd.f32 %v360, %v1004
        %v1006 = vpop.f32.mrb[0].mxu0
        %v1007 = vadd.f32 %v360, %v1006
        %1008 = vmatprep.mubr.f32.mxu0 0.0
        %1009 = vmatmul.mubr.f32.gmra.mrb[0].mxu0 %v380
        %v1010 = vpop.f32.mrb[0].mxu0
        %v1011 = vadd.f32 %v365, %v1010
        %v1012 = vpop.f32.mrb[0].mxu0
        %v1013 = vadd.f32 %v365, %v1012
        %1014 = vmatprep.mubr.f32.mxu0 0.0
        %1015 = vmatmul.mubr.f32.gmra.mrb[0].mxu0 %v383
        %v1016 = vpop.f32.mrb[0].mxu0
        %v1017 = vadd.f32 %v370, %v1016
        %v1018 = vpop.f32.mrb[0].mxu0
        %v1019 = vadd.f32 %v370, %v1018
        %1020 = vdwg.mxu0
        %1021 = vst [vmem:[#allocation2 + $0x100] sm:$0xff] %v910
        %1022 = vst [vmem:[#allocation2 + $0x108] sm:$0xff] %v912
        %1023 = vst [vmem:[#allocation2 + $0x110] sm:$0xff] %v999
        %1024 = vst [vmem:[#allocation2 + $0x118] sm:$0xff] %v1001
        %1025 = vst [vmem:[#allocation2 + $0x120] sm:$0xff] %v916
        %1026 = vst [vmem:[#allocation2 + $0x128] sm:$0xff] %v918
        %1027 = vst [vmem:[#allocation2 + $0x130] sm:$0xff] %v1005
        %1028 = vst [vmem:[#allocation2 + $0x138] sm:$0xff] %v1007
        %1029 = vst [vmem:[#allocation2 + $0x140] sm:$0xff] %v922
        %1030 = vst [vmem:[#allocation2 + $0x148] sm:$0xff] %v924
        %1031 = vst [vmem:[#allocation2 + $0x150] sm:$0xff] %v1011
        %1032 = vst [vmem:[#allocation2 + $0x158] sm:$0xff] %v1013
        %1033 = vst [vmem:[#allocation2 + $0x160] sm:$0xff] %v928
        %1034 = vst [vmem:[#allocation2 + $0x168] sm:$0xff] %v930
        %1035 = vst [vmem:[#allocation2 + $0x170] sm:$0xff] %v1017
        %1036 = vst [vmem:[#allocation2 + $0x178] sm:$0xff] %v1019
        %v1037 = vld [vmem:[%s301 + $0x20] sm:$0xe]
        %v1038 = vld [vmem:[%s301 + $0x28] sm:$0xe]
        %v1039 = vld [vmem:[%s301 + $0x30] sm:$0xe]
        %v1040 = vld [vmem:[%s301 + $0x38] sm:$0xe]
        %v1045 = vrot.slane %v1037, 1
        %v1046 = vrot.slane %v1038, 1
        %v1047 = vrot.slane %v1039, 1
        %v1048 = vrot.slane %v1040, 1
        %v1049 = vsel %vm385, %v1045, 0
        %v1051 = vsel %vm385, %v1046, 0
        %v1053 = vsel %vm385, %v1047, 0
        %v1055 = vsel %vm385, %v1048, 0
        %1057 = vmatprep.subr.mxu0 %v1051
        %1058 = vmatpush1.msra.mxu0 %v1049
        %1059 = vmatprep.subr.mxu0 0.0
        %1060 = vmatpush1.msra.mxu0 0.0
        %1061 = vmatprep.subr.mxu0 0.0
        %1062 = vmatpush1.msra.mxu0 0.0
        %1063 = vmatprep.subr.mxu0 0.0
        %1064 = vmatpush1.msra.mxu0 0.0
        %1065 = vmatprep.subr.mxu0 0.0
        %1066 = vmatpush1.msra.mxu0 0.0
        %1067 = vmatprep.subr.mxu0 0.0
        %1068 = vmatpush1.msra.mxu0 0.0
        %1069 = vmatprep.subr.mxu0 0.0
        %1070 = vmatpush1.msra.mxu0 0.0
        %1071 = vmatprep.subr.mxu0 0.0
        %1072 = vmatpush1.msra.mxu0 0.0
        %1073 = vmatprep.subr.mxu0 0.0
        %1074 = vmatpush1.msra.mxu0 0.0
        %1075 = vmatprep.subr.mxu0 0.0
        %1076 = vmatpush1.msra.mxu0 0.0
        %1077 = vmatprep.subr.mxu0 0.0
        %1078 = vmatpush1.msra.mxu0 0.0
        %1079 = vmatprep.subr.mxu0 0.0
        %1080 = vmatpush1.msra.mxu0 0.0
        %1081 = vmatprep.subr.mxu0 0.0
        %1082 = vmatpush1.msra.mxu0 0.0
        %1083 = vmatprep.subr.mxu0 0.0
        %1084 = vmatpush1.msra.mxu0 0.0
        %1085 = vmatprep.subr.mxu0 0.0
        %1086 = vmatpush1.msra.mxu0 0.0
        %1087 = vmatprep.subr.mxu0 0.0
        %1088 = vmatpush1.msra.mxu0 0.0
        %1089 = vmatprep.subr.mxu0 0.0
        %1090 = vmatpush1.msra.mxu0 0.0
        %1091 = vmatprep.subr.mxu0 0.0
        %1092 = vmatpush1.msra.mxu0 0.0
        %1093 = vmatprep.subr.mxu0 0.0
        %1094 = vmatpush1.msra.mxu0 0.0
        %1095 = vmatprep.subr.mxu0 0.0
        %1096 = vmatpush1.msra.mxu0 0.0
        %1097 = vmatprep.subr.mxu0 0.0
        %1098 = vmatpush1.msra.mxu0 0.0
        %1099 = vmatprep.subr.mxu0 0.0
        %1100 = vmatpush1.msra.mxu0 0.0
        %1101 = vmatprep.subr.mxu0 0.0
        %1102 = vmatpush1.msra.mxu0 0.0
        %1103 = vmatprep.subr.mxu0 0.0
        %1104 = vmatpush1.msra.mxu0 0.0
        %1105 = vmatprep.subr.mxu0 0.0
        %1106 = vmatpush1.msra.mxu0 0.0
        %1107 = vmatprep.subr.mxu0 0.0
        %1108 = vmatpush1.msra.mxu0 0.0
        %1109 = vmatprep.subr.mxu0 0.0
        %1110 = vmatpush1.msra.mxu0 0.0
        %1111 = vmatprep.subr.mxu0 0.0
        %1112 = vmatpush1.msra.mxu0 0.0
        %1113 = vmatprep.subr.mxu0 0.0
        %1114 = vmatpush1.msra.mxu0 0.0
        %1115 = vmatprep.subr.mxu0 0.0
        %1116 = vmatpush1.msra.mxu0 0.0
        %1117 = vmatprep.subr.mxu0 0.0
        %1118 = vmatpush1.msra.mxu0 0.0
        %1119 = vmatprep.subr.mxu0 0.0
        %1120 = vmatpush1.msra.mxu0 0.0
        %1121 = vmatprep.mubr.f32.mxu0 0.0
        %1122 = vmatmul.mubr.f32.gmra.mrb[0].mxu0 %v374
        %v1123 = vpop.f32.mrb[0].mxu0
        %v1124 = vadd.f32 %v355, %v1123
        %v1125 = vpop.f32.mrb[0].mxu0
        %v1126 = vadd.f32 %v355, %v1125
        %1127 = vmatprep.mubr.f32.mxu0 0.0
        %1128 = vmatmul.mubr.f32.gmra.mrb[0].mxu0 %v377
        %v1129 = vpop.f32.mrb[0].mxu0
        %v1130 = vadd.f32 %v360, %v1129
        %v1131 = vpop.f32.mrb[0].mxu0
        %v1132 = vadd.f32 %v360, %v1131
        %1133 = vmatprep.mubr.f32.mxu0 0.0
        %1134 = vmatmul.mubr.f32.gmra.mrb[0].mxu0 %v380
        %v1135 = vpop.f32.mrb[0].mxu0
        %v1136 = vadd.f32 %v365, %v1135
        %v1137 = vpop.f32.mrb[0].mxu0
        %v1138 = vadd.f32 %v365, %v1137
        %1139 = vmatprep.mubr.f32.mxu0 0.0
        %1140 = vmatmul.mubr.f32.gmra.mrb[0].mxu0 %v383
        %v1141 = vpop.f32.mrb[0].mxu0
        %v1142 = vadd.f32 %v370, %v1141
        %v1143 = vpop.f32.mrb[0].mxu0
        %v1144 = vadd.f32 %v370, %v1143
        %1145 = vdwg.mxu0
        %1146 = vmatprep.subr.mxu0 %v1055
        %1147 = vmatpush1.msra.mxu0 %v1053
        %1148 = vmatprep.subr.mxu0 0.0
        %1149 = vmatpush1.msra.mxu0 0.0
        %1150 = vmatprep.subr.mxu0 0.0
        %1151 = vmatpush1.msra.mxu0 0.0
        %1152 = vmatprep.subr.mxu0 0.0
        %1153 = vmatpush1.msra.mxu0 0.0
        %1154 = vmatprep.subr.mxu0 0.0
        %1155 = vmatpush1.msra.mxu0 0.0
        %1156 = vmatprep.subr.mxu0 0.0
        %1157 = vmatpush1.msra.mxu0 0.0
        %1158 = vmatprep.subr.mxu0 0.0
        %1159 = vmatpush1.msra.mxu0 0.0
        %1160 = vmatprep.subr.mxu0 0.0
        %1161 = vmatpush1.msra.mxu0 0.0
        %1162 = vmatprep.subr.mxu0 0.0
        %1163 = vmatpush1.msra.mxu0 0.0
        %1164 = vmatprep.subr.mxu0 0.0
        %1165 = vmatpush1.msra.mxu0 0.0
        %1166 = vmatprep.subr.mxu0 0.0
        %1167 = vmatpush1.msra.mxu0 0.0
        %1168 = vmatprep.subr.mxu0 0.0
        %1169 = vmatpush1.msra.mxu0 0.0
        %1170 = vmatprep.subr.mxu0 0.0
        %1171 = vmatpush1.msra.mxu0 0.0
        %1172 = vmatprep.subr.mxu0 0.0
        %1173 = vmatpush1.msra.mxu0 0.0
        %1174 = vmatprep.subr.mxu0 0.0
        %1175 = vmatpush1.msra.mxu0 0.0
        %1176 = vmatprep.subr.mxu0 0.0
        %1177 = vmatpush1.msra.mxu0 0.0
        %1178 = vmatprep.subr.mxu0 0.0
        %1179 = vmatpush1.msra.mxu0 0.0
        %1180 = vmatprep.subr.mxu0 0.0
        %1181 = vmatpush1.msra.mxu0 0.0
        %1182 = vmatprep.subr.mxu0 0.0
        %1183 = vmatpush1.msra.mxu0 0.0
        %1184 = vmatprep.subr.mxu0 0.0
        %1185 = vmatpush1.msra.mxu0 0.0
        %1186 = vmatprep.subr.mxu0 0.0
        %1187 = vmatpush1.msra.mxu0 0.0
        %1188 = vmatprep.subr.mxu0 0.0
        %1189 = vmatpush1.msra.mxu0 0.0
        %1190 = vmatprep.subr.mxu0 0.0
        %1191 = vmatpush1.msra.mxu0 0.0
        %1192 = vmatprep.subr.mxu0 0.0
        %1193 = vmatpush1.msra.mxu0 0.0
        %1194 = vmatprep.subr.mxu0 0.0
        %1195 = vmatpush1.msra.mxu0 0.0
        %1196 = vmatprep.subr.mxu0 0.0
        %1197 = vmatpush1.msra.mxu0 0.0
        %1198 = vmatprep.subr.mxu0 0.0
        %1199 = vmatpush1.msra.mxu0 0.0
        %1200 = vmatprep.subr.mxu0 0.0
        %1201 = vmatpush1.msra.mxu0 0.0
        %1202 = vmatprep.subr.mxu0 0.0
        %1203 = vmatpush1.msra.mxu0 0.0
        %1204 = vmatprep.subr.mxu0 0.0
        %1205 = vmatpush1.msra.mxu0 0.0
        %1206 = vmatprep.subr.mxu0 0.0
        %1207 = vmatpush1.msra.mxu0 0.0
        %1208 = vmatprep.subr.mxu0 0.0
        %1209 = vmatpush1.msra.mxu0 0.0
        %1210 = vmatprep.mubr.f32.mxu0 0.0
        %1211 = vmatmul.mubr.f32.gmra.mrb[0].mxu0 %v374
        %v1212 = vpop.f32.mrb[0].mxu0
        %v1213 = vadd.f32 %v355, %v1212
        %v1214 = vpop.f32.mrb[0].mxu0
        %v1215 = vadd.f32 %v355, %v1214
        %1216 = vmatprep.mubr.f32.mxu0 0.0
        %1217 = vmatmul.mubr.f32.gmra.mrb[0].mxu0 %v377
        %v1218 = vpop.f32.mrb[0].mxu0
        %v1219 = vadd.f32 %v360, %v1218
        %v1220 = vpop.f32.mrb[0].mxu0
        %v1221 = vadd.f32 %v360, %v1220
        %1222 = vmatprep.mubr.f32.mxu0 0.0
        %1223 = vmatmul.mubr.f32.gmra.mrb[0].mxu0 %v380
        %v1224 = vpop.f32.mrb[0].mxu0
        %v1225 = vadd.f32 %v365, %v1224
        %v1226 = vpop.f32.mrb[0].mxu0
        %v1227 = vadd.f32 %v365, %v1226
        %1228 = vmatprep.mubr.f32.mxu0 0.0
        %1229 = vmatmul.mubr.f32.gmra.mrb[0].mxu0 %v383
        %v1230 = vpop.f32.mrb[0].mxu0
        %v1231 = vadd.f32 %v370, %v1230
        %v1232 = vpop.f32.mrb[0].mxu0
        %v1233 = vadd.f32 %v370, %v1232
        %1234 = vdwg.mxu0
        %1235 = vst [vmem:[#allocation2 + $0x180] sm:$0xff] %v1124
        %1236 = vst [vmem:[#allocation2 + $0x188] sm:$0xff] %v1126
        %1237 = vst [vmem:[#allocation2 + $0x190] sm:$0xff] %v1213
        %1238 = vst [vmem:[#allocation2 + $0x198] sm:$0xff] %v1215
        %1239 = vst [vmem:[#allocation2 + $0x1a0] sm:$0xff] %v1130
        %1240 = vst [vmem:[#allocation2 + $0x1a8] sm:$0xff] %v1132
        %1241 = vst [vmem:[#allocation2 + $0x1b0] sm:$0xff] %v1219
        %1242 = vst [vmem:[#allocation2 + $0x1b8] sm:$0xff] %v1221
        %1243 = vst [vmem:[#allocation2 + $0x1c0] sm:$0xff] %v1136
        %1244 = vst [vmem:[#allocation2 + $0x1c8] sm:$0xff] %v1138
        %1245 = vst [vmem:[#allocation2 + $0x1d0] sm:$0xff] %v1225
        %1246 = vst [vmem:[#allocation2 + $0x1d8] sm:$0xff] %v1227
        %1247 = vst [vmem:[#allocation2 + $0x1e0] sm:$0xff] %v1142
        %1248 = vst [vmem:[#allocation2 + $0x1e8] sm:$0xff] %v1144
        %1249 = vst [vmem:[#allocation2 + $0x1f0] sm:$0xff] %v1231
        %1250 = vst [vmem:[#allocation2 + $0x1f8] sm:$0xff] %v1233
        %v1251 = vld [vmem:[%s301 + $0x20] sm:$0x70]
        %v1252 = vld [vmem:[%s301 + $0x28] sm:$0x70]
        %v1253 = vld [vmem:[%s301 + $0x30] sm:$0x70]
        %v1254 = vld [vmem:[%s301 + $0x38] sm:$0x70]
        %v1259 = vrot.slane %v1251, 4
        %v1260 = vrot.slane %v1252, 4
        %v1261 = vrot.slane %v1253, 4
        %v1262 = vrot.slane %v1254, 4
        %v1263 = vsel %vm385, %v1259, 0
        %v1265 = vsel %vm385, %v1260, 0
        %v1267 = vsel %vm385, %v1261, 0
        %v1269 = vsel %vm385, %v1262, 0
        %1271 = vmatprep.subr.mxu0 %v1265
        %1272 = vmatpush1.msra.mxu0 %v1263
        %1273 = vmatprep.subr.mxu0 0.0
        %1274 = vmatpush1.msra.mxu0 0.0
        %1275 = vmatprep.subr.mxu0 0.0
        %1276 = vmatpush1.msra.mxu0 0.0
        %1277 = vmatprep.subr.mxu0 0.0
        %1278 = vmatpush1.msra.mxu0 0.0
        %1279 = vmatprep.subr.mxu0 0.0
        %1280 = vmatpush1.msra.mxu0 0.0
        %1281 = vmatprep.subr.mxu0 0.0
        %1282 = vmatpush1.msra.mxu0 0.0
        %1283 = vmatprep.subr.mxu0 0.0
        %1284 = vmatpush1.msra.mxu0 0.0
        %1285 = vmatprep.subr.mxu0 0.0
        %1286 = vmatpush1.msra.mxu0 0.0
        %1287 = vmatprep.subr.mxu0 0.0
        %1288 = vmatpush1.msra.mxu0 0.0
        %1289 = vmatprep.subr.mxu0 0.0
        %1290 = vmatpush1.msra.mxu0 0.0
        %1291 = vmatprep.subr.mxu0 0.0
        %1292 = vmatpush1.msra.mxu0 0.0
        %1293 = vmatprep.subr.mxu0 0.0
        %1294 = vmatpush1.msra.mxu0 0.0
        %1295 = vmatprep.subr.mxu0 0.0
        %1296 = vmatpush1.msra.mxu0 0.0
        %1297 = vmatprep.subr.mxu0 0.0
        %1298 = vmatpush1.msra.mxu0 0.0
        %1299 = vmatprep.subr.mxu0 0.0
        %1300 = vmatpush1.msra.mxu0 0.0
        %1301 = vmatprep.subr.mxu0 0.0
        %1302 = vmatpush1.msra.mxu0 0.0
        %1303 = vmatprep.subr.mxu0 0.0
        %1304 = vmatpush1.msra.mxu0 0.0
        %1305 = vmatprep.subr.mxu0 0.0
        %1306 = vmatpush1.msra.mxu0 0.0
        %1307 = vmatprep.subr.mxu0 0.0
        %1308 = vmatpush1.msra.mxu0 0.0
        %1309 = vmatprep.subr.mxu0 0.0
        %1310 = vmatpush1.msra.mxu0 0.0
        %1311 = vmatprep.subr.mxu0 0.0
        %1312 = vmatpush1.msra.mxu0 0.0
        %1313 = vmatprep.subr.mxu0 0.0
        %1314 = vmatpush1.msra.mxu0 0.0
        %1315 = vmatprep.subr.mxu0 0.0
        %1316 = vmatpush1.msra.mxu0 0.0
        %1317 = vmatprep.subr.mxu0 0.0
        %1318 = vmatpush1.msra.mxu0 0.0
        %1319 = vmatprep.subr.mxu0 0.0
        %1320 = vmatpush1.msra.mxu0 0.0
        %1321 = vmatprep.subr.mxu0 0.0
        %1322 = vmatpush1.msra.mxu0 0.0
        %1323 = vmatprep.subr.mxu0 0.0
        %1324 = vmatpush1.msra.mxu0 0.0
        %1325 = vmatprep.subr.mxu0 0.0
        %1326 = vmatpush1.msra.mxu0 0.0
        %1327 = vmatprep.subr.mxu0 0.0
        %1328 = vmatpush1.msra.mxu0 0.0
        %1329 = vmatprep.subr.mxu0 0.0
        %1330 = vmatpush1.msra.mxu0 0.0
        %1331 = vmatprep.subr.mxu0 0.0
        %1332 = vmatpush1.msra.mxu0 0.0
        %1333 = vmatprep.subr.mxu0 0.0
        %1334 = vmatpush1.msra.mxu0 0.0
        %1335 = vmatprep.mubr.f32.mxu0 0.0
        %1336 = vmatmul.mubr.f32.gmra.mrb[0].mxu0 %v374
        %v1337 = vpop.f32.mrb[0].mxu0
        %v1338 = vadd.f32 %v355, %v1337
        %v1339 = vpop.f32.mrb[0].mxu0
        %v1340 = vadd.f32 %v355, %v1339
        %1341 = vmatprep.mubr.f32.mxu0 0.0
        %1342 = vmatmul.mubr.f32.gmra.mrb[0].mxu0 %v377
        %v1343 = vpop.f32.mrb[0].mxu0
        %v1344 = vadd.f32 %v360, %v1343
        %v1345 = vpop.f32.mrb[0].mxu0
        %v1346 = vadd.f32 %v360, %v1345
        %1347 = vmatprep.mubr.f32.mxu0 0.0
        %1348 = vmatmul.mubr.f32.gmra.mrb[0].mxu0 %v380
        %v1349 = vpop.f32.mrb[0].mxu0
        %v1350 = vadd.f32 %v365, %v1349
        %v1351 = vpop.f32.mrb[0].mxu0
        %v1352 = vadd.f32 %v365, %v1351
        %1353 = vmatprep.mubr.f32.mxu0 0.0
        %1354 = vmatmul.mubr.f32.gmra.mrb[0].mxu0 %v383
        %v1355 = vpop.f32.mrb[0].mxu0
        %v1356 = vadd.f32 %v370, %v1355
        %v1357 = vpop.f32.mrb[0].mxu0
        %v1358 = vadd.f32 %v370, %v1357
        %1359 = vdwg.mxu0
        %1360 = vmatprep.subr.mxu0 %v1269
        %1361 = vmatpush1.msra.mxu0 %v1267
        %1362 = vmatprep.subr.mxu0 0.0
        %1363 = vmatpush1.msra.mxu0 0.0
        %1364 = vmatprep.subr.mxu0 0.0
        %1365 = vmatpush1.msra.mxu0 0.0
        %1366 = vmatprep.subr.mxu0 0.0
        %1367 = vmatpush1.msra.mxu0 0.0
        %1368 = vmatprep.subr.mxu0 0.0
        %1369 = vmatpush1.msra.mxu0 0.0
        %1370 = vmatprep.subr.mxu0 0.0
        %1371 = vmatpush1.msra.mxu0 0.0
        %1372 = vmatprep.subr.mxu0 0.0
        %1373 = vmatpush1.msra.mxu0 0.0
        %1374 = vmatprep.subr.mxu0 0.0
        %1375 = vmatpush1.msra.mxu0 0.0
        %1376 = vmatprep.subr.mxu0 0.0
        %1377 = vmatpush1.msra.mxu0 0.0
        %1378 = vmatprep.subr.mxu0 0.0
        %1379 = vmatpush1.msra.mxu0 0.0
        %1380 = vmatprep.subr.mxu0 0.0
        %1381 = vmatpush1.msra.mxu0 0.0
        %1382 = vmatprep.subr.mxu0 0.0
        %1383 = vmatpush1.msra.mxu0 0.0
        %1384 = vmatprep.subr.mxu0 0.0
        %1385 = vmatpush1.msra.mxu0 0.0
        %1386 = vmatprep.subr.mxu0 0.0
        %1387 = vmatpush1.msra.mxu0 0.0
        %1388 = vmatprep.subr.mxu0 0.0
        %1389 = vmatpush1.msra.mxu0 0.0
        %1390 = vmatprep.subr.mxu0 0.0
        %1391 = vmatpush1.msra.mxu0 0.0
        %1392 = vmatprep.subr.mxu0 0.0
        %1393 = vmatpush1.msra.mxu0 0.0
        %1394 = vmatprep.subr.mxu0 0.0
        %1395 = vmatpush1.msra.mxu0 0.0
        %1396 = vmatprep.subr.mxu0 0.0
        %1397 = vmatpush1.msra.mxu0 0.0
        %1398 = vmatprep.subr.mxu0 0.0
        %1399 = vmatpush1.msra.mxu0 0.0
        %1400 = vmatprep.subr.mxu0 0.0
        %1401 = vmatpush1.msra.mxu0 0.0
        %1402 = vmatprep.subr.mxu0 0.0
        %1403 = vmatpush1.msra.mxu0 0.0
        %1404 = vmatprep.subr.mxu0 0.0
        %1405 = vmatpush1.msra.mxu0 0.0
        %1406 = vmatprep.subr.mxu0 0.0
        %1407 = vmatpush1.msra.mxu0 0.0
        %1408 = vmatprep.subr.mxu0 0.0
        %1409 = vmatpush1.msra.mxu0 0.0
        %1410 = vmatprep.subr.mxu0 0.0
        %1411 = vmatpush1.msra.mxu0 0.0
        %1412 = vmatprep.subr.mxu0 0.0
        %1413 = vmatpush1.msra.mxu0 0.0
        %1414 = vmatprep.subr.mxu0 0.0
        %1415 = vmatpush1.msra.mxu0 0.0
        %1416 = vmatprep.subr.mxu0 0.0
        %1417 = vmatpush1.msra.mxu0 0.0
        %1418 = vmatprep.subr.mxu0 0.0
        %1419 = vmatpush1.msra.mxu0 0.0
        %1420 = vmatprep.subr.mxu0 0.0
        %1421 = vmatpush1.msra.mxu0 0.0
        %1422 = vmatprep.subr.mxu0 0.0
        %1423 = vmatpush1.msra.mxu0 0.0
        %1424 = vmatprep.mubr.f32.mxu0 0.0
        %1425 = vmatmul.mubr.f32.gmra.mrb[0].mxu0 %v374
        %v1426 = vpop.f32.mrb[0].mxu0
        %v1427 = vadd.f32 %v355, %v1426
        %v1428 = vpop.f32.mrb[0].mxu0
        %v1429 = vadd.f32 %v355, %v1428
        %1430 = vmatprep.mubr.f32.mxu0 0.0
        %1431 = vmatmul.mubr.f32.gmra.mrb[0].mxu0 %v377
        %v1432 = vpop.f32.mrb[0].mxu0
        %v1433 = vadd.f32 %v360, %v1432
        %v1434 = vpop.f32.mrb[0].mxu0
        %v1435 = vadd.f32 %v360, %v1434
        %1436 = vmatprep.mubr.f32.mxu0 0.0
        %1437 = vmatmul.mubr.f32.gmra.mrb[0].mxu0 %v380
        %v1438 = vpop.f32.mrb[0].mxu0
        %v1439 = vadd.f32 %v365, %v1438
        %v1440 = vpop.f32.mrb[0].mxu0
        %v1441 = vadd.f32 %v365, %v1440
        %1442 = vmatprep.mubr.f32.mxu0 0.0
        %1443 = vmatmul.mubr.f32.gmra.mrb[0].mxu0 %v383
        %v1444 = vpop.f32.mrb[0].mxu0
        %v1445 = vadd.f32 %v370, %v1444
        %v1446 = vpop.f32.mrb[0].mxu0
        %v1447 = vadd.f32 %v370, %v1446
        %1448 = vdwg.mxu0
        %1449 = vst [vmem:[#allocation2 + $0x200] sm:$0xff] %v1338
        %1450 = vst [vmem:[#allocation2 + $0x208] sm:$0xff] %v1340
        %1451 = vst [vmem:[#allocation2 + $0x210] sm:$0xff] %v1427
        %1452 = vst [vmem:[#allocation2 + $0x218] sm:$0xff] %v1429
        %1453 = vst [vmem:[#allocation2 + $0x220] sm:$0xff] %v1344
        %1454 = vst [vmem:[#allocation2 + $0x228] sm:$0xff] %v1346
        %1455 = vst [vmem:[#allocation2 + $0x230] sm:$0xff] %v1433
        %1456 = vst [vmem:[#allocation2 + $0x238] sm:$0xff] %v1435
        %1457 = vst [vmem:[#allocation2 + $0x240] sm:$0xff] %v1350
        %1458 = vst [vmem:[#allocation2 + $0x248] sm:$0xff] %v1352
        %1459 = vst [vmem:[#allocation2 + $0x250] sm:$0xff] %v1439
        %1460 = vst [vmem:[#allocation2 + $0x258] sm:$0xff] %v1441
        %1461 = vst [vmem:[#allocation2 + $0x260] sm:$0xff] %v1356
        %1462 = vst [vmem:[#allocation2 + $0x268] sm:$0xff] %v1358
        %1463 = vst [vmem:[#allocation2 + $0x270] sm:$0xff] %v1445
        %1464 = vst [vmem:[#allocation2 + $0x278] sm:$0xff] %v1447
        %v1465 = vld [vmem:[%s301 + $0x20] sm:$0x80]
        %v1466 = vld [vmem:[%s301 + $0x28] sm:$0x80]
        %v1467 = vld [vmem:[%s301 + $0x30] sm:$0x80]
        %v1468 = vld [vmem:[%s301 + $0x38] sm:$0x80]
        %v1469 = vld [vmem:[%s301 + $0x40] sm:$0x3]
        %v1470 = vld [vmem:[%s301 + $0x48] sm:$0x3]
        %v1471 = vld [vmem:[%s301 + $0x50] sm:$0x3]
        %v1472 = vld [vmem:[%s301 + $0x58] sm:$0x3]
        %vm1481 = vcmask 1040384
        %v1482 = vrot.slane %v1465, 7
        %v1483 = vrot.slane %v1469, 7
        %v1484 = vsel %vm1481, %v1482, %v1483
        %v1485 = vrot.slane %v1466, 7
        %v1486 = vrot.slane %v1470, 7
        %v1487 = vsel %vm1481, %v1485, %v1486
        %v1488 = vrot.slane %v1467, 7
        %v1489 = vrot.slane %v1471, 7
        %v1490 = vsel %vm1481, %v1488, %v1489
        %v1491 = vrot.slane %v1468, 7
        %v1492 = vrot.slane %v1472, 7
        %v1493 = vsel %vm1481, %v1491, %v1492
        %v1494 = vsel %vm385, %v1484, 0
        %v1496 = vsel %vm385, %v1487, 0
        %v1498 = vsel %vm385, %v1490, 0
        %v1500 = vsel %vm385, %v1493, 0
        %1502 = vmatprep.subr.mxu0 %v1496
        %1503 = vmatpush1.msra.mxu0 %v1494
        %1504 = vmatprep.subr.mxu0 0.0
        %1505 = vmatpush1.msra.mxu0 0.0
        %1506 = vmatprep.subr.mxu0 0.0
        %1507 = vmatpush1.msra.mxu0 0.0
        %1508 = vmatprep.subr.mxu0 0.0
        %1509 = vmatpush1.msra.mxu0 0.0
        %1510 = vmatprep.subr.mxu0 0.0
        %1511 = vmatpush1.msra.mxu0 0.0
        %1512 = vmatprep.subr.mxu0 0.0
        %1513 = vmatpush1.msra.mxu0 0.0
        %1514 = vmatprep.subr.mxu0 0.0
        %1515 = vmatpush1.msra.mxu0 0.0
        %1516 = vmatprep.subr.mxu0 0.0
        %1517 = vmatpush1.msra.mxu0 0.0
        %1518 = vmatprep.subr.mxu0 0.0
        %1519 = vmatpush1.msra.mxu0 0.0
        %1520 = vmatprep.subr.mxu0 0.0
        %1521 = vmatpush1.msra.mxu0 0.0
        %1522 = vmatprep.subr.mxu0 0.0
        %1523 = vmatpush1.msra.mxu0 0.0
        %1524 = vmatprep.subr.mxu0 0.0
        %1525 = vmatpush1.msra.mxu0 0.0
        %1526 = vmatprep.subr.mxu0 0.0
        %1527 = vmatpush1.msra.mxu0 0.0
        %1528 = vmatprep.subr.mxu0 0.0
        %1529 = vmatpush1.msra.mxu0 0.0
        %1530 = vmatprep.subr.mxu0 0.0
        %1531 = vmatpush1.msra.mxu0 0.0
        %1532 = vmatprep.subr.mxu0 0.0
        %1533 = vmatpush1.msra.mxu0 0.0
        %1534 = vmatprep.subr.mxu0 0.0
        %1535 = vmatpush1.msra.mxu0 0.0
        %1536 = vmatprep.subr.mxu0 0.0
        %1537 = vmatpush1.msra.mxu0 0.0
        %1538 = vmatprep.subr.mxu0 0.0
        %1539 = vmatpush1.msra.mxu0 0.0
        %1540 = vmatprep.subr.mxu0 0.0
        %1541 = vmatpush1.msra.mxu0 0.0
        %1542 = vmatprep.subr.mxu0 0.0
        %1543 = vmatpush1.msra.mxu0 0.0
        %1544 = vmatprep.subr.mxu0 0.0
        %1545 = vmatpush1.msra.mxu0 0.0
        %1546 = vmatprep.subr.mxu0 0.0
        %1547 = vmatpush1.msra.mxu0 0.0
        %1548 = vmatprep.subr.mxu0 0.0
        %1549 = vmatpush1.msra.mxu0 0.0
        %1550 = vmatprep.subr.mxu0 0.0
        %1551 = vmatpush1.msra.mxu0 0.0
        %1552 = vmatprep.subr.mxu0 0.0
        %1553 = vmatpush1.msra.mxu0 0.0
        %1554 = vmatprep.subr.mxu0 0.0
        %1555 = vmatpush1.msra.mxu0 0.0
        %1556 = vmatprep.subr.mxu0 0.0
        %1557 = vmatpush1.msra.mxu0 0.0
        %1558 = vmatprep.subr.mxu0 0.0
        %1559 = vmatpush1.msra.mxu0 0.0
        %1560 = vmatprep.subr.mxu0 0.0
        %1561 = vmatpush1.msra.mxu0 0.0
        %1562 = vmatprep.subr.mxu0 0.0
        %1563 = vmatpush1.msra.mxu0 0.0
        %1564 = vmatprep.subr.mxu0 0.0
        %1565 = vmatpush1.msra.mxu0 0.0
        %1566 = vmatprep.mubr.f32.mxu0 0.0
        %1567 = vmatmul.mubr.f32.gmra.mrb[0].mxu0 %v374
        %v1568 = vpop.f32.mrb[0].mxu0
        %v1569 = vadd.f32 %v355, %v1568
        %v1570 = vpop.f32.mrb[0].mxu0
        %v1571 = vadd.f32 %v355, %v1570
        %1572 = vmatprep.mubr.f32.mxu0 0.0
        %1573 = vmatmul.mubr.f32.gmra.mrb[0].mxu0 %v377
        %v1574 = vpop.f32.mrb[0].mxu0
        %v1575 = vadd.f32 %v360, %v1574
        %v1576 = vpop.f32.mrb[0].mxu0
        %v1577 = vadd.f32 %v360, %v1576
        %1578 = vmatprep.mubr.f32.mxu0 0.0
        %1579 = vmatmul.mubr.f32.gmra.mrb[0].mxu0 %v380
        %v1580 = vpop.f32.mrb[0].mxu0
        %v1581 = vadd.f32 %v365, %v1580
        %v1582 = vpop.f32.mrb[0].mxu0
        %v1583 = vadd.f32 %v365, %v1582
        %1584 = vmatprep.mubr.f32.mxu0 0.0
        %1585 = vmatmul.mubr.f32.gmra.mrb[0].mxu0 %v383
        %v1586 = vpop.f32.mrb[0].mxu0
        %v1587 = vadd.f32 %v370, %v1586
        %v1588 = vpop.f32.mrb[0].mxu0
        %v1589 = vadd.f32 %v370, %v1588
        %1590 = vdwg.mxu0
        %1591 = vmatprep.subr.mxu0 %v1500
        %1592 = vmatpush1.msra.mxu0 %v1498
        %1593 = vmatprep.subr.mxu0 0.0
        %1594 = vmatpush1.msra.mxu0 0.0
        %1595 = vmatprep.subr.mxu0 0.0
        %1596 = vmatpush1.msra.mxu0 0.0
        %1597 = vmatprep.subr.mxu0 0.0
        %1598 = vmatpush1.msra.mxu0 0.0
        %1599 = vmatprep.subr.mxu0 0.0
        %1600 = vmatpush1.msra.mxu0 0.0
        %1601 = vmatprep.subr.mxu0 0.0
        %1602 = vmatpush1.msra.mxu0 0.0
        %1603 = vmatprep.subr.mxu0 0.0
        %1604 = vmatpush1.msra.mxu0 0.0
        %1605 = vmatprep.subr.mxu0 0.0
        %1606 = vmatpush1.msra.mxu0 0.0
        %1607 = vmatprep.subr.mxu0 0.0
        %1608 = vmatpush1.msra.mxu0 0.0
        %1609 = vmatprep.subr.mxu0 0.0
        %1610 = vmatpush1.msra.mxu0 0.0
        %1611 = vmatprep.subr.mxu0 0.0
        %1612 = vmatpush1.msra.mxu0 0.0
        %1613 = vmatprep.subr.mxu0 0.0
        %1614 = vmatpush1.msra.mxu0 0.0
        %1615 = vmatprep.subr.mxu0 0.0
        %1616 = vmatpush1.msra.mxu0 0.0
        %1617 = vmatprep.subr.mxu0 0.0
        %1618 = vmatpush1.msra.mxu0 0.0
        %1619 = vmatprep.subr.mxu0 0.0
        %1620 = vmatpush1.msra.mxu0 0.0
        %1621 = vmatprep.subr.mxu0 0.0
        %1622 = vmatpush1.msra.mxu0 0.0
        %1623 = vmatprep.subr.mxu0 0.0
        %1624 = vmatpush1.msra.mxu0 0.0
        %1625 = vmatprep.subr.mxu0 0.0
        %1626 = vmatpush1.msra.mxu0 0.0
        %1627 = vmatprep.subr.mxu0 0.0
        %1628 = vmatpush1.msra.mxu0 0.0
        %1629 = vmatprep.subr.mxu0 0.0
        %1630 = vmatpush1.msra.mxu0 0.0
        %1631 = vmatprep.subr.mxu0 0.0
        %1632 = vmatpush1.msra.mxu0 0.0
        %1633 = vmatprep.subr.mxu0 0.0
        %1634 = vmatpush1.msra.mxu0 0.0
        %1635 = vmatprep.subr.mxu0 0.0
        %1636 = vmatpush1.msra.mxu0 0.0
        %1637 = vmatprep.subr.mxu0 0.0
        %1638 = vmatpush1.msra.mxu0 0.0
        %1639 = vmatprep.subr.mxu0 0.0
        %1640 = vmatpush1.msra.mxu0 0.0
        %1641 = vmatprep.subr.mxu0 0.0
        %1642 = vmatpush1.msra.mxu0 0.0
        %1643 = vmatprep.subr.mxu0 0.0
        %1644 = vmatpush1.msra.mxu0 0.0
        %1645 = vmatprep.subr.mxu0 0.0
        %1646 = vmatpush1.msra.mxu0 0.0
        %1647 = vmatprep.subr.mxu0 0.0
        %1648 = vmatpush1.msra.mxu0 0.0
        %1649 = vmatprep.subr.mxu0 0.0
        %1650 = vmatpush1.msra.mxu0 0.0
        %1651 = vmatprep.subr.mxu0 0.0
        %1652 = vmatpush1.msra.mxu0 0.0
        %1653 = vmatprep.subr.mxu0 0.0
        %1654 = vmatpush1.msra.mxu0 0.0
        %1655 = vmatprep.mubr.f32.mxu0 0.0
        %1656 = vmatmul.mubr.f32.gmra.mrb[0].mxu0 %v374
        %v1657 = vpop.f32.mrb[0].mxu0
        %v1658 = vadd.f32 %v355, %v1657
        %v1659 = vpop.f32.mrb[0].mxu0
        %v1660 = vadd.f32 %v355, %v1659
        %1661 = vmatprep.mubr.f32.mxu0 0.0
        %1662 = vmatmul.mubr.f32.gmra.mrb[0].mxu0 %v377
        %v1663 = vpop.f32.mrb[0].mxu0
        %v1664 = vadd.f32 %v360, %v1663
        %v1665 = vpop.f32.mrb[0].mxu0
        %v1666 = vadd.f32 %v360, %v1665
        %1667 = vmatprep.mubr.f32.mxu0 0.0
        %1668 = vmatmul.mubr.f32.gmra.mrb[0].mxu0 %v380
        %v1669 = vpop.f32.mrb[0].mxu0
        %v1670 = vadd.f32 %v365, %v1669
        %v1671 = vpop.f32.mrb[0].mxu0
        %v1672 = vadd.f32 %v365, %v1671
        %1673 = vmatprep.mubr.f32.mxu0 0.0
        %1674 = vmatmul.mubr.f32.gmra.mrb[0].mxu0 %v383
        %v1675 = vpop.f32.mrb[0].mxu0
        %v1676 = vadd.f32 %v370, %v1675
        %v1677 = vpop.f32.mrb[0].mxu0
        %v1678 = vadd.f32 %v370, %v1677
        %1679 = vdwg.mxu0
        %1680 = vst [vmem:[#allocation2 + $0x280] sm:$0xff] %v1569
        %1681 = vst [vmem:[#allocation2 + $0x288] sm:$0xff] %v1571
        %1682 = vst [vmem:[#allocation2 + $0x290] sm:$0xff] %v1658
        %1683 = vst [vmem:[#allocation2 + $0x298] sm:$0xff] %v1660
        %1684 = vst [vmem:[#allocation2 + $0x2a0] sm:$0xff] %v1575
        %1685 = vst [vmem:[#allocation2 + $0x2a8] sm:$0xff] %v1577
        %1686 = vst [vmem:[#allocation2 + $0x2b0] sm:$0xff] %v1664
        %1687 = vst [vmem:[#allocation2 + $0x2b8] sm:$0xff] %v1666
        %1688 = vst [vmem:[#allocation2 + $0x2c0] sm:$0xff] %v1581
        %1689 = vst [vmem:[#allocation2 + $0x2c8] sm:$0xff] %v1583
        %1690 = vst [vmem:[#allocation2 + $0x2d0] sm:$0xff] %v1670
        %1691 = vst [vmem:[#allocation2 + $0x2d8] sm:$0xff] %v1672
        %1692 = vst [vmem:[#allocation2 + $0x2e0] sm:$0xff] %v1587
        %1693 = vst [vmem:[#allocation2 + $0x2e8] sm:$0xff] %v1589
        %1694 = vst [vmem:[#allocation2 + $0x2f0] sm:$0xff] %v1676
        %1695 = vst [vmem:[#allocation2 + $0x2f8] sm:$0xff] %v1678
        %v1696 = vld [vmem:[%s301 + $0x40] sm:$0x1c]
        %v1697 = vld [vmem:[%s301 + $0x48] sm:$0x1c]
        %v1698 = vld [vmem:[%s301 + $0x50] sm:$0x1c]
        %v1699 = vld [vmem:[%s301 + $0x58] sm:$0x1c]
        %v1704 = vrot.slane %v1696, 2
        %v1705 = vrot.slane %v1697, 2
        %v1706 = vrot.slane %v1698, 2
        %v1707 = vrot.slane %v1699, 2
        %v1708 = vsel %vm385, %v1704, 0
        %v1710 = vsel %vm385, %v1705, 0
        %v1712 = vsel %vm385, %v1706, 0
        %v1714 = vsel %vm385, %v1707, 0
        %1716 = vmatprep.subr.mxu0 %v1710
        %1717 = vmatpush1.msra.mxu0 %v1708
        %1718 = vmatprep.subr.mxu0 0.0
        %1719 = vmatpush1.msra.mxu0 0.0
        %1720 = vmatprep.subr.mxu0 0.0
        %1721 = vmatpush1.msra.mxu0 0.0
        %1722 = vmatprep.subr.mxu0 0.0
        %1723 = vmatpush1.msra.mxu0 0.0
        %1724 = vmatprep.subr.mxu0 0.0
        %1725 = vmatpush1.msra.mxu0 0.0
        %1726 = vmatprep.subr.mxu0 0.0
        %1727 = vmatpush1.msra.mxu0 0.0
        %1728 = vmatprep.subr.mxu0 0.0
        %1729 = vmatpush1.msra.mxu0 0.0
        %1730 = vmatprep.subr.mxu0 0.0
        %1731 = vmatpush1.msra.mxu0 0.0
        %1732 = vmatprep.subr.mxu0 0.0
        %1733 = vmatpush1.msra.mxu0 0.0
        %1734 = vmatprep.subr.mxu0 0.0
        %1735 = vmatpush1.msra.mxu0 0.0
        %1736 = vmatprep.subr.mxu0 0.0
        %1737 = vmatpush1.msra.mxu0 0.0
        %1738 = vmatprep.subr.mxu0 0.0
        %1739 = vmatpush1.msra.mxu0 0.0
        %1740 = vmatprep.subr.mxu0 0.0
        %1741 = vmatpush1.msra.mxu0 0.0
        %1742 = vmatprep.subr.mxu0 0.0
        %1743 = vmatpush1.msra.mxu0 0.0
        %1744 = vmatprep.subr.mxu0 0.0
        %1745 = vmatpush1.msra.mxu0 0.0
        %1746 = vmatprep.subr.mxu0 0.0
        %1747 = vmatpush1.msra.mxu0 0.0
        %1748 = vmatprep.subr.mxu0 0.0
        %1749 = vmatpush1.msra.mxu0 0.0
        %1750 = vmatprep.subr.mxu0 0.0
        %1751 = vmatpush1.msra.mxu0 0.0
        %1752 = vmatprep.subr.mxu0 0.0
        %1753 = vmatpush1.msra.mxu0 0.0
        %1754 = vmatprep.subr.mxu0 0.0
        %1755 = vmatpush1.msra.mxu0 0.0
        %1756 = vmatprep.subr.mxu0 0.0
        %1757 = vmatpush1.msra.mxu0 0.0
        %1758 = vmatprep.subr.mxu0 0.0
        %1759 = vmatpush1.msra.mxu0 0.0
        %1760 = vmatprep.subr.mxu0 0.0
        %1761 = vmatpush1.msra.mxu0 0.0
        %1762 = vmatprep.subr.mxu0 0.0
        %1763 = vmatpush1.msra.mxu0 0.0
        %1764 = vmatprep.subr.mxu0 0.0
        %1765 = vmatpush1.msra.mxu0 0.0
        %1766 = vmatprep.subr.mxu0 0.0
        %1767 = vmatpush1.msra.mxu0 0.0
        %1768 = vmatprep.subr.mxu0 0.0
        %1769 = vmatpush1.msra.mxu0 0.0
        %1770 = vmatprep.subr.mxu0 0.0
        %1771 = vmatpush1.msra.mxu0 0.0
        %1772 = vmatprep.subr.mxu0 0.0
        %1773 = vmatpush1.msra.mxu0 0.0
        %1774 = vmatprep.subr.mxu0 0.0
        %1775 = vmatpush1.msra.mxu0 0.0
        %1776 = vmatprep.subr.mxu0 0.0
        %1777 = vmatpush1.msra.mxu0 0.0
        %1778 = vmatprep.subr.mxu0 0.0
        %1779 = vmatpush1.msra.mxu0 0.0
        %1780 = vmatprep.mubr.f32.mxu0 0.0
        %1781 = vmatmul.mubr.f32.gmra.mrb[0].mxu0 %v374
        %v1782 = vpop.f32.mrb[0].mxu0
        %v1783 = vadd.f32 %v355, %v1782
        %v1784 = vpop.f32.mrb[0].mxu0
        %v1785 = vadd.f32 %v355, %v1784
        %1786 = vmatprep.mubr.f32.mxu0 0.0
        %1787 = vmatmul.mubr.f32.gmra.mrb[0].mxu0 %v377
        %v1788 = vpop.f32.mrb[0].mxu0
        %v1789 = vadd.f32 %v360, %v1788
        %v1790 = vpop.f32.mrb[0].mxu0
        %v1791 = vadd.f32 %v360, %v1790
        %1792 = vmatprep.mubr.f32.mxu0 0.0
        %1793 = vmatmul.mubr.f32.gmra.mrb[0].mxu0 %v380
        %v1794 = vpop.f32.mrb[0].mxu0
        %v1795 = vadd.f32 %v365, %v1794
        %v1796 = vpop.f32.mrb[0].mxu0
        %v1797 = vadd.f32 %v365, %v1796
        %1798 = vmatprep.mubr.f32.mxu0 0.0
        %1799 = vmatmul.mubr.f32.gmra.mrb[0].mxu0 %v383
        %v1800 = vpop.f32.mrb[0].mxu0
        %v1801 = vadd.f32 %v370, %v1800
        %v1802 = vpop.f32.mrb[0].mxu0
        %v1803 = vadd.f32 %v370, %v1802
        %1804 = vdwg.mxu0
        %1805 = vmatprep.subr.mxu0 %v1714
        %1806 = vmatpush1.msra.mxu0 %v1712
        %1807 = vmatprep.subr.mxu0 0.0
        %1808 = vmatpush1.msra.mxu0 0.0
        %1809 = vmatprep.subr.mxu0 0.0
        %1810 = vmatpush1.msra.mxu0 0.0
        %1811 = vmatprep.subr.mxu0 0.0
        %1812 = vmatpush1.msra.mxu0 0.0
        %1813 = vmatprep.subr.mxu0 0.0
        %1814 = vmatpush1.msra.mxu0 0.0
        %1815 = vmatprep.subr.mxu0 0.0
        %1816 = vmatpush1.msra.mxu0 0.0
        %1817 = vmatprep.subr.mxu0 0.0
        %1818 = vmatpush1.msra.mxu0 0.0
        %1819 = vmatprep.subr.mxu0 0.0
        %1820 = vmatpush1.msra.mxu0 0.0
        %1821 = vmatprep.subr.mxu0 0.0
        %1822 = vmatpush1.msra.mxu0 0.0
        %1823 = vmatprep.subr.mxu0 0.0
        %1824 = vmatpush1.msra.mxu0 0.0
        %1825 = vmatprep.subr.mxu0 0.0
        %1826 = vmatpush1.msra.mxu0 0.0
        %1827 = vmatprep.subr.mxu0 0.0
        %1828 = vmatpush1.msra.mxu0 0.0
        %1829 = vmatprep.subr.mxu0 0.0
        %1830 = vmatpush1.msra.mxu0 0.0
        %1831 = vmatprep.subr.mxu0 0.0
        %1832 = vmatpush1.msra.mxu0 0.0
        %1833 = vmatprep.subr.mxu0 0.0
        %1834 = vmatpush1.msra.mxu0 0.0
        %1835 = vmatprep.subr.mxu0 0.0
        %1836 = vmatpush1.msra.mxu0 0.0
        %1837 = vmatprep.subr.mxu0 0.0
        %1838 = vmatpush1.msra.mxu0 0.0
        %1839 = vmatprep.subr.mxu0 0.0
        %1840 = vmatpush1.msra.mxu0 0.0
        %1841 = vmatprep.subr.mxu0 0.0
        %1842 = vmatpush1.msra.mxu0 0.0
        %1843 = vmatprep.subr.mxu0 0.0
        %1844 = vmatpush1.msra.mxu0 0.0
        %1845 = vmatprep.subr.mxu0 0.0
        %1846 = vmatpush1.msra.mxu0 0.0
        %1847 = vmatprep.subr.mxu0 0.0
        %1848 = vmatpush1.msra.mxu0 0.0
        %1849 = vmatprep.subr.mxu0 0.0
        %1850 = vmatpush1.msra.mxu0 0.0
        %1851 = vmatprep.subr.mxu0 0.0
        %1852 = vmatpush1.msra.mxu0 0.0
        %1853 = vmatprep.subr.mxu0 0.0
        %1854 = vmatpush1.msra.mxu0 0.0
        %1855 = vmatprep.subr.mxu0 0.0
        %1856 = vmatpush1.msra.mxu0 0.0
        %1857 = vmatprep.subr.mxu0 0.0
        %1858 = vmatpush1.msra.mxu0 0.0
        %1859 = vmatprep.subr.mxu0 0.0
        %1860 = vmatpush1.msra.mxu0 0.0
        %1861 = vmatprep.subr.mxu0 0.0
        %1862 = vmatpush1.msra.mxu0 0.0
        %1863 = vmatprep.subr.mxu0 0.0
        %1864 = vmatpush1.msra.mxu0 0.0
        %1865 = vmatprep.subr.mxu0 0.0
        %1866 = vmatpush1.msra.mxu0 0.0
        %1867 = vmatprep.subr.mxu0 0.0
        %1868 = vmatpush1.msra.mxu0 0.0
        %1869 = vmatprep.mubr.f32.mxu0 0.0
        %1870 = vmatmul.mubr.f32.gmra.mrb[0].mxu0 %v374
        %v1871 = vpop.f32.mrb[0].mxu0
        %v1872 = vadd.f32 %v355, %v1871
        %v1873 = vpop.f32.mrb[0].mxu0
        %v1874 = vadd.f32 %v355, %v1873
        %1875 = vmatprep.mubr.f32.mxu0 0.0
        %1876 = vmatmul.mubr.f32.gmra.mrb[0].mxu0 %v377
        %v1877 = vpop.f32.mrb[0].mxu0
        %v1878 = vadd.f32 %v360, %v1877
        %v1879 = vpop.f32.mrb[0].mxu0
        %v1880 = vadd.f32 %v360, %v1879
        %1881 = vmatprep.mubr.f32.mxu0 0.0
        %1882 = vmatmul.mubr.f32.gmra.mrb[0].mxu0 %v380
        %v1883 = vpop.f32.mrb[0].mxu0
        %v1884 = vadd.f32 %v365, %v1883
        %v1885 = vpop.f32.mrb[0].mxu0
        %v1886 = vadd.f32 %v365, %v1885
        %1887 = vmatprep.mubr.f32.mxu0 0.0
        %1888 = vmatmul.mubr.f32.gmra.mrb[0].mxu0 %v383
        %v1889 = vpop.f32.mrb[0].mxu0
        %v1890 = vadd.f32 %v370, %v1889
        %v1891 = vpop.f32.mrb[0].mxu0
        %v1892 = vadd.f32 %v370, %v1891
        %1893 = vdwg.mxu0
        %1894 = vst [vmem:[#allocation2 + $0x300] sm:$0xff] %v1783
        %1895 = vst [vmem:[#allocation2 + $0x308] sm:$0xff] %v1785
        %1896 = vst [vmem:[#allocation2 + $0x310] sm:$0xff] %v1872
        %1897 = vst [vmem:[#allocation2 + $0x318] sm:$0xff] %v1874
        %1898 = vst [vmem:[#allocation2 + $0x320] sm:$0xff] %v1789
        %1899 = vst [vmem:[#allocation2 + $0x328] sm:$0xff] %v1791
        %1900 = vst [vmem:[#allocation2 + $0x330] sm:$0xff] %v1878
        %1901 = vst [vmem:[#allocation2 + $0x338] sm:$0xff] %v1880
        %1902 = vst [vmem:[#allocation2 + $0x340] sm:$0xff] %v1795
        %1903 = vst [vmem:[#allocation2 + $0x348] sm:$0xff] %v1797
        %1904 = vst [vmem:[#allocation2 + $0x350] sm:$0xff] %v1884
        %1905 = vst [vmem:[#allocation2 + $0x358] sm:$0xff] %v1886
        %1906 = vst [vmem:[#allocation2 + $0x360] sm:$0xff] %v1801
        %1907 = vst [vmem:[#allocation2 + $0x368] sm:$0xff] %v1803
        %1908 = vst [vmem:[#allocation2 + $0x370] sm:$0xff] %v1890
        %1909 = vst [vmem:[#allocation2 + $0x378] sm:$0xff] %v1892
        %v1910 = vld [vmem:[%s301 + $0x40] sm:$0xe0]
        %v1911 = vld [vmem:[%s301 + $0x48] sm:$0xe0]
        %v1912 = vld [vmem:[%s301 + $0x50] sm:$0xe0]
        %v1913 = vld [vmem:[%s301 + $0x58] sm:$0xe0]
        %v1918 = vrot.slane %v1910, 5
        %v1919 = vrot.slane %v1911, 5
        %v1920 = vrot.slane %v1912, 5
        %v1921 = vrot.slane %v1913, 5
        %v1922 = vsel %vm385, %v1918, 0
        %v1924 = vsel %vm385, %v1919, 0
        %v1926 = vsel %vm385, %v1920, 0
        %v1928 = vsel %vm385, %v1921, 0
        %1930 = vmatprep.subr.mxu0 %v1924
        %1931 = vmatpush1.msra.mxu0 %v1922
        %1932 = vmatprep.subr.mxu0 0.0
        %1933 = vmatpush1.msra.mxu0 0.0
        %1934 = vmatprep.subr.mxu0 0.0
        %1935 = vmatpush1.msra.mxu0 0.0
        %1936 = vmatprep.subr.mxu0 0.0
        %1937 = vmatpush1.msra.mxu0 0.0
        %1938 = vmatprep.subr.mxu0 0.0
        %1939 = vmatpush1.msra.mxu0 0.0
        %1940 = vmatprep.subr.mxu0 0.0
        %1941 = vmatpush1.msra.mxu0 0.0
        %1942 = vmatprep.subr.mxu0 0.0
        %1943 = vmatpush1.msra.mxu0 0.0
        %1944 = vmatprep.subr.mxu0 0.0
        %1945 = vmatpush1.msra.mxu0 0.0
        %1946 = vmatprep.subr.mxu0 0.0
        %1947 = vmatpush1.msra.mxu0 0.0
        %1948 = vmatprep.subr.mxu0 0.0
        %1949 = vmatpush1.msra.mxu0 0.0
        %1950 = vmatprep.subr.mxu0 0.0
        %1951 = vmatpush1.msra.mxu0 0.0
        %1952 = vmatprep.subr.mxu0 0.0
        %1953 = vmatpush1.msra.mxu0 0.0
        %1954 = vmatprep.subr.mxu0 0.0
        %1955 = vmatpush1.msra.mxu0 0.0
        %1956 = vmatprep.subr.mxu0 0.0
        %1957 = vmatpush1.msra.mxu0 0.0
        %1958 = vmatprep.subr.mxu0 0.0
        %1959 = vmatpush1.msra.mxu0 0.0
        %1960 = vmatprep.subr.mxu0 0.0
        %1961 = vmatpush1.msra.mxu0 0.0
        %1962 = vmatprep.subr.mxu0 0.0
        %1963 = vmatpush1.msra.mxu0 0.0
        %1964 = vmatprep.subr.mxu0 0.0
        %1965 = vmatpush1.msra.mxu0 0.0
        %1966 = vmatprep.subr.mxu0 0.0
        %1967 = vmatpush1.msra.mxu0 0.0
        %1968 = vmatprep.subr.mxu0 0.0
        %1969 = vmatpush1.msra.mxu0 0.0
        %1970 = vmatprep.subr.mxu0 0.0
        %1971 = vmatpush1.msra.mxu0 0.0
        %1972 = vmatprep.subr.mxu0 0.0
        %1973 = vmatpush1.msra.mxu0 0.0
        %1974 = vmatprep.subr.mxu0 0.0
        %1975 = vmatpush1.msra.mxu0 0.0
        %1976 = vmatprep.subr.mxu0 0.0
        %1977 = vmatpush1.msra.mxu0 0.0
        %1978 = vmatprep.subr.mxu0 0.0
        %1979 = vmatpush1.msra.mxu0 0.0
        %1980 = vmatprep.subr.mxu0 0.0
        %1981 = vmatpush1.msra.mxu0 0.0
        %1982 = vmatprep.subr.mxu0 0.0
        %1983 = vmatpush1.msra.mxu0 0.0
        %1984 = vmatprep.subr.mxu0 0.0
        %1985 = vmatpush1.msra.mxu0 0.0
        %1986 = vmatprep.subr.mxu0 0.0
        %1987 = vmatpush1.msra.mxu0 0.0
        %1988 = vmatprep.subr.mxu0 0.0
        %1989 = vmatpush1.msra.mxu0 0.0
        %1990 = vmatprep.subr.mxu0 0.0
        %1991 = vmatpush1.msra.mxu0 0.0
        %1992 = vmatprep.subr.mxu0 0.0
        %1993 = vmatpush1.msra.mxu0 0.0
        %1994 = vmatprep.mubr.f32.mxu0 0.0
        %1995 = vmatmul.mubr.f32.gmra.mrb[0].mxu0 %v374
        %v1996 = vpop.f32.mrb[0].mxu0
        %v1997 = vadd.f32 %v355, %v1996
        %v1998 = vpop.f32.mrb[0].mxu0
        %v1999 = vadd.f32 %v355, %v1998
        %2000 = vmatprep.mubr.f32.mxu0 0.0
        %2001 = vmatmul.mubr.f32.gmra.mrb[0].mxu0 %v377
        %v2002 = vpop.f32.mrb[0].mxu0
        %v2003 = vadd.f32 %v360, %v2002
        %v2004 = vpop.f32.mrb[0].mxu0
        %v2005 = vadd.f32 %v360, %v2004
        %2006 = vmatprep.mubr.f32.mxu0 0.0
        %2007 = vmatmul.mubr.f32.gmra.mrb[0].mxu0 %v380
        %v2008 = vpop.f32.mrb[0].mxu0
        %v2009 = vadd.f32 %v365, %v2008
        %v2010 = vpop.f32.mrb[0].mxu0
        %v2011 = vadd.f32 %v365, %v2010
        %2012 = vmatprep.mubr.f32.mxu0 0.0
        %2013 = vmatmul.mubr.f32.gmra.mrb[0].mxu0 %v383
        %v2014 = vpop.f32.mrb[0].mxu0
        %v2015 = vadd.f32 %v370, %v2014
        %v2016 = vpop.f32.mrb[0].mxu0
        %v2017 = vadd.f32 %v370, %v2016
        %2018 = vdwg.mxu0
        %2019 = vmatprep.subr.mxu0 %v1928
        %2020 = vmatpush1.msra.mxu0 %v1926
        %2021 = vmatprep.subr.mxu0 0.0
        %2022 = vmatpush1.msra.mxu0 0.0
        %2023 = vmatprep.subr.mxu0 0.0
        %2024 = vmatpush1.msra.mxu0 0.0
        %2025 = vmatprep.subr.mxu0 0.0
        %2026 = vmatpush1.msra.mxu0 0.0
        %2027 = vmatprep.subr.mxu0 0.0
        %2028 = vmatpush1.msra.mxu0 0.0
        %2029 = vmatprep.subr.mxu0 0.0
        %2030 = vmatpush1.msra.mxu0 0.0
        %2031 = vmatprep.subr.mxu0 0.0
        %2032 = vmatpush1.msra.mxu0 0.0
        %2033 = vmatprep.subr.mxu0 0.0
        %2034 = vmatpush1.msra.mxu0 0.0
        %2035 = vmatprep.subr.mxu0 0.0
        %2036 = vmatpush1.msra.mxu0 0.0
        %2037 = vmatprep.subr.mxu0 0.0
        %2038 = vmatpush1.msra.mxu0 0.0
        %2039 = vmatprep.subr.mxu0 0.0
        %2040 = vmatpush1.msra.mxu0 0.0
        %2041 = vmatprep.subr.mxu0 0.0
        %2042 = vmatpush1.msra.mxu0 0.0
        %2043 = vmatprep.subr.mxu0 0.0
        %2044 = vmatpush1.msra.mxu0 0.0
        %2045 = vmatprep.subr.mxu0 0.0
        %2046 = vmatpush1.msra.mxu0 0.0
        %2047 = vmatprep.subr.mxu0 0.0
        %2048 = vmatpush1.msra.mxu0 0.0
        %2049 = vmatprep.subr.mxu0 0.0
        %2050 = vmatpush1.msra.mxu0 0.0
        %2051 = vmatprep.subr.mxu0 0.0
        %2052 = vmatpush1.msra.mxu0 0.0
        %2053 = vmatprep.subr.mxu0 0.0
        %2054 = vmatpush1.msra.mxu0 0.0
        %2055 = vmatprep.subr.mxu0 0.0
        %2056 = vmatpush1.msra.mxu0 0.0
        %2057 = vmatprep.subr.mxu0 0.0
        %2058 = vmatpush1.msra.mxu0 0.0
        %2059 = vmatprep.subr.mxu0 0.0
        %2060 = vmatpush1.msra.mxu0 0.0
        %2061 = vmatprep.subr.mxu0 0.0
        %2062 = vmatpush1.msra.mxu0 0.0
        %2063 = vmatprep.subr.mxu0 0.0
        %2064 = vmatpush1.msra.mxu0 0.0
        %2065 = vmatprep.subr.mxu0 0.0
        %2066 = vmatpush1.msra.mxu0 0.0
        %2067 = vmatprep.subr.mxu0 0.0
        %2068 = vmatpush1.msra.mxu0 0.0
        %2069 = vmatprep.subr.mxu0 0.0
        %2070 = vmatpush1.msra.mxu0 0.0
        %2071 = vmatprep.subr.mxu0 0.0
        %2072 = vmatpush1.msra.mxu0 0.0
        %2073 = vmatprep.subr.mxu0 0.0
        %2074 = vmatpush1.msra.mxu0 0.0
        %2075 = vmatprep.subr.mxu0 0.0
        %2076 = vmatpush1.msra.mxu0 0.0
        %2077 = vmatprep.subr.mxu0 0.0
        %2078 = vmatpush1.msra.mxu0 0.0
        %2079 = vmatprep.subr.mxu0 0.0
        %2080 = vmatpush1.msra.mxu0 0.0
        %2081 = vmatprep.subr.mxu0 0.0
        %2082 = vmatpush1.msra.mxu0 0.0
        %2083 = vmatprep.mubr.f32.mxu0 0.0
        %2084 = vmatmul.mubr.f32.gmra.mrb[0].mxu0 %v374
        %v2085 = vpop.f32.mrb[0].mxu0
        %v2086 = vadd.f32 %v355, %v2085
        %v2087 = vpop.f32.mrb[0].mxu0
        %v2088 = vadd.f32 %v355, %v2087
        %2089 = vmatprep.mubr.f32.mxu0 0.0
        %2090 = vmatmul.mubr.f32.gmra.mrb[0].mxu0 %v377
        %v2091 = vpop.f32.mrb[0].mxu0
        %v2092 = vadd.f32 %v360, %v2091
        %v2093 = vpop.f32.mrb[0].mxu0
        %v2094 = vadd.f32 %v360, %v2093
        %2095 = vmatprep.mubr.f32.mxu0 0.0
        %2096 = vmatmul.mubr.f32.gmra.mrb[0].mxu0 %v380
        %v2097 = vpop.f32.mrb[0].mxu0
        %v2098 = vadd.f32 %v365, %v2097
        %v2099 = vpop.f32.mrb[0].mxu0
        %v2100 = vadd.f32 %v365, %v2099
        %2101 = vmatprep.mubr.f32.mxu0 0.0
        %2102 = vmatmul.mubr.f32.gmra.mrb[0].mxu0 %v383
        %v2103 = vpop.f32.mrb[0].mxu0
        %v2104 = vadd.f32 %v370, %v2103
        %v2105 = vpop.f32.mrb[0].mxu0
        %v2106 = vadd.f32 %v370, %v2105
        %2107 = vdwg.mxu0
        %2108 = vst [vmem:[#allocation2 + $0x380] sm:$0xff] %v1997
        %2109 = vst [vmem:[#allocation2 + $0x388] sm:$0xff] %v1999
        %2110 = vst [vmem:[#allocation2 + $0x390] sm:$0xff] %v2086
        %2111 = vst [vmem:[#allocation2 + $0x398] sm:$0xff] %v2088
        %2112 = vst [vmem:[#allocation2 + $0x3a0] sm:$0xff] %v2003
        %2113 = vst [vmem:[#allocation2 + $0x3a8] sm:$0xff] %v2005
        %2114 = vst [vmem:[#allocation2 + $0x3b0] sm:$0xff] %v2092
        %2115 = vst [vmem:[#allocation2 + $0x3b8] sm:$0xff] %v2094
        %2116 = vst [vmem:[#allocation2 + $0x3c0] sm:$0xff] %v2009
        %2117 = vst [vmem:[#allocation2 + $0x3c8] sm:$0xff] %v2011
        %2118 = vst [vmem:[#allocation2 + $0x3d0] sm:$0xff] %v2098
        %2119 = vst [vmem:[#allocation2 + $0x3d8] sm:$0xff] %v2100
        %2120 = vst [vmem:[#allocation2 + $0x3e0] sm:$0xff] %v2015
        %2121 = vst [vmem:[#allocation2 + $0x3e8] sm:$0xff] %v2017
        %2122 = vst [vmem:[#allocation2 + $0x3f0] sm:$0xff] %v2104
        %2123 = vst [vmem:[#allocation2 + $0x3f8] sm:$0xff] %v2106
        %v2124 = vld [vmem:[%s3] sm:$0xff]
        %v2125 = vld [vmem:[%s3 + $0x8] sm:$0xff]
        %v2126 = vld [vmem:[%s3 + $0x10] sm:$0xff]
        %v2127 = vld [vmem:[%s3 + $0x18] sm:$0xff]
        %v2128 = vld [vmem:[%s5] sm:$0x3]
        %v2129 = vld [vmem:[%s6] sm:$0x3]
        %v2130 = vld [vmem:[%s292] sm:$0x3]
        %v2131 = vld [vmem:[%s292 + $0x8] sm:$0x3]
        %v2132 = vld [vmem:[%s292 + $0x10] sm:$0x3]
        %v2133 = vld [vmem:[%s292 + $0x18] sm:$0x3]
        %v2134 = vlaneseq
        %vm2135 = vcmp.ge.s32.totalorder %v2134, 0
        %vm2136 = vcmp.lt.s32.totalorder %v2134, 512
        %vm2137 = vmand %vm2135, %vm2136
        %2138 = vst.msk [vmem:[%s336] ss:$8 sm:$0xf] %vm2137, 0.0
        %2139 = vst.msk [vmem:[%s336] ss:$8 sm:$0x0] %vm2137, 0.0
        %v2140 = vld [vmem:[#allocation2] sm:$0xff]
        %v2141 = vld [vmem:[#allocation2 + $0x20] sm:$0xff]
        %v2142 = vld [vmem:[#allocation2 + $0x40] sm:$0xff]
        %v2143 = vld [vmem:[#allocation2 + $0x60] sm:$0xff]
        %vm2144 = vcmask 15360
        %v2146 = vsel %vm2144, %v2124, 0
        %v2149 = vsel %vm2144, %v2125, 0
        %v2152 = vsel %vm2144, %v2126, 0
        %v2155 = vsel %vm2144, %v2127, 0
        %v2158 = vsel %vm822, 0.0, 0
        %2160 = vmatprep.subr.mxu0 0.0
        %2161 = vmatpush1.msra.mxu0 %v2158
        %2162 = vmatprep.subr.mxu0 0.0
        %2163 = vmatpush1.msra.mxu0 0.0
        %2164 = vmatprep.subr.mxu0 0.0
        %2165 = vmatpush1.msra.mxu0 0.0
        %2166 = vmatprep.subr.mxu0 0.0
        %2167 = vmatpush1.msra.mxu0 0.0
        %2168 = vmatprep.subr.mxu0 0.0
        %2169 = vmatpush1.msra.mxu0 0.0
        %2170 = vmatprep.subr.mxu0 0.0
        %2171 = vmatpush1.msra.mxu0 0.0
        %2172 = vmatprep.subr.mxu0 0.0
        %2173 = vmatpush1.msra.mxu0 0.0
        %2174 = vmatprep.subr.mxu0 0.0
        %2175 = vmatpush1.msra.mxu0 0.0
        %2176 = vmatprep.subr.mxu0 0.0
        %2177 = vmatpush1.msra.mxu0 0.0
        %2178 = vmatprep.subr.mxu0 0.0
        %2179 = vmatpush1.msra.mxu0 0.0
        %2180 = vmatprep.subr.mxu0 0.0
        %2181 = vmatpush1.msra.mxu0 0.0
        %2182 = vmatprep.subr.mxu0 0.0
        %2183 = vmatpush1.msra.mxu0 0.0
        %2184 = vmatprep.subr.mxu0 0.0
        %2185 = vmatpush1.msra.mxu0 0.0
        %2186 = vmatprep.subr.mxu0 0.0
        %2187 = vmatpush1.msra.mxu0 0.0
        %2188 = vmatprep.subr.mxu0 0.0
        %2189 = vmatpush1.msra.mxu0 0.0
        %2190 = vmatprep.subr.mxu0 0.0
        %2191 = vmatpush1.msra.mxu0 0.0
        %2192 = vmatprep.subr.mxu0 0.0
        %2193 = vmatpush1.msra.mxu0 0.0
        %2194 = vmatprep.subr.mxu0 0.0
        %2195 = vmatpush1.msra.mxu0 0.0
        %2196 = vmatprep.subr.mxu0 0.0
        %2197 = vmatpush1.msra.mxu0 0.0
        %2198 = vmatprep.subr.mxu0 0.0
        %2199 = vmatpush1.msra.mxu0 0.0
        %2200 = vmatprep.subr.mxu0 0.0
        %2201 = vmatpush1.msra.mxu0 0.0
        %2202 = vmatprep.subr.mxu0 0.0
        %2203 = vmatpush1.msra.mxu0 0.0
        %2204 = vmatprep.subr.mxu0 0.0
        %2205 = vmatpush1.msra.mxu0 0.0
        %2206 = vmatprep.subr.mxu0 0.0
        %2207 = vmatpush1.msra.mxu0 0.0
        %2208 = vmatprep.subr.mxu0 0.0
        %2209 = vmatpush1.msra.mxu0 0.0
        %2210 = vmatprep.subr.mxu0 0.0
        %2211 = vmatpush1.msra.mxu0 0.0
        %2212 = vmatprep.subr.mxu0 0.0
        %2213 = vmatpush1.msra.mxu0 0.0
        %2214 = vmatprep.subr.mxu0 0.0
        %2215 = vmatpush1.msra.mxu0 0.0
        %2216 = vmatprep.subr.mxu0 0.0
        %2217 = vmatpush1.msra.mxu0 0.0
        %2218 = vmatprep.subr.mxu0 0.0
        %2219 = vmatpush1.msra.mxu0 0.0
        %2220 = vmatprep.subr.mxu0 0.0
        %2221 = vmatpush1.msra.mxu0 0.0
        %2222 = vmatprep.subr.mxu0 0.0
        %2223 = vmatpush1.msra.mxu0 0.0
        %2224 = vmatprep.mubr.f32.mxu0 0.0
        %2225 = vmatmul.mubr.f32.gmra.mrb[0].mxu0 %v2146
        %v2226 = vpop.f32.mrb[0].mxu0
        %v2227 = vadd.f32 0.0, %v2226
        %v2228 = vpop.f32.mrb[0].mxu0
        %2229 = vmatprep.mubr.f32.mxu0 0.0
        %2230 = vmatmul.mubr.f32.gmra.mrb[0].mxu0 %v2149
        %v2231 = vpop.f32.mrb[0].mxu0
        %v2232 = vadd.f32 0.0, %v2231
        %v2233 = vpop.f32.mrb[0].mxu0
        %2234 = vmatprep.mubr.f32.mxu0 0.0
        %2235 = vmatmul.mubr.f32.gmra.mrb[0].mxu0 %v2152
        %v2236 = vpop.f32.mrb[0].mxu0
        %v2237 = vadd.f32 0.0, %v2236
        %v2238 = vpop.f32.mrb[0].mxu0
        %2239 = vmatprep.mubr.f32.mxu0 0.0
        %2240 = vmatmul.mubr.f32.gmra.mrb[0].mxu0 %v2155
        %v2241 = vpop.f32.mrb[0].mxu0
        %v2242 = vadd.f32 0.0, %v2241
        %v2243 = vpop.f32.mrb[0].mxu0
        %2244 = vdwg.mxu0
        %v2245 = vadd.f32 %v2140, %v2227
        %v2246 = vadd.f32 %v2141, %v2232
        %v2247 = vadd.f32 %v2142, %v2237
        %v2248 = vadd.f32 %v2143, %v2242
        %v2249 = vmax.f32 %v2245, 0.0
        %v2250 = vmax.f32 %v2246, 0.0
        %v2251 = vmax.f32 %v2247, 0.0
        %v2252 = vmax.f32 %v2248, 0.0
        %2254 = vset.pattern.permute.xlu0 0
        %2255 = vperm.xlu0 %2254, %v2129
        %v2256 = vpop.permute.xlu0 %2255
        %vm2258 = vcmask 261120
        %v2260 = vsel %vm2258, %v2128, 0
        %2262 = vmatprep.subr.mxu0 0.0
        %2263 = vmatpush1.msra.mxu0 %v2249
        %2264 = vmatprep.subr.mxu0 0.0
        %2265 = vmatpush1.msra.mxu0 %v2250
        %2266 = vmatprep.subr.mxu0 0.0
        %2267 = vmatpush1.msra.mxu0 %v2251
        %2268 = vmatprep.subr.mxu0 0.0
        %2269 = vmatpush1.msra.mxu0 %v2252
        %2270 = vmatprep.subr.mxu0 0.0
        %2271 = vmatpush1.msra.mxu0 0.0
        %2272 = vmatprep.subr.mxu0 0.0
        %2273 = vmatpush1.msra.mxu0 0.0
        %2274 = vmatprep.subr.mxu0 0.0
        %2275 = vmatpush1.msra.mxu0 0.0
        %2276 = vmatprep.subr.mxu0 0.0
        %2277 = vmatpush1.msra.mxu0 0.0
        %2278 = vmatprep.subr.mxu0 0.0
        %2279 = vmatpush1.msra.mxu0 0.0
        %2280 = vmatprep.subr.mxu0 0.0
        %2281 = vmatpush1.msra.mxu0 0.0
        %2282 = vmatprep.subr.mxu0 0.0
        %2283 = vmatpush1.msra.mxu0 0.0
        %2284 = vmatprep.subr.mxu0 0.0
        %2285 = vmatpush1.msra.mxu0 0.0
        %2286 = vmatprep.subr.mxu0 0.0
        %2287 = vmatpush1.msra.mxu0 0.0
        %2288 = vmatprep.subr.mxu0 0.0
        %2289 = vmatpush1.msra.mxu0 0.0
        %2290 = vmatprep.subr.mxu0 0.0
        %2291 = vmatpush1.msra.mxu0 0.0
        %2292 = vmatprep.subr.mxu0 0.0
        %2293 = vmatpush1.msra.mxu0 0.0
        %2294 = vmatprep.subr.mxu0 0.0
        %2295 = vmatpush1.msra.mxu0 0.0
        %2296 = vmatprep.subr.mxu0 0.0
        %2297 = vmatpush1.msra.mxu0 0.0
        %2298 = vmatprep.subr.mxu0 0.0
        %2299 = vmatpush1.msra.mxu0 0.0
        %2300 = vmatprep.subr.mxu0 0.0
        %2301 = vmatpush1.msra.mxu0 0.0
        %2302 = vmatprep.subr.mxu0 0.0
        %2303 = vmatpush1.msra.mxu0 0.0
        %2304 = vmatprep.subr.mxu0 0.0
        %2305 = vmatpush1.msra.mxu0 0.0
        %2306 = vmatprep.subr.mxu0 0.0
        %2307 = vmatpush1.msra.mxu0 0.0
        %2308 = vmatprep.subr.mxu0 0.0
        %2309 = vmatpush1.msra.mxu0 0.0
        %2310 = vmatprep.subr.mxu0 0.0
        %2311 = vmatpush1.msra.mxu0 0.0
        %2312 = vmatprep.subr.mxu0 0.0
        %2313 = vmatpush1.msra.mxu0 0.0
        %2314 = vmatprep.subr.mxu0 0.0
        %2315 = vmatpush1.msra.mxu0 0.0
        %2316 = vmatprep.subr.mxu0 0.0
        %2317 = vmatpush1.msra.mxu0 0.0
        %2318 = vmatprep.subr.mxu0 0.0
        %2319 = vmatpush1.msra.mxu0 0.0
        %2320 = vmatprep.subr.mxu0 0.0
        %2321 = vmatpush1.msra.mxu0 0.0
        %2322 = vmatprep.subr.mxu0 0.0
        %2323 = vmatpush1.msra.mxu0 0.0
        %2324 = vmatprep.subr.mxu0 0.0
        %2325 = vmatpush1.msra.mxu0 0.0
        %2326 = vmatprep.mubr.f32.mxu0 0.0
        %2327 = vmatmul.mubr.f32.gmra.mrb[0].mxu0 %v2260
        %v2328 = vpop.f32.mrb[0].mxu0
        %v2329 = vadd.f32 %v2256, %v2328
        %v2330 = vpop.f32.mrb[0].mxu0
        %2331 = vdwg.mxu0
        %v2332 = vld [vmem:[%s292] sm:$0xc]
        %v2334 = vrot.slane %v2130, 6
        %v2336 = vsub.f32 %v2332, %v2334
        %v2338 = vrot.slane %v2336, 2
        %v2340 = vmul.f32 %v2329, %v2338
        %v2341 = vsel %vm822, %v2340, 0.0
        %v2342 = vrot.slane %v2341, 4
        %v2343 = vadd.f32 %v2341, %v2342
        %v2344 = vrot.slane %v2343, 2
        %v2345 = vadd.f32 %v2343, %v2344
        %v2346 = vrot.slane %v2345, 1
        %v2347 = vadd.f32 %v2345, %v2346
        %v2348 = vadd.f32 %v2347, 0.0
        %2349 = vst [vmem:[%s336 + $0x1] sm:$0x1] %v2348
        %v2350 = vld [vmem:[#allocation2 + $0x8] sm:$0xff]
        %v2351 = vld [vmem:[#allocation2 + $0x28] sm:$0xff]
        %v2352 = vld [vmem:[#allocation2 + $0x48] sm:$0xff]
        %v2353 = vld [vmem:[#allocation2 + $0x68] sm:$0xff]
        %v2354 = vadd.f32 %v2350, %v2227
        %v2355 = vadd.f32 %v2351, %v2232
        %v2356 = vadd.f32 %v2352, %v2237
        %v2357 = vadd.f32 %v2353, %v2242
        %v2358 = vmax.f32 %v2354, 0.0
        %v2359 = vmax.f32 %v2355, 0.0
        %v2360 = vmax.f32 %v2356, 0.0
        %v2361 = vmax.f32 %v2357, 0.0
        %2362 = vmatprep.subr.mxu0 0.0
        %2363 = vmatpush1.msra.mxu0 %v2358
        %2364 = vmatprep.subr.mxu0 0.0
        %2365 = vmatpush1.msra.mxu0 %v2359
        %2366 = vmatprep.subr.mxu0 0.0
        %2367 = vmatpush1.msra.mxu0 %v2360
        %2368 = vmatprep.subr.mxu0 0.0
        %2369 = vmatpush1.msra.mxu0 %v2361
        %2370 = vmatprep.subr.mxu0 0.0
        %2371 = vmatpush1.msra.mxu0 0.0
        %2372 = vmatprep.subr.mxu0 0.0
        %2373 = vmatpush1.msra.mxu0 0.0
        %2374 = vmatprep.subr.mxu0 0.0
        %2375 = vmatpush1.msra.mxu0 0.0
        %2376 = vmatprep.subr.mxu0 0.0
        %2377 = vmatpush1.msra.mxu0 0.0
        %2378 = vmatprep.subr.mxu0 0.0
        %2379 = vmatpush1.msra.mxu0 0.0
        %2380 = vmatprep.subr.mxu0 0.0
        %2381 = vmatpush1.msra.mxu0 0.0
        %2382 = vmatprep.subr.mxu0 0.0
        %2383 = vmatpush1.msra.mxu0 0.0
        %2384 = vmatprep.subr.mxu0 0.0
        %2385 = vmatpush1.msra.mxu0 0.0
        %2386 = vmatprep.subr.mxu0 0.0
        %2387 = vmatpush1.msra.mxu0 0.0
        %2388 = vmatprep.subr.mxu0 0.0
        %2389 = vmatpush1.msra.mxu0 0.0
        %2390 = vmatprep.subr.mxu0 0.0
        %2391 = vmatpush1.msra.mxu0 0.0
        %2392 = vmatprep.subr.mxu0 0.0
        %2393 = vmatpush1.msra.mxu0 0.0
        %2394 = vmatprep.subr.mxu0 0.0
        %2395 = vmatpush1.msra.mxu0 0.0
        %2396 = vmatprep.subr.mxu0 0.0
        %2397 = vmatpush1.msra.mxu0 0.0
        %2398 = vmatprep.subr.mxu0 0.0
        %2399 = vmatpush1.msra.mxu0 0.0
        %2400 = vmatprep.subr.mxu0 0.0
        %2401 = vmatpush1.msra.mxu0 0.0
        %2402 = vmatprep.subr.mxu0 0.0
        %2403 = vmatpush1.msra.mxu0 0.0
        %2404 = vmatprep.subr.mxu0 0.0
        %2405 = vmatpush1.msra.mxu0 0.0
        %2406 = vmatprep.subr.mxu0 0.0
        %2407 = vmatpush1.msra.mxu0 0.0
        %2408 = vmatprep.subr.mxu0 0.0
        %2409 = vmatpush1.msra.mxu0 0.0
        %2410 = vmatprep.subr.mxu0 0.0
        %2411 = vmatpush1.msra.mxu0 0.0
        %2412 = vmatprep.subr.mxu0 0.0
        %2413 = vmatpush1.msra.mxu0 0.0
        %2414 = vmatprep.subr.mxu0 0.0
        %2415 = vmatpush1.msra.mxu0 0.0
        %2416 = vmatprep.subr.mxu0 0.0
        %2417 = vmatpush1.msra.mxu0 0.0
        %2418 = vmatprep.subr.mxu0 0.0
        %2419 = vmatpush1.msra.mxu0 0.0
        %2420 = vmatprep.subr.mxu0 0.0
        %2421 = vmatpush1.msra.mxu0 0.0
        %2422 = vmatprep.subr.mxu0 0.0
        %2423 = vmatpush1.msra.mxu0 0.0
        %2424 = vmatprep.subr.mxu0 0.0
        %2425 = vmatpush1.msra.mxu0 0.0
        %2426 = vmatprep.mubr.f32.mxu0 0.0
        %2427 = vmatmul.mubr.f32.gmra.mrb[0].mxu0 %v2260
        %v2428 = vpop.f32.mrb[0].mxu0
        %v2429 = vadd.f32 %v2256, %v2428
        %v2430 = vpop.f32.mrb[0].mxu0
        %2431 = vdwg.mxu0
        %v2432 = vld [vmem:[%s292 + $0x8] sm:$0xc]
        %v2434 = vrot.slane %v2131, 6
        %v2436 = vsub.f32 %v2432, %v2434
        %v2438 = vrot.slane %v2436, 2
        %v2440 = vmul.f32 %v2429, %v2438
        %v2441 = vsel %vm822, %v2440, 0.0
        %v2442 = vrot.slane %v2441, 4
        %v2443 = vadd.f32 %v2441, %v2442
        %v2444 = vrot.slane %v2443, 2
        %v2445 = vadd.f32 %v2443, %v2444
        %v2446 = vrot.slane %v2445, 1
        %v2447 = vadd.f32 %v2445, %v2446
        %v2448 = vadd.f32 %v2447, 0.0
        %2449 = vst [vmem:[%s336 + $0x9] sm:$0x1] %v2448
        %v2450 = vld [vmem:[#allocation2 + $0x10] sm:$0xff]
        %v2451 = vld [vmem:[#allocation2 + $0x30] sm:$0xff]
        %v2452 = vld [vmem:[#allocation2 + $0x50] sm:$0xff]
        %v2453 = vld [vmem:[#allocation2 + $0x70] sm:$0xff]
        %v2454 = vadd.f32 %v2450, %v2227
        %v2455 = vadd.f32 %v2451, %v2232
        %v2456 = vadd.f32 %v2452, %v2237
        %v2457 = vadd.f32 %v2453, %v2242
        %v2458 = vmax.f32 %v2454, 0.0
        %v2459 = vmax.f32 %v2455, 0.0
        %v2460 = vmax.f32 %v2456, 0.0
        %v2461 = vmax.f32 %v2457, 0.0
        %2462 = vmatprep.subr.mxu0 0.0
        %2463 = vmatpush1.msra.mxu0 %v2458
        %2464 = vmatprep.subr.mxu0 0.0
        %2465 = vmatpush1.msra.mxu0 %v2459
        %2466 = vmatprep.subr.mxu0 0.0
        %2467 = vmatpush1.msra.mxu0 %v2460
        %2468 = vmatprep.subr.mxu0 0.0
        %2469 = vmatpush1.msra.mxu0 %v2461
        %2470 = vmatprep.subr.mxu0 0.0
        %2471 = vmatpush1.msra.mxu0 0.0
        %2472 = vmatprep.subr.mxu0 0.0
        %2473 = vmatpush1.msra.mxu0 0.0
        %2474 = vmatprep.subr.mxu0 0.0
        %2475 = vmatpush1.msra.mxu0 0.0
        %2476 = vmatprep.subr.mxu0 0.0
        %2477 = vmatpush1.msra.mxu0 0.0
        %2478 = vmatprep.subr.mxu0 0.0
        %2479 = vmatpush1.msra.mxu0 0.0
        %2480 = vmatprep.subr.mxu0 0.0
        %2481 = vmatpush1.msra.mxu0 0.0
        %2482 = vmatprep.subr.mxu0 0.0
        %2483 = vmatpush1.msra.mxu0 0.0
        %2484 = vmatprep.subr.mxu0 0.0
        %2485 = vmatpush1.msra.mxu0 0.0
        %2486 = vmatprep.subr.mxu0 0.0
        %2487 = vmatpush1.msra.mxu0 0.0
        %2488 = vmatprep.subr.mxu0 0.0
        %2489 = vmatpush1.msra.mxu0 0.0
        %2490 = vmatprep.subr.mxu0 0.0
        %2491 = vmatpush1.msra.mxu0 0.0
        %2492 = vmatprep.subr.mxu0 0.0
        %2493 = vmatpush1.msra.mxu0 0.0
        %2494 = vmatprep.subr.mxu0 0.0
        %2495 = vmatpush1.msra.mxu0 0.0
        %2496 = vmatprep.subr.mxu0 0.0
        %2497 = vmatpush1.msra.mxu0 0.0
        %2498 = vmatprep.subr.mxu0 0.0
        %2499 = vmatpush1.msra.mxu0 0.0
        %2500 = vmatprep.subr.mxu0 0.0
        %2501 = vmatpush1.msra.mxu0 0.0
        %2502 = vmatprep.subr.mxu0 0.0
        %2503 = vmatpush1.msra.mxu0 0.0
        %2504 = vmatprep.subr.mxu0 0.0
        %2505 = vmatpush1.msra.mxu0 0.0
        %2506 = vmatprep.subr.mxu0 0.0
        %2507 = vmatpush1.msra.mxu0 0.0
        %2508 = vmatprep.subr.mxu0 0.0
        %2509 = vmatpush1.msra.mxu0 0.0
        %2510 = vmatprep.subr.mxu0 0.0
        %2511 = vmatpush1.msra.mxu0 0.0
        %2512 = vmatprep.subr.mxu0 0.0
        %2513 = vmatpush1.msra.mxu0 0.0
        %2514 = vmatprep.subr.mxu0 0.0
        %2515 = vmatpush1.msra.mxu0 0.0
        %2516 = vmatprep.subr.mxu0 0.0
        %2517 = vmatpush1.msra.mxu0 0.0
        %2518 = vmatprep.subr.mxu0 0.0
        %2519 = vmatpush1.msra.mxu0 0.0
        %2520 = vmatprep.subr.mxu0 0.0
        %2521 = vmatpush1.msra.mxu0 0.0
        %2522 = vmatprep.subr.mxu0 0.0
        %2523 = vmatpush1.msra.mxu0 0.0
        %2524 = vmatprep.subr.mxu0 0.0
        %2525 = vmatpush1.msra.mxu0 0.0
        %2526 = vmatprep.mubr.f32.mxu0 0.0
        %2527 = vmatmul.mubr.f32.gmra.mrb[0].mxu0 %v2260
        %v2528 = vpop.f32.mrb[0].mxu0
        %v2529 = vadd.f32 %v2256, %v2528
        %v2530 = vpop.f32.mrb[0].mxu0
        %2531 = vdwg.mxu0
        %v2532 = vld [vmem:[%s292 + $0x10] sm:$0xc]
        %v2534 = vrot.slane %v2132, 6
        %v2536 = vsub.f32 %v2532, %v2534
        %v2538 = vrot.slane %v2536, 2
        %v2540 = vmul.f32 %v2529, %v2538
        %v2541 = vsel %vm822, %v2540, 0.0
        %v2542 = vrot.slane %v2541, 4
        %v2543 = vadd.f32 %v2541, %v2542
        %v2544 = vrot.slane %v2543, 2
        %v2545 = vadd.f32 %v2543, %v2544
        %v2546 = vrot.slane %v2545, 1
        %v2547 = vadd.f32 %v2545, %v2546
        %v2548 = vadd.f32 %v2547, 0.0
        %2549 = vst [vmem:[%s336 + $0x11] sm:$0x1] %v2548
        %v2550 = vld [vmem:[#allocation2 + $0x18] sm:$0xff]
        %v2551 = vld [vmem:[#allocation2 + $0x38] sm:$0xff]
        %v2552 = vld [vmem:[#allocation2 + $0x58] sm:$0xff]
        %v2553 = vld [vmem:[#allocation2 + $0x78] sm:$0xff]
        %v2554 = vadd.f32 %v2550, %v2227
        %v2555 = vadd.f32 %v2551, %v2232
        %v2556 = vadd.f32 %v2552, %v2237
        %v2557 = vadd.f32 %v2553, %v2242
        %v2558 = vmax.f32 %v2554, 0.0
        %v2559 = vmax.f32 %v2555, 0.0
        %v2560 = vmax.f32 %v2556, 0.0
        %v2561 = vmax.f32 %v2557, 0.0
        %2562 = vmatprep.subr.mxu0 0.0
        %2563 = vmatpush1.msra.mxu0 %v2558
        %2564 = vmatprep.subr.mxu0 0.0
        %2565 = vmatpush1.msra.mxu0 %v2559
        %2566 = vmatprep.subr.mxu0 0.0
        %2567 = vmatpush1.msra.mxu0 %v2560
        %2568 = vmatprep.subr.mxu0 0.0
        %2569 = vmatpush1.msra.mxu0 %v2561
        %2570 = vmatprep.subr.mxu0 0.0
        %2571 = vmatpush1.msra.mxu0 0.0
        %2572 = vmatprep.subr.mxu0 0.0
        %2573 = vmatpush1.msra.mxu0 0.0
        %2574 = vmatprep.subr.mxu0 0.0
        %2575 = vmatpush1.msra.mxu0 0.0
        %2576 = vmatprep.subr.mxu0 0.0
        %2577 = vmatpush1.msra.mxu0 0.0
        %2578 = vmatprep.subr.mxu0 0.0
        %2579 = vmatpush1.msra.mxu0 0.0
        %2580 = vmatprep.subr.mxu0 0.0
        %2581 = vmatpush1.msra.mxu0 0.0
        %2582 = vmatprep.subr.mxu0 0.0
        %2583 = vmatpush1.msra.mxu0 0.0
        %2584 = vmatprep.subr.mxu0 0.0
        %2585 = vmatpush1.msra.mxu0 0.0
        %2586 = vmatprep.subr.mxu0 0.0
        %2587 = vmatpush1.msra.mxu0 0.0
        %2588 = vmatprep.subr.mxu0 0.0
        %2589 = vmatpush1.msra.mxu0 0.0
        %2590 = vmatprep.subr.mxu0 0.0
        %2591 = vmatpush1.msra.mxu0 0.0
        %2592 = vmatprep.subr.mxu0 0.0
        %2593 = vmatpush1.msra.mxu0 0.0
        %2594 = vmatprep.subr.mxu0 0.0
        %2595 = vmatpush1.msra.mxu0 0.0
        %2596 = vmatprep.subr.mxu0 0.0
        %2597 = vmatpush1.msra.mxu0 0.0
        %2598 = vmatprep.subr.mxu0 0.0
        %2599 = vmatpush1.msra.mxu0 0.0
        %2600 = vmatprep.subr.mxu0 0.0
        %2601 = vmatpush1.msra.mxu0 0.0
        %2602 = vmatprep.subr.mxu0 0.0
        %2603 = vmatpush1.msra.mxu0 0.0
        %2604 = vmatprep.subr.mxu0 0.0
        %2605 = vmatpush1.msra.mxu0 0.0
        %2606 = vmatprep.subr.mxu0 0.0
        %2607 = vmatpush1.msra.mxu0 0.0
        %2608 = vmatprep.subr.mxu0 0.0
        %2609 = vmatpush1.msra.mxu0 0.0
        %2610 = vmatprep.subr.mxu0 0.0
        %2611 = vmatpush1.msra.mxu0 0.0
        %2612 = vmatprep.subr.mxu0 0.0
        %2613 = vmatpush1.msra.mxu0 0.0
        %2614 = vmatprep.subr.mxu0 0.0
        %2615 = vmatpush1.msra.mxu0 0.0
        %2616 = vmatprep.subr.mxu0 0.0
        %2617 = vmatpush1.msra.mxu0 0.0
        %2618 = vmatprep.subr.mxu0 0.0
        %2619 = vmatpush1.msra.mxu0 0.0
        %2620 = vmatprep.subr.mxu0 0.0
        %2621 = vmatpush1.msra.mxu0 0.0
        %2622 = vmatprep.subr.mxu0 0.0
        %2623 = vmatpush1.msra.mxu0 0.0
        %2624 = vmatprep.subr.mxu0 0.0
        %2625 = vmatpush1.msra.mxu0 0.0
        %2626 = vmatprep.mubr.f32.mxu0 0.0
        %2627 = vmatmul.mubr.f32.gmra.mrb[0].mxu0 %v2260
        %v2628 = vpop.f32.mrb[0].mxu0
        %v2629 = vadd.f32 %v2256, %v2628
        %v2630 = vpop.f32.mrb[0].mxu0
        %2631 = vdwg.mxu0
        %v2632 = vld [vmem:[%s292 + $0x18] sm:$0xc]
        %v2634 = vrot.slane %v2133, 6
        %v2636 = vsub.f32 %v2632, %v2634
        %v2638 = vrot.slane %v2636, 2
        %v2640 = vmul.f32 %v2629, %v2638
        %v2641 = vsel %vm822, %v2640, 0.0
        %v2642 = vrot.slane %v2641, 4
        %v2643 = vadd.f32 %v2641, %v2642
        %v2644 = vrot.slane %v2643, 2
        %v2645 = vadd.f32 %v2643, %v2644
        %v2646 = vrot.slane %v2645, 1
        %v2647 = vadd.f32 %v2645, %v2646
        %v2648 = vadd.f32 %v2647, 0.0
        %2649 = vst [vmem:[%s336 + $0x19] sm:$0x1] %v2648
        %v2650 = vld [vmem:[#allocation2 + $0x80] sm:$0xff]
        %v2651 = vld [vmem:[#allocation2 + $0xa0] sm:$0xff]
        %v2652 = vld [vmem:[#allocation2 + $0xc0] sm:$0xff]
        %v2653 = vld [vmem:[#allocation2 + $0xe0] sm:$0xff]
        %v2655 = vsel %vm822, %v2329, 0
        %2657 = vmatprep.subr.mxu0 0.0
        %2658 = vmatpush1.msra.mxu0 %v2655
        %2659 = vmatprep.subr.mxu0 0.0
        %2660 = vmatpush1.msra.mxu0 0.0
        %2661 = vmatprep.subr.mxu0 0.0
        %2662 = vmatpush1.msra.mxu0 0.0
        %2663 = vmatprep.subr.mxu0 0.0
        %2664 = vmatpush1.msra.mxu0 0.0
        %2665 = vmatprep.subr.mxu0 0.0
        %2666 = vmatpush1.msra.mxu0 0.0
        %2667 = vmatprep.subr.mxu0 0.0
        %2668 = vmatpush1.msra.mxu0 0.0
        %2669 = vmatprep.subr.mxu0 0.0
        %2670 = vmatpush1.msra.mxu0 0.0
        %2671 = vmatprep.subr.mxu0 0.0
        %2672 = vmatpush1.msra.mxu0 0.0
        %2673 = vmatprep.subr.mxu0 0.0
        %2674 = vmatpush1.msra.mxu0 0.0
        %2675 = vmatprep.subr.mxu0 0.0
        %2676 = vmatpush1.msra.mxu0 0.0
        %2677 = vmatprep.subr.mxu0 0.0
        %2678 = vmatpush1.msra.mxu0 0.0
        %2679 = vmatprep.subr.mxu0 0.0
        %2680 = vmatpush1.msra.mxu0 0.0
        %2681 = vmatprep.subr.mxu0 0.0
        %2682 = vmatpush1.msra.mxu0 0.0
        %2683 = vmatprep.subr.mxu0 0.0
        %2684 = vmatpush1.msra.mxu0 0.0
        %2685 = vmatprep.subr.mxu0 0.0
        %2686 = vmatpush1.msra.mxu0 0.0
        %2687 = vmatprep.subr.mxu0 0.0
        %2688 = vmatpush1.msra.mxu0 0.0
        %2689 = vmatprep.subr.mxu0 0.0
        %2690 = vmatpush1.msra.mxu0 0.0
        %2691 = vmatprep.subr.mxu0 0.0
        %2692 = vmatpush1.msra.mxu0 0.0
        %2693 = vmatprep.subr.mxu0 0.0
        %2694 = vmatpush1.msra.mxu0 0.0
        %2695 = vmatprep.subr.mxu0 0.0
        %2696 = vmatpush1.msra.mxu0 0.0
        %2697 = vmatprep.subr.mxu0 0.0
        %2698 = vmatpush1.msra.mxu0 0.0
        %2699 = vmatprep.subr.mxu0 0.0
        %2700 = vmatpush1.msra.mxu0 0.0
        %2701 = vmatprep.subr.mxu0 0.0
        %2702 = vmatpush1.msra.mxu0 0.0
        %2703 = vmatprep.subr.mxu0 0.0
        %2704 = vmatpush1.msra.mxu0 0.0
        %2705 = vmatprep.subr.mxu0 0.0
        %2706 = vmatpush1.msra.mxu0 0.0
        %2707 = vmatprep.subr.mxu0 0.0
        %2708 = vmatpush1.msra.mxu0 0.0
        %2709 = vmatprep.subr.mxu0 0.0
        %2710 = vmatpush1.msra.mxu0 0.0
        %2711 = vmatprep.subr.mxu0 0.0
        %2712 = vmatpush1.msra.mxu0 0.0
        %2713 = vmatprep.subr.mxu0 0.0
        %2714 = vmatpush1.msra.mxu0 0.0
        %2715 = vmatprep.subr.mxu0 0.0
        %2716 = vmatpush1.msra.mxu0 0.0
        %2717 = vmatprep.subr.mxu0 0.0
        %2718 = vmatpush1.msra.mxu0 0.0
        %2719 = vmatprep.subr.mxu0 0.0
        %2720 = vmatpush1.msra.mxu0 0.0
        %2721 = vmatprep.mubr.f32.mxu0 0.0
        %2722 = vmatmul.mubr.f32.gmra.mrb[0].mxu0 %v2146
        %v2723 = vpop.f32.mrb[0].mxu0
        %v2724 = vadd.f32 0.0, %v2723
        %v2725 = vpop.f32.mrb[0].mxu0
        %2726 = vmatprep.mubr.f32.mxu0 0.0
        %2727 = vmatmul.mubr.f32.gmra.mrb[0].mxu0 %v2149
        %v2728 = vpop.f32.mrb[0].mxu0
        %v2729 = vadd.f32 0.0, %v2728
        %v2730 = vpop.f32.mrb[0].mxu0
        %2731 = vmatprep.mubr.f32.mxu0 0.0
        %2732 = vmatmul.mubr.f32.gmra.mrb[0].mxu0 %v2152
        %v2733 = vpop.f32.mrb[0].mxu0
        %v2734 = vadd.f32 0.0, %v2733
        %v2735 = vpop.f32.mrb[0].mxu0
        %2736 = vmatprep.mubr.f32.mxu0 0.0
        %2737 = vmatmul.mubr.f32.gmra.mrb[0].mxu0 %v2155
        %v2738 = vpop.f32.mrb[0].mxu0
        %v2739 = vadd.f32 0.0, %v2738
        %v2740 = vpop.f32.mrb[0].mxu0
        %2741 = vdwg.mxu0
        %v2742 = vadd.f32 %v2650, %v2724
        %v2743 = vadd.f32 %v2651, %v2729
        %v2744 = vadd.f32 %v2652, %v2734
        %v2745 = vadd.f32 %v2653, %v2739
        %v2746 = vmax.f32 %v2742, 0.0
        %v2747 = vmax.f32 %v2743, 0.0
        %v2748 = vmax.f32 %v2744, 0.0
        %v2749 = vmax.f32 %v2745, 0.0
        %2750 = vmatprep.subr.mxu0 0.0
        %2751 = vmatpush1.msra.mxu0 %v2746
        %2752 = vmatprep.subr.mxu0 0.0
        %2753 = vmatpush1.msra.mxu0 %v2747
        %2754 = vmatprep.subr.mxu0 0.0
        %2755 = vmatpush1.msra.mxu0 %v2748
        %2756 = vmatprep.subr.mxu0 0.0
        %2757 = vmatpush1.msra.mxu0 %v2749
        %2758 = vmatprep.subr.mxu0 0.0
        %2759 = vmatpush1.msra.mxu0 0.0
        %2760 = vmatprep.subr.mxu0 0.0
        %2761 = vmatpush1.msra.mxu0 0.0
        %2762 = vmatprep.subr.mxu0 0.0
        %2763 = vmatpush1.msra.mxu0 0.0
        %2764 = vmatprep.subr.mxu0 0.0
        %2765 = vmatpush1.msra.mxu0 0.0
        %2766 = vmatprep.subr.mxu0 0.0
        %2767 = vmatpush1.msra.mxu0 0.0
        %2768 = vmatprep.subr.mxu0 0.0
        %2769 = vmatpush1.msra.mxu0 0.0
        %2770 = vmatprep.subr.mxu0 0.0
        %2771 = vmatpush1.msra.mxu0 0.0
        %2772 = vmatprep.subr.mxu0 0.0
        %2773 = vmatpush1.msra.mxu0 0.0
        %2774 = vmatprep.subr.mxu0 0.0
        %2775 = vmatpush1.msra.mxu0 0.0
        %2776 = vmatprep.subr.mxu0 0.0
        %2777 = vmatpush1.msra.mxu0 0.0
        %2778 = vmatprep.subr.mxu0 0.0
        %2779 = vmatpush1.msra.mxu0 0.0
        %2780 = vmatprep.subr.mxu0 0.0
        %2781 = vmatpush1.msra.mxu0 0.0
        %2782 = vmatprep.subr.mxu0 0.0
        %2783 = vmatpush1.msra.mxu0 0.0
        %2784 = vmatprep.subr.mxu0 0.0
        %2785 = vmatpush1.msra.mxu0 0.0
        %2786 = vmatprep.subr.mxu0 0.0
        %2787 = vmatpush1.msra.mxu0 0.0
        %2788 = vmatprep.subr.mxu0 0.0
        %2789 = vmatpush1.msra.mxu0 0.0
        %2790 = vmatprep.subr.mxu0 0.0
        %2791 = vmatpush1.msra.mxu0 0.0
        %2792 = vmatprep.subr.mxu0 0.0
        %2793 = vmatpush1.msra.mxu0 0.0
        %2794 = vmatprep.subr.mxu0 0.0
        %2795 = vmatpush1.msra.mxu0 0.0
        %2796 = vmatprep.subr.mxu0 0.0
        %2797 = vmatpush1.msra.mxu0 0.0
        %2798 = vmatprep.subr.mxu0 0.0
        %2799 = vmatpush1.msra.mxu0 0.0
        %2800 = vmatprep.subr.mxu0 0.0
        %2801 = vmatpush1.msra.mxu0 0.0
        %2802 = vmatprep.subr.mxu0 0.0
        %2803 = vmatpush1.msra.mxu0 0.0
        %2804 = vmatprep.subr.mxu0 0.0
        %2805 = vmatpush1.msra.mxu0 0.0
        %2806 = vmatprep.subr.mxu0 0.0
        %2807 = vmatpush1.msra.mxu0 0.0
        %2808 = vmatprep.subr.mxu0 0.0
        %2809 = vmatpush1.msra.mxu0 0.0
        %2810 = vmatprep.subr.mxu0 0.0
        %2811 = vmatpush1.msra.mxu0 0.0
        %2812 = vmatprep.subr.mxu0 0.0
        %2813 = vmatpush1.msra.mxu0 0.0
        %2814 = vmatprep.mubr.f32.mxu0 0.0
        %2815 = vmatmul.mubr.f32.gmra.mrb[0].mxu0 %v2260
        %v2816 = vpop.f32.mrb[0].mxu0
        %v2817 = vadd.f32 %v2256, %v2816
        %v2818 = vpop.f32.mrb[0].mxu0
        %2819 = vdwg.mxu0
        %v2820 = vld [vmem:[%s292] sm:$0x30]
        %v2822 = vrot.slane %v2332, 6
        %v2824 = vsub.f32 %v2820, %v2822
        %v2826 = vrot.slane %v2824, 4
        %v2828 = vmul.f32 %v2817, %v2826
        %v2829 = vsel %vm822, %v2828, 0.0
        %v2830 = vrot.slane %v2829, 4
        %v2831 = vadd.f32 %v2829, %v2830
        %v2832 = vrot.slane %v2831, 2
        %v2833 = vadd.f32 %v2831, %v2832
        %v2834 = vrot.slane %v2833, 1
        %v2835 = vadd.f32 %v2833, %v2834
        %v2836 = vadd.f32 %v2348, %v2835
        %2837 = vst [vmem:[%s336 + $0x2] sm:$0x1] %v2836
        %v2838 = vld [vmem:[#allocation2 + $0x88] sm:$0xff]
        %v2839 = vld [vmem:[#allocation2 + $0xa8] sm:$0xff]
        %v2840 = vld [vmem:[#allocation2 + $0xc8] sm:$0xff]
        %v2841 = vld [vmem:[#allocation2 + $0xe8] sm:$0xff]
        %v2843 = vsel %vm822, %v2429, 0
        %2845 = vmatprep.subr.mxu0 0.0
        %2846 = vmatpush1.msra.mxu0 %v2843
        %2847 = vmatprep.subr.mxu0 0.0
        %2848 = vmatpush1.msra.mxu0 0.0
        %2849 = vmatprep.subr.mxu0 0.0
        %2850 = vmatpush1.msra.mxu0 0.0
        %2851 = vmatprep.subr.mxu0 0.0
        %2852 = vmatpush1.msra.mxu0 0.0
        %2853 = vmatprep.subr.mxu0 0.0
        %2854 = vmatpush1.msra.mxu0 0.0
        %2855 = vmatprep.subr.mxu0 0.0
        %2856 = vmatpush1.msra.mxu0 0.0
        %2857 = vmatprep.subr.mxu0 0.0
        %2858 = vmatpush1.msra.mxu0 0.0
        %2859 = vmatprep.subr.mxu0 0.0
        %2860 = vmatpush1.msra.mxu0 0.0
        %2861 = vmatprep.subr.mxu0 0.0
        %2862 = vmatpush1.msra.mxu0 0.0
        %2863 = vmatprep.subr.mxu0 0.0
        %2864 = vmatpush1.msra.mxu0 0.0
        %2865 = vmatprep.subr.mxu0 0.0
        %2866 = vmatpush1.msra.mxu0 0.0
        %2867 = vmatprep.subr.mxu0 0.0
        %2868 = vmatpush1.msra.mxu0 0.0
        %2869 = vmatprep.subr.mxu0 0.0
        %2870 = vmatpush1.msra.mxu0 0.0
        %2871 = vmatprep.subr.mxu0 0.0
        %2872 = vmatpush1.msra.mxu0 0.0
        %2873 = vmatprep.subr.mxu0 0.0
        %2874 = vmatpush1.msra.mxu0 0.0
        %2875 = vmatprep.subr.mxu0 0.0
        %2876 = vmatpush1.msra.mxu0 0.0
        %2877 = vmatprep.subr.mxu0 0.0
        %2878 = vmatpush1.msra.mxu0 0.0
        %2879 = vmatprep.subr.mxu0 0.0
        %2880 = vmatpush1.msra.mxu0 0.0
        %2881 = vmatprep.subr.mxu0 0.0
        %2882 = vmatpush1.msra.mxu0 0.0
        %2883 = vmatprep.subr.mxu0 0.0
        %2884 = vmatpush1.msra.mxu0 0.0
        %2885 = vmatprep.subr.mxu0 0.0
        %2886 = vmatpush1.msra.mxu0 0.0
        %2887 = vmatprep.subr.mxu0 0.0
        %2888 = vmatpush1.msra.mxu0 0.0
        %2889 = vmatprep.subr.mxu0 0.0
        %2890 = vmatpush1.msra.mxu0 0.0
        %2891 = vmatprep.subr.mxu0 0.0
        %2892 = vmatpush1.msra.mxu0 0.0
        %2893 = vmatprep.subr.mxu0 0.0
        %2894 = vmatpush1.msra.mxu0 0.0
        %2895 = vmatprep.subr.mxu0 0.0
        %2896 = vmatpush1.msra.mxu0 0.0
        %2897 = vmatprep.subr.mxu0 0.0
        %2898 = vmatpush1.msra.mxu0 0.0
        %2899 = vmatprep.subr.mxu0 0.0
        %2900 = vmatpush1.msra.mxu0 0.0
        %2901 = vmatprep.subr.mxu0 0.0
        %2902 = vmatpush1.msra.mxu0 0.0
        %2903 = vmatprep.subr.mxu0 0.0
        %2904 = vmatpush1.msra.mxu0 0.0
        %2905 = vmatprep.subr.mxu0 0.0
        %2906 = vmatpush1.msra.mxu0 0.0
        %2907 = vmatprep.subr.mxu0 0.0
        %2908 = vmatpush1.msra.mxu0 0.0
        %2909 = vmatprep.mubr.f32.mxu0 0.0
        %2910 = vmatmul.mubr.f32.gmra.mrb[0].mxu0 %v2146
        %v2911 = vpop.f32.mrb[0].mxu0
        %v2912 = vadd.f32 0.0, %v2911
        %v2913 = vpop.f32.mrb[0].mxu0
        %2914 = vmatprep.mubr.f32.mxu0 0.0
        %2915 = vmatmul.mubr.f32.gmra.mrb[0].mxu0 %v2149
        %v2916 = vpop.f32.mrb[0].mxu0
        %v2917 = vadd.f32 0.0, %v2916
        %v2918 = vpop.f32.mrb[0].mxu0
        %2919 = vmatprep.mubr.f32.mxu0 0.0
        %2920 = vmatmul.mubr.f32.gmra.mrb[0].mxu0 %v2152
        %v2921 = vpop.f32.mrb[0].mxu0
        %v2922 = vadd.f32 0.0, %v2921
        %v2923 = vpop.f32.mrb[0].mxu0
        %2924 = vmatprep.mubr.f32.mxu0 0.0
        %2925 = vmatmul.mubr.f32.gmra.mrb[0].mxu0 %v2155
        %v2926 = vpop.f32.mrb[0].mxu0
        %v2927 = vadd.f32 0.0, %v2926
        %v2928 = vpop.f32.mrb[0].mxu0
        %2929 = vdwg.mxu0
        %v2930 = vadd.f32 %v2838, %v2912
        %v2931 = vadd.f32 %v2839, %v2917
        %v2932 = vadd.f32 %v2840, %v2922
        %v2933 = vadd.f32 %v2841, %v2927
        %v2934 = vmax.f32 %v2930, 0.0
        %v2935 = vmax.f32 %v2931, 0.0
        %v2936 = vmax.f32 %v2932, 0.0
        %v2937 = vmax.f32 %v2933, 0.0
        %2938 = vmatprep.subr.mxu0 0.0
        %2939 = vmatpush1.msra.mxu0 %v2934
        %2940 = vmatprep.subr.mxu0 0.0
        %2941 = vmatpush1.msra.mxu0 %v2935
        %2942 = vmatprep.subr.mxu0 0.0
        %2943 = vmatpush1.msra.mxu0 %v2936
        %2944 = vmatprep.subr.mxu0 0.0
        %2945 = vmatpush1.msra.mxu0 %v2937
        %2946 = vmatprep.subr.mxu0 0.0
        %2947 = vmatpush1.msra.mxu0 0.0
        %2948 = vmatprep.subr.mxu0 0.0
        %2949 = vmatpush1.msra.mxu0 0.0
        %2950 = vmatprep.subr.mxu0 0.0
        %2951 = vmatpush1.msra.mxu0 0.0
        %2952 = vmatprep.subr.mxu0 0.0
        %2953 = vmatpush1.msra.mxu0 0.0
        %2954 = vmatprep.subr.mxu0 0.0
        %2955 = vmatpush1.msra.mxu0 0.0
        %2956 = vmatprep.subr.mxu0 0.0
        %2957 = vmatpush1.msra.mxu0 0.0
        %2958 = vmatprep.subr.mxu0 0.0
        %2959 = vmatpush1.msra.mxu0 0.0
        %2960 = vmatprep.subr.mxu0 0.0
        %2961 = vmatpush1.msra.mxu0 0.0
        %2962 = vmatprep.subr.mxu0 0.0
        %2963 = vmatpush1.msra.mxu0 0.0
        %2964 = vmatprep.subr.mxu0 0.0
        %2965 = vmatpush1.msra.mxu0 0.0
        %2966 = vmatprep.subr.mxu0 0.0
        %2967 = vmatpush1.msra.mxu0 0.0
        %2968 = vmatprep.subr.mxu0 0.0
        %2969 = vmatpush1.msra.mxu0 0.0
        %2970 = vmatprep.subr.mxu0 0.0
        %2971 = vmatpush1.msra.mxu0 0.0
        %2972 = vmatprep.subr.mxu0 0.0
        %2973 = vmatpush1.msra.mxu0 0.0
        %2974 = vmatprep.subr.mxu0 0.0
        %2975 = vmatpush1.msra.mxu0 0.0
        %2976 = vmatprep.subr.mxu0 0.0
        %2977 = vmatpush1.msra.mxu0 0.0
        %2978 = vmatprep.subr.mxu0 0.0
        %2979 = vmatpush1.msra.mxu0 0.0
        %2980 = vmatprep.subr.mxu0 0.0
        %2981 = vmatpush1.msra.mxu0 0.0
        %2982 = vmatprep.subr.mxu0 0.0
        %2983 = vmatpush1.msra.mxu0 0.0
        %2984 = vmatprep.subr.mxu0 0.0
        %2985 = vmatpush1.msra.mxu0 0.0
        %2986 = vmatprep.subr.mxu0 0.0
        %2987 = vmatpush1.msra.mxu0 0.0
        %2988 = vmatprep.subr.mxu0 0.0
        %2989 = vmatpush1.msra.mxu0 0.0
        %2990 = vmatprep.subr.mxu0 0.0
        %2991 = vmatpush1.msra.mxu0 0.0
        %2992 = vmatprep.subr.mxu0 0.0
        %2993 = vmatpush1.msra.mxu0 0.0
        %2994 = vmatprep.subr.mxu0 0.0
        %2995 = vmatpush1.msra.mxu0 0.0
        %2996 = vmatprep.subr.mxu0 0.0
        %2997 = vmatpush1.msra.mxu0 0.0
        %2998 = vmatprep.subr.mxu0 0.0
        %2999 = vmatpush1.msra.mxu0 0.0
        %3000 = vmatprep.subr.mxu0 0.0
        %3001 = vmatpush1.msra.mxu0 0.0
        %3002 = vmatprep.mubr.f32.mxu0 0.0
        %3003 = vmatmul.mubr.f32.gmra.mrb[0].mxu0 %v2260
        %v3004 = vpop.f32.mrb[0].mxu0
        %v3005 = vadd.f32 %v2256, %v3004
        %v3006 = vpop.f32.mrb[0].mxu0
        %3007 = vdwg.mxu0
        %v3008 = vld [vmem:[%s292 + $0x8] sm:$0x30]
        %v3010 = vrot.slane %v2432, 6
        %v3012 = vsub.f32 %v3008, %v3010
        %v3014 = vrot.slane %v3012, 4
        %v3016 = vmul.f32 %v3005, %v3014
        %v3017 = vsel %vm822, %v3016, 0.0
        %v3018 = vrot.slane %v3017, 4
        %v3019 = vadd.f32 %v3017, %v3018
        %v3020 = vrot.slane %v3019, 2
        %v3021 = vadd.f32 %v3019, %v3020
        %v3022 = vrot.slane %v3021, 1
        %v3023 = vadd.f32 %v3021, %v3022
        %v3024 = vadd.f32 %v2448, %v3023
        %3025 = vst [vmem:[%s336 + $0xa] sm:$0x1] %v3024
        %v3026 = vld [vmem:[#allocation2 + $0x90] sm:$0xff]
        %v3027 = vld [vmem:[#allocation2 + $0xb0] sm:$0xff]
        %v3028 = vld [vmem:[#allocation2 + $0xd0] sm:$0xff]
        %v3029 = vld [vmem:[#allocation2 + $0xf0] sm:$0xff]
        %v3031 = vsel %vm822, %v2529, 0
        %3033 = vmatprep.subr.mxu0 0.0
        %3034 = vmatpush1.msra.mxu0 %v3031
        %3035 = vmatprep.subr.mxu0 0.0
        %3036 = vmatpush1.msra.mxu0 0.0
        %3037 = vmatprep.subr.mxu0 0.0
        %3038 = vmatpush1.msra.mxu0 0.0
        %3039 = vmatprep.subr.mxu0 0.0
        %3040 = vmatpush1.msra.mxu0 0.0
        %3041 = vmatprep.subr.mxu0 0.0
        %3042 = vmatpush1.msra.mxu0 0.0
        %3043 = vmatprep.subr.mxu0 0.0
        %3044 = vmatpush1.msra.mxu0 0.0
        %3045 = vmatprep.subr.mxu0 0.0
        %3046 = vmatpush1.msra.mxu0 0.0
        %3047 = vmatprep.subr.mxu0 0.0
        %3048 = vmatpush1.msra.mxu0 0.0
        %3049 = vmatprep.subr.mxu0 0.0
        %3050 = vmatpush1.msra.mxu0 0.0
        %3051 = vmatprep.subr.mxu0 0.0
        %3052 = vmatpush1.msra.mxu0 0.0
        %3053 = vmatprep.subr.mxu0 0.0
        %3054 = vmatpush1.msra.mxu0 0.0
        %3055 = vmatprep.subr.mxu0 0.0
        %3056 = vmatpush1.msra.mxu0 0.0
        %3057 = vmatprep.subr.mxu0 0.0
        %3058 = vmatpush1.msra.mxu0 0.0
        %3059 = vmatprep.subr.mxu0 0.0
        %3060 = vmatpush1.msra.mxu0 0.0
        %3061 = vmatprep.subr.mxu0 0.0
        %3062 = vmatpush1.msra.mxu0 0.0
        %3063 = vmatprep.subr.mxu0 0.0
        %3064 = vmatpush1.msra.mxu0 0.0
        %3065 = vmatprep.subr.mxu0 0.0
        %3066 = vmatpush1.msra.mxu0 0.0
        %3067 = vmatprep.subr.mxu0 0.0
        %3068 = vmatpush1.msra.mxu0 0.0
        %3069 = vmatprep.subr.mxu0 0.0
        %3070 = vmatpush1.msra.mxu0 0.0
        %3071 = vmatprep.subr.mxu0 0.0
        %3072 = vmatpush1.msra.mxu0 0.0
        %3073 = vmatprep.subr.mxu0 0.0
        %3074 = vmatpush1.msra.mxu0 0.0
        %3075 = vmatprep.subr.mxu0 0.0
        %3076 = vmatpush1.msra.mxu0 0.0
        %3077 = vmatprep.subr.mxu0 0.0
        %3078 = vmatpush1.msra.mxu0 0.0
        %3079 = vmatprep.subr.mxu0 0.0
        %3080 = vmatpush1.msra.mxu0 0.0
        %3081 = vmatprep.subr.mxu0 0.0
        %3082 = vmatpush1.msra.mxu0 0.0
        %3083 = vmatprep.subr.mxu0 0.0
        %3084 = vmatpush1.msra.mxu0 0.0
        %3085 = vmatprep.subr.mxu0 0.0
        %3086 = vmatpush1.msra.mxu0 0.0
        %3087 = vmatprep.subr.mxu0 0.0
        %3088 = vmatpush1.msra.mxu0 0.0
        %3089 = vmatprep.subr.mxu0 0.0
        %3090 = vmatpush1.msra.mxu0 0.0
        %3091 = vmatprep.subr.mxu0 0.0
        %3092 = vmatpush1.msra.mxu0 0.0
        %3093 = vmatprep.subr.mxu0 0.0
        %3094 = vmatpush1.msra.mxu0 0.0
        %3095 = vmatprep.subr.mxu0 0.0
        %3096 = vmatpush1.msra.mxu0 0.0
        %3097 = vmatprep.mubr.f32.mxu0 0.0
        %3098 = vmatmul.mubr.f32.gmra.mrb[0].mxu0 %v2146
        %v3099 = vpop.f32.mrb[0].mxu0
        %v3100 = vadd.f32 0.0, %v3099
        %v3101 = vpop.f32.mrb[0].mxu0
        %3102 = vmatprep.mubr.f32.mxu0 0.0
        %3103 = vmatmul.mubr.f32.gmra.mrb[0].mxu0 %v2149
        %v3104 = vpop.f32.mrb[0].mxu0
        %v3105 = vadd.f32 0.0, %v3104
        %v3106 = vpop.f32.mrb[0].mxu0
        %3107 = vmatprep.mubr.f32.mxu0 0.0
        %3108 = vmatmul.mubr.f32.gmra.mrb[0].mxu0 %v2152
        %v3109 = vpop.f32.mrb[0].mxu0
        %v3110 = vadd.f32 0.0, %v3109
        %v3111 = vpop.f32.mrb[0].mxu0
        %3112 = vmatprep.mubr.f32.mxu0 0.0
        %3113 = vmatmul.mubr.f32.gmra.mrb[0].mxu0 %v2155
        %v3114 = vpop.f32.mrb[0].mxu0
        %v3115 = vadd.f32 0.0, %v3114
        %v3116 = vpop.f32.mrb[0].mxu0
        %3117 = vdwg.mxu0
        %v3118 = vadd.f32 %v3026, %v3100
        %v3119 = vadd.f32 %v3027, %v3105
        %v3120 = vadd.f32 %v3028, %v3110
        %v3121 = vadd.f32 %v3029, %v3115
        %v3122 = vmax.f32 %v3118, 0.0
        %v3123 = vmax.f32 %v3119, 0.0
        %v3124 = vmax.f32 %v3120, 0.0
        %v3125 = vmax.f32 %v3121, 0.0
        %3126 = vmatprep.subr.mxu0 0.0
        %3127 = vmatpush1.msra.mxu0 %v3122
        %3128 = vmatprep.subr.mxu0 0.0
        %3129 = vmatpush1.msra.mxu0 %v3123
        %3130 = vmatprep.subr.mxu0 0.0
        %3131 = vmatpush1.msra.mxu0 %v3124
        %3132 = vmatprep.subr.mxu0 0.0
        %3133 = vmatpush1.msra.mxu0 %v3125
        %3134 = vmatprep.subr.mxu0 0.0
        %3135 = vmatpush1.msra.mxu0 0.0
        %3136 = vmatprep.subr.mxu0 0.0
        %3137 = vmatpush1.msra.mxu0 0.0
        %3138 = vmatprep.subr.mxu0 0.0
        %3139 = vmatpush1.msra.mxu0 0.0
        %3140 = vmatprep.subr.mxu0 0.0
        %3141 = vmatpush1.msra.mxu0 0.0
        %3142 = vmatprep.subr.mxu0 0.0
        %3143 = vmatpush1.msra.mxu0 0.0
        %3144 = vmatprep.subr.mxu0 0.0
        %3145 = vmatpush1.msra.mxu0 0.0
        %3146 = vmatprep.subr.mxu0 0.0
        %3147 = vmatpush1.msra.mxu0 0.0
        %3148 = vmatprep.subr.mxu0 0.0
        %3149 = vmatpush1.msra.mxu0 0.0
        %3150 = vmatprep.subr.mxu0 0.0
        %3151 = vmatpush1.msra.mxu0 0.0
        %3152 = vmatprep.subr.mxu0 0.0
        %3153 = vmatpush1.msra.mxu0 0.0
        %3154 = vmatprep.subr.mxu0 0.0
        %3155 = vmatpush1.msra.mxu0 0.0
        %3156 = vmatprep.subr.mxu0 0.0
        %3157 = vmatpush1.msra.mxu0 0.0
        %3158 = vmatprep.subr.mxu0 0.0
        %3159 = vmatpush1.msra.mxu0 0.0
        %3160 = vmatprep.subr.mxu0 0.0
        %3161 = vmatpush1.msra.mxu0 0.0
        %3162 = vmatprep.subr.mxu0 0.0
        %3163 = vmatpush1.msra.mxu0 0.0
        %3164 = vmatprep.subr.mxu0 0.0
        %3165 = vmatpush1.msra.mxu0 0.0
        %3166 = vmatprep.subr.mxu0 0.0
        %3167 = vmatpush1.msra.mxu0 0.0
        %3168 = vmatprep.subr.mxu0 0.0
        %3169 = vmatpush1.msra.mxu0 0.0
        %3170 = vmatprep.subr.mxu0 0.0
        %3171 = vmatpush1.msra.mxu0 0.0
        %3172 = vmatprep.subr.mxu0 0.0
        %3173 = vmatpush1.msra.mxu0 0.0
        %3174 = vmatprep.subr.mxu0 0.0
        %3175 = vmatpush1.msra.mxu0 0.0
        %3176 = vmatprep.subr.mxu0 0.0
        %3177 = vmatpush1.msra.mxu0 0.0
        %3178 = vmatprep.subr.mxu0 0.0
        %3179 = vmatpush1.msra.mxu0 0.0
        %3180 = vmatprep.subr.mxu0 0.0
        %3181 = vmatpush1.msra.mxu0 0.0
        %3182 = vmatprep.subr.mxu0 0.0
        %3183 = vmatpush1.msra.mxu0 0.0
        %3184 = vmatprep.subr.mxu0 0.0
        %3185 = vmatpush1.msra.mxu0 0.0
        %3186 = vmatprep.subr.mxu0 0.0
        %3187 = vmatpush1.msra.mxu0 0.0
        %3188 = vmatprep.subr.mxu0 0.0
        %3189 = vmatpush1.msra.mxu0 0.0
        %3190 = vmatprep.mubr.f32.mxu0 0.0
        %3191 = vmatmul.mubr.f32.gmra.mrb[0].mxu0 %v2260
        %v3192 = vpop.f32.mrb[0].mxu0
        %v3193 = vadd.f32 %v2256, %v3192
        %v3194 = vpop.f32.mrb[0].mxu0
        %3195 = vdwg.mxu0
        %v3196 = vld [vmem:[%s292 + $0x10] sm:$0x30]
        %v3198 = vrot.slane %v2532, 6
        %v3200 = vsub.f32 %v3196, %v3198
        %v3202 = vrot.slane %v3200, 4
        %v3204 = vmul.f32 %v3193, %v3202
        %v3205 = vsel %vm822, %v3204, 0.0
        %v3206 = vrot.slane %v3205, 4
        %v3207 = vadd.f32 %v3205, %v3206
        %v3208 = vrot.slane %v3207, 2
        %v3209 = vadd.f32 %v3207, %v3208
        %v3210 = vrot.slane %v3209, 1
        %v3211 = vadd.f32 %v3209, %v3210
        %v3212 = vadd.f32 %v2548, %v3211
        %3213 = vst [vmem:[%s336 + $0x12] sm:$0x1] %v3212
        %v3214 = vld [vmem:[#allocation2 + $0x98] sm:$0xff]
        %v3215 = vld [vmem:[#allocation2 + $0xb8] sm:$0xff]
        %v3216 = vld [vmem:[#allocation2 + $0xd8] sm:$0xff]
        %v3217 = vld [vmem:[#allocation2 + $0xf8] sm:$0xff]
        %v3219 = vsel %vm822, %v2629, 0
        %3221 = vmatprep.subr.mxu0 0.0
        %3222 = vmatpush1.msra.mxu0 %v3219
        %3223 = vmatprep.subr.mxu0 0.0
        %3224 = vmatpush1.msra.mxu0 0.0
        %3225 = vmatprep.subr.mxu0 0.0
        %3226 = vmatpush1.msra.mxu0 0.0
        %3227 = vmatprep.subr.mxu0 0.0
        %3228 = vmatpush1.msra.mxu0 0.0
        %3229 = vmatprep.subr.mxu0 0.0
        %3230 = vmatpush1.msra.mxu0 0.0
        %3231 = vmatprep.subr.mxu0 0.0
        %3232 = vmatpush1.msra.mxu0 0.0
        %3233 = vmatprep.subr.mxu0 0.0
        %3234 = vmatpush1.msra.mxu0 0.0
        %3235 = vmatprep.subr.mxu0 0.0
        %3236 = vmatpush1.msra.mxu0 0.0
        %3237 = vmatprep.subr.mxu0 0.0
        %3238 = vmatpush1.msra.mxu0 0.0
        %3239 = vmatprep.subr.mxu0 0.0
        %3240 = vmatpush1.msra.mxu0 0.0
        %3241 = vmatprep.subr.mxu0 0.0
        %3242 = vmatpush1.msra.mxu0 0.0
        %3243 = vmatprep.subr.mxu0 0.0
        %3244 = vmatpush1.msra.mxu0 0.0
        %3245 = vmatprep.subr.mxu0 0.0
        %3246 = vmatpush1.msra.mxu0 0.0
        %3247 = vmatprep.subr.mxu0 0.0
        %3248 = vmatpush1.msra.mxu0 0.0
        %3249 = vmatprep.subr.mxu0 0.0
        %3250 = vmatpush1.msra.mxu0 0.0
        %3251 = vmatprep.subr.mxu0 0.0
        %3252 = vmatpush1.msra.mxu0 0.0
        %3253 = vmatprep.subr.mxu0 0.0
        %3254 = vmatpush1.msra.mxu0 0.0
        %3255 = vmatprep.subr.mxu0 0.0
        %3256 = vmatpush1.msra.mxu0 0.0
        %3257 = vmatprep.subr.mxu0 0.0
        %3258 = vmatpush1.msra.mxu0 0.0
        %3259 = vmatprep.subr.mxu0 0.0
        %3260 = vmatpush1.msra.mxu0 0.0
        %3261 = vmatprep.subr.mxu0 0.0
        %3262 = vmatpush1.msra.mxu0 0.0
        %3263 = vmatprep.subr.mxu0 0.0
        %3264 = vmatpush1.msra.mxu0 0.0
        %3265 = vmatprep.subr.mxu0 0.0
        %3266 = vmatpush1.msra.mxu0 0.0
        %3267 = vmatprep.subr.mxu0 0.0
        %3268 = vmatpush1.msra.mxu0 0.0
        %3269 = vmatprep.subr.mxu0 0.0
        %3270 = vmatpush1.msra.mxu0 0.0
        %3271 = vmatprep.subr.mxu0 0.0
        %3272 = vmatpush1.msra.mxu0 0.0
        %3273 = vmatprep.subr.mxu0 0.0
        %3274 = vmatpush1.msra.mxu0 0.0
        %3275 = vmatprep.subr.mxu0 0.0
        %3276 = vmatpush1.msra.mxu0 0.0
        %3277 = vmatprep.subr.mxu0 0.0
        %3278 = vmatpush1.msra.mxu0 0.0
        %3279 = vmatprep.subr.mxu0 0.0
        %3280 = vmatpush1.msra.mxu0 0.0
        %3281 = vmatprep.subr.mxu0 0.0
        %3282 = vmatpush1.msra.mxu0 0.0
        %3283 = vmatprep.subr.mxu0 0.0
        %3284 = vmatpush1.msra.mxu0 0.0
        %3285 = vmatprep.mubr.f32.mxu0 0.0
        %3286 = vmatmul.mubr.f32.gmra.mrb[0].mxu0 %v2146
        %v3287 = vpop.f32.mrb[0].mxu0
        %v3288 = vadd.f32 0.0, %v3287
        %v3289 = vpop.f32.mrb[0].mxu0
        %3290 = vmatprep.mubr.f32.mxu0 0.0
        %3291 = vmatmul.mubr.f32.gmra.mrb[0].mxu0 %v2149
        %v3292 = vpop.f32.mrb[0].mxu0
        %v3293 = vadd.f32 0.0, %v3292
        %v3294 = vpop.f32.mrb[0].mxu0
        %3295 = vmatprep.mubr.f32.mxu0 0.0
        %3296 = vmatmul.mubr.f32.gmra.mrb[0].mxu0 %v2152
        %v3297 = vpop.f32.mrb[0].mxu0
        %v3298 = vadd.f32 0.0, %v3297
        %v3299 = vpop.f32.mrb[0].mxu0
        %3300 = vmatprep.mubr.f32.mxu0 0.0
        %3301 = vmatmul.mubr.f32.gmra.mrb[0].mxu0 %v2155
        %v3302 = vpop.f32.mrb[0].mxu0
        %v3303 = vadd.f32 0.0, %v3302
        %v3304 = vpop.f32.mrb[0].mxu0
        %3305 = vdwg.mxu0
        %v3306 = vadd.f32 %v3214, %v3288
        %v3307 = vadd.f32 %v3215, %v3293
        %v3308 = vadd.f32 %v3216, %v3298
        %v3309 = vadd.f32 %v3217, %v3303
        %v3310 = vmax.f32 %v3306, 0.0
        %v3311 = vmax.f32 %v3307, 0.0
        %v3312 = vmax.f32 %v3308, 0.0
        %v3313 = vmax.f32 %v3309, 0.0
        %3314 = vmatprep.subr.mxu0 0.0
        %3315 = vmatpush1.msra.mxu0 %v3310
        %3316 = vmatprep.subr.mxu0 0.0
        %3317 = vmatpush1.msra.mxu0 %v3311
        %3318 = vmatprep.subr.mxu0 0.0
        %3319 = vmatpush1.msra.mxu0 %v3312
        %3320 = vmatprep.subr.mxu0 0.0
        %3321 = vmatpush1.msra.mxu0 %v3313
        %3322 = vmatprep.subr.mxu0 0.0
        %3323 = vmatpush1.msra.mxu0 0.0
        %3324 = vmatprep.subr.mxu0 0.0
        %3325 = vmatpush1.msra.mxu0 0.0
        %3326 = vmatprep.subr.mxu0 0.0
        %3327 = vmatpush1.msra.mxu0 0.0
        %3328 = vmatprep.subr.mxu0 0.0
        %3329 = vmatpush1.msra.mxu0 0.0
        %3330 = vmatprep.subr.mxu0 0.0
        %3331 = vmatpush1.msra.mxu0 0.0
        %3332 = vmatprep.subr.mxu0 0.0
        %3333 = vmatpush1.msra.mxu0 0.0
        %3334 = vmatprep.subr.mxu0 0.0
        %3335 = vmatpush1.msra.mxu0 0.0
        %3336 = vmatprep.subr.mxu0 0.0
        %3337 = vmatpush1.msra.mxu0 0.0
        %3338 = vmatprep.subr.mxu0 0.0
        %3339 = vmatpush1.msra.mxu0 0.0
        %3340 = vmatprep.subr.mxu0 0.0
        %3341 = vmatpush1.msra.mxu0 0.0
        %3342 = vmatprep.subr.mxu0 0.0
        %3343 = vmatpush1.msra.mxu0 0.0
        %3344 = vmatprep.subr.mxu0 0.0
        %3345 = vmatpush1.msra.mxu0 0.0
        %3346 = vmatprep.subr.mxu0 0.0
        %3347 = vmatpush1.msra.mxu0 0.0
        %3348 = vmatprep.subr.mxu0 0.0
        %3349 = vmatpush1.msra.mxu0 0.0
        %3350 = vmatprep.subr.mxu0 0.0
        %3351 = vmatpush1.msra.mxu0 0.0
        %3352 = vmatprep.subr.mxu0 0.0
        %3353 = vmatpush1.msra.mxu0 0.0
        %3354 = vmatprep.subr.mxu0 0.0
        %3355 = vmatpush1.msra.mxu0 0.0
        %3356 = vmatprep.subr.mxu0 0.0
        %3357 = vmatpush1.msra.mxu0 0.0
        %3358 = vmatprep.subr.mxu0 0.0
        %3359 = vmatpush1.msra.mxu0 0.0
        %3360 = vmatprep.subr.mxu0 0.0
        %3361 = vmatpush1.msra.mxu0 0.0
        %3362 = vmatprep.subr.mxu0 0.0
        %3363 = vmatpush1.msra.mxu0 0.0
        %3364 = vmatprep.subr.mxu0 0.0
        %3365 = vmatpush1.msra.mxu0 0.0
        %3366 = vmatprep.subr.mxu0 0.0
        %3367 = vmatpush1.msra.mxu0 0.0
        %3368 = vmatprep.subr.mxu0 0.0
        %3369 = vmatpush1.msra.mxu0 0.0
        %3370 = vmatprep.subr.mxu0 0.0
        %3371 = vmatpush1.msra.mxu0 0.0
        %3372 = vmatprep.subr.mxu0 0.0
        %3373 = vmatpush1.msra.mxu0 0.0
        %3374 = vmatprep.subr.mxu0 0.0
        %3375 = vmatpush1.msra.mxu0 0.0
        %3376 = vmatprep.subr.mxu0 0.0
        %3377 = vmatpush1.msra.mxu0 0.0
        %3378 = vmatprep.mubr.f32.mxu0 0.0
        %3379 = vmatmul.mubr.f32.gmra.mrb[0].mxu0 %v2260
        %v3380 = vpop.f32.mrb[0].mxu0
        %v3381 = vadd.f32 %v2256, %v3380
        %v3382 = vpop.f32.mrb[0].mxu0
        %3383 = vdwg.mxu0
        %v3384 = vld [vmem:[%s292 + $0x18] sm:$0x30]
        %v3386 = vrot.slane %v2632, 6
        %v3388 = vsub.f32 %v3384, %v3386
        %v3390 = vrot.slane %v3388, 4
        %v3392 = vmul.f32 %v3381, %v3390
        %v3393 = vsel %vm822, %v3392, 0.0
        %v3394 = vrot.slane %v3393, 4
        %v3395 = vadd.f32 %v3393, %v3394
        %v3396 = vrot.slane %v3395, 2
        %v3397 = vadd.f32 %v3395, %v3396
        %v3398 = vrot.slane %v3397, 1
        %v3399 = vadd.f32 %v3397, %v3398
        %v3400 = vadd.f32 %v2648, %v3399
        %3401 = vst [vmem:[%s336 + $0x1a] sm:$0x1] %v3400
        %v3402 = vld [vmem:[#allocation2 + $0x100] sm:$0xff]
        %v3403 = vld [vmem:[#allocation2 + $0x120] sm:$0xff]
        %v3404 = vld [vmem:[#allocation2 + $0x140] sm:$0xff]
        %v3405 = vld [vmem:[#allocation2 + $0x160] sm:$0xff]
        %v3407 = vsel %vm822, %v2817, 0
        %3409 = vmatprep.subr.mxu0 0.0
        %3410 = vmatpush1.msra.mxu0 %v3407
        %3411 = vmatprep.subr.mxu0 0.0
        %3412 = vmatpush1.msra.mxu0 0.0
        %3413 = vmatprep.subr.mxu0 0.0
        %3414 = vmatpush1.msra.mxu0 0.0
        %3415 = vmatprep.subr.mxu0 0.0
        %3416 = vmatpush1.msra.mxu0 0.0
        %3417 = vmatprep.subr.mxu0 0.0
        %3418 = vmatpush1.msra.mxu0 0.0
        %3419 = vmatprep.subr.mxu0 0.0
        %3420 = vmatpush1.msra.mxu0 0.0
        %3421 = vmatprep.subr.mxu0 0.0
        %3422 = vmatpush1.msra.mxu0 0.0
        %3423 = vmatprep.subr.mxu0 0.0
        %3424 = vmatpush1.msra.mxu0 0.0
        %3425 = vmatprep.subr.mxu0 0.0
        %3426 = vmatpush1.msra.mxu0 0.0
        %3427 = vmatprep.subr.mxu0 0.0
        %3428 = vmatpush1.msra.mxu0 0.0
        %3429 = vmatprep.subr.mxu0 0.0
        %3430 = vmatpush1.msra.mxu0 0.0
        %3431 = vmatprep.subr.mxu0 0.0
        %3432 = vmatpush1.msra.mxu0 0.0
        %3433 = vmatprep.subr.mxu0 0.0
        %3434 = vmatpush1.msra.mxu0 0.0
        %3435 = vmatprep.subr.mxu0 0.0
        %3436 = vmatpush1.msra.mxu0 0.0
        %3437 = vmatprep.subr.mxu0 0.0
        %3438 = vmatpush1.msra.mxu0 0.0
        %3439 = vmatprep.subr.mxu0 0.0
        %3440 = vmatpush1.msra.mxu0 0.0
        %3441 = vmatprep.subr.mxu0 0.0
        %3442 = vmatpush1.msra.mxu0 0.0
        %3443 = vmatprep.subr.mxu0 0.0
        %3444 = vmatpush1.msra.mxu0 0.0
        %3445 = vmatprep.subr.mxu0 0.0
        %3446 = vmatpush1.msra.mxu0 0.0
        %3447 = vmatprep.subr.mxu0 0.0
        %3448 = vmatpush1.msra.mxu0 0.0
        %3449 = vmatprep.subr.mxu0 0.0
        %3450 = vmatpush1.msra.mxu0 0.0
        %3451 = vmatprep.subr.mxu0 0.0
        %3452 = vmatpush1.msra.mxu0 0.0
        %3453 = vmatprep.subr.mxu0 0.0
        %3454 = vmatpush1.msra.mxu0 0.0
        %3455 = vmatprep.subr.mxu0 0.0
        %3456 = vmatpush1.msra.mxu0 0.0
        %3457 = vmatprep.subr.mxu0 0.0
        %3458 = vmatpush1.msra.mxu0 0.0
        %3459 = vmatprep.subr.mxu0 0.0
        %3460 = vmatpush1.msra.mxu0 0.0
        %3461 = vmatprep.subr.mxu0 0.0
        %3462 = vmatpush1.msra.mxu0 0.0
        %3463 = vmatprep.subr.mxu0 0.0
        %3464 = vmatpush1.msra.mxu0 0.0
        %3465 = vmatprep.subr.mxu0 0.0
        %3466 = vmatpush1.msra.mxu0 0.0
        %3467 = vmatprep.subr.mxu0 0.0
        %3468 = vmatpush1.msra.mxu0 0.0
        %3469 = vmatprep.subr.mxu0 0.0
        %3470 = vmatpush1.msra.mxu0 0.0
        %3471 = vmatprep.subr.mxu0 0.0
        %3472 = vmatpush1.msra.mxu0 0.0
        %3473 = vmatprep.mubr.f32.mxu0 0.0
        %3474 = vmatmul.mubr.f32.gmra.mrb[0].mxu0 %v2146
        %v3475 = vpop.f32.mrb[0].mxu0
        %v3476 = vadd.f32 0.0, %v3475
        %v3477 = vpop.f32.mrb[0].mxu0
        %3478 = vmatprep.mubr.f32.mxu0 0.0
        %3479 = vmatmul.mubr.f32.gmra.mrb[0].mxu0 %v2149
        %v3480 = vpop.f32.mrb[0].mxu0
        %v3481 = vadd.f32 0.0, %v3480
        %v3482 = vpop.f32.mrb[0].mxu0
        %3483 = vmatprep.mubr.f32.mxu0 0.0
        %3484 = vmatmul.mubr.f32.gmra.mrb[0].mxu0 %v2152
        %v3485 = vpop.f32.mrb[0].mxu0
        %v3486 = vadd.f32 0.0, %v3485
        %v3487 = vpop.f32.mrb[0].mxu0
        %3488 = vmatprep.mubr.f32.mxu0 0.0
        %3489 = vmatmul.mubr.f32.gmra.mrb[0].mxu0 %v2155
        %v3490 = vpop.f32.mrb[0].mxu0
        %v3491 = vadd.f32 0.0, %v3490
        %v3492 = vpop.f32.mrb[0].mxu0
        %3493 = vdwg.mxu0
        %v3494 = vadd.f32 %v3402, %v3476
        %v3495 = vadd.f32 %v3403, %v3481
        %v3496 = vadd.f32 %v3404, %v3486
        %v3497 = vadd.f32 %v3405, %v3491
        %v3498 = vmax.f32 %v3494, 0.0
        %v3499 = vmax.f32 %v3495, 0.0
        %v3500 = vmax.f32 %v3496, 0.0
        %v3501 = vmax.f32 %v3497, 0.0
        %3502 = vmatprep.subr.mxu0 0.0
        %3503 = vmatpush1.msra.mxu0 %v3498
        %3504 = vmatprep.subr.mxu0 0.0
        %3505 = vmatpush1.msra.mxu0 %v3499
        %3506 = vmatprep.subr.mxu0 0.0
        %3507 = vmatpush1.msra.mxu0 %v3500
        %3508 = vmatprep.subr.mxu0 0.0
        %3509 = vmatpush1.msra.mxu0 %v3501
        %3510 = vmatprep.subr.mxu0 0.0
        %3511 = vmatpush1.msra.mxu0 0.0
        %3512 = vmatprep.subr.mxu0 0.0
        %3513 = vmatpush1.msra.mxu0 0.0
        %3514 = vmatprep.subr.mxu0 0.0
        %3515 = vmatpush1.msra.mxu0 0.0
        %3516 = vmatprep.subr.mxu0 0.0
        %3517 = vmatpush1.msra.mxu0 0.0
        %3518 = vmatprep.subr.mxu0 0.0
        %3519 = vmatpush1.msra.mxu0 0.0
        %3520 = vmatprep.subr.mxu0 0.0
        %3521 = vmatpush1.msra.mxu0 0.0
        %3522 = vmatprep.subr.mxu0 0.0
        %3523 = vmatpush1.msra.mxu0 0.0
        %3524 = vmatprep.subr.mxu0 0.0
        %3525 = vmatpush1.msra.mxu0 0.0
        %3526 = vmatprep.subr.mxu0 0.0
        %3527 = vmatpush1.msra.mxu0 0.0
        %3528 = vmatprep.subr.mxu0 0.0
        %3529 = vmatpush1.msra.mxu0 0.0
        %3530 = vmatprep.subr.mxu0 0.0
        %3531 = vmatpush1.msra.mxu0 0.0
        %3532 = vmatprep.subr.mxu0 0.0
        %3533 = vmatpush1.msra.mxu0 0.0
        %3534 = vmatprep.subr.mxu0 0.0
        %3535 = vmatpush1.msra.mxu0 0.0
        %3536 = vmatprep.subr.mxu0 0.0
        %3537 = vmatpush1.msra.mxu0 0.0
        %3538 = vmatprep.subr.mxu0 0.0
        %3539 = vmatpush1.msra.mxu0 0.0
        %3540 = vmatprep.subr.mxu0 0.0
        %3541 = vmatpush1.msra.mxu0 0.0
        %3542 = vmatprep.subr.mxu0 0.0
        %3543 = vmatpush1.msra.mxu0 0.0
        %3544 = vmatprep.subr.mxu0 0.0
        %3545 = vmatpush1.msra.mxu0 0.0
        %3546 = vmatprep.subr.mxu0 0.0
        %3547 = vmatpush1.msra.mxu0 0.0
        %3548 = vmatprep.subr.mxu0 0.0
        %3549 = vmatpush1.msra.mxu0 0.0
        %3550 = vmatprep.subr.mxu0 0.0
        %3551 = vmatpush1.msra.mxu0 0.0
        %3552 = vmatprep.subr.mxu0 0.0
        %3553 = vmatpush1.msra.mxu0 0.0
        %3554 = vmatprep.subr.mxu0 0.0
        %3555 = vmatpush1.msra.mxu0 0.0
        %3556 = vmatprep.subr.mxu0 0.0
        %3557 = vmatpush1.msra.mxu0 0.0
        %3558 = vmatprep.subr.mxu0 0.0
        %3559 = vmatpush1.msra.mxu0 0.0
        %3560 = vmatprep.subr.mxu0 0.0
        %3561 = vmatpush1.msra.mxu0 0.0
        %3562 = vmatprep.subr.mxu0 0.0
        %3563 = vmatpush1.msra.mxu0 0.0
        %3564 = vmatprep.subr.mxu0 0.0
        %3565 = vmatpush1.msra.mxu0 0.0
        %3566 = vmatprep.mubr.f32.mxu0 0.0
        %3567 = vmatmul.mubr.f32.gmra.mrb[0].mxu0 %v2260
        %v3568 = vpop.f32.mrb[0].mxu0
        %v3569 = vadd.f32 %v2256, %v3568
        %v3570 = vpop.f32.mrb[0].mxu0
        %3571 = vdwg.mxu0
        %v3572 = vld [vmem:[%s292] sm:$0xc0]
        %v3574 = vrot.slane %v2820, 6
        %v3576 = vsub.f32 %v3572, %v3574
        %v3578 = vrot.slane %v3576, 6
        %v3580 = vmul.f32 %v3569, %v3578
        %v3581 = vsel %vm822, %v3580, 0.0
        %v3582 = vrot.slane %v3581, 4
        %v3583 = vadd.f32 %v3581, %v3582
        %v3584 = vrot.slane %v3583, 2
        %v3585 = vadd.f32 %v3583, %v3584
        %v3586 = vrot.slane %v3585, 1
        %v3587 = vadd.f32 %v3585, %v3586
        %v3588 = vadd.f32 %v2836, %v3587
        %3589 = vst [vmem:[%s336 + $0x3] sm:$0x1] %v3588
        %v3590 = vld [vmem:[#allocation2 + $0x108] sm:$0xff]
        %v3591 = vld [vmem:[#allocation2 + $0x128] sm:$0xff]
        %v3592 = vld [vmem:[#allocation2 + $0x148] sm:$0xff]
        %v3593 = vld [vmem:[#allocation2 + $0x168] sm:$0xff]
        %v3595 = vsel %vm822, %v3005, 0
        %3597 = vmatprep.subr.mxu0 0.0
        %3598 = vmatpush1.msra.mxu0 %v3595
        %3599 = vmatprep.subr.mxu0 0.0
        %3600 = vmatpush1.msra.mxu0 0.0
        %3601 = vmatprep.subr.mxu0 0.0
        %3602 = vmatpush1.msra.mxu0 0.0
        %3603 = vmatprep.subr.mxu0 0.0
        %3604 = vmatpush1.msra.mxu0 0.0
        %3605 = vmatprep.subr.mxu0 0.0
        %3606 = vmatpush1.msra.mxu0 0.0
        %3607 = vmatprep.subr.mxu0 0.0
        %3608 = vmatpush1.msra.mxu0 0.0
        %3609 = vmatprep.subr.mxu0 0.0
        %3610 = vmatpush1.msra.mxu0 0.0
        %3611 = vmatprep.subr.mxu0 0.0
        %3612 = vmatpush1.msra.mxu0 0.0
        %3613 = vmatprep.subr.mxu0 0.0
        %3614 = vmatpush1.msra.mxu0 0.0
        %3615 = vmatprep.subr.mxu0 0.0
        %3616 = vmatpush1.msra.mxu0 0.0
        %3617 = vmatprep.subr.mxu0 0.0
        %3618 = vmatpush1.msra.mxu0 0.0
        %3619 = vmatprep.subr.mxu0 0.0
        %3620 = vmatpush1.msra.mxu0 0.0
        %3621 = vmatprep.subr.mxu0 0.0
        %3622 = vmatpush1.msra.mxu0 0.0
        %3623 = vmatprep.subr.mxu0 0.0
        %3624 = vmatpush1.msra.mxu0 0.0
        %3625 = vmatprep.subr.mxu0 0.0
        %3626 = vmatpush1.msra.mxu0 0.0
        %3627 = vmatprep.subr.mxu0 0.0
        %3628 = vmatpush1.msra.mxu0 0.0
        %3629 = vmatprep.subr.mxu0 0.0
        %3630 = vmatpush1.msra.mxu0 0.0
        %3631 = vmatprep.subr.mxu0 0.0
        %3632 = vmatpush1.msra.mxu0 0.0
        %3633 = vmatprep.subr.mxu0 0.0
        %3634 = vmatpush1.msra.mxu0 0.0
        %3635 = vmatprep.subr.mxu0 0.0
        %3636 = vmatpush1.msra.mxu0 0.0
        %3637 = vmatprep.subr.mxu0 0.0
        %3638 = vmatpush1.msra.mxu0 0.0
        %3639 = vmatprep.subr.mxu0 0.0
        %3640 = vmatpush1.msra.mxu0 0.0
        %3641 = vmatprep.subr.mxu0 0.0
        %3642 = vmatpush1.msra.mxu0 0.0
        %3643 = vmatprep.subr.mxu0 0.0
        %3644 = vmatpush1.msra.mxu0 0.0
        %3645 = vmatprep.subr.mxu0 0.0
        %3646 = vmatpush1.msra.mxu0 0.0
        %3647 = vmatprep.subr.mxu0 0.0
        %3648 = vmatpush1.msra.mxu0 0.0
        %3649 = vmatprep.subr.mxu0 0.0
        %3650 = vmatpush1.msra.mxu0 0.0
        %3651 = vmatprep.subr.mxu0 0.0
        %3652 = vmatpush1.msra.mxu0 0.0
        %3653 = vmatprep.subr.mxu0 0.0
        %3654 = vmatpush1.msra.mxu0 0.0
        %3655 = vmatprep.subr.mxu0 0.0
        %3656 = vmatpush1.msra.mxu0 0.0
        %3657 = vmatprep.subr.mxu0 0.0
        %3658 = vmatpush1.msra.mxu0 0.0
        %3659 = vmatprep.subr.mxu0 0.0
        %3660 = vmatpush1.msra.mxu0 0.0
        %3661 = vmatprep.mubr.f32.mxu0 0.0
        %3662 = vmatmul.mubr.f32.gmra.mrb[0].mxu0 %v2146
        %v3663 = vpop.f32.mrb[0].mxu0
        %v3664 = vadd.f32 0.0, %v3663
        %v3665 = vpop.f32.mrb[0].mxu0
        %3666 = vmatprep.mubr.f32.mxu0 0.0
        %3667 = vmatmul.mubr.f32.gmra.mrb[0].mxu0 %v2149
        %v3668 = vpop.f32.mrb[0].mxu0
        %v3669 = vadd.f32 0.0, %v3668
        %v3670 = vpop.f32.mrb[0].mxu0
        %3671 = vmatprep.mubr.f32.mxu0 0.0
        %3672 = vmatmul.mubr.f32.gmra.mrb[0].mxu0 %v2152
        %v3673 = vpop.f32.mrb[0].mxu0
        %v3674 = vadd.f32 0.0, %v3673
        %v3675 = vpop.f32.mrb[0].mxu0
        %3676 = vmatprep.mubr.f32.mxu0 0.0
        %3677 = vmatmul.mubr.f32.gmra.mrb[0].mxu0 %v2155
        %v3678 = vpop.f32.mrb[0].mxu0
        %v3679 = vadd.f32 0.0, %v3678
        %v3680 = vpop.f32.mrb[0].mxu0
        %3681 = vdwg.mxu0
        %v3682 = vadd.f32 %v3590, %v3664
        %v3683 = vadd.f32 %v3591, %v3669
        %v3684 = vadd.f32 %v3592, %v3674
        %v3685 = vadd.f32 %v3593, %v3679
        %v3686 = vmax.f32 %v3682, 0.0
        %v3687 = vmax.f32 %v3683, 0.0
        %v3688 = vmax.f32 %v3684, 0.0
        %v3689 = vmax.f32 %v3685, 0.0
        %3690 = vmatprep.subr.mxu0 0.0
        %3691 = vmatpush1.msra.mxu0 %v3686
        %3692 = vmatprep.subr.mxu0 0.0
        %3693 = vmatpush1.msra.mxu0 %v3687
        %3694 = vmatprep.subr.mxu0 0.0
        %3695 = vmatpush1.msra.mxu0 %v3688
        %3696 = vmatprep.subr.mxu0 0.0
        %3697 = vmatpush1.msra.mxu0 %v3689
        %3698 = vmatprep.subr.mxu0 0.0
        %3699 = vmatpush1.msra.mxu0 0.0
        %3700 = vmatprep.subr.mxu0 0.0
        %3701 = vmatpush1.msra.mxu0 0.0
        %3702 = vmatprep.subr.mxu0 0.0
        %3703 = vmatpush1.msra.mxu0 0.0
        %3704 = vmatprep.subr.mxu0 0.0
        %3705 = vmatpush1.msra.mxu0 0.0
        %3706 = vmatprep.subr.mxu0 0.0
        %3707 = vmatpush1.msra.mxu0 0.0
        %3708 = vmatprep.subr.mxu0 0.0
        %3709 = vmatpush1.msra.mxu0 0.0
        %3710 = vmatprep.subr.mxu0 0.0
        %3711 = vmatpush1.msra.mxu0 0.0
        %3712 = vmatprep.subr.mxu0 0.0
        %3713 = vmatpush1.msra.mxu0 0.0
        %3714 = vmatprep.subr.mxu0 0.0
        %3715 = vmatpush1.msra.mxu0 0.0
        %3716 = vmatprep.subr.mxu0 0.0
        %3717 = vmatpush1.msra.mxu0 0.0
        %3718 = vmatprep.subr.mxu0 0.0
        %3719 = vmatpush1.msra.mxu0 0.0
        %3720 = vmatprep.subr.mxu0 0.0
        %3721 = vmatpush1.msra.mxu0 0.0
        %3722 = vmatprep.subr.mxu0 0.0
        %3723 = vmatpush1.msra.mxu0 0.0
        %3724 = vmatprep.subr.mxu0 0.0
        %3725 = vmatpush1.msra.mxu0 0.0
        %3726 = vmatprep.subr.mxu0 0.0
        %3727 = vmatpush1.msra.mxu0 0.0
        %3728 = vmatprep.subr.mxu0 0.0
        %3729 = vmatpush1.msra.mxu0 0.0
        %3730 = vmatprep.subr.mxu0 0.0
        %3731 = vmatpush1.msra.mxu0 0.0
        %3732 = vmatprep.subr.mxu0 0.0
        %3733 = vmatpush1.msra.mxu0 0.0
        %3734 = vmatprep.subr.mxu0 0.0
        %3735 = vmatpush1.msra.mxu0 0.0
        %3736 = vmatprep.subr.mxu0 0.0
        %3737 = vmatpush1.msra.mxu0 0.0
        %3738 = vmatprep.subr.mxu0 0.0
        %3739 = vmatpush1.msra.mxu0 0.0
        %3740 = vmatprep.subr.mxu0 0.0
        %3741 = vmatpush1.msra.mxu0 0.0
        %3742 = vmatprep.subr.mxu0 0.0
        %3743 = vmatpush1.msra.mxu0 0.0
        %3744 = vmatprep.subr.mxu0 0.0
        %3745 = vmatpush1.msra.mxu0 0.0
        %3746 = vmatprep.subr.mxu0 0.0
        %3747 = vmatpush1.msra.mxu0 0.0
        %3748 = vmatprep.subr.mxu0 0.0
        %3749 = vmatpush1.msra.mxu0 0.0
        %3750 = vmatprep.subr.mxu0 0.0
        %3751 = vmatpush1.msra.mxu0 0.0
        %3752 = vmatprep.subr.mxu0 0.0
        %3753 = vmatpush1.msra.mxu0 0.0
        %3754 = vmatprep.mubr.f32.mxu0 0.0
        %3755 = vmatmul.mubr.f32.gmra.mrb[0].mxu0 %v2260
        %v3756 = vpop.f32.mrb[0].mxu0
        %v3757 = vadd.f32 %v2256, %v3756
        %v3758 = vpop.f32.mrb[0].mxu0
        %3759 = vdwg.mxu0
        %v3760 = vld [vmem:[%s292 + $0x8] sm:$0xc0]
        %v3762 = vrot.slane %v3008, 6
        %v3764 = vsub.f32 %v3760, %v3762
        %v3766 = vrot.slane %v3764, 6
        %v3768 = vmul.f32 %v3757, %v3766
        %v3769 = vsel %vm822, %v3768, 0.0
        %v3770 = vrot.slane %v3769, 4
        %v3771 = vadd.f32 %v3769, %v3770
        %v3772 = vrot.slane %v3771, 2
        %v3773 = vadd.f32 %v3771, %v3772
        %v3774 = vrot.slane %v3773, 1
        %v3775 = vadd.f32 %v3773, %v3774
        %v3776 = vadd.f32 %v3024, %v3775
        %3777 = vst [vmem:[%s336 + $0xb] sm:$0x1] %v3776
        %v3778 = vld [vmem:[#allocation2 + $0x110] sm:$0xff]
        %v3779 = vld [vmem:[#allocation2 + $0x130] sm:$0xff]
        %v3780 = vld [vmem:[#allocation2 + $0x150] sm:$0xff]
        %v3781 = vld [vmem:[#allocation2 + $0x170] sm:$0xff]
        %v3783 = vsel %vm822, %v3193, 0
        %3785 = vmatprep.subr.mxu0 0.0
        %3786 = vmatpush1.msra.mxu0 %v3783
        %3787 = vmatprep.subr.mxu0 0.0
        %3788 = vmatpush1.msra.mxu0 0.0
        %3789 = vmatprep.subr.mxu0 0.0
        %3790 = vmatpush1.msra.mxu0 0.0
        %3791 = vmatprep.subr.mxu0 0.0
        %3792 = vmatpush1.msra.mxu0 0.0
        %3793 = vmatprep.subr.mxu0 0.0
        %3794 = vmatpush1.msra.mxu0 0.0
        %3795 = vmatprep.subr.mxu0 0.0
        %3796 = vmatpush1.msra.mxu0 0.0
        %3797 = vmatprep.subr.mxu0 0.0
        %3798 = vmatpush1.msra.mxu0 0.0
        %3799 = vmatprep.subr.mxu0 0.0
        %3800 = vmatpush1.msra.mxu0 0.0
        %3801 = vmatprep.subr.mxu0 0.0
        %3802 = vmatpush1.msra.mxu0 0.0
        %3803 = vmatprep.subr.mxu0 0.0
        %3804 = vmatpush1.msra.mxu0 0.0
        %3805 = vmatprep.subr.mxu0 0.0
        %3806 = vmatpush1.msra.mxu0 0.0
        %3807 = vmatprep.subr.mxu0 0.0
        %3808 = vmatpush1.msra.mxu0 0.0
        %3809 = vmatprep.subr.mxu0 0.0
        %3810 = vmatpush1.msra.mxu0 0.0
        %3811 = vmatprep.subr.mxu0 0.0
        %3812 = vmatpush1.msra.mxu0 0.0
        %3813 = vmatprep.subr.mxu0 0.0
        %3814 = vmatpush1.msra.mxu0 0.0
        %3815 = vmatprep.subr.mxu0 0.0
        %3816 = vmatpush1.msra.mxu0 0.0
        %3817 = vmatprep.subr.mxu0 0.0
        %3818 = vmatpush1.msra.mxu0 0.0
        %3819 = vmatprep.subr.mxu0 0.0
        %3820 = vmatpush1.msra.mxu0 0.0
        %3821 = vmatprep.subr.mxu0 0.0
        %3822 = vmatpush1.msra.mxu0 0.0
        %3823 = vmatprep.subr.mxu0 0.0
        %3824 = vmatpush1.msra.mxu0 0.0
        %3825 = vmatprep.subr.mxu0 0.0
        %3826 = vmatpush1.msra.mxu0 0.0
        %3827 = vmatprep.subr.mxu0 0.0
        %3828 = vmatpush1.msra.mxu0 0.0
        %3829 = vmatprep.subr.mxu0 0.0
        %3830 = vmatpush1.msra.mxu0 0.0
        %3831 = vmatprep.subr.mxu0 0.0
        %3832 = vmatpush1.msra.mxu0 0.0
        %3833 = vmatprep.subr.mxu0 0.0
        %3834 = vmatpush1.msra.mxu0 0.0
        %3835 = vmatprep.subr.mxu0 0.0
        %3836 = vmatpush1.msra.mxu0 0.0
        %3837 = vmatprep.subr.mxu0 0.0
        %3838 = vmatpush1.msra.mxu0 0.0
        %3839 = vmatprep.subr.mxu0 0.0
        %3840 = vmatpush1.msra.mxu0 0.0
        %3841 = vmatprep.subr.mxu0 0.0
        %3842 = vmatpush1.msra.mxu0 0.0
        %3843 = vmatprep.subr.mxu0 0.0
        %3844 = vmatpush1.msra.mxu0 0.0
        %3845 = vmatprep.subr.mxu0 0.0
        %3846 = vmatpush1.msra.mxu0 0.0
        %3847 = vmatprep.subr.mxu0 0.0
        %3848 = vmatpush1.msra.mxu0 0.0
        %3849 = vmatprep.mubr.f32.mxu0 0.0
        %3850 = vmatmul.mubr.f32.gmra.mrb[0].mxu0 %v2146
        %v3851 = vpop.f32.mrb[0].mxu0
        %v3852 = vadd.f32 0.0, %v3851
        %v3853 = vpop.f32.mrb[0].mxu0
        %3854 = vmatprep.mubr.f32.mxu0 0.0
        %3855 = vmatmul.mubr.f32.gmra.mrb[0].mxu0 %v2149
        %v3856 = vpop.f32.mrb[0].mxu0
        %v3857 = vadd.f32 0.0, %v3856
        %v3858 = vpop.f32.mrb[0].mxu0
        %3859 = vmatprep.mubr.f32.mxu0 0.0
        %3860 = vmatmul.mubr.f32.gmra.mrb[0].mxu0 %v2152
        %v3861 = vpop.f32.mrb[0].mxu0
        %v3862 = vadd.f32 0.0, %v3861
        %v3863 = vpop.f32.mrb[0].mxu0
        %3864 = vmatprep.mubr.f32.mxu0 0.0
        %3865 = vmatmul.mubr.f32.gmra.mrb[0].mxu0 %v2155
        %v3866 = vpop.f32.mrb[0].mxu0
        %v3867 = vadd.f32 0.0, %v3866
        %v3868 = vpop.f32.mrb[0].mxu0
        %3869 = vdwg.mxu0
        %v3870 = vadd.f32 %v3778, %v3852
        %v3871 = vadd.f32 %v3779, %v3857
        %v3872 = vadd.f32 %v3780, %v3862
        %v3873 = vadd.f32 %v3781, %v3867
        %v3874 = vmax.f32 %v3870, 0.0
        %v3875 = vmax.f32 %v3871, 0.0
        %v3876 = vmax.f32 %v3872, 0.0
        %v3877 = vmax.f32 %v3873, 0.0
        %3878 = vmatprep.subr.mxu0 0.0
        %3879 = vmatpush1.msra.mxu0 %v3874
        %3880 = vmatprep.subr.mxu0 0.0
        %3881 = vmatpush1.msra.mxu0 %v3875
        %3882 = vmatprep.subr.mxu0 0.0
        %3883 = vmatpush1.msra.mxu0 %v3876
        %3884 = vmatprep.subr.mxu0 0.0
        %3885 = vmatpush1.msra.mxu0 %v3877
        %3886 = vmatprep.subr.mxu0 0.0
        %3887 = vmatpush1.msra.mxu0 0.0
        %3888 = vmatprep.subr.mxu0 0.0
        %3889 = vmatpush1.msra.mxu0 0.0
        %3890 = vmatprep.subr.mxu0 0.0
        %3891 = vmatpush1.msra.mxu0 0.0
        %3892 = vmatprep.subr.mxu0 0.0
        %3893 = vmatpush1.msra.mxu0 0.0
        %3894 = vmatprep.subr.mxu0 0.0
        %3895 = vmatpush1.msra.mxu0 0.0
        %3896 = vmatprep.subr.mxu0 0.0
        %3897 = vmatpush1.msra.mxu0 0.0
        %3898 = vmatprep.subr.mxu0 0.0
        %3899 = vmatpush1.msra.mxu0 0.0
        %3900 = vmatprep.subr.mxu0 0.0
        %3901 = vmatpush1.msra.mxu0 0.0
        %3902 = vmatprep.subr.mxu0 0.0
        %3903 = vmatpush1.msra.mxu0 0.0
        %3904 = vmatprep.subr.mxu0 0.0
        %3905 = vmatpush1.msra.mxu0 0.0
        %3906 = vmatprep.subr.mxu0 0.0
        %3907 = vmatpush1.msra.mxu0 0.0
        %3908 = vmatprep.subr.mxu0 0.0
        %3909 = vmatpush1.msra.mxu0 0.0
        %3910 = vmatprep.subr.mxu0 0.0
        %3911 = vmatpush1.msra.mxu0 0.0
        %3912 = vmatprep.subr.mxu0 0.0
        %3913 = vmatpush1.msra.mxu0 0.0
        %3914 = vmatprep.subr.mxu0 0.0
        %3915 = vmatpush1.msra.mxu0 0.0
        %3916 = vmatprep.subr.mxu0 0.0
        %3917 = vmatpush1.msra.mxu0 0.0
        %3918 = vmatprep.subr.mxu0 0.0
        %3919 = vmatpush1.msra.mxu0 0.0
        %3920 = vmatprep.subr.mxu0 0.0
        %3921 = vmatpush1.msra.mxu0 0.0
        %3922 = vmatprep.subr.mxu0 0.0
        %3923 = vmatpush1.msra.mxu0 0.0
        %3924 = vmatprep.subr.mxu0 0.0
        %3925 = vmatpush1.msra.mxu0 0.0
        %3926 = vmatprep.subr.mxu0 0.0
        %3927 = vmatpush1.msra.mxu0 0.0
        %3928 = vmatprep.subr.mxu0 0.0
        %3929 = vmatpush1.msra.mxu0 0.0
        %3930 = vmatprep.subr.mxu0 0.0
        %3931 = vmatpush1.msra.mxu0 0.0
        %3932 = vmatprep.subr.mxu0 0.0
        %3933 = vmatpush1.msra.mxu0 0.0
        %3934 = vmatprep.subr.mxu0 0.0
        %3935 = vmatpush1.msra.mxu0 0.0
        %3936 = vmatprep.subr.mxu0 0.0
        %3937 = vmatpush1.msra.mxu0 0.0
        %3938 = vmatprep.subr.mxu0 0.0
        %3939 = vmatpush1.msra.mxu0 0.0
        %3940 = vmatprep.subr.mxu0 0.0
        %3941 = vmatpush1.msra.mxu0 0.0
        %3942 = vmatprep.mubr.f32.mxu0 0.0
        %3943 = vmatmul.mubr.f32.gmra.mrb[0].mxu0 %v2260
        %v3944 = vpop.f32.mrb[0].mxu0
        %v3945 = vadd.f32 %v2256, %v3944
        %v3946 = vpop.f32.mrb[0].mxu0
        %3947 = vdwg.mxu0
        %v3948 = vld [vmem:[%s292 + $0x10] sm:$0xc0]
        %v3950 = vrot.slane %v3196, 6
        %v3952 = vsub.f32 %v3948, %v3950
        %v3954 = vrot.slane %v3952, 6
        %v3956 = vmul.f32 %v3945, %v3954
        %v3957 = vsel %vm822, %v3956, 0.0
        %v3958 = vrot.slane %v3957, 4
        %v3959 = vadd.f32 %v3957, %v3958
        %v3960 = vrot.slane %v3959, 2
        %v3961 = vadd.f32 %v3959, %v3960
        %v3962 = vrot.slane %v3961, 1
        %v3963 = vadd.f32 %v3961, %v3962
        %v3964 = vadd.f32 %v3212, %v3963
        %3965 = vst [vmem:[%s336 + $0x13] sm:$0x1] %v3964
        %v3966 = vld [vmem:[#allocation2 + $0x118] sm:$0xff]
        %v3967 = vld [vmem:[#allocation2 + $0x138] sm:$0xff]
        %v3968 = vld [vmem:[#allocation2 + $0x158] sm:$0xff]
        %v3969 = vld [vmem:[#allocation2 + $0x178] sm:$0xff]
        %v3971 = vsel %vm822, %v3381, 0
        %3973 = vmatprep.subr.mxu0 0.0
        %3974 = vmatpush1.msra.mxu0 %v3971
        %3975 = vmatprep.subr.mxu0 0.0
        %3976 = vmatpush1.msra.mxu0 0.0
        %3977 = vmatprep.subr.mxu0 0.0
        %3978 = vmatpush1.msra.mxu0 0.0
        %3979 = vmatprep.subr.mxu0 0.0
        %3980 = vmatpush1.msra.mxu0 0.0
        %3981 = vmatprep.subr.mxu0 0.0
        %3982 = vmatpush1.msra.mxu0 0.0
        %3983 = vmatprep.subr.mxu0 0.0
        %3984 = vmatpush1.msra.mxu0 0.0
        %3985 = vmatprep.subr.mxu0 0.0
        %3986 = vmatpush1.msra.mxu0 0.0
        %3987 = vmatprep.subr.mxu0 0.0
        %3988 = vmatpush1.msra.mxu0 0.0
        %3989 = vmatprep.subr.mxu0 0.0
        %3990 = vmatpush1.msra.mxu0 0.0
        %3991 = vmatprep.subr.mxu0 0.0
        %3992 = vmatpush1.msra.mxu0 0.0
        %3993 = vmatprep.subr.mxu0 0.0
        %3994 = vmatpush1.msra.mxu0 0.0
        %3995 = vmatprep.subr.mxu0 0.0
        %3996 = vmatpush1.msra.mxu0 0.0
        %3997 = vmatprep.subr.mxu0 0.0
        %3998 = vmatpush1.msra.mxu0 0.0
        %3999 = vmatprep.subr.mxu0 0.0
        %4000 = vmatpush1.msra.mxu0 0.0
        %4001 = vmatprep.subr.mxu0 0.0
        %4002 = vmatpush1.msra.mxu0 0.0
        %4003 = vmatprep.subr.mxu0 0.0
        %4004 = vmatpush1.msra.mxu0 0.0
        %4005 = vmatprep.subr.mxu0 0.0
        %4006 = vmatpush1.msra.mxu0 0.0
        %4007 = vmatprep.subr.mxu0 0.0
        %4008 = vmatpush1.msra.mxu0 0.0
        %4009 = vmatprep.subr.mxu0 0.0
        %4010 = vmatpush1.msra.mxu0 0.0
        %4011 = vmatprep.subr.mxu0 0.0
        %4012 = vmatpush1.msra.mxu0 0.0
        %4013 = vmatprep.subr.mxu0 0.0
        %4014 = vmatpush1.msra.mxu0 0.0
        %4015 = vmatprep.subr.mxu0 0.0
        %4016 = vmatpush1.msra.mxu0 0.0
        %4017 = vmatprep.subr.mxu0 0.0
        %4018 = vmatpush1.msra.mxu0 0.0
        %4019 = vmatprep.subr.mxu0 0.0
        %4020 = vmatpush1.msra.mxu0 0.0
        %4021 = vmatprep.subr.mxu0 0.0
        %4022 = vmatpush1.msra.mxu0 0.0
        %4023 = vmatprep.subr.mxu0 0.0
        %4024 = vmatpush1.msra.mxu0 0.0
        %4025 = vmatprep.subr.mxu0 0.0
        %4026 = vmatpush1.msra.mxu0 0.0
        %4027 = vmatprep.subr.mxu0 0.0
        %4028 = vmatpush1.msra.mxu0 0.0
        %4029 = vmatprep.subr.mxu0 0.0
        %4030 = vmatpush1.msra.mxu0 0.0
        %4031 = vmatprep.subr.mxu0 0.0
        %4032 = vmatpush1.msra.mxu0 0.0
        %4033 = vmatprep.subr.mxu0 0.0
        %4034 = vmatpush1.msra.mxu0 0.0
        %4035 = vmatprep.subr.mxu0 0.0
        %4036 = vmatpush1.msra.mxu0 0.0
        %4037 = vmatprep.mubr.f32.mxu0 0.0
        %4038 = vmatmul.mubr.f32.gmra.mrb[0].mxu0 %v2146
        %v4039 = vpop.f32.mrb[0].mxu0
        %v4040 = vadd.f32 0.0, %v4039
        %v4041 = vpop.f32.mrb[0].mxu0
        %4042 = vmatprep.mubr.f32.mxu0 0.0
        %4043 = vmatmul.mubr.f32.gmra.mrb[0].mxu0 %v2149
        %v4044 = vpop.f32.mrb[0].mxu0
        %v4045 = vadd.f32 0.0, %v4044
        %v4046 = vpop.f32.mrb[0].mxu0
        %4047 = vmatprep.mubr.f32.mxu0 0.0
        %4048 = vmatmul.mubr.f32.gmra.mrb[0].mxu0 %v2152
        %v4049 = vpop.f32.mrb[0].mxu0
        %v4050 = vadd.f32 0.0, %v4049
        %v4051 = vpop.f32.mrb[0].mxu0
        %4052 = vmatprep.mubr.f32.mxu0 0.0
        %4053 = vmatmul.mubr.f32.gmra.mrb[0].mxu0 %v2155
        %v4054 = vpop.f32.mrb[0].mxu0
        %v4055 = vadd.f32 0.0, %v4054
        %v4056 = vpop.f32.mrb[0].mxu0
        %4057 = vdwg.mxu0
        %v4058 = vadd.f32 %v3966, %v4040
        %v4059 = vadd.f32 %v3967, %v4045
        %v4060 = vadd.f32 %v3968, %v4050
        %v4061 = vadd.f32 %v3969, %v4055
        %v4062 = vmax.f32 %v4058, 0.0
        %v4063 = vmax.f32 %v4059, 0.0
        %v4064 = vmax.f32 %v4060, 0.0
        %v4065 = vmax.f32 %v4061, 0.0
        %4066 = vmatprep.subr.mxu0 0.0
        %4067 = vmatpush1.msra.mxu0 %v4062
        %4068 = vmatprep.subr.mxu0 0.0
        %4069 = vmatpush1.msra.mxu0 %v4063
        %4070 = vmatprep.subr.mxu0 0.0
        %4071 = vmatpush1.msra.mxu0 %v4064
        %4072 = vmatprep.subr.mxu0 0.0
        %4073 = vmatpush1.msra.mxu0 %v4065
        %4074 = vmatprep.subr.mxu0 0.0
        %4075 = vmatpush1.msra.mxu0 0.0
        %4076 = vmatprep.subr.mxu0 0.0
        %4077 = vmatpush1.msra.mxu0 0.0
        %4078 = vmatprep.subr.mxu0 0.0
        %4079 = vmatpush1.msra.mxu0 0.0
        %4080 = vmatprep.subr.mxu0 0.0
        %4081 = vmatpush1.msra.mxu0 0.0
        %4082 = vmatprep.subr.mxu0 0.0
        %4083 = vmatpush1.msra.mxu0 0.0
        %4084 = vmatprep.subr.mxu0 0.0
        %4085 = vmatpush1.msra.mxu0 0.0
        %4086 = vmatprep.subr.mxu0 0.0
        %4087 = vmatpush1.msra.mxu0 0.0
        %4088 = vmatprep.subr.mxu0 0.0
        %4089 = vmatpush1.msra.mxu0 0.0
        %4090 = vmatprep.subr.mxu0 0.0
        %4091 = vmatpush1.msra.mxu0 0.0
        %4092 = vmatprep.subr.mxu0 0.0
        %4093 = vmatpush1.msra.mxu0 0.0
        %4094 = vmatprep.subr.mxu0 0.0
        %4095 = vmatpush1.msra.mxu0 0.0
        %4096 = vmatprep.subr.mxu0 0.0
        %4097 = vmatpush1.msra.mxu0 0.0
        %4098 = vmatprep.subr.mxu0 0.0
        %4099 = vmatpush1.msra.mxu0 0.0
        %4100 = vmatprep.subr.mxu0 0.0
        %4101 = vmatpush1.msra.mxu0 0.0
        %4102 = vmatprep.subr.mxu0 0.0
        %4103 = vmatpush1.msra.mxu0 0.0
        %4104 = vmatprep.subr.mxu0 0.0
        %4105 = vmatpush1.msra.mxu0 0.0
        %4106 = vmatprep.subr.mxu0 0.0
        %4107 = vmatpush1.msra.mxu0 0.0
        %4108 = vmatprep.subr.mxu0 0.0
        %4109 = vmatpush1.msra.mxu0 0.0
        %4110 = vmatprep.subr.mxu0 0.0
        %4111 = vmatpush1.msra.mxu0 0.0
        %4112 = vmatprep.subr.mxu0 0.0
        %4113 = vmatpush1.msra.mxu0 0.0
        %4114 = vmatprep.subr.mxu0 0.0
        %4115 = vmatpush1.msra.mxu0 0.0
        %4116 = vmatprep.subr.mxu0 0.0
        %4117 = vmatpush1.msra.mxu0 0.0
        %4118 = vmatprep.subr.mxu0 0.0
        %4119 = vmatpush1.msra.mxu0 0.0
        %4120 = vmatprep.subr.mxu0 0.0
        %4121 = vmatpush1.msra.mxu0 0.0
        %4122 = vmatprep.subr.mxu0 0.0
        %4123 = vmatpush1.msra.mxu0 0.0
        %4124 = vmatprep.subr.mxu0 0.0
        %4125 = vmatpush1.msra.mxu0 0.0
        %4126 = vmatprep.subr.mxu0 0.0
        %4127 = vmatpush1.msra.mxu0 0.0
        %4128 = vmatprep.subr.mxu0 0.0
        %4129 = vmatpush1.msra.mxu0 0.0
        %4130 = vmatprep.mubr.f32.mxu0 0.0
        %4131 = vmatmul.mubr.f32.gmra.mrb[0].mxu0 %v2260
        %v4132 = vpop.f32.mrb[0].mxu0
        %v4133 = vadd.f32 %v2256, %v4132
        %v4134 = vpop.f32.mrb[0].mxu0
        %4135 = vdwg.mxu0
        %v4136 = vld [vmem:[%s292 + $0x18] sm:$0xc0]
        %v4138 = vrot.slane %v3384, 6
        %v4140 = vsub.f32 %v4136, %v4138
        %v4142 = vrot.slane %v4140, 6
        %v4144 = vmul.f32 %v4133, %v4142
        %v4145 = vsel %vm822, %v4144, 0.0
        %v4146 = vrot.slane %v4145, 4
        %v4147 = vadd.f32 %v4145, %v4146
        %v4148 = vrot.slane %v4147, 2
        %v4149 = vadd.f32 %v4147, %v4148
        %v4150 = vrot.slane %v4149, 1
        %v4151 = vadd.f32 %v4149, %v4150
        %v4152 = vadd.f32 %v3400, %v4151
        %4153 = vst [vmem:[%s336 + $0x1b] sm:$0x1] %v4152
        %v4154 = vld [vmem:[#allocation2 + $0x180] sm:$0xff]
        %v4155 = vld [vmem:[#allocation2 + $0x1a0] sm:$0xff]
        %v4156 = vld [vmem:[#allocation2 + $0x1c0] sm:$0xff]
        %v4157 = vld [vmem:[#allocation2 + $0x1e0] sm:$0xff]
        %v4159 = vsel %vm822, %v3569, 0
        %4161 = vmatprep.subr.mxu0 0.0
        %4162 = vmatpush1.msra.mxu0 %v4159
        %4163 = vmatprep.subr.mxu0 0.0
        %4164 = vmatpush1.msra.mxu0 0.0
        %4165 = vmatprep.subr.mxu0 0.0
        %4166 = vmatpush1.msra.mxu0 0.0
        %4167 = vmatprep.subr.mxu0 0.0
        %4168 = vmatpush1.msra.mxu0 0.0
        %4169 = vmatprep.subr.mxu0 0.0
        %4170 = vmatpush1.msra.mxu0 0.0
        %4171 = vmatprep.subr.mxu0 0.0
        %4172 = vmatpush1.msra.mxu0 0.0
        %4173 = vmatprep.subr.mxu0 0.0
        %4174 = vmatpush1.msra.mxu0 0.0
        %4175 = vmatprep.subr.mxu0 0.0
        %4176 = vmatpush1.msra.mxu0 0.0
        %4177 = vmatprep.subr.mxu0 0.0
        %4178 = vmatpush1.msra.mxu0 0.0
        %4179 = vmatprep.subr.mxu0 0.0
        %4180 = vmatpush1.msra.mxu0 0.0
        %4181 = vmatprep.subr.mxu0 0.0
        %4182 = vmatpush1.msra.mxu0 0.0
        %4183 = vmatprep.subr.mxu0 0.0
        %4184 = vmatpush1.msra.mxu0 0.0
        %4185 = vmatprep.subr.mxu0 0.0
        %4186 = vmatpush1.msra.mxu0 0.0
        %4187 = vmatprep.subr.mxu0 0.0
        %4188 = vmatpush1.msra.mxu0 0.0
        %4189 = vmatprep.subr.mxu0 0.0
        %4190 = vmatpush1.msra.mxu0 0.0
        %4191 = vmatprep.subr.mxu0 0.0
        %4192 = vmatpush1.msra.mxu0 0.0
        %4193 = vmatprep.subr.mxu0 0.0
        %4194 = vmatpush1.msra.mxu0 0.0
        %4195 = vmatprep.subr.mxu0 0.0
        %4196 = vmatpush1.msra.mxu0 0.0
        %4197 = vmatprep.subr.mxu0 0.0
        %4198 = vmatpush1.msra.mxu0 0.0
        %4199 = vmatprep.subr.mxu0 0.0
        %4200 = vmatpush1.msra.mxu0 0.0
        %4201 = vmatprep.subr.mxu0 0.0
        %4202 = vmatpush1.msra.mxu0 0.0
        %4203 = vmatprep.subr.mxu0 0.0
        %4204 = vmatpush1.msra.mxu0 0.0
        %4205 = vmatprep.subr.mxu0 0.0
        %4206 = vmatpush1.msra.mxu0 0.0
        %4207 = vmatprep.subr.mxu0 0.0
        %4208 = vmatpush1.msra.mxu0 0.0
        %4209 = vmatprep.subr.mxu0 0.0
        %4210 = vmatpush1.msra.mxu0 0.0
        %4211 = vmatprep.subr.mxu0 0.0
        %4212 = vmatpush1.msra.mxu0 0.0
        %4213 = vmatprep.subr.mxu0 0.0
        %4214 = vmatpush1.msra.mxu0 0.0
        %4215 = vmatprep.subr.mxu0 0.0
        %4216 = vmatpush1.msra.mxu0 0.0
        %4217 = vmatprep.subr.mxu0 0.0
        %4218 = vmatpush1.msra.mxu0 0.0
        %4219 = vmatprep.subr.mxu0 0.0
        %4220 = vmatpush1.msra.mxu0 0.0
        %4221 = vmatprep.subr.mxu0 0.0
        %4222 = vmatpush1.msra.mxu0 0.0
        %4223 = vmatprep.subr.mxu0 0.0
        %4224 = vmatpush1.msra.mxu0 0.0
        %4225 = vmatprep.mubr.f32.mxu0 0.0
        %4226 = vmatmul.mubr.f32.gmra.mrb[0].mxu0 %v2146
        %v4227 = vpop.f32.mrb[0].mxu0
        %v4228 = vadd.f32 0.0, %v4227
        %v4229 = vpop.f32.mrb[0].mxu0
        %4230 = vmatprep.mubr.f32.mxu0 0.0
        %4231 = vmatmul.mubr.f32.gmra.mrb[0].mxu0 %v2149
        %v4232 = vpop.f32.mrb[0].mxu0
        %v4233 = vadd.f32 0.0, %v4232
        %v4234 = vpop.f32.mrb[0].mxu0
        %4235 = vmatprep.mubr.f32.mxu0 0.0
        %4236 = vmatmul.mubr.f32.gmra.mrb[0].mxu0 %v2152
        %v4237 = vpop.f32.mrb[0].mxu0
        %v4238 = vadd.f32 0.0, %v4237
        %v4239 = vpop.f32.mrb[0].mxu0
        %4240 = vmatprep.mubr.f32.mxu0 0.0
        %4241 = vmatmul.mubr.f32.gmra.mrb[0].mxu0 %v2155
        %v4242 = vpop.f32.mrb[0].mxu0
        %v4243 = vadd.f32 0.0, %v4242
        %v4244 = vpop.f32.mrb[0].mxu0
        %4245 = vdwg.mxu0
        %v4246 = vadd.f32 %v4154, %v4228
        %v4247 = vadd.f32 %v4155, %v4233
        %v4248 = vadd.f32 %v4156, %v4238
        %v4249 = vadd.f32 %v4157, %v4243
        %v4250 = vmax.f32 %v4246, 0.0
        %v4251 = vmax.f32 %v4247, 0.0
        %v4252 = vmax.f32 %v4248, 0.0
        %v4253 = vmax.f32 %v4249, 0.0
        %4254 = vmatprep.subr.mxu0 0.0
        %4255 = vmatpush1.msra.mxu0 %v4250
        %4256 = vmatprep.subr.mxu0 0.0
        %4257 = vmatpush1.msra.mxu0 %v4251
        %4258 = vmatprep.subr.mxu0 0.0
        %4259 = vmatpush1.msra.mxu0 %v4252
        %4260 = vmatprep.subr.mxu0 0.0
        %4261 = vmatpush1.msra.mxu0 %v4253
        %4262 = vmatprep.subr.mxu0 0.0
        %4263 = vmatpush1.msra.mxu0 0.0
        %4264 = vmatprep.subr.mxu0 0.0
        %4265 = vmatpush1.msra.mxu0 0.0
        %4266 = vmatprep.subr.mxu0 0.0
        %4267 = vmatpush1.msra.mxu0 0.0
        %4268 = vmatprep.subr.mxu0 0.0
        %4269 = vmatpush1.msra.mxu0 0.0
        %4270 = vmatprep.subr.mxu0 0.0
        %4271 = vmatpush1.msra.mxu0 0.0
        %4272 = vmatprep.subr.mxu0 0.0
        %4273 = vmatpush1.msra.mxu0 0.0
        %4274 = vmatprep.subr.mxu0 0.0
        %4275 = vmatpush1.msra.mxu0 0.0
        %4276 = vmatprep.subr.mxu0 0.0
        %4277 = vmatpush1.msra.mxu0 0.0
        %4278 = vmatprep.subr.mxu0 0.0
        %4279 = vmatpush1.msra.mxu0 0.0
        %4280 = vmatprep.subr.mxu0 0.0
        %4281 = vmatpush1.msra.mxu0 0.0
        %4282 = vmatprep.subr.mxu0 0.0
        %4283 = vmatpush1.msra.mxu0 0.0
        %4284 = vmatprep.subr.mxu0 0.0
        %4285 = vmatpush1.msra.mxu0 0.0
        %4286 = vmatprep.subr.mxu0 0.0
        %4287 = vmatpush1.msra.mxu0 0.0
        %4288 = vmatprep.subr.mxu0 0.0
        %4289 = vmatpush1.msra.mxu0 0.0
        %4290 = vmatprep.subr.mxu0 0.0
        %4291 = vmatpush1.msra.mxu0 0.0
        %4292 = vmatprep.subr.mxu0 0.0
        %4293 = vmatpush1.msra.mxu0 0.0
        %4294 = vmatprep.subr.mxu0 0.0
        %4295 = vmatpush1.msra.mxu0 0.0
        %4296 = vmatprep.subr.mxu0 0.0
        %4297 = vmatpush1.msra.mxu0 0.0
        %4298 = vmatprep.subr.mxu0 0.0
        %4299 = vmatpush1.msra.mxu0 0.0
        %4300 = vmatprep.subr.mxu0 0.0
        %4301 = vmatpush1.msra.mxu0 0.0
        %4302 = vmatprep.subr.mxu0 0.0
        %4303 = vmatpush1.msra.mxu0 0.0
        %4304 = vmatprep.subr.mxu0 0.0
        %4305 = vmatpush1.msra.mxu0 0.0
        %4306 = vmatprep.subr.mxu0 0.0
        %4307 = vmatpush1.msra.mxu0 0.0
        %4308 = vmatprep.subr.mxu0 0.0
        %4309 = vmatpush1.msra.mxu0 0.0
        %4310 = vmatprep.subr.mxu0 0.0
        %4311 = vmatpush1.msra.mxu0 0.0
        %4312 = vmatprep.subr.mxu0 0.0
        %4313 = vmatpush1.msra.mxu0 0.0
        %4314 = vmatprep.subr.mxu0 0.0
        %4315 = vmatpush1.msra.mxu0 0.0
        %4316 = vmatprep.subr.mxu0 0.0
        %4317 = vmatpush1.msra.mxu0 0.0
        %4318 = vmatprep.mubr.f32.mxu0 0.0
        %4319 = vmatmul.mubr.f32.gmra.mrb[0].mxu0 %v2260
        %v4320 = vpop.f32.mrb[0].mxu0
        %v4321 = vadd.f32 %v2256, %v4320
        %v4322 = vpop.f32.mrb[0].mxu0
        %4323 = vdwg.mxu0
        %v4324 = vld [vmem:[%s292 + $0x20] sm:$0x3]
        %v4326 = vrot.slane %v3572, 6
        %v4328 = vsub.f32 %v4324, %v4326
        %v4329 = vmul.f32 %v4321, %v4328
        %v4330 = vsel %vm822, %v4329, 0.0
        %v4331 = vrot.slane %v4330, 4
        %v4332 = vadd.f32 %v4330, %v4331
        %v4333 = vrot.slane %v4332, 2
        %v4334 = vadd.f32 %v4332, %v4333
        %v4335 = vrot.slane %v4334, 1
        %v4336 = vadd.f32 %v4334, %v4335
        %v4337 = vadd.f32 %v3588, %v4336
        %4338 = vst [vmem:[%s336 + $0x4] sm:$0x1] %v4337
        %v4339 = vld [vmem:[#allocation2 + $0x188] sm:$0xff]
        %v4340 = vld [vmem:[#allocation2 + $0x1a8] sm:$0xff]
        %v4341 = vld [vmem:[#allocation2 + $0x1c8] sm:$0xff]
        %v4342 = vld [vmem:[#allocation2 + $0x1e8] sm:$0xff]
        %v4344 = vsel %vm822, %v3757, 0
        %4346 = vmatprep.subr.mxu0 0.0
        %4347 = vmatpush1.msra.mxu0 %v4344
        %4348 = vmatprep.subr.mxu0 0.0
        %4349 = vmatpush1.msra.mxu0 0.0
        %4350 = vmatprep.subr.mxu0 0.0
        %4351 = vmatpush1.msra.mxu0 0.0
        %4352 = vmatprep.subr.mxu0 0.0
        %4353 = vmatpush1.msra.mxu0 0.0
        %4354 = vmatprep.subr.mxu0 0.0
        %4355 = vmatpush1.msra.mxu0 0.0
        %4356 = vmatprep.subr.mxu0 0.0
        %4357 = vmatpush1.msra.mxu0 0.0
        %4358 = vmatprep.subr.mxu0 0.0
        %4359 = vmatpush1.msra.mxu0 0.0
        %4360 = vmatprep.subr.mxu0 0.0
        %4361 = vmatpush1.msra.mxu0 0.0
        %4362 = vmatprep.subr.mxu0 0.0
        %4363 = vmatpush1.msra.mxu0 0.0
        %4364 = vmatprep.subr.mxu0 0.0
        %4365 = vmatpush1.msra.mxu0 0.0
        %4366 = vmatprep.subr.mxu0 0.0
        %4367 = vmatpush1.msra.mxu0 0.0
        %4368 = vmatprep.subr.mxu0 0.0
        %4369 = vmatpush1.msra.mxu0 0.0
        %4370 = vmatprep.subr.mxu0 0.0
        %4371 = vmatpush1.msra.mxu0 0.0
        %4372 = vmatprep.subr.mxu0 0.0
        %4373 = vmatpush1.msra.mxu0 0.0
        %4374 = vmatprep.subr.mxu0 0.0
        %4375 = vmatpush1.msra.mxu0 0.0
        %4376 = vmatprep.subr.mxu0 0.0
        %4377 = vmatpush1.msra.mxu0 0.0
        %4378 = vmatprep.subr.mxu0 0.0
        %4379 = vmatpush1.msra.mxu0 0.0
        %4380 = vmatprep.subr.mxu0 0.0
        %4381 = vmatpush1.msra.mxu0 0.0
        %4382 = vmatprep.subr.mxu0 0.0
        %4383 = vmatpush1.msra.mxu0 0.0
        %4384 = vmatprep.subr.mxu0 0.0
        %4385 = vmatpush1.msra.mxu0 0.0
        %4386 = vmatprep.subr.mxu0 0.0
        %4387 = vmatpush1.msra.mxu0 0.0
        %4388 = vmatprep.subr.mxu0 0.0
        %4389 = vmatpush1.msra.mxu0 0.0
        %4390 = vmatprep.subr.mxu0 0.0
        %4391 = vmatpush1.msra.mxu0 0.0
        %4392 = vmatprep.subr.mxu0 0.0
        %4393 = vmatpush1.msra.mxu0 0.0
        %4394 = vmatprep.subr.mxu0 0.0
        %4395 = vmatpush1.msra.mxu0 0.0
        %4396 = vmatprep.subr.mxu0 0.0
        %4397 = vmatpush1.msra.mxu0 0.0
        %4398 = vmatprep.subr.mxu0 0.0
        %4399 = vmatpush1.msra.mxu0 0.0
        %4400 = vmatprep.subr.mxu0 0.0
        %4401 = vmatpush1.msra.mxu0 0.0
        %4402 = vmatprep.subr.mxu0 0.0
        %4403 = vmatpush1.msra.mxu0 0.0
        %4404 = vmatprep.subr.mxu0 0.0
        %4405 = vmatpush1.msra.mxu0 0.0
        %4406 = vmatprep.subr.mxu0 0.0
        %4407 = vmatpush1.msra.mxu0 0.0
        %4408 = vmatprep.subr.mxu0 0.0
        %4409 = vmatpush1.msra.mxu0 0.0
        %4410 = vmatprep.mubr.f32.mxu0 0.0
        %4411 = vmatmul.mubr.f32.gmra.mrb[0].mxu0 %v2146
        %v4412 = vpop.f32.mrb[0].mxu0
        %v4413 = vadd.f32 0.0, %v4412
        %v4414 = vpop.f32.mrb[0].mxu0
        %4415 = vmatprep.mubr.f32.mxu0 0.0
        %4416 = vmatmul.mubr.f32.gmra.mrb[0].mxu0 %v2149
        %v4417 = vpop.f32.mrb[0].mxu0
        %v4418 = vadd.f32 0.0, %v4417
        %v4419 = vpop.f32.mrb[0].mxu0
        %4420 = vmatprep.mubr.f32.mxu0 0.0
        %4421 = vmatmul.mubr.f32.gmra.mrb[0].mxu0 %v2152
        %v4422 = vpop.f32.mrb[0].mxu0
        %v4423 = vadd.f32 0.0, %v4422
        %v4424 = vpop.f32.mrb[0].mxu0
        %4425 = vmatprep.mubr.f32.mxu0 0.0
        %4426 = vmatmul.mubr.f32.gmra.mrb[0].mxu0 %v2155
        %v4427 = vpop.f32.mrb[0].mxu0
        %v4428 = vadd.f32 0.0, %v4427
        %v4429 = vpop.f32.mrb[0].mxu0
        %4430 = vdwg.mxu0
        %v4431 = vadd.f32 %v4339, %v4413
        %v4432 = vadd.f32 %v4340, %v4418
        %v4433 = vadd.f32 %v4341, %v4423
        %v4434 = vadd.f32 %v4342, %v4428
        %v4435 = vmax.f32 %v4431, 0.0
        %v4436 = vmax.f32 %v4432, 0.0
        %v4437 = vmax.f32 %v4433, 0.0
        %v4438 = vmax.f32 %v4434, 0.0
        %4439 = vmatprep.subr.mxu0 0.0
        %4440 = vmatpush1.msra.mxu0 %v4435
        %4441 = vmatprep.subr.mxu0 0.0
        %4442 = vmatpush1.msra.mxu0 %v4436
        %4443 = vmatprep.subr.mxu0 0.0
        %4444 = vmatpush1.msra.mxu0 %v4437
        %4445 = vmatprep.subr.mxu0 0.0
        %4446 = vmatpush1.msra.mxu0 %v4438
        %4447 = vmatprep.subr.mxu0 0.0
        %4448 = vmatpush1.msra.mxu0 0.0
        %4449 = vmatprep.subr.mxu0 0.0
        %4450 = vmatpush1.msra.mxu0 0.0
        %4451 = vmatprep.subr.mxu0 0.0
        %4452 = vmatpush1.msra.mxu0 0.0
        %4453 = vmatprep.subr.mxu0 0.0
        %4454 = vmatpush1.msra.mxu0 0.0
        %4455 = vmatprep.subr.mxu0 0.0
        %4456 = vmatpush1.msra.mxu0 0.0
        %4457 = vmatprep.subr.mxu0 0.0
        %4458 = vmatpush1.msra.mxu0 0.0
        %4459 = vmatprep.subr.mxu0 0.0
        %4460 = vmatpush1.msra.mxu0 0.0
        %4461 = vmatprep.subr.mxu0 0.0
        %4462 = vmatpush1.msra.mxu0 0.0
        %4463 = vmatprep.subr.mxu0 0.0
        %4464 = vmatpush1.msra.mxu0 0.0
        %4465 = vmatprep.subr.mxu0 0.0
        %4466 = vmatpush1.msra.mxu0 0.0
        %4467 = vmatprep.subr.mxu0 0.0
        %4468 = vmatpush1.msra.mxu0 0.0
        %4469 = vmatprep.subr.mxu0 0.0
        %4470 = vmatpush1.msra.mxu0 0.0
        %4471 = vmatprep.subr.mxu0 0.0
        %4472 = vmatpush1.msra.mxu0 0.0
        %4473 = vmatprep.subr.mxu0 0.0
        %4474 = vmatpush1.msra.mxu0 0.0
        %4475 = vmatprep.subr.mxu0 0.0
        %4476 = vmatpush1.msra.mxu0 0.0
        %4477 = vmatprep.subr.mxu0 0.0
        %4478 = vmatpush1.msra.mxu0 0.0
        %4479 = vmatprep.subr.mxu0 0.0
        %4480 = vmatpush1.msra.mxu0 0.0
        %4481 = vmatprep.subr.mxu0 0.0
        %4482 = vmatpush1.msra.mxu0 0.0
        %4483 = vmatprep.subr.mxu0 0.0
        %4484 = vmatpush1.msra.mxu0 0.0
        %4485 = vmatprep.subr.mxu0 0.0
        %4486 = vmatpush1.msra.mxu0 0.0
        %4487 = vmatprep.subr.mxu0 0.0
        %4488 = vmatpush1.msra.mxu0 0.0
        %4489 = vmatprep.subr.mxu0 0.0
        %4490 = vmatpush1.msra.mxu0 0.0
        %4491 = vmatprep.subr.mxu0 0.0
        %4492 = vmatpush1.msra.mxu0 0.0
        %4493 = vmatprep.subr.mxu0 0.0
        %4494 = vmatpush1.msra.mxu0 0.0
        %4495 = vmatprep.subr.mxu0 0.0
        %4496 = vmatpush1.msra.mxu0 0.0
        %4497 = vmatprep.subr.mxu0 0.0
        %4498 = vmatpush1.msra.mxu0 0.0
        %4499 = vmatprep.subr.mxu0 0.0
        %4500 = vmatpush1.msra.mxu0 0.0
        %4501 = vmatprep.subr.mxu0 0.0
        %4502 = vmatpush1.msra.mxu0 0.0
        %4503 = vmatprep.mubr.f32.mxu0 0.0
        %4504 = vmatmul.mubr.f32.gmra.mrb[0].mxu0 %v2260
        %v4505 = vpop.f32.mrb[0].mxu0
        %v4506 = vadd.f32 %v2256, %v4505
        %v4507 = vpop.f32.mrb[0].mxu0
        %4508 = vdwg.mxu0
        %v4509 = vld [vmem:[%s292 + $0x28] sm:$0x3]
        %v4511 = vrot.slane %v3760, 6
        %v4513 = vsub.f32 %v4509, %v4511
        %v4514 = vmul.f32 %v4506, %v4513
        %v4515 = vsel %vm822, %v4514, 0.0
        %v4516 = vrot.slane %v4515, 4
        %v4517 = vadd.f32 %v4515, %v4516
        %v4518 = vrot.slane %v4517, 2
        %v4519 = vadd.f32 %v4517, %v4518
        %v4520 = vrot.slane %v4519, 1
        %v4521 = vadd.f32 %v4519, %v4520
        %v4522 = vadd.f32 %v3776, %v4521
        %4523 = vst [vmem:[%s336 + $0xc] sm:$0x1] %v4522
        %v4524 = vld [vmem:[#allocation2 + $0x190] sm:$0xff]
        %v4525 = vld [vmem:[#allocation2 + $0x1b0] sm:$0xff]
        %v4526 = vld [vmem:[#allocation2 + $0x1d0] sm:$0xff]
        %v4527 = vld [vmem:[#allocation2 + $0x1f0] sm:$0xff]
        %v4529 = vsel %vm822, %v3945, 0
        %4531 = vmatprep.subr.mxu0 0.0
        %4532 = vmatpush1.msra.mxu0 %v4529
        %4533 = vmatprep.subr.mxu0 0.0
        %4534 = vmatpush1.msra.mxu0 0.0
        %4535 = vmatprep.subr.mxu0 0.0
        %4536 = vmatpush1.msra.mxu0 0.0
        %4537 = vmatprep.subr.mxu0 0.0
        %4538 = vmatpush1.msra.mxu0 0.0
        %4539 = vmatprep.subr.mxu0 0.0
        %4540 = vmatpush1.msra.mxu0 0.0
        %4541 = vmatprep.subr.mxu0 0.0
        %4542 = vmatpush1.msra.mxu0 0.0
        %4543 = vmatprep.subr.mxu0 0.0
        %4544 = vmatpush1.msra.mxu0 0.0
        %4545 = vmatprep.subr.mxu0 0.0
        %4546 = vmatpush1.msra.mxu0 0.0
        %4547 = vmatprep.subr.mxu0 0.0
        %4548 = vmatpush1.msra.mxu0 0.0
        %4549 = vmatprep.subr.mxu0 0.0
        %4550 = vmatpush1.msra.mxu0 0.0
        %4551 = vmatprep.subr.mxu0 0.0
        %4552 = vmatpush1.msra.mxu0 0.0
        %4553 = vmatprep.subr.mxu0 0.0
        %4554 = vmatpush1.msra.mxu0 0.0
        %4555 = vmatprep.subr.mxu0 0.0
        %4556 = vmatpush1.msra.mxu0 0.0
        %4557 = vmatprep.subr.mxu0 0.0
        %4558 = vmatpush1.msra.mxu0 0.0
        %4559 = vmatprep.subr.mxu0 0.0
        %4560 = vmatpush1.msra.mxu0 0.0
        %4561 = vmatprep.subr.mxu0 0.0
        %4562 = vmatpush1.msra.mxu0 0.0
        %4563 = vmatprep.subr.mxu0 0.0
        %4564 = vmatpush1.msra.mxu0 0.0
        %4565 = vmatprep.subr.mxu0 0.0
        %4566 = vmatpush1.msra.mxu0 0.0
        %4567 = vmatprep.subr.mxu0 0.0
        %4568 = vmatpush1.msra.mxu0 0.0
        %4569 = vmatprep.subr.mxu0 0.0
        %4570 = vmatpush1.msra.mxu0 0.0
        %4571 = vmatprep.subr.mxu0 0.0
        %4572 = vmatpush1.msra.mxu0 0.0
        %4573 = vmatprep.subr.mxu0 0.0
        %4574 = vmatpush1.msra.mxu0 0.0
        %4575 = vmatprep.subr.mxu0 0.0
        %4576 = vmatpush1.msra.mxu0 0.0
        %4577 = vmatprep.subr.mxu0 0.0
        %4578 = vmatpush1.msra.mxu0 0.0
        %4579 = vmatprep.subr.mxu0 0.0
        %4580 = vmatpush1.msra.mxu0 0.0
        %4581 = vmatprep.subr.mxu0 0.0
        %4582 = vmatpush1.msra.mxu0 0.0
        %4583 = vmatprep.subr.mxu0 0.0
        %4584 = vmatpush1.msra.mxu0 0.0
        %4585 = vmatprep.subr.mxu0 0.0
        %4586 = vmatpush1.msra.mxu0 0.0
        %4587 = vmatprep.subr.mxu0 0.0
        %4588 = vmatpush1.msra.mxu0 0.0
        %4589 = vmatprep.subr.mxu0 0.0
        %4590 = vmatpush1.msra.mxu0 0.0
        %4591 = vmatprep.subr.mxu0 0.0
        %4592 = vmatpush1.msra.mxu0 0.0
        %4593 = vmatprep.subr.mxu0 0.0
        %4594 = vmatpush1.msra.mxu0 0.0
        %4595 = vmatprep.mubr.f32.mxu0 0.0
        %4596 = vmatmul.mubr.f32.gmra.mrb[0].mxu0 %v2146
        %v4597 = vpop.f32.mrb[0].mxu0
        %v4598 = vadd.f32 0.0, %v4597
        %v4599 = vpop.f32.mrb[0].mxu0
        %4600 = vmatprep.mubr.f32.mxu0 0.0
        %4601 = vmatmul.mubr.f32.gmra.mrb[0].mxu0 %v2149
        %v4602 = vpop.f32.mrb[0].mxu0
        %v4603 = vadd.f32 0.0, %v4602
        %v4604 = vpop.f32.mrb[0].mxu0
        %4605 = vmatprep.mubr.f32.mxu0 0.0
        %4606 = vmatmul.mubr.f32.gmra.mrb[0].mxu0 %v2152
        %v4607 = vpop.f32.mrb[0].mxu0
        %v4608 = vadd.f32 0.0, %v4607
        %v4609 = vpop.f32.mrb[0].mxu0
        %4610 = vmatprep.mubr.f32.mxu0 0.0
        %4611 = vmatmul.mubr.f32.gmra.mrb[0].mxu0 %v2155
        %v4612 = vpop.f32.mrb[0].mxu0
        %v4613 = vadd.f32 0.0, %v4612
        %v4614 = vpop.f32.mrb[0].mxu0
        %4615 = vdwg.mxu0
        %v4616 = vadd.f32 %v4524, %v4598
        %v4617 = vadd.f32 %v4525, %v4603
        %v4618 = vadd.f32 %v4526, %v4608
        %v4619 = vadd.f32 %v4527, %v4613
        %v4620 = vmax.f32 %v4616, 0.0
        %v4621 = vmax.f32 %v4617, 0.0
        %v4622 = vmax.f32 %v4618, 0.0
        %v4623 = vmax.f32 %v4619, 0.0
        %4624 = vmatprep.subr.mxu0 0.0
        %4625 = vmatpush1.msra.mxu0 %v4620
        %4626 = vmatprep.subr.mxu0 0.0
        %4627 = vmatpush1.msra.mxu0 %v4621
        %4628 = vmatprep.subr.mxu0 0.0
        %4629 = vmatpush1.msra.mxu0 %v4622
        %4630 = vmatprep.subr.mxu0 0.0
        %4631 = vmatpush1.msra.mxu0 %v4623
        %4632 = vmatprep.subr.mxu0 0.0
        %4633 = vmatpush1.msra.mxu0 0.0
        %4634 = vmatprep.subr.mxu0 0.0
        %4635 = vmatpush1.msra.mxu0 0.0
        %4636 = vmatprep.subr.mxu0 0.0
        %4637 = vmatpush1.msra.mxu0 0.0
        %4638 = vmatprep.subr.mxu0 0.0
        %4639 = vmatpush1.msra.mxu0 0.0
        %4640 = vmatprep.subr.mxu0 0.0
        %4641 = vmatpush1.msra.mxu0 0.0
        %4642 = vmatprep.subr.mxu0 0.0
        %4643 = vmatpush1.msra.mxu0 0.0
        %4644 = vmatprep.subr.mxu0 0.0
        %4645 = vmatpush1.msra.mxu0 0.0
        %4646 = vmatprep.subr.mxu0 0.0
        %4647 = vmatpush1.msra.mxu0 0.0
        %4648 = vmatprep.subr.mxu0 0.0
        %4649 = vmatpush1.msra.mxu0 0.0
        %4650 = vmatprep.subr.mxu0 0.0
        %4651 = vmatpush1.msra.mxu0 0.0
        %4652 = vmatprep.subr.mxu0 0.0
        %4653 = vmatpush1.msra.mxu0 0.0
        %4654 = vmatprep.subr.mxu0 0.0
        %4655 = vmatpush1.msra.mxu0 0.0
        %4656 = vmatprep.subr.mxu0 0.0
        %4657 = vmatpush1.msra.mxu0 0.0
        %4658 = vmatprep.subr.mxu0 0.0
        %4659 = vmatpush1.msra.mxu0 0.0
        %4660 = vmatprep.subr.mxu0 0.0
        %4661 = vmatpush1.msra.mxu0 0.0
        %4662 = vmatprep.subr.mxu0 0.0
        %4663 = vmatpush1.msra.mxu0 0.0
        %4664 = vmatprep.subr.mxu0 0.0
        %4665 = vmatpush1.msra.mxu0 0.0
        %4666 = vmatprep.subr.mxu0 0.0
        %4667 = vmatpush1.msra.mxu0 0.0
        %4668 = vmatprep.subr.mxu0 0.0
        %4669 = vmatpush1.msra.mxu0 0.0
        %4670 = vmatprep.subr.mxu0 0.0
        %4671 = vmatpush1.msra.mxu0 0.0
        %4672 = vmatprep.subr.mxu0 0.0
        %4673 = vmatpush1.msra.mxu0 0.0
        %4674 = vmatprep.subr.mxu0 0.0
        %4675 = vmatpush1.msra.mxu0 0.0
        %4676 = vmatprep.subr.mxu0 0.0
        %4677 = vmatpush1.msra.mxu0 0.0
        %4678 = vmatprep.subr.mxu0 0.0
        %4679 = vmatpush1.msra.mxu0 0.0
        %4680 = vmatprep.subr.mxu0 0.0
        %4681 = vmatpush1.msra.mxu0 0.0
        %4682 = vmatprep.subr.mxu0 0.0
        %4683 = vmatpush1.msra.mxu0 0.0
        %4684 = vmatprep.subr.mxu0 0.0
        %4685 = vmatpush1.msra.mxu0 0.0
        %4686 = vmatprep.subr.mxu0 0.0
        %4687 = vmatpush1.msra.mxu0 0.0
        %4688 = vmatprep.mubr.f32.mxu0 0.0
        %4689 = vmatmul.mubr.f32.gmra.mrb[0].mxu0 %v2260
        %v4690 = vpop.f32.mrb[0].mxu0
        %v4691 = vadd.f32 %v2256, %v4690
        %v4692 = vpop.f32.mrb[0].mxu0
        %4693 = vdwg.mxu0
        %v4694 = vld [vmem:[%s292 + $0x30] sm:$0x3]
        %v4696 = vrot.slane %v3948, 6
        %v4698 = vsub.f32 %v4694, %v4696
        %v4699 = vmul.f32 %v4691, %v4698
        %v4700 = vsel %vm822, %v4699, 0.0
        %v4701 = vrot.slane %v4700, 4
        %v4702 = vadd.f32 %v4700, %v4701
        %v4703 = vrot.slane %v4702, 2
        %v4704 = vadd.f32 %v4702, %v4703
        %v4705 = vrot.slane %v4704, 1
        %v4706 = vadd.f32 %v4704, %v4705
        %v4707 = vadd.f32 %v3964, %v4706
        %4708 = vst [vmem:[%s336 + $0x14] sm:$0x1] %v4707
        %v4709 = vld [vmem:[#allocation2 + $0x198] sm:$0xff]
        %v4710 = vld [vmem:[#allocation2 + $0x1b8] sm:$0xff]
        %v4711 = vld [vmem:[#allocation2 + $0x1d8] sm:$0xff]
        %v4712 = vld [vmem:[#allocation2 + $0x1f8] sm:$0xff]
        %v4714 = vsel %vm822, %v4133, 0
        %4716 = vmatprep.subr.mxu0 0.0
        %4717 = vmatpush1.msra.mxu0 %v4714
        %4718 = vmatprep.subr.mxu0 0.0
        %4719 = vmatpush1.msra.mxu0 0.0
        %4720 = vmatprep.subr.mxu0 0.0
        %4721 = vmatpush1.msra.mxu0 0.0
        %4722 = vmatprep.subr.mxu0 0.0
        %4723 = vmatpush1.msra.mxu0 0.0
        %4724 = vmatprep.subr.mxu0 0.0
        %4725 = vmatpush1.msra.mxu0 0.0
        %4726 = vmatprep.subr.mxu0 0.0
        %4727 = vmatpush1.msra.mxu0 0.0
        %4728 = vmatprep.subr.mxu0 0.0
        %4729 = vmatpush1.msra.mxu0 0.0
        %4730 = vmatprep.subr.mxu0 0.0
        %4731 = vmatpush1.msra.mxu0 0.0
        %4732 = vmatprep.subr.mxu0 0.0
        %4733 = vmatpush1.msra.mxu0 0.0
        %4734 = vmatprep.subr.mxu0 0.0
        %4735 = vmatpush1.msra.mxu0 0.0
        %4736 = vmatprep.subr.mxu0 0.0
        %4737 = vmatpush1.msra.mxu0 0.0
        %4738 = vmatprep.subr.mxu0 0.0
        %4739 = vmatpush1.msra.mxu0 0.0
        %4740 = vmatprep.subr.mxu0 0.0
        %4741 = vmatpush1.msra.mxu0 0.0
        %4742 = vmatprep.subr.mxu0 0.0
        %4743 = vmatpush1.msra.mxu0 0.0
        %4744 = vmatprep.subr.mxu0 0.0
        %4745 = vmatpush1.msra.mxu0 0.0
        %4746 = vmatprep.subr.mxu0 0.0
        %4747 = vmatpush1.msra.mxu0 0.0
        %4748 = vmatprep.subr.mxu0 0.0
        %4749 = vmatpush1.msra.mxu0 0.0
        %4750 = vmatprep.subr.mxu0 0.0
        %4751 = vmatpush1.msra.mxu0 0.0
        %4752 = vmatprep.subr.mxu0 0.0
        %4753 = vmatpush1.msra.mxu0 0.0
        %4754 = vmatprep.subr.mxu0 0.0
        %4755 = vmatpush1.msra.mxu0 0.0
        %4756 = vmatprep.subr.mxu0 0.0
        %4757 = vmatpush1.msra.mxu0 0.0
        %4758 = vmatprep.subr.mxu0 0.0
        %4759 = vmatpush1.msra.mxu0 0.0
        %4760 = vmatprep.subr.mxu0 0.0
        %4761 = vmatpush1.msra.mxu0 0.0
        %4762 = vmatprep.subr.mxu0 0.0
        %4763 = vmatpush1.msra.mxu0 0.0
        %4764 = vmatprep.subr.mxu0 0.0
        %4765 = vmatpush1.msra.mxu0 0.0
        %4766 = vmatprep.subr.mxu0 0.0
        %4767 = vmatpush1.msra.mxu0 0.0
        %4768 = vmatprep.subr.mxu0 0.0
        %4769 = vmatpush1.msra.mxu0 0.0
        %4770 = vmatprep.subr.mxu0 0.0
        %4771 = vmatpush1.msra.mxu0 0.0
        %4772 = vmatprep.subr.mxu0 0.0
        %4773 = vmatpush1.msra.mxu0 0.0
        %4774 = vmatprep.subr.mxu0 0.0
        %4775 = vmatpush1.msra.mxu0 0.0
        %4776 = vmatprep.subr.mxu0 0.0
        %4777 = vmatpush1.msra.mxu0 0.0
        %4778 = vmatprep.subr.mxu0 0.0
        %4779 = vmatpush1.msra.mxu0 0.0
        %4780 = vmatprep.mubr.f32.mxu0 0.0
        %4781 = vmatmul.mubr.f32.gmra.mrb[0].mxu0 %v2146
        %v4782 = vpop.f32.mrb[0].mxu0
        %v4783 = vadd.f32 0.0, %v4782
        %v4784 = vpop.f32.mrb[0].mxu0
        %4785 = vmatprep.mubr.f32.mxu0 0.0
        %4786 = vmatmul.mubr.f32.gmra.mrb[0].mxu0 %v2149
        %v4787 = vpop.f32.mrb[0].mxu0
        %v4788 = vadd.f32 0.0, %v4787
        %v4789 = vpop.f32.mrb[0].mxu0
        %4790 = vmatprep.mubr.f32.mxu0 0.0
        %4791 = vmatmul.mubr.f32.gmra.mrb[0].mxu0 %v2152
        %v4792 = vpop.f32.mrb[0].mxu0
        %v4793 = vadd.f32 0.0, %v4792
        %v4794 = vpop.f32.mrb[0].mxu0
        %4795 = vmatprep.mubr.f32.mxu0 0.0
        %4796 = vmatmul.mubr.f32.gmra.mrb[0].mxu0 %v2155
        %v4797 = vpop.f32.mrb[0].mxu0
        %v4798 = vadd.f32 0.0, %v4797
        %v4799 = vpop.f32.mrb[0].mxu0
        %4800 = vdwg.mxu0
        %v4801 = vadd.f32 %v4709, %v4783
        %v4802 = vadd.f32 %v4710, %v4788
        %v4803 = vadd.f32 %v4711, %v4793
        %v4804 = vadd.f32 %v4712, %v4798
        %v4805 = vmax.f32 %v4801, 0.0
        %v4806 = vmax.f32 %v4802, 0.0
        %v4807 = vmax.f32 %v4803, 0.0
        %v4808 = vmax.f32 %v4804, 0.0
        %4809 = vmatprep.subr.mxu0 0.0
        %4810 = vmatpush1.msra.mxu0 %v4805
        %4811 = vmatprep.subr.mxu0 0.0
        %4812 = vmatpush1.msra.mxu0 %v4806
        %4813 = vmatprep.subr.mxu0 0.0
        %4814 = vmatpush1.msra.mxu0 %v4807
        %4815 = vmatprep.subr.mxu0 0.0
        %4816 = vmatpush1.msra.mxu0 %v4808
        %4817 = vmatprep.subr.mxu0 0.0
        %4818 = vmatpush1.msra.mxu0 0.0
        %4819 = vmatprep.subr.mxu0 0.0
        %4820 = vmatpush1.msra.mxu0 0.0
        %4821 = vmatprep.subr.mxu0 0.0
        %4822 = vmatpush1.msra.mxu0 0.0
        %4823 = vmatprep.subr.mxu0 0.0
        %4824 = vmatpush1.msra.mxu0 0.0
        %4825 = vmatprep.subr.mxu0 0.0
        %4826 = vmatpush1.msra.mxu0 0.0
        %4827 = vmatprep.subr.mxu0 0.0
        %4828 = vmatpush1.msra.mxu0 0.0
        %4829 = vmatprep.subr.mxu0 0.0
        %4830 = vmatpush1.msra.mxu0 0.0
        %4831 = vmatprep.subr.mxu0 0.0
        %4832 = vmatpush1.msra.mxu0 0.0
        %4833 = vmatprep.subr.mxu0 0.0
        %4834 = vmatpush1.msra.mxu0 0.0
        %4835 = vmatprep.subr.mxu0 0.0
        %4836 = vmatpush1.msra.mxu0 0.0
        %4837 = vmatprep.subr.mxu0 0.0
        %4838 = vmatpush1.msra.mxu0 0.0
        %4839 = vmatprep.subr.mxu0 0.0
        %4840 = vmatpush1.msra.mxu0 0.0
        %4841 = vmatprep.subr.mxu0 0.0
        %4842 = vmatpush1.msra.mxu0 0.0
        %4843 = vmatprep.subr.mxu0 0.0
        %4844 = vmatpush1.msra.mxu0 0.0
        %4845 = vmatprep.subr.mxu0 0.0
        %4846 = vmatpush1.msra.mxu0 0.0
        %4847 = vmatprep.subr.mxu0 0.0
        %4848 = vmatpush1.msra.mxu0 0.0
        %4849 = vmatprep.subr.mxu0 0.0
        %4850 = vmatpush1.msra.mxu0 0.0
        %4851 = vmatprep.subr.mxu0 0.0
        %4852 = vmatpush1.msra.mxu0 0.0
        %4853 = vmatprep.subr.mxu0 0.0
        %4854 = vmatpush1.msra.mxu0 0.0
        %4855 = vmatprep.subr.mxu0 0.0
        %4856 = vmatpush1.msra.mxu0 0.0
        %4857 = vmatprep.subr.mxu0 0.0
        %4858 = vmatpush1.msra.mxu0 0.0
        %4859 = vmatprep.subr.mxu0 0.0
        %4860 = vmatpush1.msra.mxu0 0.0
        %4861 = vmatprep.subr.mxu0 0.0
        %4862 = vmatpush1.msra.mxu0 0.0
        %4863 = vmatprep.subr.mxu0 0.0
        %4864 = vmatpush1.msra.mxu0 0.0
        %4865 = vmatprep.subr.mxu0 0.0
        %4866 = vmatpush1.msra.mxu0 0.0
        %4867 = vmatprep.subr.mxu0 0.0
        %4868 = vmatpush1.msra.mxu0 0.0
        %4869 = vmatprep.subr.mxu0 0.0
        %4870 = vmatpush1.msra.mxu0 0.0
        %4871 = vmatprep.subr.mxu0 0.0
        %4872 = vmatpush1.msra.mxu0 0.0
        %4873 = vmatprep.mubr.f32.mxu0 0.0
        %4874 = vmatmul.mubr.f32.gmra.mrb[0].mxu0 %v2260
        %v4875 = vpop.f32.mrb[0].mxu0
        %v4876 = vadd.f32 %v2256, %v4875
        %v4877 = vpop.f32.mrb[0].mxu0
        %4878 = vdwg.mxu0
        %v4879 = vld [vmem:[%s292 + $0x38] sm:$0x3]
        %v4881 = vrot.slane %v4136, 6
        %v4883 = vsub.f32 %v4879, %v4881
        %v4884 = vmul.f32 %v4876, %v4883
        %v4885 = vsel %vm822, %v4884, 0.0
        %v4886 = vrot.slane %v4885, 4
        %v4887 = vadd.f32 %v4885, %v4886
        %v4888 = vrot.slane %v4887, 2
        %v4889 = vadd.f32 %v4887, %v4888
        %v4890 = vrot.slane %v4889, 1
        %v4891 = vadd.f32 %v4889, %v4890
        %v4892 = vadd.f32 %v4152, %v4891
        %4893 = vst [vmem:[%s336 + $0x1c] sm:$0x1] %v4892
        %v4894 = vld [vmem:[#allocation2 + $0x200] sm:$0xff]
        %v4895 = vld [vmem:[#allocation2 + $0x220] sm:$0xff]
        %v4896 = vld [vmem:[#allocation2 + $0x240] sm:$0xff]
        %v4897 = vld [vmem:[#allocation2 + $0x260] sm:$0xff]
        %v4899 = vsel %vm822, %v4321, 0
        %4901 = vmatprep.subr.mxu0 0.0
        %4902 = vmatpush1.msra.mxu0 %v4899
        %4903 = vmatprep.subr.mxu0 0.0
        %4904 = vmatpush1.msra.mxu0 0.0
        %4905 = vmatprep.subr.mxu0 0.0
        %4906 = vmatpush1.msra.mxu0 0.0
        %4907 = vmatprep.subr.mxu0 0.0
        %4908 = vmatpush1.msra.mxu0 0.0
        %4909 = vmatprep.subr.mxu0 0.0
        %4910 = vmatpush1.msra.mxu0 0.0
        %4911 = vmatprep.subr.mxu0 0.0
        %4912 = vmatpush1.msra.mxu0 0.0
        %4913 = vmatprep.subr.mxu0 0.0
        %4914 = vmatpush1.msra.mxu0 0.0
        %4915 = vmatprep.subr.mxu0 0.0
        %4916 = vmatpush1.msra.mxu0 0.0
        %4917 = vmatprep.subr.mxu0 0.0
        %4918 = vmatpush1.msra.mxu0 0.0
        %4919 = vmatprep.subr.mxu0 0.0
        %4920 = vmatpush1.msra.mxu0 0.0
        %4921 = vmatprep.subr.mxu0 0.0
        %4922 = vmatpush1.msra.mxu0 0.0
        %4923 = vmatprep.subr.mxu0 0.0
        %4924 = vmatpush1.msra.mxu0 0.0
        %4925 = vmatprep.subr.mxu0 0.0
        %4926 = vmatpush1.msra.mxu0 0.0
        %4927 = vmatprep.subr.mxu0 0.0
        %4928 = vmatpush1.msra.mxu0 0.0
        %4929 = vmatprep.subr.mxu0 0.0
        %4930 = vmatpush1.msra.mxu0 0.0
        %4931 = vmatprep.subr.mxu0 0.0
        %4932 = vmatpush1.msra.mxu0 0.0
        %4933 = vmatprep.subr.mxu0 0.0
        %4934 = vmatpush1.msra.mxu0 0.0
        %4935 = vmatprep.subr.mxu0 0.0
        %4936 = vmatpush1.msra.mxu0 0.0
        %4937 = vmatprep.subr.mxu0 0.0
        %4938 = vmatpush1.msra.mxu0 0.0
        %4939 = vmatprep.subr.mxu0 0.0
        %4940 = vmatpush1.msra.mxu0 0.0
        %4941 = vmatprep.subr.mxu0 0.0
        %4942 = vmatpush1.msra.mxu0 0.0
        %4943 = vmatprep.subr.mxu0 0.0
        %4944 = vmatpush1.msra.mxu0 0.0
        %4945 = vmatprep.subr.mxu0 0.0
        %4946 = vmatpush1.msra.mxu0 0.0
        %4947 = vmatprep.subr.mxu0 0.0
        %4948 = vmatpush1.msra.mxu0 0.0
        %4949 = vmatprep.subr.mxu0 0.0
        %4950 = vmatpush1.msra.mxu0 0.0
        %4951 = vmatprep.subr.mxu0 0.0
        %4952 = vmatpush1.msra.mxu0 0.0
        %4953 = vmatprep.subr.mxu0 0.0
        %4954 = vmatpush1.msra.mxu0 0.0
        %4955 = vmatprep.subr.mxu0 0.0
        %4956 = vmatpush1.msra.mxu0 0.0
        %4957 = vmatprep.subr.mxu0 0.0
        %4958 = vmatpush1.msra.mxu0 0.0
        %4959 = vmatprep.subr.mxu0 0.0
        %4960 = vmatpush1.msra.mxu0 0.0
        %4961 = vmatprep.subr.mxu0 0.0
        %4962 = vmatpush1.msra.mxu0 0.0
        %4963 = vmatprep.subr.mxu0 0.0
        %4964 = vmatpush1.msra.mxu0 0.0
        %4965 = vmatprep.mubr.f32.mxu0 0.0
        %4966 = vmatmul.mubr.f32.gmra.mrb[0].mxu0 %v2146
        %v4967 = vpop.f32.mrb[0].mxu0
        %v4968 = vadd.f32 0.0, %v4967
        %v4969 = vpop.f32.mrb[0].mxu0
        %4970 = vmatprep.mubr.f32.mxu0 0.0
        %4971 = vmatmul.mubr.f32.gmra.mrb[0].mxu0 %v2149
        %v4972 = vpop.f32.mrb[0].mxu0
        %v4973 = vadd.f32 0.0, %v4972
        %v4974 = vpop.f32.mrb[0].mxu0
        %4975 = vmatprep.mubr.f32.mxu0 0.0
        %4976 = vmatmul.mubr.f32.gmra.mrb[0].mxu0 %v2152
        %v4977 = vpop.f32.mrb[0].mxu0
        %v4978 = vadd.f32 0.0, %v4977
        %v4979 = vpop.f32.mrb[0].mxu0
        %4980 = vmatprep.mubr.f32.mxu0 0.0
        %4981 = vmatmul.mubr.f32.gmra.mrb[0].mxu0 %v2155
        %v4982 = vpop.f32.mrb[0].mxu0
        %v4983 = vadd.f32 0.0, %v4982
        %v4984 = vpop.f32.mrb[0].mxu0
        %4985 = vdwg.mxu0
        %v4986 = vadd.f32 %v4894, %v4968
        %v4987 = vadd.f32 %v4895, %v4973
        %v4988 = vadd.f32 %v4896, %v4978
        %v4989 = vadd.f32 %v4897, %v4983
        %v4990 = vmax.f32 %v4986, 0.0
        %v4991 = vmax.f32 %v4987, 0.0
        %v4992 = vmax.f32 %v4988, 0.0
        %v4993 = vmax.f32 %v4989, 0.0
        %4994 = vmatprep.subr.mxu0 0.0
        %4995 = vmatpush1.msra.mxu0 %v4990
        %4996 = vmatprep.subr.mxu0 0.0
        %4997 = vmatpush1.msra.mxu0 %v4991
        %4998 = vmatprep.subr.mxu0 0.0
        %4999 = vmatpush1.msra.mxu0 %v4992
        %5000 = vmatprep.subr.mxu0 0.0
        %5001 = vmatpush1.msra.mxu0 %v4993
        %5002 = vmatprep.subr.mxu0 0.0
        %5003 = vmatpush1.msra.mxu0 0.0
        %5004 = vmatprep.subr.mxu0 0.0
        %5005 = vmatpush1.msra.mxu0 0.0
        %5006 = vmatprep.subr.mxu0 0.0
        %5007 = vmatpush1.msra.mxu0 0.0
        %5008 = vmatprep.subr.mxu0 0.0
        %5009 = vmatpush1.msra.mxu0 0.0
        %5010 = vmatprep.subr.mxu0 0.0
        %5011 = vmatpush1.msra.mxu0 0.0
        %5012 = vmatprep.subr.mxu0 0.0
        %5013 = vmatpush1.msra.mxu0 0.0
        %5014 = vmatprep.subr.mxu0 0.0
        %5015 = vmatpush1.msra.mxu0 0.0
        %5016 = vmatprep.subr.mxu0 0.0
        %5017 = vmatpush1.msra.mxu0 0.0
        %5018 = vmatprep.subr.mxu0 0.0
        %5019 = vmatpush1.msra.mxu0 0.0
        %5020 = vmatprep.subr.mxu0 0.0
        %5021 = vmatpush1.msra.mxu0 0.0
        %5022 = vmatprep.subr.mxu0 0.0
        %5023 = vmatpush1.msra.mxu0 0.0
        %5024 = vmatprep.subr.mxu0 0.0
        %5025 = vmatpush1.msra.mxu0 0.0
        %5026 = vmatprep.subr.mxu0 0.0
        %5027 = vmatpush1.msra.mxu0 0.0
        %5028 = vmatprep.subr.mxu0 0.0
        %5029 = vmatpush1.msra.mxu0 0.0
        %5030 = vmatprep.subr.mxu0 0.0
        %5031 = vmatpush1.msra.mxu0 0.0
        %5032 = vmatprep.subr.mxu0 0.0
        %5033 = vmatpush1.msra.mxu0 0.0
        %5034 = vmatprep.subr.mxu0 0.0
        %5035 = vmatpush1.msra.mxu0 0.0
        %5036 = vmatprep.subr.mxu0 0.0
        %5037 = vmatpush1.msra.mxu0 0.0
        %5038 = vmatprep.subr.mxu0 0.0
        %5039 = vmatpush1.msra.mxu0 0.0
        %5040 = vmatprep.subr.mxu0 0.0
        %5041 = vmatpush1.msra.mxu0 0.0
        %5042 = vmatprep.subr.mxu0 0.0
        %5043 = vmatpush1.msra.mxu0 0.0
        %5044 = vmatprep.subr.mxu0 0.0
        %5045 = vmatpush1.msra.mxu0 0.0
        %5046 = vmatprep.subr.mxu0 0.0
        %5047 = vmatpush1.msra.mxu0 0.0
        %5048 = vmatprep.subr.mxu0 0.0
        %5049 = vmatpush1.msra.mxu0 0.0
        %5050 = vmatprep.subr.mxu0 0.0
        %5051 = vmatpush1.msra.mxu0 0.0
        %5052 = vmatprep.subr.mxu0 0.0
        %5053 = vmatpush1.msra.mxu0 0.0
        %5054 = vmatprep.subr.mxu0 0.0
        %5055 = vmatpush1.msra.mxu0 0.0
        %5056 = vmatprep.subr.mxu0 0.0
        %5057 = vmatpush1.msra.mxu0 0.0
        %5058 = vmatprep.mubr.f32.mxu0 0.0
        %5059 = vmatmul.mubr.f32.gmra.mrb[0].mxu0 %v2260
        %v5060 = vpop.f32.mrb[0].mxu0
        %v5061 = vadd.f32 %v2256, %v5060
        %v5062 = vpop.f32.mrb[0].mxu0
        %5063 = vdwg.mxu0
        %v5064 = vld [vmem:[%s292 + $0x20] sm:$0xc]
        %v5066 = vrot.slane %v4324, 6
        %v5068 = vsub.f32 %v5064, %v5066
        %v5070 = vrot.slane %v5068, 2
        %v5072 = vmul.f32 %v5061, %v5070
        %v5073 = vsel %vm822, %v5072, 0.0
        %v5074 = vrot.slane %v5073, 4
        %v5075 = vadd.f32 %v5073, %v5074
        %v5076 = vrot.slane %v5075, 2
        %v5077 = vadd.f32 %v5075, %v5076
        %v5078 = vrot.slane %v5077, 1
        %v5079 = vadd.f32 %v5077, %v5078
        %v5080 = vadd.f32 %v4337, %v5079
        %5081 = vst [vmem:[%s336 + $0x5] sm:$0x1] %v5080
        %v5082 = vld [vmem:[#allocation2 + $0x208] sm:$0xff]
        %v5083 = vld [vmem:[#allocation2 + $0x228] sm:$0xff]
        %v5084 = vld [vmem:[#allocation2 + $0x248] sm:$0xff]
        %v5085 = vld [vmem:[#allocation2 + $0x268] sm:$0xff]
        %v5087 = vsel %vm822, %v4506, 0
        %5089 = vmatprep.subr.mxu0 0.0
        %5090 = vmatpush1.msra.mxu0 %v5087
        %5091 = vmatprep.subr.mxu0 0.0
        %5092 = vmatpush1.msra.mxu0 0.0
        %5093 = vmatprep.subr.mxu0 0.0
        %5094 = vmatpush1.msra.mxu0 0.0
        %5095 = vmatprep.subr.mxu0 0.0
        %5096 = vmatpush1.msra.mxu0 0.0
        %5097 = vmatprep.subr.mxu0 0.0
        %5098 = vmatpush1.msra.mxu0 0.0
        %5099 = vmatprep.subr.mxu0 0.0
        %5100 = vmatpush1.msra.mxu0 0.0
        %5101 = vmatprep.subr.mxu0 0.0
        %5102 = vmatpush1.msra.mxu0 0.0
        %5103 = vmatprep.subr.mxu0 0.0
        %5104 = vmatpush1.msra.mxu0 0.0
        %5105 = vmatprep.subr.mxu0 0.0
        %5106 = vmatpush1.msra.mxu0 0.0
        %5107 = vmatprep.subr.mxu0 0.0
        %5108 = vmatpush1.msra.mxu0 0.0
        %5109 = vmatprep.subr.mxu0 0.0
        %5110 = vmatpush1.msra.mxu0 0.0
        %5111 = vmatprep.subr.mxu0 0.0
        %5112 = vmatpush1.msra.mxu0 0.0
        %5113 = vmatprep.subr.mxu0 0.0
        %5114 = vmatpush1.msra.mxu0 0.0
        %5115 = vmatprep.subr.mxu0 0.0
        %5116 = vmatpush1.msra.mxu0 0.0
        %5117 = vmatprep.subr.mxu0 0.0
        %5118 = vmatpush1.msra.mxu0 0.0
        %5119 = vmatprep.subr.mxu0 0.0
        %5120 = vmatpush1.msra.mxu0 0.0
        %5121 = vmatprep.subr.mxu0 0.0
        %5122 = vmatpush1.msra.mxu0 0.0
        %5123 = vmatprep.subr.mxu0 0.0
        %5124 = vmatpush1.msra.mxu0 0.0
        %5125 = vmatprep.subr.mxu0 0.0
        %5126 = vmatpush1.msra.mxu0 0.0
        %5127 = vmatprep.subr.mxu0 0.0
        %5128 = vmatpush1.msra.mxu0 0.0
        %5129 = vmatprep.subr.mxu0 0.0
        %5130 = vmatpush1.msra.mxu0 0.0
        %5131 = vmatprep.subr.mxu0 0.0
        %5132 = vmatpush1.msra.mxu0 0.0
        %5133 = vmatprep.subr.mxu0 0.0
        %5134 = vmatpush1.msra.mxu0 0.0
        %5135 = vmatprep.subr.mxu0 0.0
        %5136 = vmatpush1.msra.mxu0 0.0
        %5137 = vmatprep.subr.mxu0 0.0
        %5138 = vmatpush1.msra.mxu0 0.0
        %5139 = vmatprep.subr.mxu0 0.0
        %5140 = vmatpush1.msra.mxu0 0.0
        %5141 = vmatprep.subr.mxu0 0.0
        %5142 = vmatpush1.msra.mxu0 0.0
        %5143 = vmatprep.subr.mxu0 0.0
        %5144 = vmatpush1.msra.mxu0 0.0
        %5145 = vmatprep.subr.mxu0 0.0
        %5146 = vmatpush1.msra.mxu0 0.0
        %5147 = vmatprep.subr.mxu0 0.0
        %5148 = vmatpush1.msra.mxu0 0.0
        %5149 = vmatprep.subr.mxu0 0.0
        %5150 = vmatpush1.msra.mxu0 0.0
        %5151 = vmatprep.subr.mxu0 0.0
        %5152 = vmatpush1.msra.mxu0 0.0
        %5153 = vmatprep.mubr.f32.mxu0 0.0
        %5154 = vmatmul.mubr.f32.gmra.mrb[0].mxu0 %v2146
        %v5155 = vpop.f32.mrb[0].mxu0
        %v5156 = vadd.f32 0.0, %v5155
        %v5157 = vpop.f32.mrb[0].mxu0
        %5158 = vmatprep.mubr.f32.mxu0 0.0
        %5159 = vmatmul.mubr.f32.gmra.mrb[0].mxu0 %v2149
        %v5160 = vpop.f32.mrb[0].mxu0
        %v5161 = vadd.f32 0.0, %v5160
        %v5162 = vpop.f32.mrb[0].mxu0
        %5163 = vmatprep.mubr.f32.mxu0 0.0
        %5164 = vmatmul.mubr.f32.gmra.mrb[0].mxu0 %v2152
        %v5165 = vpop.f32.mrb[0].mxu0
        %v5166 = vadd.f32 0.0, %v5165
        %v5167 = vpop.f32.mrb[0].mxu0
        %5168 = vmatprep.mubr.f32.mxu0 0.0
        %5169 = vmatmul.mubr.f32.gmra.mrb[0].mxu0 %v2155
        %v5170 = vpop.f32.mrb[0].mxu0
        %v5171 = vadd.f32 0.0, %v5170
        %v5172 = vpop.f32.mrb[0].mxu0
        %5173 = vdwg.mxu0
        %v5174 = vadd.f32 %v5082, %v5156
        %v5175 = vadd.f32 %v5083, %v5161
        %v5176 = vadd.f32 %v5084, %v5166
        %v5177 = vadd.f32 %v5085, %v5171
        %v5178 = vmax.f32 %v5174, 0.0
        %v5179 = vmax.f32 %v5175, 0.0
        %v5180 = vmax.f32 %v5176, 0.0
        %v5181 = vmax.f32 %v5177, 0.0
        %5182 = vmatprep.subr.mxu0 0.0
        %5183 = vmatpush1.msra.mxu0 %v5178
        %5184 = vmatprep.subr.mxu0 0.0
        %5185 = vmatpush1.msra.mxu0 %v5179
        %5186 = vmatprep.subr.mxu0 0.0
        %5187 = vmatpush1.msra.mxu0 %v5180
        %5188 = vmatprep.subr.mxu0 0.0
        %5189 = vmatpush1.msra.mxu0 %v5181
        %5190 = vmatprep.subr.mxu0 0.0
        %5191 = vmatpush1.msra.mxu0 0.0
        %5192 = vmatprep.subr.mxu0 0.0
        %5193 = vmatpush1.msra.mxu0 0.0
        %5194 = vmatprep.subr.mxu0 0.0
        %5195 = vmatpush1.msra.mxu0 0.0
        %5196 = vmatprep.subr.mxu0 0.0
        %5197 = vmatpush1.msra.mxu0 0.0
        %5198 = vmatprep.subr.mxu0 0.0
        %5199 = vmatpush1.msra.mxu0 0.0
        %5200 = vmatprep.subr.mxu0 0.0
        %5201 = vmatpush1.msra.mxu0 0.0
        %5202 = vmatprep.subr.mxu0 0.0
        %5203 = vmatpush1.msra.mxu0 0.0
        %5204 = vmatprep.subr.mxu0 0.0
        %5205 = vmatpush1.msra.mxu0 0.0
        %5206 = vmatprep.subr.mxu0 0.0
        %5207 = vmatpush1.msra.mxu0 0.0
        %5208 = vmatprep.subr.mxu0 0.0
        %5209 = vmatpush1.msra.mxu0 0.0
        %5210 = vmatprep.subr.mxu0 0.0
        %5211 = vmatpush1.msra.mxu0 0.0
        %5212 = vmatprep.subr.mxu0 0.0
        %5213 = vmatpush1.msra.mxu0 0.0
        %5214 = vmatprep.subr.mxu0 0.0
        %5215 = vmatpush1.msra.mxu0 0.0
        %5216 = vmatprep.subr.mxu0 0.0
        %5217 = vmatpush1.msra.mxu0 0.0
        %5218 = vmatprep.subr.mxu0 0.0
        %5219 = vmatpush1.msra.mxu0 0.0
        %5220 = vmatprep.subr.mxu0 0.0
        %5221 = vmatpush1.msra.mxu0 0.0
        %5222 = vmatprep.subr.mxu0 0.0
        %5223 = vmatpush1.msra.mxu0 0.0
        %5224 = vmatprep.subr.mxu0 0.0
        %5225 = vmatpush1.msra.mxu0 0.0
        %5226 = vmatprep.subr.mxu0 0.0
        %5227 = vmatpush1.msra.mxu0 0.0
        %5228 = vmatprep.subr.mxu0 0.0
        %5229 = vmatpush1.msra.mxu0 0.0
        %5230 = vmatprep.subr.mxu0 0.0
        %5231 = vmatpush1.msra.mxu0 0.0
        %5232 = vmatprep.subr.mxu0 0.0
        %5233 = vmatpush1.msra.mxu0 0.0
        %5234 = vmatprep.subr.mxu0 0.0
        %5235 = vmatpush1.msra.mxu0 0.0
        %5236 = vmatprep.subr.mxu0 0.0
        %5237 = vmatpush1.msra.mxu0 0.0
        %5238 = vmatprep.subr.mxu0 0.0
        %5239 = vmatpush1.msra.mxu0 0.0
        %5240 = vmatprep.subr.mxu0 0.0
        %5241 = vmatpush1.msra.mxu0 0.0
        %5242 = vmatprep.subr.mxu0 0.0
        %5243 = vmatpush1.msra.mxu0 0.0
        %5244 = vmatprep.subr.mxu0 0.0
        %5245 = vmatpush1.msra.mxu0 0.0
        %5246 = vmatprep.mubr.f32.mxu0 0.0
        %5247 = vmatmul.mubr.f32.gmra.mrb[0].mxu0 %v2260
        %v5248 = vpop.f32.mrb[0].mxu0
        %v5249 = vadd.f32 %v2256, %v5248
        %v5250 = vpop.f32.mrb[0].mxu0
        %5251 = vdwg.mxu0
        %v5252 = vld [vmem:[%s292 + $0x28] sm:$0xc]
        %v5254 = vrot.slane %v4509, 6
        %v5256 = vsub.f32 %v5252, %v5254
        %v5258 = vrot.slane %v5256, 2
        %v5260 = vmul.f32 %v5249, %v5258
        %v5261 = vsel %vm822, %v5260, 0.0
        %v5262 = vrot.slane %v5261, 4
        %v5263 = vadd.f32 %v5261, %v5262
        %v5264 = vrot.slane %v5263, 2
        %v5265 = vadd.f32 %v5263, %v5264
        %v5266 = vrot.slane %v5265, 1
        %v5267 = vadd.f32 %v5265, %v5266
        %v5268 = vadd.f32 %v4522, %v5267
        %5269 = vst [vmem:[%s336 + $0xd] sm:$0x1] %v5268
        %v5270 = vld [vmem:[#allocation2 + $0x210] sm:$0xff]
        %v5271 = vld [vmem:[#allocation2 + $0x230] sm:$0xff]
        %v5272 = vld [vmem:[#allocation2 + $0x250] sm:$0xff]
        %v5273 = vld [vmem:[#allocation2 + $0x270] sm:$0xff]
        %v5275 = vsel %vm822, %v4691, 0
        %5277 = vmatprep.subr.mxu0 0.0
        %5278 = vmatpush1.msra.mxu0 %v5275
        %5279 = vmatprep.subr.mxu0 0.0
        %5280 = vmatpush1.msra.mxu0 0.0
        %5281 = vmatprep.subr.mxu0 0.0
        %5282 = vmatpush1.msra.mxu0 0.0
        %5283 = vmatprep.subr.mxu0 0.0
        %5284 = vmatpush1.msra.mxu0 0.0
        %5285 = vmatprep.subr.mxu0 0.0
        %5286 = vmatpush1.msra.mxu0 0.0
        %5287 = vmatprep.subr.mxu0 0.0
        %5288 = vmatpush1.msra.mxu0 0.0
        %5289 = vmatprep.subr.mxu0 0.0
        %5290 = vmatpush1.msra.mxu0 0.0
        %5291 = vmatprep.subr.mxu0 0.0
        %5292 = vmatpush1.msra.mxu0 0.0
        %5293 = vmatprep.subr.mxu0 0.0
        %5294 = vmatpush1.msra.mxu0 0.0
        %5295 = vmatprep.subr.mxu0 0.0
        %5296 = vmatpush1.msra.mxu0 0.0
        %5297 = vmatprep.subr.mxu0 0.0
        %5298 = vmatpush1.msra.mxu0 0.0
        %5299 = vmatprep.subr.mxu0 0.0
        %5300 = vmatpush1.msra.mxu0 0.0
        %5301 = vmatprep.subr.mxu0 0.0
        %5302 = vmatpush1.msra.mxu0 0.0
        %5303 = vmatprep.subr.mxu0 0.0
        %5304 = vmatpush1.msra.mxu0 0.0
        %5305 = vmatprep.subr.mxu0 0.0
        %5306 = vmatpush1.msra.mxu0 0.0
        %5307 = vmatprep.subr.mxu0 0.0
        %5308 = vmatpush1.msra.mxu0 0.0
        %5309 = vmatprep.subr.mxu0 0.0
        %5310 = vmatpush1.msra.mxu0 0.0
        %5311 = vmatprep.subr.mxu0 0.0
        %5312 = vmatpush1.msra.mxu0 0.0
        %5313 = vmatprep.subr.mxu0 0.0
        %5314 = vmatpush1.msra.mxu0 0.0
        %5315 = vmatprep.subr.mxu0 0.0
        %5316 = vmatpush1.msra.mxu0 0.0
        %5317 = vmatprep.subr.mxu0 0.0
        %5318 = vmatpush1.msra.mxu0 0.0
        %5319 = vmatprep.subr.mxu0 0.0
        %5320 = vmatpush1.msra.mxu0 0.0
        %5321 = vmatprep.subr.mxu0 0.0
        %5322 = vmatpush1.msra.mxu0 0.0
        %5323 = vmatprep.subr.mxu0 0.0
        %5324 = vmatpush1.msra.mxu0 0.0
        %5325 = vmatprep.subr.mxu0 0.0
        %5326 = vmatpush1.msra.mxu0 0.0
        %5327 = vmatprep.subr.mxu0 0.0
        %5328 = vmatpush1.msra.mxu0 0.0
        %5329 = vmatprep.subr.mxu0 0.0
        %5330 = vmatpush1.msra.mxu0 0.0
        %5331 = vmatprep.subr.mxu0 0.0
        %5332 = vmatpush1.msra.mxu0 0.0
        %5333 = vmatprep.subr.mxu0 0.0
        %5334 = vmatpush1.msra.mxu0 0.0
        %5335 = vmatprep.subr.mxu0 0.0
        %5336 = vmatpush1.msra.mxu0 0.0
        %5337 = vmatprep.subr.mxu0 0.0
        %5338 = vmatpush1.msra.mxu0 0.0
        %5339 = vmatprep.subr.mxu0 0.0
        %5340 = vmatpush1.msra.mxu0 0.0
        %5341 = vmatprep.mubr.f32.mxu0 0.0
        %5342 = vmatmul.mubr.f32.gmra.mrb[0].mxu0 %v2146
        %v5343 = vpop.f32.mrb[0].mxu0
        %v5344 = vadd.f32 0.0, %v5343
        %v5345 = vpop.f32.mrb[0].mxu0
        %5346 = vmatprep.mubr.f32.mxu0 0.0
        %5347 = vmatmul.mubr.f32.gmra.mrb[0].mxu0 %v2149
        %v5348 = vpop.f32.mrb[0].mxu0
        %v5349 = vadd.f32 0.0, %v5348
        %v5350 = vpop.f32.mrb[0].mxu0
        %5351 = vmatprep.mubr.f32.mxu0 0.0
        %5352 = vmatmul.mubr.f32.gmra.mrb[0].mxu0 %v2152
        %v5353 = vpop.f32.mrb[0].mxu0
        %v5354 = vadd.f32 0.0, %v5353
        %v5355 = vpop.f32.mrb[0].mxu0
        %5356 = vmatprep.mubr.f32.mxu0 0.0
        %5357 = vmatmul.mubr.f32.gmra.mrb[0].mxu0 %v2155
        %v5358 = vpop.f32.mrb[0].mxu0
        %v5359 = vadd.f32 0.0, %v5358
        %v5360 = vpop.f32.mrb[0].mxu0
        %5361 = vdwg.mxu0
        %v5362 = vadd.f32 %v5270, %v5344
        %v5363 = vadd.f32 %v5271, %v5349
        %v5364 = vadd.f32 %v5272, %v5354
        %v5365 = vadd.f32 %v5273, %v5359
        %v5366 = vmax.f32 %v5362, 0.0
        %v5367 = vmax.f32 %v5363, 0.0
        %v5368 = vmax.f32 %v5364, 0.0
        %v5369 = vmax.f32 %v5365, 0.0
        %5370 = vmatprep.subr.mxu0 0.0
        %5371 = vmatpush1.msra.mxu0 %v5366
        %5372 = vmatprep.subr.mxu0 0.0
        %5373 = vmatpush1.msra.mxu0 %v5367
        %5374 = vmatprep.subr.mxu0 0.0
        %5375 = vmatpush1.msra.mxu0 %v5368
        %5376 = vmatprep.subr.mxu0 0.0
        %5377 = vmatpush1.msra.mxu0 %v5369
        %5378 = vmatprep.subr.mxu0 0.0
        %5379 = vmatpush1.msra.mxu0 0.0
        %5380 = vmatprep.subr.mxu0 0.0
        %5381 = vmatpush1.msra.mxu0 0.0
        %5382 = vmatprep.subr.mxu0 0.0
        %5383 = vmatpush1.msra.mxu0 0.0
        %5384 = vmatprep.subr.mxu0 0.0
        %5385 = vmatpush1.msra.mxu0 0.0
        %5386 = vmatprep.subr.mxu0 0.0
        %5387 = vmatpush1.msra.mxu0 0.0
        %5388 = vmatprep.subr.mxu0 0.0
        %5389 = vmatpush1.msra.mxu0 0.0
        %5390 = vmatprep.subr.mxu0 0.0
        %5391 = vmatpush1.msra.mxu0 0.0
        %5392 = vmatprep.subr.mxu0 0.0
        %5393 = vmatpush1.msra.mxu0 0.0
        %5394 = vmatprep.subr.mxu0 0.0
        %5395 = vmatpush1.msra.mxu0 0.0
        %5396 = vmatprep.subr.mxu0 0.0
        %5397 = vmatpush1.msra.mxu0 0.0
        %5398 = vmatprep.subr.mxu0 0.0
        %5399 = vmatpush1.msra.mxu0 0.0
        %5400 = vmatprep.subr.mxu0 0.0
        %5401 = vmatpush1.msra.mxu0 0.0
        %5402 = vmatprep.subr.mxu0 0.0
        %5403 = vmatpush1.msra.mxu0 0.0
        %5404 = vmatprep.subr.mxu0 0.0
        %5405 = vmatpush1.msra.mxu0 0.0
        %5406 = vmatprep.subr.mxu0 0.0
        %5407 = vmatpush1.msra.mxu0 0.0
        %5408 = vmatprep.subr.mxu0 0.0
        %5409 = vmatpush1.msra.mxu0 0.0
        %5410 = vmatprep.subr.mxu0 0.0
        %5411 = vmatpush1.msra.mxu0 0.0
        %5412 = vmatprep.subr.mxu0 0.0
        %5413 = vmatpush1.msra.mxu0 0.0
        %5414 = vmatprep.subr.mxu0 0.0
        %5415 = vmatpush1.msra.mxu0 0.0
        %5416 = vmatprep.subr.mxu0 0.0
        %5417 = vmatpush1.msra.mxu0 0.0
        %5418 = vmatprep.subr.mxu0 0.0
        %5419 = vmatpush1.msra.mxu0 0.0
        %5420 = vmatprep.subr.mxu0 0.0
        %5421 = vmatpush1.msra.mxu0 0.0
        %5422 = vmatprep.subr.mxu0 0.0
        %5423 = vmatpush1.msra.mxu0 0.0
        %5424 = vmatprep.subr.mxu0 0.0
        %5425 = vmatpush1.msra.mxu0 0.0
        %5426 = vmatprep.subr.mxu0 0.0
        %5427 = vmatpush1.msra.mxu0 0.0
        %5428 = vmatprep.subr.mxu0 0.0
        %5429 = vmatpush1.msra.mxu0 0.0
        %5430 = vmatprep.subr.mxu0 0.0
        %5431 = vmatpush1.msra.mxu0 0.0
        %5432 = vmatprep.subr.mxu0 0.0
        %5433 = vmatpush1.msra.mxu0 0.0
        %5434 = vmatprep.mubr.f32.mxu0 0.0
        %5435 = vmatmul.mubr.f32.gmra.mrb[0].mxu0 %v2260
        %v5436 = vpop.f32.mrb[0].mxu0
        %v5437 = vadd.f32 %v2256, %v5436
        %v5438 = vpop.f32.mrb[0].mxu0
        %5439 = vdwg.mxu0
        %v5440 = vld [vmem:[%s292 + $0x30] sm:$0xc]
        %v5442 = vrot.slane %v4694, 6
        %v5444 = vsub.f32 %v5440, %v5442
        %v5446 = vrot.slane %v5444, 2
        %v5448 = vmul.f32 %v5437, %v5446
        %v5449 = vsel %vm822, %v5448, 0.0
        %v5450 = vrot.slane %v5449, 4
        %v5451 = vadd.f32 %v5449, %v5450
        %v5452 = vrot.slane %v5451, 2
        %v5453 = vadd.f32 %v5451, %v5452
        %v5454 = vrot.slane %v5453, 1
        %v5455 = vadd.f32 %v5453, %v5454
        %v5456 = vadd.f32 %v4707, %v5455
        %5457 = vst [vmem:[%s336 + $0x15] sm:$0x1] %v5456
        %v5458 = vld [vmem:[#allocation2 + $0x218] sm:$0xff]
        %v5459 = vld [vmem:[#allocation2 + $0x238] sm:$0xff]
        %v5460 = vld [vmem:[#allocation2 + $0x258] sm:$0xff]
        %v5461 = vld [vmem:[#allocation2 + $0x278] sm:$0xff]
        %v5463 = vsel %vm822, %v4876, 0
        %5465 = vmatprep.subr.mxu0 0.0
        %5466 = vmatpush1.msra.mxu0 %v5463
        %5467 = vmatprep.subr.mxu0 0.0
        %5468 = vmatpush1.msra.mxu0 0.0
        %5469 = vmatprep.subr.mxu0 0.0
        %5470 = vmatpush1.msra.mxu0 0.0
        %5471 = vmatprep.subr.mxu0 0.0
        %5472 = vmatpush1.msra.mxu0 0.0
        %5473 = vmatprep.subr.mxu0 0.0
        %5474 = vmatpush1.msra.mxu0 0.0
        %5475 = vmatprep.subr.mxu0 0.0
        %5476 = vmatpush1.msra.mxu0 0.0
        %5477 = vmatprep.subr.mxu0 0.0
        %5478 = vmatpush1.msra.mxu0 0.0
        %5479 = vmatprep.subr.mxu0 0.0
        %5480 = vmatpush1.msra.mxu0 0.0
        %5481 = vmatprep.subr.mxu0 0.0
        %5482 = vmatpush1.msra.mxu0 0.0
        %5483 = vmatprep.subr.mxu0 0.0
        %5484 = vmatpush1.msra.mxu0 0.0
        %5485 = vmatprep.subr.mxu0 0.0
        %5486 = vmatpush1.msra.mxu0 0.0
        %5487 = vmatprep.subr.mxu0 0.0
        %5488 = vmatpush1.msra.mxu0 0.0
        %5489 = vmatprep.subr.mxu0 0.0
        %5490 = vmatpush1.msra.mxu0 0.0
        %5491 = vmatprep.subr.mxu0 0.0
        %5492 = vmatpush1.msra.mxu0 0.0
        %5493 = vmatprep.subr.mxu0 0.0
        %5494 = vmatpush1.msra.mxu0 0.0
        %5495 = vmatprep.subr.mxu0 0.0
        %5496 = vmatpush1.msra.mxu0 0.0
        %5497 = vmatprep.subr.mxu0 0.0
        %5498 = vmatpush1.msra.mxu0 0.0
        %5499 = vmatprep.subr.mxu0 0.0
        %5500 = vmatpush1.msra.mxu0 0.0
        %5501 = vmatprep.subr.mxu0 0.0
        %5502 = vmatpush1.msra.mxu0 0.0
        %5503 = vmatprep.subr.mxu0 0.0
        %5504 = vmatpush1.msra.mxu0 0.0
        %5505 = vmatprep.subr.mxu0 0.0
        %5506 = vmatpush1.msra.mxu0 0.0
        %5507 = vmatprep.subr.mxu0 0.0
        %5508 = vmatpush1.msra.mxu0 0.0
        %5509 = vmatprep.subr.mxu0 0.0
        %5510 = vmatpush1.msra.mxu0 0.0
        %5511 = vmatprep.subr.mxu0 0.0
        %5512 = vmatpush1.msra.mxu0 0.0
        %5513 = vmatprep.subr.mxu0 0.0
        %5514 = vmatpush1.msra.mxu0 0.0
        %5515 = vmatprep.subr.mxu0 0.0
        %5516 = vmatpush1.msra.mxu0 0.0
        %5517 = vmatprep.subr.mxu0 0.0
        %5518 = vmatpush1.msra.mxu0 0.0
        %5519 = vmatprep.subr.mxu0 0.0
        %5520 = vmatpush1.msra.mxu0 0.0
        %5521 = vmatprep.subr.mxu0 0.0
        %5522 = vmatpush1.msra.mxu0 0.0
        %5523 = vmatprep.subr.mxu0 0.0
        %5524 = vmatpush1.msra.mxu0 0.0
        %5525 = vmatprep.subr.mxu0 0.0
        %5526 = vmatpush1.msra.mxu0 0.0
        %5527 = vmatprep.subr.mxu0 0.0
        %5528 = vmatpush1.msra.mxu0 0.0
        %5529 = vmatprep.mubr.f32.mxu0 0.0
        %5530 = vmatmul.mubr.f32.gmra.mrb[0].mxu0 %v2146
        %v5531 = vpop.f32.mrb[0].mxu0
        %v5532 = vadd.f32 0.0, %v5531
        %v5533 = vpop.f32.mrb[0].mxu0
        %5534 = vmatprep.mubr.f32.mxu0 0.0
        %5535 = vmatmul.mubr.f32.gmra.mrb[0].mxu0 %v2149
        %v5536 = vpop.f32.mrb[0].mxu0
        %v5537 = vadd.f32 0.0, %v5536
        %v5538 = vpop.f32.mrb[0].mxu0
        %5539 = vmatprep.mubr.f32.mxu0 0.0
        %5540 = vmatmul.mubr.f32.gmra.mrb[0].mxu0 %v2152
        %v5541 = vpop.f32.mrb[0].mxu0
        %v5542 = vadd.f32 0.0, %v5541
        %v5543 = vpop.f32.mrb[0].mxu0
        %5544 = vmatprep.mubr.f32.mxu0 0.0
        %5545 = vmatmul.mubr.f32.gmra.mrb[0].mxu0 %v2155
        %v5546 = vpop.f32.mrb[0].mxu0
        %v5547 = vadd.f32 0.0, %v5546
        %v5548 = vpop.f32.mrb[0].mxu0
        %5549 = vdwg.mxu0
        %v5550 = vadd.f32 %v5458, %v5532
        %v5551 = vadd.f32 %v5459, %v5537
        %v5552 = vadd.f32 %v5460, %v5542
        %v5553 = vadd.f32 %v5461, %v5547
        %v5554 = vmax.f32 %v5550, 0.0
        %v5555 = vmax.f32 %v5551, 0.0
        %v5556 = vmax.f32 %v5552, 0.0
        %v5557 = vmax.f32 %v5553, 0.0
        %5558 = vmatprep.subr.mxu0 0.0
        %5559 = vmatpush1.msra.mxu0 %v5554
        %5560 = vmatprep.subr.mxu0 0.0
        %5561 = vmatpush1.msra.mxu0 %v5555
        %5562 = vmatprep.subr.mxu0 0.0
        %5563 = vmatpush1.msra.mxu0 %v5556
        %5564 = vmatprep.subr.mxu0 0.0
        %5565 = vmatpush1.msra.mxu0 %v5557
        %5566 = vmatprep.subr.mxu0 0.0
        %5567 = vmatpush1.msra.mxu0 0.0
        %5568 = vmatprep.subr.mxu0 0.0
        %5569 = vmatpush1.msra.mxu0 0.0
        %5570 = vmatprep.subr.mxu0 0.0
        %5571 = vmatpush1.msra.mxu0 0.0
        %5572 = vmatprep.subr.mxu0 0.0
        %5573 = vmatpush1.msra.mxu0 0.0
        %5574 = vmatprep.subr.mxu0 0.0
        %5575 = vmatpush1.msra.mxu0 0.0
        %5576 = vmatprep.subr.mxu0 0.0
        %5577 = vmatpush1.msra.mxu0 0.0
        %5578 = vmatprep.subr.mxu0 0.0
        %5579 = vmatpush1.msra.mxu0 0.0
        %5580 = vmatprep.subr.mxu0 0.0
        %5581 = vmatpush1.msra.mxu0 0.0
        %5582 = vmatprep.subr.mxu0 0.0
        %5583 = vmatpush1.msra.mxu0 0.0
        %5584 = vmatprep.subr.mxu0 0.0
        %5585 = vmatpush1.msra.mxu0 0.0
        %5586 = vmatprep.subr.mxu0 0.0
        %5587 = vmatpush1.msra.mxu0 0.0
        %5588 = vmatprep.subr.mxu0 0.0
        %5589 = vmatpush1.msra.mxu0 0.0
        %5590 = vmatprep.subr.mxu0 0.0
        %5591 = vmatpush1.msra.mxu0 0.0
        %5592 = vmatprep.subr.mxu0 0.0
        %5593 = vmatpush1.msra.mxu0 0.0
        %5594 = vmatprep.subr.mxu0 0.0
        %5595 = vmatpush1.msra.mxu0 0.0
        %5596 = vmatprep.subr.mxu0 0.0
        %5597 = vmatpush1.msra.mxu0 0.0
        %5598 = vmatprep.subr.mxu0 0.0
        %5599 = vmatpush1.msra.mxu0 0.0
        %5600 = vmatprep.subr.mxu0 0.0
        %5601 = vmatpush1.msra.mxu0 0.0
        %5602 = vmatprep.subr.mxu0 0.0
        %5603 = vmatpush1.msra.mxu0 0.0
        %5604 = vmatprep.subr.mxu0 0.0
        %5605 = vmatpush1.msra.mxu0 0.0
        %5606 = vmatprep.subr.mxu0 0.0
        %5607 = vmatpush1.msra.mxu0 0.0
        %5608 = vmatprep.subr.mxu0 0.0
        %5609 = vmatpush1.msra.mxu0 0.0
        %5610 = vmatprep.subr.mxu0 0.0
        %5611 = vmatpush1.msra.mxu0 0.0
        %5612 = vmatprep.subr.mxu0 0.0
        %5613 = vmatpush1.msra.mxu0 0.0
        %5614 = vmatprep.subr.mxu0 0.0
        %5615 = vmatpush1.msra.mxu0 0.0
        %5616 = vmatprep.subr.mxu0 0.0
        %5617 = vmatpush1.msra.mxu0 0.0
        %5618 = vmatprep.subr.mxu0 0.0
        %5619 = vmatpush1.msra.mxu0 0.0
        %5620 = vmatprep.subr.mxu0 0.0
        %5621 = vmatpush1.msra.mxu0 0.0
        %5622 = vmatprep.mubr.f32.mxu0 0.0
        %5623 = vmatmul.mubr.f32.gmra.mrb[0].mxu0 %v2260
        %v5624 = vpop.f32.mrb[0].mxu0
        %v5625 = vadd.f32 %v2256, %v5624
        %v5626 = vpop.f32.mrb[0].mxu0
        %5627 = vdwg.mxu0
        %v5628 = vld [vmem:[%s292 + $0x38] sm:$0xc]
        %v5630 = vrot.slane %v4879, 6
        %v5632 = vsub.f32 %v5628, %v5630
        %v5634 = vrot.slane %v5632, 2
        %v5636 = vmul.f32 %v5625, %v5634
        %v5637 = vsel %vm822, %v5636, 0.0
        %v5638 = vrot.slane %v5637, 4
        %v5639 = vadd.f32 %v5637, %v5638
        %v5640 = vrot.slane %v5639, 2
        %v5641 = vadd.f32 %v5639, %v5640
        %v5642 = vrot.slane %v5641, 1
        %v5643 = vadd.f32 %v5641, %v5642
        %v5644 = vadd.f32 %v4892, %v5643
        %5645 = vst [vmem:[%s336 + $0x1d] sm:$0x1] %v5644
        %v5646 = vld [vmem:[#allocation2 + $0x280] sm:$0xff]
        %v5647 = vld [vmem:[#allocation2 + $0x2a0] sm:$0xff]
        %v5648 = vld [vmem:[#allocation2 + $0x2c0] sm:$0xff]
        %v5649 = vld [vmem:[#allocation2 + $0x2e0] sm:$0xff]
        %v5651 = vsel %vm822, %v5061, 0
        %5653 = vmatprep.subr.mxu0 0.0
        %5654 = vmatpush1.msra.mxu0 %v5651
        %5655 = vmatprep.subr.mxu0 0.0
        %5656 = vmatpush1.msra.mxu0 0.0
        %5657 = vmatprep.subr.mxu0 0.0
        %5658 = vmatpush1.msra.mxu0 0.0
        %5659 = vmatprep.subr.mxu0 0.0
        %5660 = vmatpush1.msra.mxu0 0.0
        %5661 = vmatprep.subr.mxu0 0.0
        %5662 = vmatpush1.msra.mxu0 0.0
        %5663 = vmatprep.subr.mxu0 0.0
        %5664 = vmatpush1.msra.mxu0 0.0
        %5665 = vmatprep.subr.mxu0 0.0
        %5666 = vmatpush1.msra.mxu0 0.0
        %5667 = vmatprep.subr.mxu0 0.0
        %5668 = vmatpush1.msra.mxu0 0.0
        %5669 = vmatprep.subr.mxu0 0.0
        %5670 = vmatpush1.msra.mxu0 0.0
        %5671 = vmatprep.subr.mxu0 0.0
        %5672 = vmatpush1.msra.mxu0 0.0
        %5673 = vmatprep.subr.mxu0 0.0
        %5674 = vmatpush1.msra.mxu0 0.0
        %5675 = vmatprep.subr.mxu0 0.0
        %5676 = vmatpush1.msra.mxu0 0.0
        %5677 = vmatprep.subr.mxu0 0.0
        %5678 = vmatpush1.msra.mxu0 0.0
        %5679 = vmatprep.subr.mxu0 0.0
        %5680 = vmatpush1.msra.mxu0 0.0
        %5681 = vmatprep.subr.mxu0 0.0
        %5682 = vmatpush1.msra.mxu0 0.0
        %5683 = vmatprep.subr.mxu0 0.0
        %5684 = vmatpush1.msra.mxu0 0.0
        %5685 = vmatprep.subr.mxu0 0.0
        %5686 = vmatpush1.msra.mxu0 0.0
        %5687 = vmatprep.subr.mxu0 0.0
        %5688 = vmatpush1.msra.mxu0 0.0
        %5689 = vmatprep.subr.mxu0 0.0
        %5690 = vmatpush1.msra.mxu0 0.0
        %5691 = vmatprep.subr.mxu0 0.0
        %5692 = vmatpush1.msra.mxu0 0.0
        %5693 = vmatprep.subr.mxu0 0.0
        %5694 = vmatpush1.msra.mxu0 0.0
        %5695 = vmatprep.subr.mxu0 0.0
        %5696 = vmatpush1.msra.mxu0 0.0
        %5697 = vmatprep.subr.mxu0 0.0
        %5698 = vmatpush1.msra.mxu0 0.0
        %5699 = vmatprep.subr.mxu0 0.0
        %5700 = vmatpush1.msra.mxu0 0.0
        %5701 = vmatprep.subr.mxu0 0.0
        %5702 = vmatpush1.msra.mxu0 0.0
        %5703 = vmatprep.subr.mxu0 0.0
        %5704 = vmatpush1.msra.mxu0 0.0
        %5705 = vmatprep.subr.mxu0 0.0
        %5706 = vmatpush1.msra.mxu0 0.0
        %5707 = vmatprep.subr.mxu0 0.0
        %5708 = vmatpush1.msra.mxu0 0.0
        %5709 = vmatprep.subr.mxu0 0.0
        %5710 = vmatpush1.msra.mxu0 0.0
        %5711 = vmatprep.subr.mxu0 0.0
        %5712 = vmatpush1.msra.mxu0 0.0
        %5713 = vmatprep.subr.mxu0 0.0
        %5714 = vmatpush1.msra.mxu0 0.0
        %5715 = vmatprep.subr.mxu0 0.0
        %5716 = vmatpush1.msra.mxu0 0.0
        %5717 = vmatprep.mubr.f32.mxu0 0.0
        %5718 = vmatmul.mubr.f32.gmra.mrb[0].mxu0 %v2146
        %v5719 = vpop.f32.mrb[0].mxu0
        %v5720 = vadd.f32 0.0, %v5719
        %v5721 = vpop.f32.mrb[0].mxu0
        %5722 = vmatprep.mubr.f32.mxu0 0.0
        %5723 = vmatmul.mubr.f32.gmra.mrb[0].mxu0 %v2149
        %v5724 = vpop.f32.mrb[0].mxu0
        %v5725 = vadd.f32 0.0, %v5724
        %v5726 = vpop.f32.mrb[0].mxu0
        %5727 = vmatprep.mubr.f32.mxu0 0.0
        %5728 = vmatmul.mubr.f32.gmra.mrb[0].mxu0 %v2152
        %v5729 = vpop.f32.mrb[0].mxu0
        %v5730 = vadd.f32 0.0, %v5729
        %v5731 = vpop.f32.mrb[0].mxu0
        %5732 = vmatprep.mubr.f32.mxu0 0.0
        %5733 = vmatmul.mubr.f32.gmra.mrb[0].mxu0 %v2155
        %v5734 = vpop.f32.mrb[0].mxu0
        %v5735 = vadd.f32 0.0, %v5734
        %v5736 = vpop.f32.mrb[0].mxu0
        %5737 = vdwg.mxu0
        %v5738 = vadd.f32 %v5646, %v5720
        %v5739 = vadd.f32 %v5647, %v5725
        %v5740 = vadd.f32 %v5648, %v5730
        %v5741 = vadd.f32 %v5649, %v5735
        %v5742 = vmax.f32 %v5738, 0.0
        %v5743 = vmax.f32 %v5739, 0.0
        %v5744 = vmax.f32 %v5740, 0.0
        %v5745 = vmax.f32 %v5741, 0.0
        %5746 = vmatprep.subr.mxu0 0.0
        %5747 = vmatpush1.msra.mxu0 %v5742
        %5748 = vmatprep.subr.mxu0 0.0
        %5749 = vmatpush1.msra.mxu0 %v5743
        %5750 = vmatprep.subr.mxu0 0.0
        %5751 = vmatpush1.msra.mxu0 %v5744
        %5752 = vmatprep.subr.mxu0 0.0
        %5753 = vmatpush1.msra.mxu0 %v5745
        %5754 = vmatprep.subr.mxu0 0.0
        %5755 = vmatpush1.msra.mxu0 0.0
        %5756 = vmatprep.subr.mxu0 0.0
        %5757 = vmatpush1.msra.mxu0 0.0
        %5758 = vmatprep.subr.mxu0 0.0
        %5759 = vmatpush1.msra.mxu0 0.0
        %5760 = vmatprep.subr.mxu0 0.0
        %5761 = vmatpush1.msra.mxu0 0.0
        %5762 = vmatprep.subr.mxu0 0.0
        %5763 = vmatpush1.msra.mxu0 0.0
        %5764 = vmatprep.subr.mxu0 0.0
        %5765 = vmatpush1.msra.mxu0 0.0
        %5766 = vmatprep.subr.mxu0 0.0
        %5767 = vmatpush1.msra.mxu0 0.0
        %5768 = vmatprep.subr.mxu0 0.0
        %5769 = vmatpush1.msra.mxu0 0.0
        %5770 = vmatprep.subr.mxu0 0.0
        %5771 = vmatpush1.msra.mxu0 0.0
        %5772 = vmatprep.subr.mxu0 0.0
        %5773 = vmatpush1.msra.mxu0 0.0
        %5774 = vmatprep.subr.mxu0 0.0
        %5775 = vmatpush1.msra.mxu0 0.0
        %5776 = vmatprep.subr.mxu0 0.0
        %5777 = vmatpush1.msra.mxu0 0.0
        %5778 = vmatprep.subr.mxu0 0.0
        %5779 = vmatpush1.msra.mxu0 0.0
        %5780 = vmatprep.subr.mxu0 0.0
        %5781 = vmatpush1.msra.mxu0 0.0
        %5782 = vmatprep.subr.mxu0 0.0
        %5783 = vmatpush1.msra.mxu0 0.0
        %5784 = vmatprep.subr.mxu0 0.0
        %5785 = vmatpush1.msra.mxu0 0.0
        %5786 = vmatprep.subr.mxu0 0.0
        %5787 = vmatpush1.msra.mxu0 0.0
        %5788 = vmatprep.subr.mxu0 0.0
        %5789 = vmatpush1.msra.mxu0 0.0
        %5790 = vmatprep.subr.mxu0 0.0
        %5791 = vmatpush1.msra.mxu0 0.0
        %5792 = vmatprep.subr.mxu0 0.0
        %5793 = vmatpush1.msra.mxu0 0.0
        %5794 = vmatprep.subr.mxu0 0.0
        %5795 = vmatpush1.msra.mxu0 0.0
        %5796 = vmatprep.subr.mxu0 0.0
        %5797 = vmatpush1.msra.mxu0 0.0
        %5798 = vmatprep.subr.mxu0 0.0
        %5799 = vmatpush1.msra.mxu0 0.0
        %5800 = vmatprep.subr.mxu0 0.0
        %5801 = vmatpush1.msra.mxu0 0.0
        %5802 = vmatprep.subr.mxu0 0.0
        %5803 = vmatpush1.msra.mxu0 0.0
        %5804 = vmatprep.subr.mxu0 0.0
        %5805 = vmatpush1.msra.mxu0 0.0
        %5806 = vmatprep.subr.mxu0 0.0
        %5807 = vmatpush1.msra.mxu0 0.0
        %5808 = vmatprep.subr.mxu0 0.0
        %5809 = vmatpush1.msra.mxu0 0.0
        %5810 = vmatprep.mubr.f32.mxu0 0.0
        %5811 = vmatmul.mubr.f32.gmra.mrb[0].mxu0 %v2260
        %v5812 = vpop.f32.mrb[0].mxu0
        %v5813 = vadd.f32 %v2256, %v5812
        %v5814 = vpop.f32.mrb[0].mxu0
        %5815 = vdwg.mxu0
        %v5816 = vld [vmem:[%s292 + $0x20] sm:$0x30]
        %v5818 = vrot.slane %v5064, 6
        %v5820 = vsub.f32 %v5816, %v5818
        %v5822 = vrot.slane %v5820, 4
        %v5824 = vmul.f32 %v5813, %v5822
        %v5825 = vsel %vm822, %v5824, 0.0
        %v5826 = vrot.slane %v5825, 4
        %v5827 = vadd.f32 %v5825, %v5826
        %v5828 = vrot.slane %v5827, 2
        %v5829 = vadd.f32 %v5827, %v5828
        %v5830 = vrot.slane %v5829, 1
        %v5831 = vadd.f32 %v5829, %v5830
        %v5832 = vadd.f32 %v5080, %v5831
        %5833 = vst [vmem:[%s336 + $0x6] sm:$0x1] %v5832
        %v5834 = vld [vmem:[#allocation2 + $0x288] sm:$0xff]
        %v5835 = vld [vmem:[#allocation2 + $0x2a8] sm:$0xff]
        %v5836 = vld [vmem:[#allocation2 + $0x2c8] sm:$0xff]
        %v5837 = vld [vmem:[#allocation2 + $0x2e8] sm:$0xff]
        %v5839 = vsel %vm822, %v5249, 0
        %5841 = vmatprep.subr.mxu0 0.0
        %5842 = vmatpush1.msra.mxu0 %v5839
        %5843 = vmatprep.subr.mxu0 0.0
        %5844 = vmatpush1.msra.mxu0 0.0
        %5845 = vmatprep.subr.mxu0 0.0
        %5846 = vmatpush1.msra.mxu0 0.0
        %5847 = vmatprep.subr.mxu0 0.0
        %5848 = vmatpush1.msra.mxu0 0.0
        %5849 = vmatprep.subr.mxu0 0.0
        %5850 = vmatpush1.msra.mxu0 0.0
        %5851 = vmatprep.subr.mxu0 0.0
        %5852 = vmatpush1.msra.mxu0 0.0
        %5853 = vmatprep.subr.mxu0 0.0
        %5854 = vmatpush1.msra.mxu0 0.0
        %5855 = vmatprep.subr.mxu0 0.0
        %5856 = vmatpush1.msra.mxu0 0.0
        %5857 = vmatprep.subr.mxu0 0.0
        %5858 = vmatpush1.msra.mxu0 0.0
        %5859 = vmatprep.subr.mxu0 0.0
        %5860 = vmatpush1.msra.mxu0 0.0
        %5861 = vmatprep.subr.mxu0 0.0
        %5862 = vmatpush1.msra.mxu0 0.0
        %5863 = vmatprep.subr.mxu0 0.0
        %5864 = vmatpush1.msra.mxu0 0.0
        %5865 = vmatprep.subr.mxu0 0.0
        %5866 = vmatpush1.msra.mxu0 0.0
        %5867 = vmatprep.subr.mxu0 0.0
        %5868 = vmatpush1.msra.mxu0 0.0
        %5869 = vmatprep.subr.mxu0 0.0
        %5870 = vmatpush1.msra.mxu0 0.0
        %5871 = vmatprep.subr.mxu0 0.0
        %5872 = vmatpush1.msra.mxu0 0.0
        %5873 = vmatprep.subr.mxu0 0.0
        %5874 = vmatpush1.msra.mxu0 0.0
        %5875 = vmatprep.subr.mxu0 0.0
        %5876 = vmatpush1.msra.mxu0 0.0
        %5877 = vmatprep.subr.mxu0 0.0
        %5878 = vmatpush1.msra.mxu0 0.0
        %5879 = vmatprep.subr.mxu0 0.0
        %5880 = vmatpush1.msra.mxu0 0.0
        %5881 = vmatprep.subr.mxu0 0.0
        %5882 = vmatpush1.msra.mxu0 0.0
        %5883 = vmatprep.subr.mxu0 0.0
        %5884 = vmatpush1.msra.mxu0 0.0
        %5885 = vmatprep.subr.mxu0 0.0
        %5886 = vmatpush1.msra.mxu0 0.0
        %5887 = vmatprep.subr.mxu0 0.0
        %5888 = vmatpush1.msra.mxu0 0.0
        %5889 = vmatprep.subr.mxu0 0.0
        %5890 = vmatpush1.msra.mxu0 0.0
        %5891 = vmatprep.subr.mxu0 0.0
        %5892 = vmatpush1.msra.mxu0 0.0
        %5893 = vmatprep.subr.mxu0 0.0
        %5894 = vmatpush1.msra.mxu0 0.0
        %5895 = vmatprep.subr.mxu0 0.0
        %5896 = vmatpush1.msra.mxu0 0.0
        %5897 = vmatprep.subr.mxu0 0.0
        %5898 = vmatpush1.msra.mxu0 0.0
        %5899 = vmatprep.subr.mxu0 0.0
        %5900 = vmatpush1.msra.mxu0 0.0
        %5901 = vmatprep.subr.mxu0 0.0
        %5902 = vmatpush1.msra.mxu0 0.0
        %5903 = vmatprep.subr.mxu0 0.0
        %5904 = vmatpush1.msra.mxu0 0.0
        %5905 = vmatprep.mubr.f32.mxu0 0.0
        %5906 = vmatmul.mubr.f32.gmra.mrb[0].mxu0 %v2146
        %v5907 = vpop.f32.mrb[0].mxu0
        %v5908 = vadd.f32 0.0, %v5907
        %v5909 = vpop.f32.mrb[0].mxu0
        %5910 = vmatprep.mubr.f32.mxu0 0.0
        %5911 = vmatmul.mubr.f32.gmra.mrb[0].mxu0 %v2149
        %v5912 = vpop.f32.mrb[0].mxu0
        %v5913 = vadd.f32 0.0, %v5912
        %v5914 = vpop.f32.mrb[0].mxu0
        %5915 = vmatprep.mubr.f32.mxu0 0.0
        %5916 = vmatmul.mubr.f32.gmra.mrb[0].mxu0 %v2152
        %v5917 = vpop.f32.mrb[0].mxu0
        %v5918 = vadd.f32 0.0, %v5917
        %v5919 = vpop.f32.mrb[0].mxu0
        %5920 = vmatprep.mubr.f32.mxu0 0.0
        %5921 = vmatmul.mubr.f32.gmra.mrb[0].mxu0 %v2155
        %v5922 = vpop.f32.mrb[0].mxu0
        %v5923 = vadd.f32 0.0, %v5922
        %v5924 = vpop.f32.mrb[0].mxu0
        %5925 = vdwg.mxu0
        %v5926 = vadd.f32 %v5834, %v5908
        %v5927 = vadd.f32 %v5835, %v5913
        %v5928 = vadd.f32 %v5836, %v5918
        %v5929 = vadd.f32 %v5837, %v5923
        %v5930 = vmax.f32 %v5926, 0.0
        %v5931 = vmax.f32 %v5927, 0.0
        %v5932 = vmax.f32 %v5928, 0.0
        %v5933 = vmax.f32 %v5929, 0.0
        %5934 = vmatprep.subr.mxu0 0.0
        %5935 = vmatpush1.msra.mxu0 %v5930
        %5936 = vmatprep.subr.mxu0 0.0
        %5937 = vmatpush1.msra.mxu0 %v5931
        %5938 = vmatprep.subr.mxu0 0.0
        %5939 = vmatpush1.msra.mxu0 %v5932
        %5940 = vmatprep.subr.mxu0 0.0
        %5941 = vmatpush1.msra.mxu0 %v5933
        %5942 = vmatprep.subr.mxu0 0.0
        %5943 = vmatpush1.msra.mxu0 0.0
        %5944 = vmatprep.subr.mxu0 0.0
        %5945 = vmatpush1.msra.mxu0 0.0
        %5946 = vmatprep.subr.mxu0 0.0
        %5947 = vmatpush1.msra.mxu0 0.0
        %5948 = vmatprep.subr.mxu0 0.0
        %5949 = vmatpush1.msra.mxu0 0.0
        %5950 = vmatprep.subr.mxu0 0.0
        %5951 = vmatpush1.msra.mxu0 0.0
        %5952 = vmatprep.subr.mxu0 0.0
        %5953 = vmatpush1.msra.mxu0 0.0
        %5954 = vmatprep.subr.mxu0 0.0
        %5955 = vmatpush1.msra.mxu0 0.0
        %5956 = vmatprep.subr.mxu0 0.0
        %5957 = vmatpush1.msra.mxu0 0.0
        %5958 = vmatprep.subr.mxu0 0.0
        %5959 = vmatpush1.msra.mxu0 0.0
        %5960 = vmatprep.subr.mxu0 0.0
        %5961 = vmatpush1.msra.mxu0 0.0
        %5962 = vmatprep.subr.mxu0 0.0
        %5963 = vmatpush1.msra.mxu0 0.0
        %5964 = vmatprep.subr.mxu0 0.0
        %5965 = vmatpush1.msra.mxu0 0.0
        %5966 = vmatprep.subr.mxu0 0.0
        %5967 = vmatpush1.msra.mxu0 0.0
        %5968 = vmatprep.subr.mxu0 0.0
        %5969 = vmatpush1.msra.mxu0 0.0
        %5970 = vmatprep.subr.mxu0 0.0
        %5971 = vmatpush1.msra.mxu0 0.0
        %5972 = vmatprep.subr.mxu0 0.0
        %5973 = vmatpush1.msra.mxu0 0.0
        %5974 = vmatprep.subr.mxu0 0.0
        %5975 = vmatpush1.msra.mxu0 0.0
        %5976 = vmatprep.subr.mxu0 0.0
        %5977 = vmatpush1.msra.mxu0 0.0
        %5978 = vmatprep.subr.mxu0 0.0
        %5979 = vmatpush1.msra.mxu0 0.0
        %5980 = vmatprep.subr.mxu0 0.0
        %5981 = vmatpush1.msra.mxu0 0.0
        %5982 = vmatprep.subr.mxu0 0.0
        %5983 = vmatpush1.msra.mxu0 0.0
        %5984 = vmatprep.subr.mxu0 0.0
        %5985 = vmatpush1.msra.mxu0 0.0
        %5986 = vmatprep.subr.mxu0 0.0
        %5987 = vmatpush1.msra.mxu0 0.0
        %5988 = vmatprep.subr.mxu0 0.0
        %5989 = vmatpush1.msra.mxu0 0.0
        %5990 = vmatprep.subr.mxu0 0.0
        %5991 = vmatpush1.msra.mxu0 0.0
        %5992 = vmatprep.subr.mxu0 0.0
        %5993 = vmatpush1.msra.mxu0 0.0
        %5994 = vmatprep.subr.mxu0 0.0
        %5995 = vmatpush1.msra.mxu0 0.0
        %5996 = vmatprep.subr.mxu0 0.0
        %5997 = vmatpush1.msra.mxu0 0.0
        %5998 = vmatprep.mubr.f32.mxu0 0.0
        %5999 = vmatmul.mubr.f32.gmra.mrb[0].mxu0 %v2260
        %v6000 = vpop.f32.mrb[0].mxu0
        %v6001 = vadd.f32 %v2256, %v6000
        %v6002 = vpop.f32.mrb[0].mxu0
        %6003 = vdwg.mxu0
        %v6004 = vld [vmem:[%s292 + $0x28] sm:$0x30]
        %v6006 = vrot.slane %v5252, 6
        %v6008 = vsub.f32 %v6004, %v6006
        %v6010 = vrot.slane %v6008, 4
        %v6012 = vmul.f32 %v6001, %v6010
        %v6013 = vsel %vm822, %v6012, 0.0
        %v6014 = vrot.slane %v6013, 4
        %v6015 = vadd.f32 %v6013, %v6014
        %v6016 = vrot.slane %v6015, 2
        %v6017 = vadd.f32 %v6015, %v6016
        %v6018 = vrot.slane %v6017, 1
        %v6019 = vadd.f32 %v6017, %v6018
        %v6020 = vadd.f32 %v5268, %v6019
        %6021 = vst [vmem:[%s336 + $0xe] sm:$0x1] %v6020
        %v6022 = vld [vmem:[#allocation2 + $0x290] sm:$0xff]
        %v6023 = vld [vmem:[#allocation2 + $0x2b0] sm:$0xff]
        %v6024 = vld [vmem:[#allocation2 + $0x2d0] sm:$0xff]
        %v6025 = vld [vmem:[#allocation2 + $0x2f0] sm:$0xff]
        %v6027 = vsel %vm822, %v5437, 0
        %6029 = vmatprep.subr.mxu0 0.0
        %6030 = vmatpush1.msra.mxu0 %v6027
        %6031 = vmatprep.subr.mxu0 0.0
        %6032 = vmatpush1.msra.mxu0 0.0
        %6033 = vmatprep.subr.mxu0 0.0
        %6034 = vmatpush1.msra.mxu0 0.0
        %6035 = vmatprep.subr.mxu0 0.0
        %6036 = vmatpush1.msra.mxu0 0.0
        %6037 = vmatprep.subr.mxu0 0.0
        %6038 = vmatpush1.msra.mxu0 0.0
        %6039 = vmatprep.subr.mxu0 0.0
        %6040 = vmatpush1.msra.mxu0 0.0
        %6041 = vmatprep.subr.mxu0 0.0
        %6042 = vmatpush1.msra.mxu0 0.0
        %6043 = vmatprep.subr.mxu0 0.0
        %6044 = vmatpush1.msra.mxu0 0.0
        %6045 = vmatprep.subr.mxu0 0.0
        %6046 = vmatpush1.msra.mxu0 0.0
        %6047 = vmatprep.subr.mxu0 0.0
        %6048 = vmatpush1.msra.mxu0 0.0
        %6049 = vmatprep.subr.mxu0 0.0
        %6050 = vmatpush1.msra.mxu0 0.0
        %6051 = vmatprep.subr.mxu0 0.0
        %6052 = vmatpush1.msra.mxu0 0.0
        %6053 = vmatprep.subr.mxu0 0.0
        %6054 = vmatpush1.msra.mxu0 0.0
        %6055 = vmatprep.subr.mxu0 0.0
        %6056 = vmatpush1.msra.mxu0 0.0
        %6057 = vmatprep.subr.mxu0 0.0
        %6058 = vmatpush1.msra.mxu0 0.0
        %6059 = vmatprep.subr.mxu0 0.0
        %6060 = vmatpush1.msra.mxu0 0.0
        %6061 = vmatprep.subr.mxu0 0.0
        %6062 = vmatpush1.msra.mxu0 0.0
        %6063 = vmatprep.subr.mxu0 0.0
        %6064 = vmatpush1.msra.mxu0 0.0
        %6065 = vmatprep.subr.mxu0 0.0
        %6066 = vmatpush1.msra.mxu0 0.0
        %6067 = vmatprep.subr.mxu0 0.0
        %6068 = vmatpush1.msra.mxu0 0.0
        %6069 = vmatprep.subr.mxu0 0.0
        %6070 = vmatpush1.msra.mxu0 0.0
        %6071 = vmatprep.subr.mxu0 0.0
        %6072 = vmatpush1.msra.mxu0 0.0
        %6073 = vmatprep.subr.mxu0 0.0
        %6074 = vmatpush1.msra.mxu0 0.0
        %6075 = vmatprep.subr.mxu0 0.0
        %6076 = vmatpush1.msra.mxu0 0.0
        %6077 = vmatprep.subr.mxu0 0.0
        %6078 = vmatpush1.msra.mxu0 0.0
        %6079 = vmatprep.subr.mxu0 0.0
        %6080 = vmatpush1.msra.mxu0 0.0
        %6081 = vmatprep.subr.mxu0 0.0
        %6082 = vmatpush1.msra.mxu0 0.0
        %6083 = vmatprep.subr.mxu0 0.0
        %6084 = vmatpush1.msra.mxu0 0.0
        %6085 = vmatprep.subr.mxu0 0.0
        %6086 = vmatpush1.msra.mxu0 0.0
        %6087 = vmatprep.subr.mxu0 0.0
        %6088 = vmatpush1.msra.mxu0 0.0
        %6089 = vmatprep.subr.mxu0 0.0
        %6090 = vmatpush1.msra.mxu0 0.0
        %6091 = vmatprep.subr.mxu0 0.0
        %6092 = vmatpush1.msra.mxu0 0.0
        %6093 = vmatprep.mubr.f32.mxu0 0.0
        %6094 = vmatmul.mubr.f32.gmra.mrb[0].mxu0 %v2146
        %v6095 = vpop.f32.mrb[0].mxu0
        %v6096 = vadd.f32 0.0, %v6095
        %v6097 = vpop.f32.mrb[0].mxu0
        %6098 = vmatprep.mubr.f32.mxu0 0.0
        %6099 = vmatmul.mubr.f32.gmra.mrb[0].mxu0 %v2149
        %v6100 = vpop.f32.mrb[0].mxu0
        %v6101 = vadd.f32 0.0, %v6100
        %v6102 = vpop.f32.mrb[0].mxu0
        %6103 = vmatprep.mubr.f32.mxu0 0.0
        %6104 = vmatmul.mubr.f32.gmra.mrb[0].mxu0 %v2152
        %v6105 = vpop.f32.mrb[0].mxu0
        %v6106 = vadd.f32 0.0, %v6105
        %v6107 = vpop.f32.mrb[0].mxu0
        %6108 = vmatprep.mubr.f32.mxu0 0.0
        %6109 = vmatmul.mubr.f32.gmra.mrb[0].mxu0 %v2155
        %v6110 = vpop.f32.mrb[0].mxu0
        %v6111 = vadd.f32 0.0, %v6110
        %v6112 = vpop.f32.mrb[0].mxu0
        %6113 = vdwg.mxu0
        %v6114 = vadd.f32 %v6022, %v6096
        %v6115 = vadd.f32 %v6023, %v6101
        %v6116 = vadd.f32 %v6024, %v6106
        %v6117 = vadd.f32 %v6025, %v6111
        %v6118 = vmax.f32 %v6114, 0.0
        %v6119 = vmax.f32 %v6115, 0.0
        %v6120 = vmax.f32 %v6116, 0.0
        %v6121 = vmax.f32 %v6117, 0.0
        %6122 = vmatprep.subr.mxu0 0.0
        %6123 = vmatpush1.msra.mxu0 %v6118
        %6124 = vmatprep.subr.mxu0 0.0
        %6125 = vmatpush1.msra.mxu0 %v6119
        %6126 = vmatprep.subr.mxu0 0.0
        %6127 = vmatpush1.msra.mxu0 %v6120
        %6128 = vmatprep.subr.mxu0 0.0
        %6129 = vmatpush1.msra.mxu0 %v6121
        %6130 = vmatprep.subr.mxu0 0.0
        %6131 = vmatpush1.msra.mxu0 0.0
        %6132 = vmatprep.subr.mxu0 0.0
        %6133 = vmatpush1.msra.mxu0 0.0
        %6134 = vmatprep.subr.mxu0 0.0
        %6135 = vmatpush1.msra.mxu0 0.0
        %6136 = vmatprep.subr.mxu0 0.0
        %6137 = vmatpush1.msra.mxu0 0.0
        %6138 = vmatprep.subr.mxu0 0.0
        %6139 = vmatpush1.msra.mxu0 0.0
        %6140 = vmatprep.subr.mxu0 0.0
        %6141 = vmatpush1.msra.mxu0 0.0
        %6142 = vmatprep.subr.mxu0 0.0
        %6143 = vmatpush1.msra.mxu0 0.0
        %6144 = vmatprep.subr.mxu0 0.0
        %6145 = vmatpush1.msra.mxu0 0.0
        %6146 = vmatprep.subr.mxu0 0.0
        %6147 = vmatpush1.msra.mxu0 0.0
        %6148 = vmatprep.subr.mxu0 0.0
        %6149 = vmatpush1.msra.mxu0 0.0
        %6150 = vmatprep.subr.mxu0 0.0
        %6151 = vmatpush1.msra.mxu0 0.0
        %6152 = vmatprep.subr.mxu0 0.0
        %6153 = vmatpush1.msra.mxu0 0.0
        %6154 = vmatprep.subr.mxu0 0.0
        %6155 = vmatpush1.msra.mxu0 0.0
        %6156 = vmatprep.subr.mxu0 0.0
        %6157 = vmatpush1.msra.mxu0 0.0
        %6158 = vmatprep.subr.mxu0 0.0
        %6159 = vmatpush1.msra.mxu0 0.0
        %6160 = vmatprep.subr.mxu0 0.0
        %6161 = vmatpush1.msra.mxu0 0.0
        %6162 = vmatprep.subr.mxu0 0.0
        %6163 = vmatpush1.msra.mxu0 0.0
        %6164 = vmatprep.subr.mxu0 0.0
        %6165 = vmatpush1.msra.mxu0 0.0
        %6166 = vmatprep.subr.mxu0 0.0
        %6167 = vmatpush1.msra.mxu0 0.0
        %6168 = vmatprep.subr.mxu0 0.0
        %6169 = vmatpush1.msra.mxu0 0.0
        %6170 = vmatprep.subr.mxu0 0.0
        %6171 = vmatpush1.msra.mxu0 0.0
        %6172 = vmatprep.subr.mxu0 0.0
        %6173 = vmatpush1.msra.mxu0 0.0
        %6174 = vmatprep.subr.mxu0 0.0
        %6175 = vmatpush1.msra.mxu0 0.0
        %6176 = vmatprep.subr.mxu0 0.0
        %6177 = vmatpush1.msra.mxu0 0.0
        %6178 = vmatprep.subr.mxu0 0.0
        %6179 = vmatpush1.msra.mxu0 0.0
        %6180 = vmatprep.subr.mxu0 0.0
        %6181 = vmatpush1.msra.mxu0 0.0
        %6182 = vmatprep.subr.mxu0 0.0
        %6183 = vmatpush1.msra.mxu0 0.0
        %6184 = vmatprep.subr.mxu0 0.0
        %6185 = vmatpush1.msra.mxu0 0.0
        %6186 = vmatprep.mubr.f32.mxu0 0.0
        %6187 = vmatmul.mubr.f32.gmra.mrb[0].mxu0 %v2260
        %v6188 = vpop.f32.mrb[0].mxu0
        %v6189 = vadd.f32 %v2256, %v6188
        %v6190 = vpop.f32.mrb[0].mxu0
        %6191 = vdwg.mxu0
        %v6192 = vld [vmem:[%s292 + $0x30] sm:$0x30]
        %v6194 = vrot.slane %v5440, 6
        %v6196 = vsub.f32 %v6192, %v6194
        %v6198 = vrot.slane %v6196, 4
        %v6200 = vmul.f32 %v6189, %v6198
        %v6201 = vsel %vm822, %v6200, 0.0
        %v6202 = vrot.slane %v6201, 4
        %v6203 = vadd.f32 %v6201, %v6202
        %v6204 = vrot.slane %v6203, 2
        %v6205 = vadd.f32 %v6203, %v6204
        %v6206 = vrot.slane %v6205, 1
        %v6207 = vadd.f32 %v6205, %v6206
        %v6208 = vadd.f32 %v5456, %v6207
        %6209 = vst [vmem:[%s336 + $0x16] sm:$0x1] %v6208
        %v6210 = vld [vmem:[#allocation2 + $0x298] sm:$0xff]
        %v6211 = vld [vmem:[#allocation2 + $0x2b8] sm:$0xff]
        %v6212 = vld [vmem:[#allocation2 + $0x2d8] sm:$0xff]
        %v6213 = vld [vmem:[#allocation2 + $0x2f8] sm:$0xff]
        %v6215 = vsel %vm822, %v5625, 0
        %6217 = vmatprep.subr.mxu0 0.0
        %6218 = vmatpush1.msra.mxu0 %v6215
        %6219 = vmatprep.subr.mxu0 0.0
        %6220 = vmatpush1.msra.mxu0 0.0
        %6221 = vmatprep.subr.mxu0 0.0
        %6222 = vmatpush1.msra.mxu0 0.0
        %6223 = vmatprep.subr.mxu0 0.0
        %6224 = vmatpush1.msra.mxu0 0.0
        %6225 = vmatprep.subr.mxu0 0.0
        %6226 = vmatpush1.msra.mxu0 0.0
        %6227 = vmatprep.subr.mxu0 0.0
        %6228 = vmatpush1.msra.mxu0 0.0
        %6229 = vmatprep.subr.mxu0 0.0
        %6230 = vmatpush1.msra.mxu0 0.0
        %6231 = vmatprep.subr.mxu0 0.0
        %6232 = vmatpush1.msra.mxu0 0.0
        %6233 = vmatprep.subr.mxu0 0.0
        %6234 = vmatpush1.msra.mxu0 0.0
        %6235 = vmatprep.subr.mxu0 0.0
        %6236 = vmatpush1.msra.mxu0 0.0
        %6237 = vmatprep.subr.mxu0 0.0
        %6238 = vmatpush1.msra.mxu0 0.0
        %6239 = vmatprep.subr.mxu0 0.0
        %6240 = vmatpush1.msra.mxu0 0.0
        %6241 = vmatprep.subr.mxu0 0.0
        %6242 = vmatpush1.msra.mxu0 0.0
        %6243 = vmatprep.subr.mxu0 0.0
        %6244 = vmatpush1.msra.mxu0 0.0
        %6245 = vmatprep.subr.mxu0 0.0
        %6246 = vmatpush1.msra.mxu0 0.0
        %6247 = vmatprep.subr.mxu0 0.0
        %6248 = vmatpush1.msra.mxu0 0.0
        %6249 = vmatprep.subr.mxu0 0.0
        %6250 = vmatpush1.msra.mxu0 0.0
        %6251 = vmatprep.subr.mxu0 0.0
        %6252 = vmatpush1.msra.mxu0 0.0
        %6253 = vmatprep.subr.mxu0 0.0
        %6254 = vmatpush1.msra.mxu0 0.0
        %6255 = vmatprep.subr.mxu0 0.0
        %6256 = vmatpush1.msra.mxu0 0.0
        %6257 = vmatprep.subr.mxu0 0.0
        %6258 = vmatpush1.msra.mxu0 0.0
        %6259 = vmatprep.subr.mxu0 0.0
        %6260 = vmatpush1.msra.mxu0 0.0
        %6261 = vmatprep.subr.mxu0 0.0
        %6262 = vmatpush1.msra.mxu0 0.0
        %6263 = vmatprep.subr.mxu0 0.0
        %6264 = vmatpush1.msra.mxu0 0.0
        %6265 = vmatprep.subr.mxu0 0.0
        %6266 = vmatpush1.msra.mxu0 0.0
        %6267 = vmatprep.subr.mxu0 0.0
        %6268 = vmatpush1.msra.mxu0 0.0
        %6269 = vmatprep.subr.mxu0 0.0
        %6270 = vmatpush1.msra.mxu0 0.0
        %6271 = vmatprep.subr.mxu0 0.0
        %6272 = vmatpush1.msra.mxu0 0.0
        %6273 = vmatprep.subr.mxu0 0.0
        %6274 = vmatpush1.msra.mxu0 0.0
        %6275 = vmatprep.subr.mxu0 0.0
        %6276 = vmatpush1.msra.mxu0 0.0
        %6277 = vmatprep.subr.mxu0 0.0
        %6278 = vmatpush1.msra.mxu0 0.0
        %6279 = vmatprep.subr.mxu0 0.0
        %6280 = vmatpush1.msra.mxu0 0.0
        %6281 = vmatprep.mubr.f32.mxu0 0.0
        %6282 = vmatmul.mubr.f32.gmra.mrb[0].mxu0 %v2146
        %v6283 = vpop.f32.mrb[0].mxu0
        %v6284 = vadd.f32 0.0, %v6283
        %v6285 = vpop.f32.mrb[0].mxu0
        %6286 = vmatprep.mubr.f32.mxu0 0.0
        %6287 = vmatmul.mubr.f32.gmra.mrb[0].mxu0 %v2149
        %v6288 = vpop.f32.mrb[0].mxu0
        %v6289 = vadd.f32 0.0, %v6288
        %v6290 = vpop.f32.mrb[0].mxu0
        %6291 = vmatprep.mubr.f32.mxu0 0.0
        %6292 = vmatmul.mubr.f32.gmra.mrb[0].mxu0 %v2152
        %v6293 = vpop.f32.mrb[0].mxu0
        %v6294 = vadd.f32 0.0, %v6293
        %v6295 = vpop.f32.mrb[0].mxu0
        %6296 = vmatprep.mubr.f32.mxu0 0.0
        %6297 = vmatmul.mubr.f32.gmra.mrb[0].mxu0 %v2155
        %v6298 = vpop.f32.mrb[0].mxu0
        %v6299 = vadd.f32 0.0, %v6298
        %v6300 = vpop.f32.mrb[0].mxu0
        %6301 = vdwg.mxu0
        %v6302 = vadd.f32 %v6210, %v6284
        %v6303 = vadd.f32 %v6211, %v6289
        %v6304 = vadd.f32 %v6212, %v6294
        %v6305 = vadd.f32 %v6213, %v6299
        %v6306 = vmax.f32 %v6302, 0.0
        %v6307 = vmax.f32 %v6303, 0.0
        %v6308 = vmax.f32 %v6304, 0.0
        %v6309 = vmax.f32 %v6305, 0.0
        %6310 = vmatprep.subr.mxu0 0.0
        %6311 = vmatpush1.msra.mxu0 %v6306
        %6312 = vmatprep.subr.mxu0 0.0
        %6313 = vmatpush1.msra.mxu0 %v6307
        %6314 = vmatprep.subr.mxu0 0.0
        %6315 = vmatpush1.msra.mxu0 %v6308
        %6316 = vmatprep.subr.mxu0 0.0
        %6317 = vmatpush1.msra.mxu0 %v6309
        %6318 = vmatprep.subr.mxu0 0.0
        %6319 = vmatpush1.msra.mxu0 0.0
        %6320 = vmatprep.subr.mxu0 0.0
        %6321 = vmatpush1.msra.mxu0 0.0
        %6322 = vmatprep.subr.mxu0 0.0
        %6323 = vmatpush1.msra.mxu0 0.0
        %6324 = vmatprep.subr.mxu0 0.0
        %6325 = vmatpush1.msra.mxu0 0.0
        %6326 = vmatprep.subr.mxu0 0.0
        %6327 = vmatpush1.msra.mxu0 0.0
        %6328 = vmatprep.subr.mxu0 0.0
        %6329 = vmatpush1.msra.mxu0 0.0
        %6330 = vmatprep.subr.mxu0 0.0
        %6331 = vmatpush1.msra.mxu0 0.0
        %6332 = vmatprep.subr.mxu0 0.0
        %6333 = vmatpush1.msra.mxu0 0.0
        %6334 = vmatprep.subr.mxu0 0.0
        %6335 = vmatpush1.msra.mxu0 0.0
        %6336 = vmatprep.subr.mxu0 0.0
        %6337 = vmatpush1.msra.mxu0 0.0
        %6338 = vmatprep.subr.mxu0 0.0
        %6339 = vmatpush1.msra.mxu0 0.0
        %6340 = vmatprep.subr.mxu0 0.0
        %6341 = vmatpush1.msra.mxu0 0.0
        %6342 = vmatprep.subr.mxu0 0.0
        %6343 = vmatpush1.msra.mxu0 0.0
        %6344 = vmatprep.subr.mxu0 0.0
        %6345 = vmatpush1.msra.mxu0 0.0
        %6346 = vmatprep.subr.mxu0 0.0
        %6347 = vmatpush1.msra.mxu0 0.0
        %6348 = vmatprep.subr.mxu0 0.0
        %6349 = vmatpush1.msra.mxu0 0.0
        %6350 = vmatprep.subr.mxu0 0.0
        %6351 = vmatpush1.msra.mxu0 0.0
        %6352 = vmatprep.subr.mxu0 0.0
        %6353 = vmatpush1.msra.mxu0 0.0
        %6354 = vmatprep.subr.mxu0 0.0
        %6355 = vmatpush1.msra.mxu0 0.0
        %6356 = vmatprep.subr.mxu0 0.0
        %6357 = vmatpush1.msra.mxu0 0.0
        %6358 = vmatprep.subr.mxu0 0.0
        %6359 = vmatpush1.msra.mxu0 0.0
        %6360 = vmatprep.subr.mxu0 0.0
        %6361 = vmatpush1.msra.mxu0 0.0
        %6362 = vmatprep.subr.mxu0 0.0
        %6363 = vmatpush1.msra.mxu0 0.0
        %6364 = vmatprep.subr.mxu0 0.0
        %6365 = vmatpush1.msra.mxu0 0.0
        %6366 = vmatprep.subr.mxu0 0.0
        %6367 = vmatpush1.msra.mxu0 0.0
        %6368 = vmatprep.subr.mxu0 0.0
        %6369 = vmatpush1.msra.mxu0 0.0
        %6370 = vmatprep.subr.mxu0 0.0
        %6371 = vmatpush1.msra.mxu0 0.0
        %6372 = vmatprep.subr.mxu0 0.0
        %6373 = vmatpush1.msra.mxu0 0.0
        %6374 = vmatprep.mubr.f32.mxu0 0.0
        %6375 = vmatmul.mubr.f32.gmra.mrb[0].mxu0 %v2260
        %v6376 = vpop.f32.mrb[0].mxu0
        %v6377 = vadd.f32 %v2256, %v6376
        %v6378 = vpop.f32.mrb[0].mxu0
        %6379 = vdwg.mxu0
        %v6380 = vld [vmem:[%s292 + $0x38] sm:$0x30]
        %v6382 = vrot.slane %v5628, 6
        %v6384 = vsub.f32 %v6380, %v6382
        %v6386 = vrot.slane %v6384, 4
        %v6388 = vmul.f32 %v6377, %v6386
        %v6389 = vsel %vm822, %v6388, 0.0
        %v6390 = vrot.slane %v6389, 4
        %v6391 = vadd.f32 %v6389, %v6390
        %v6392 = vrot.slane %v6391, 2
        %v6393 = vadd.f32 %v6391, %v6392
        %v6394 = vrot.slane %v6393, 1
        %v6395 = vadd.f32 %v6393, %v6394
        %v6396 = vadd.f32 %v5644, %v6395
        %6397 = vst [vmem:[%s336 + $0x1e] sm:$0x1] %v6396
        %v6398 = vld [vmem:[#allocation2 + $0x300] sm:$0xff]
        %v6399 = vld [vmem:[#allocation2 + $0x320] sm:$0xff]
        %v6400 = vld [vmem:[#allocation2 + $0x340] sm:$0xff]
        %v6401 = vld [vmem:[#allocation2 + $0x360] sm:$0xff]
        %v6403 = vsel %vm822, %v5813, 0
        %6405 = vmatprep.subr.mxu0 0.0
        %6406 = vmatpush1.msra.mxu0 %v6403
        %6407 = vmatprep.subr.mxu0 0.0
        %6408 = vmatpush1.msra.mxu0 0.0
        %6409 = vmatprep.subr.mxu0 0.0
        %6410 = vmatpush1.msra.mxu0 0.0
        %6411 = vmatprep.subr.mxu0 0.0
        %6412 = vmatpush1.msra.mxu0 0.0
        %6413 = vmatprep.subr.mxu0 0.0
        %6414 = vmatpush1.msra.mxu0 0.0
        %6415 = vmatprep.subr.mxu0 0.0
        %6416 = vmatpush1.msra.mxu0 0.0
        %6417 = vmatprep.subr.mxu0 0.0
        %6418 = vmatpush1.msra.mxu0 0.0
        %6419 = vmatprep.subr.mxu0 0.0
        %6420 = vmatpush1.msra.mxu0 0.0
        %6421 = vmatprep.subr.mxu0 0.0
        %6422 = vmatpush1.msra.mxu0 0.0
        %6423 = vmatprep.subr.mxu0 0.0
        %6424 = vmatpush1.msra.mxu0 0.0
        %6425 = vmatprep.subr.mxu0 0.0
        %6426 = vmatpush1.msra.mxu0 0.0
        %6427 = vmatprep.subr.mxu0 0.0
        %6428 = vmatpush1.msra.mxu0 0.0
        %6429 = vmatprep.subr.mxu0 0.0
        %6430 = vmatpush1.msra.mxu0 0.0
        %6431 = vmatprep.subr.mxu0 0.0
        %6432 = vmatpush1.msra.mxu0 0.0
        %6433 = vmatprep.subr.mxu0 0.0
        %6434 = vmatpush1.msra.mxu0 0.0
        %6435 = vmatprep.subr.mxu0 0.0
        %6436 = vmatpush1.msra.mxu0 0.0
        %6437 = vmatprep.subr.mxu0 0.0
        %6438 = vmatpush1.msra.mxu0 0.0
        %6439 = vmatprep.subr.mxu0 0.0
        %6440 = vmatpush1.msra.mxu0 0.0
        %6441 = vmatprep.subr.mxu0 0.0
        %6442 = vmatpush1.msra.mxu0 0.0
        %6443 = vmatprep.subr.mxu0 0.0
        %6444 = vmatpush1.msra.mxu0 0.0
        %6445 = vmatprep.subr.mxu0 0.0
        %6446 = vmatpush1.msra.mxu0 0.0
        %6447 = vmatprep.subr.mxu0 0.0
        %6448 = vmatpush1.msra.mxu0 0.0
        %6449 = vmatprep.subr.mxu0 0.0
        %6450 = vmatpush1.msra.mxu0 0.0
        %6451 = vmatprep.subr.mxu0 0.0
        %6452 = vmatpush1.msra.mxu0 0.0
        %6453 = vmatprep.subr.mxu0 0.0
        %6454 = vmatpush1.msra.mxu0 0.0
        %6455 = vmatprep.subr.mxu0 0.0
        %6456 = vmatpush1.msra.mxu0 0.0
        %6457 = vmatprep.subr.mxu0 0.0
        %6458 = vmatpush1.msra.mxu0 0.0
        %6459 = vmatprep.subr.mxu0 0.0
        %6460 = vmatpush1.msra.mxu0 0.0
        %6461 = vmatprep.subr.mxu0 0.0
        %6462 = vmatpush1.msra.mxu0 0.0
        %6463 = vmatprep.subr.mxu0 0.0
        %6464 = vmatpush1.msra.mxu0 0.0
        %6465 = vmatprep.subr.mxu0 0.0
        %6466 = vmatpush1.msra.mxu0 0.0
        %6467 = vmatprep.subr.mxu0 0.0
        %6468 = vmatpush1.msra.mxu0 0.0
        %6469 = vmatprep.mubr.f32.mxu0 0.0
        %6470 = vmatmul.mubr.f32.gmra.mrb[0].mxu0 %v2146
        %v6471 = vpop.f32.mrb[0].mxu0
        %v6472 = vadd.f32 0.0, %v6471
        %v6473 = vpop.f32.mrb[0].mxu0
        %6474 = vmatprep.mubr.f32.mxu0 0.0
        %6475 = vmatmul.mubr.f32.gmra.mrb[0].mxu0 %v2149
        %v6476 = vpop.f32.mrb[0].mxu0
        %v6477 = vadd.f32 0.0, %v6476
        %v6478 = vpop.f32.mrb[0].mxu0
        %6479 = vmatprep.mubr.f32.mxu0 0.0
        %6480 = vmatmul.mubr.f32.gmra.mrb[0].mxu0 %v2152
        %v6481 = vpop.f32.mrb[0].mxu0
        %v6482 = vadd.f32 0.0, %v6481
        %v6483 = vpop.f32.mrb[0].mxu0
        %6484 = vmatprep.mubr.f32.mxu0 0.0
        %6485 = vmatmul.mubr.f32.gmra.mrb[0].mxu0 %v2155
        %v6486 = vpop.f32.mrb[0].mxu0
        %v6487 = vadd.f32 0.0, %v6486
        %v6488 = vpop.f32.mrb[0].mxu0
        %6489 = vdwg.mxu0
        %v6490 = vadd.f32 %v6398, %v6472
        %v6491 = vadd.f32 %v6399, %v6477
        %v6492 = vadd.f32 %v6400, %v6482
        %v6493 = vadd.f32 %v6401, %v6487
        %v6494 = vmax.f32 %v6490, 0.0
        %v6495 = vmax.f32 %v6491, 0.0
        %v6496 = vmax.f32 %v6492, 0.0
        %v6497 = vmax.f32 %v6493, 0.0
        %6498 = vmatprep.subr.mxu0 0.0
        %6499 = vmatpush1.msra.mxu0 %v6494
        %6500 = vmatprep.subr.mxu0 0.0
        %6501 = vmatpush1.msra.mxu0 %v6495
        %6502 = vmatprep.subr.mxu0 0.0
        %6503 = vmatpush1.msra.mxu0 %v6496
        %6504 = vmatprep.subr.mxu0 0.0
        %6505 = vmatpush1.msra.mxu0 %v6497
        %6506 = vmatprep.subr.mxu0 0.0
        %6507 = vmatpush1.msra.mxu0 0.0
        %6508 = vmatprep.subr.mxu0 0.0
        %6509 = vmatpush1.msra.mxu0 0.0
        %6510 = vmatprep.subr.mxu0 0.0
        %6511 = vmatpush1.msra.mxu0 0.0
        %6512 = vmatprep.subr.mxu0 0.0
        %6513 = vmatpush1.msra.mxu0 0.0
        %6514 = vmatprep.subr.mxu0 0.0
        %6515 = vmatpush1.msra.mxu0 0.0
        %6516 = vmatprep.subr.mxu0 0.0
        %6517 = vmatpush1.msra.mxu0 0.0
        %6518 = vmatprep.subr.mxu0 0.0
        %6519 = vmatpush1.msra.mxu0 0.0
        %6520 = vmatprep.subr.mxu0 0.0
        %6521 = vmatpush1.msra.mxu0 0.0
        %6522 = vmatprep.subr.mxu0 0.0
        %6523 = vmatpush1.msra.mxu0 0.0
        %6524 = vmatprep.subr.mxu0 0.0
        %6525 = vmatpush1.msra.mxu0 0.0
        %6526 = vmatprep.subr.mxu0 0.0
        %6527 = vmatpush1.msra.mxu0 0.0
        %6528 = vmatprep.subr.mxu0 0.0
        %6529 = vmatpush1.msra.mxu0 0.0
        %6530 = vmatprep.subr.mxu0 0.0
        %6531 = vmatpush1.msra.mxu0 0.0
        %6532 = vmatprep.subr.mxu0 0.0
        %6533 = vmatpush1.msra.mxu0 0.0
        %6534 = vmatprep.subr.mxu0 0.0
        %6535 = vmatpush1.msra.mxu0 0.0
        %6536 = vmatprep.subr.mxu0 0.0
        %6537 = vmatpush1.msra.mxu0 0.0
        %6538 = vmatprep.subr.mxu0 0.0
        %6539 = vmatpush1.msra.mxu0 0.0
        %6540 = vmatprep.subr.mxu0 0.0
        %6541 = vmatpush1.msra.mxu0 0.0
        %6542 = vmatprep.subr.mxu0 0.0
        %6543 = vmatpush1.msra.mxu0 0.0
        %6544 = vmatprep.subr.mxu0 0.0
        %6545 = vmatpush1.msra.mxu0 0.0
        %6546 = vmatprep.subr.mxu0 0.0
        %6547 = vmatpush1.msra.mxu0 0.0
        %6548 = vmatprep.subr.mxu0 0.0
        %6549 = vmatpush1.msra.mxu0 0.0
        %6550 = vmatprep.subr.mxu0 0.0
        %6551 = vmatpush1.msra.mxu0 0.0
        %6552 = vmatprep.subr.mxu0 0.0
        %6553 = vmatpush1.msra.mxu0 0.0
        %6554 = vmatprep.subr.mxu0 0.0
        %6555 = vmatpush1.msra.mxu0 0.0
        %6556 = vmatprep.subr.mxu0 0.0
        %6557 = vmatpush1.msra.mxu0 0.0
        %6558 = vmatprep.subr.mxu0 0.0
        %6559 = vmatpush1.msra.mxu0 0.0
        %6560 = vmatprep.subr.mxu0 0.0
        %6561 = vmatpush1.msra.mxu0 0.0
        %6562 = vmatprep.mubr.f32.mxu0 0.0
        %6563 = vmatmul.mubr.f32.gmra.mrb[0].mxu0 %v2260
        %v6564 = vpop.f32.mrb[0].mxu0
        %v6565 = vadd.f32 %v2256, %v6564
        %v6566 = vpop.f32.mrb[0].mxu0
        %6567 = vdwg.mxu0
        %v6568 = vld [vmem:[%s292 + $0x20] sm:$0xc0]
        %v6570 = vrot.slane %v5816, 6
        %v6572 = vsub.f32 %v6568, %v6570
        %v6574 = vrot.slane %v6572, 6
        %v6576 = vmul.f32 %v6565, %v6574
        %v6577 = vsel %vm822, %v6576, 0.0
        %v6578 = vrot.slane %v6577, 4
        %v6579 = vadd.f32 %v6577, %v6578
        %v6580 = vrot.slane %v6579, 2
        %v6581 = vadd.f32 %v6579, %v6580
        %v6582 = vrot.slane %v6581, 1
        %v6583 = vadd.f32 %v6581, %v6582
        %v6584 = vadd.f32 %v5832, %v6583
        %6585 = vst [vmem:[%s336 + $0x7] sm:$0x1] %v6584
        %v6586 = vld [vmem:[#allocation2 + $0x308] sm:$0xff]
        %v6587 = vld [vmem:[#allocation2 + $0x328] sm:$0xff]
        %v6588 = vld [vmem:[#allocation2 + $0x348] sm:$0xff]
        %v6589 = vld [vmem:[#allocation2 + $0x368] sm:$0xff]
        %v6591 = vsel %vm822, %v6001, 0
        %6593 = vmatprep.subr.mxu0 0.0
        %6594 = vmatpush1.msra.mxu0 %v6591
        %6595 = vmatprep.subr.mxu0 0.0
        %6596 = vmatpush1.msra.mxu0 0.0
        %6597 = vmatprep.subr.mxu0 0.0
        %6598 = vmatpush1.msra.mxu0 0.0
        %6599 = vmatprep.subr.mxu0 0.0
        %6600 = vmatpush1.msra.mxu0 0.0
        %6601 = vmatprep.subr.mxu0 0.0
        %6602 = vmatpush1.msra.mxu0 0.0
        %6603 = vmatprep.subr.mxu0 0.0
        %6604 = vmatpush1.msra.mxu0 0.0
        %6605 = vmatprep.subr.mxu0 0.0
        %6606 = vmatpush1.msra.mxu0 0.0
        %6607 = vmatprep.subr.mxu0 0.0
        %6608 = vmatpush1.msra.mxu0 0.0
        %6609 = vmatprep.subr.mxu0 0.0
        %6610 = vmatpush1.msra.mxu0 0.0
        %6611 = vmatprep.subr.mxu0 0.0
        %6612 = vmatpush1.msra.mxu0 0.0
        %6613 = vmatprep.subr.mxu0 0.0
        %6614 = vmatpush1.msra.mxu0 0.0
        %6615 = vmatprep.subr.mxu0 0.0
        %6616 = vmatpush1.msra.mxu0 0.0
        %6617 = vmatprep.subr.mxu0 0.0
        %6618 = vmatpush1.msra.mxu0 0.0
        %6619 = vmatprep.subr.mxu0 0.0
        %6620 = vmatpush1.msra.mxu0 0.0
        %6621 = vmatprep.subr.mxu0 0.0
        %6622 = vmatpush1.msra.mxu0 0.0
        %6623 = vmatprep.subr.mxu0 0.0
        %6624 = vmatpush1.msra.mxu0 0.0
        %6625 = vmatprep.subr.mxu0 0.0
        %6626 = vmatpush1.msra.mxu0 0.0
        %6627 = vmatprep.subr.mxu0 0.0
        %6628 = vmatpush1.msra.mxu0 0.0
        %6629 = vmatprep.subr.mxu0 0.0
        %6630 = vmatpush1.msra.mxu0 0.0
        %6631 = vmatprep.subr.mxu0 0.0
        %6632 = vmatpush1.msra.mxu0 0.0
        %6633 = vmatprep.subr.mxu0 0.0
        %6634 = vmatpush1.msra.mxu0 0.0
        %6635 = vmatprep.subr.mxu0 0.0
        %6636 = vmatpush1.msra.mxu0 0.0
        %6637 = vmatprep.subr.mxu0 0.0
        %6638 = vmatpush1.msra.mxu0 0.0
        %6639 = vmatprep.subr.mxu0 0.0
        %6640 = vmatpush1.msra.mxu0 0.0
        %6641 = vmatprep.subr.mxu0 0.0
        %6642 = vmatpush1.msra.mxu0 0.0
        %6643 = vmatprep.subr.mxu0 0.0
        %6644 = vmatpush1.msra.mxu0 0.0
        %6645 = vmatprep.subr.mxu0 0.0
        %6646 = vmatpush1.msra.mxu0 0.0
        %6647 = vmatprep.subr.mxu0 0.0
        %6648 = vmatpush1.msra.mxu0 0.0
        %6649 = vmatprep.subr.mxu0 0.0
        %6650 = vmatpush1.msra.mxu0 0.0
        %6651 = vmatprep.subr.mxu0 0.0
        %6652 = vmatpush1.msra.mxu0 0.0
        %6653 = vmatprep.subr.mxu0 0.0
        %6654 = vmatpush1.msra.mxu0 0.0
        %6655 = vmatprep.subr.mxu0 0.0
        %6656 = vmatpush1.msra.mxu0 0.0
        %6657 = vmatprep.mubr.f32.mxu0 0.0
        %6658 = vmatmul.mubr.f32.gmra.mrb[0].mxu0 %v2146
        %v6659 = vpop.f32.mrb[0].mxu0
        %v6660 = vadd.f32 0.0, %v6659
        %v6661 = vpop.f32.mrb[0].mxu0
        %6662 = vmatprep.mubr.f32.mxu0 0.0
        %6663 = vmatmul.mubr.f32.gmra.mrb[0].mxu0 %v2149
        %v6664 = vpop.f32.mrb[0].mxu0
        %v6665 = vadd.f32 0.0, %v6664
        %v6666 = vpop.f32.mrb[0].mxu0
        %6667 = vmatprep.mubr.f32.mxu0 0.0
        %6668 = vmatmul.mubr.f32.gmra.mrb[0].mxu0 %v2152
        %v6669 = vpop.f32.mrb[0].mxu0
        %v6670 = vadd.f32 0.0, %v6669
        %v6671 = vpop.f32.mrb[0].mxu0
        %6672 = vmatprep.mubr.f32.mxu0 0.0
        %6673 = vmatmul.mubr.f32.gmra.mrb[0].mxu0 %v2155
        %v6674 = vpop.f32.mrb[0].mxu0
        %v6675 = vadd.f32 0.0, %v6674
        %v6676 = vpop.f32.mrb[0].mxu0
        %6677 = vdwg.mxu0
        %v6678 = vadd.f32 %v6586, %v6660
        %v6679 = vadd.f32 %v6587, %v6665
        %v6680 = vadd.f32 %v6588, %v6670
        %v6681 = vadd.f32 %v6589, %v6675
        %v6682 = vmax.f32 %v6678, 0.0
        %v6683 = vmax.f32 %v6679, 0.0
        %v6684 = vmax.f32 %v6680, 0.0
        %v6685 = vmax.f32 %v6681, 0.0
        %6686 = vmatprep.subr.mxu0 0.0
        %6687 = vmatpush1.msra.mxu0 %v6682
        %6688 = vmatprep.subr.mxu0 0.0
        %6689 = vmatpush1.msra.mxu0 %v6683
        %6690 = vmatprep.subr.mxu0 0.0
        %6691 = vmatpush1.msra.mxu0 %v6684
        %6692 = vmatprep.subr.mxu0 0.0
        %6693 = vmatpush1.msra.mxu0 %v6685
        %6694 = vmatprep.subr.mxu0 0.0
        %6695 = vmatpush1.msra.mxu0 0.0
        %6696 = vmatprep.subr.mxu0 0.0
        %6697 = vmatpush1.msra.mxu0 0.0
        %6698 = vmatprep.subr.mxu0 0.0
        %6699 = vmatpush1.msra.mxu0 0.0
        %6700 = vmatprep.subr.mxu0 0.0
        %6701 = vmatpush1.msra.mxu0 0.0
        %6702 = vmatprep.subr.mxu0 0.0
        %6703 = vmatpush1.msra.mxu0 0.0
        %6704 = vmatprep.subr.mxu0 0.0
        %6705 = vmatpush1.msra.mxu0 0.0
        %6706 = vmatprep.subr.mxu0 0.0
        %6707 = vmatpush1.msra.mxu0 0.0
        %6708 = vmatprep.subr.mxu0 0.0
        %6709 = vmatpush1.msra.mxu0 0.0
        %6710 = vmatprep.subr.mxu0 0.0
        %6711 = vmatpush1.msra.mxu0 0.0
        %6712 = vmatprep.subr.mxu0 0.0
        %6713 = vmatpush1.msra.mxu0 0.0
        %6714 = vmatprep.subr.mxu0 0.0
        %6715 = vmatpush1.msra.mxu0 0.0
        %6716 = vmatprep.subr.mxu0 0.0
        %6717 = vmatpush1.msra.mxu0 0.0
        %6718 = vmatprep.subr.mxu0 0.0
        %6719 = vmatpush1.msra.mxu0 0.0
        %6720 = vmatprep.subr.mxu0 0.0
        %6721 = vmatpush1.msra.mxu0 0.0
        %6722 = vmatprep.subr.mxu0 0.0
        %6723 = vmatpush1.msra.mxu0 0.0
        %6724 = vmatprep.subr.mxu0 0.0
        %6725 = vmatpush1.msra.mxu0 0.0
        %6726 = vmatprep.subr.mxu0 0.0
        %6727 = vmatpush1.msra.mxu0 0.0
        %6728 = vmatprep.subr.mxu0 0.0
        %6729 = vmatpush1.msra.mxu0 0.0
        %6730 = vmatprep.subr.mxu0 0.0
        %6731 = vmatpush1.msra.mxu0 0.0
        %6732 = vmatprep.subr.mxu0 0.0
        %6733 = vmatpush1.msra.mxu0 0.0
        %6734 = vmatprep.subr.mxu0 0.0
        %6735 = vmatpush1.msra.mxu0 0.0
        %6736 = vmatprep.subr.mxu0 0.0
        %6737 = vmatpush1.msra.mxu0 0.0
        %6738 = vmatprep.subr.mxu0 0.0
        %6739 = vmatpush1.msra.mxu0 0.0
        %6740 = vmatprep.subr.mxu0 0.0
        %6741 = vmatpush1.msra.mxu0 0.0
        %6742 = vmatprep.subr.mxu0 0.0
        %6743 = vmatpush1.msra.mxu0 0.0
        %6744 = vmatprep.subr.mxu0 0.0
        %6745 = vmatpush1.msra.mxu0 0.0
        %6746 = vmatprep.subr.mxu0 0.0
        %6747 = vmatpush1.msra.mxu0 0.0
        %6748 = vmatprep.subr.mxu0 0.0
        %6749 = vmatpush1.msra.mxu0 0.0
        %6750 = vmatprep.mubr.f32.mxu0 0.0
        %6751 = vmatmul.mubr.f32.gmra.mrb[0].mxu0 %v2260
        %v6752 = vpop.f32.mrb[0].mxu0
        %v6753 = vadd.f32 %v2256, %v6752
        %v6754 = vpop.f32.mrb[0].mxu0
        %6755 = vdwg.mxu0
        %v6756 = vld [vmem:[%s292 + $0x28] sm:$0xc0]
        %v6758 = vrot.slane %v6004, 6
        %v6760 = vsub.f32 %v6756, %v6758
        %v6762 = vrot.slane %v6760, 6
        %v6764 = vmul.f32 %v6753, %v6762
        %v6765 = vsel %vm822, %v6764, 0.0
        %v6766 = vrot.slane %v6765, 4
        %v6767 = vadd.f32 %v6765, %v6766
        %v6768 = vrot.slane %v6767, 2
        %v6769 = vadd.f32 %v6767, %v6768
        %v6770 = vrot.slane %v6769, 1
        %v6771 = vadd.f32 %v6769, %v6770
        %v6772 = vadd.f32 %v6020, %v6771
        %6773 = vst [vmem:[%s336 + $0xf] sm:$0x1] %v6772
        %v6774 = vld [vmem:[#allocation2 + $0x310] sm:$0xff]
        %v6775 = vld [vmem:[#allocation2 + $0x330] sm:$0xff]
        %v6776 = vld [vmem:[#allocation2 + $0x350] sm:$0xff]
        %v6777 = vld [vmem:[#allocation2 + $0x370] sm:$0xff]
        %v6779 = vsel %vm822, %v6189, 0
        %6781 = vmatprep.subr.mxu0 0.0
        %6782 = vmatpush1.msra.mxu0 %v6779
        %6783 = vmatprep.subr.mxu0 0.0
        %6784 = vmatpush1.msra.mxu0 0.0
        %6785 = vmatprep.subr.mxu0 0.0
        %6786 = vmatpush1.msra.mxu0 0.0
        %6787 = vmatprep.subr.mxu0 0.0
        %6788 = vmatpush1.msra.mxu0 0.0
        %6789 = vmatprep.subr.mxu0 0.0
        %6790 = vmatpush1.msra.mxu0 0.0
        %6791 = vmatprep.subr.mxu0 0.0
        %6792 = vmatpush1.msra.mxu0 0.0
        %6793 = vmatprep.subr.mxu0 0.0
        %6794 = vmatpush1.msra.mxu0 0.0
        %6795 = vmatprep.subr.mxu0 0.0
        %6796 = vmatpush1.msra.mxu0 0.0
        %6797 = vmatprep.subr.mxu0 0.0
        %6798 = vmatpush1.msra.mxu0 0.0
        %6799 = vmatprep.subr.mxu0 0.0
        %6800 = vmatpush1.msra.mxu0 0.0
        %6801 = vmatprep.subr.mxu0 0.0
        %6802 = vmatpush1.msra.mxu0 0.0
        %6803 = vmatprep.subr.mxu0 0.0
        %6804 = vmatpush1.msra.mxu0 0.0
        %6805 = vmatprep.subr.mxu0 0.0
        %6806 = vmatpush1.msra.mxu0 0.0
        %6807 = vmatprep.subr.mxu0 0.0
        %6808 = vmatpush1.msra.mxu0 0.0
        %6809 = vmatprep.subr.mxu0 0.0
        %6810 = vmatpush1.msra.mxu0 0.0
        %6811 = vmatprep.subr.mxu0 0.0
        %6812 = vmatpush1.msra.mxu0 0.0
        %6813 = vmatprep.subr.mxu0 0.0
        %6814 = vmatpush1.msra.mxu0 0.0
        %6815 = vmatprep.subr.mxu0 0.0
        %6816 = vmatpush1.msra.mxu0 0.0
        %6817 = vmatprep.subr.mxu0 0.0
        %6818 = vmatpush1.msra.mxu0 0.0
        %6819 = vmatprep.subr.mxu0 0.0
        %6820 = vmatpush1.msra.mxu0 0.0
        %6821 = vmatprep.subr.mxu0 0.0
        %6822 = vmatpush1.msra.mxu0 0.0
        %6823 = vmatprep.subr.mxu0 0.0
        %6824 = vmatpush1.msra.mxu0 0.0
        %6825 = vmatprep.subr.mxu0 0.0
        %6826 = vmatpush1.msra.mxu0 0.0
        %6827 = vmatprep.subr.mxu0 0.0
        %6828 = vmatpush1.msra.mxu0 0.0
        %6829 = vmatprep.subr.mxu0 0.0
        %6830 = vmatpush1.msra.mxu0 0.0
        %6831 = vmatprep.subr.mxu0 0.0
        %6832 = vmatpush1.msra.mxu0 0.0
        %6833 = vmatprep.subr.mxu0 0.0
        %6834 = vmatpush1.msra.mxu0 0.0
        %6835 = vmatprep.subr.mxu0 0.0
        %6836 = vmatpush1.msra.mxu0 0.0
        %6837 = vmatprep.subr.mxu0 0.0
        %6838 = vmatpush1.msra.mxu0 0.0
        %6839 = vmatprep.subr.mxu0 0.0
        %6840 = vmatpush1.msra.mxu0 0.0
        %6841 = vmatprep.subr.mxu0 0.0
        %6842 = vmatpush1.msra.mxu0 0.0
        %6843 = vmatprep.subr.mxu0 0.0
        %6844 = vmatpush1.msra.mxu0 0.0
        %6845 = vmatprep.mubr.f32.mxu0 0.0
        %6846 = vmatmul.mubr.f32.gmra.mrb[0].mxu0 %v2146
        %v6847 = vpop.f32.mrb[0].mxu0
        %v6848 = vadd.f32 0.0, %v6847
        %v6849 = vpop.f32.mrb[0].mxu0
        %6850 = vmatprep.mubr.f32.mxu0 0.0
        %6851 = vmatmul.mubr.f32.gmra.mrb[0].mxu0 %v2149
        %v6852 = vpop.f32.mrb[0].mxu0
        %v6853 = vadd.f32 0.0, %v6852
        %v6854 = vpop.f32.mrb[0].mxu0
        %6855 = vmatprep.mubr.f32.mxu0 0.0
        %6856 = vmatmul.mubr.f32.gmra.mrb[0].mxu0 %v2152
        %v6857 = vpop.f32.mrb[0].mxu0
        %v6858 = vadd.f32 0.0, %v6857
        %v6859 = vpop.f32.mrb[0].mxu0
        %6860 = vmatprep.mubr.f32.mxu0 0.0
        %6861 = vmatmul.mubr.f32.gmra.mrb[0].mxu0 %v2155
        %v6862 = vpop.f32.mrb[0].mxu0
        %v6863 = vadd.f32 0.0, %v6862
        %v6864 = vpop.f32.mrb[0].mxu0
        %6865 = vdwg.mxu0
        %v6866 = vadd.f32 %v6774, %v6848
        %v6867 = vadd.f32 %v6775, %v6853
        %v6868 = vadd.f32 %v6776, %v6858
        %v6869 = vadd.f32 %v6777, %v6863
        %v6870 = vmax.f32 %v6866, 0.0
        %v6871 = vmax.f32 %v6867, 0.0
        %v6872 = vmax.f32 %v6868, 0.0
        %v6873 = vmax.f32 %v6869, 0.0
        %6874 = vmatprep.subr.mxu0 0.0
        %6875 = vmatpush1.msra.mxu0 %v6870
        %6876 = vmatprep.subr.mxu0 0.0
        %6877 = vmatpush1.msra.mxu0 %v6871
        %6878 = vmatprep.subr.mxu0 0.0
        %6879 = vmatpush1.msra.mxu0 %v6872
        %6880 = vmatprep.subr.mxu0 0.0
        %6881 = vmatpush1.msra.mxu0 %v6873
        %6882 = vmatprep.subr.mxu0 0.0
        %6883 = vmatpush1.msra.mxu0 0.0
        %6884 = vmatprep.subr.mxu0 0.0
        %6885 = vmatpush1.msra.mxu0 0.0
        %6886 = vmatprep.subr.mxu0 0.0
        %6887 = vmatpush1.msra.mxu0 0.0
        %6888 = vmatprep.subr.mxu0 0.0
        %6889 = vmatpush1.msra.mxu0 0.0
        %6890 = vmatprep.subr.mxu0 0.0
        %6891 = vmatpush1.msra.mxu0 0.0
        %6892 = vmatprep.subr.mxu0 0.0
        %6893 = vmatpush1.msra.mxu0 0.0
        %6894 = vmatprep.subr.mxu0 0.0
        %6895 = vmatpush1.msra.mxu0 0.0
        %6896 = vmatprep.subr.mxu0 0.0
        %6897 = vmatpush1.msra.mxu0 0.0
        %6898 = vmatprep.subr.mxu0 0.0
        %6899 = vmatpush1.msra.mxu0 0.0
        %6900 = vmatprep.subr.mxu0 0.0
        %6901 = vmatpush1.msra.mxu0 0.0
        %6902 = vmatprep.subr.mxu0 0.0
        %6903 = vmatpush1.msra.mxu0 0.0
        %6904 = vmatprep.subr.mxu0 0.0
        %6905 = vmatpush1.msra.mxu0 0.0
        %6906 = vmatprep.subr.mxu0 0.0
        %6907 = vmatpush1.msra.mxu0 0.0
        %6908 = vmatprep.subr.mxu0 0.0
        %6909 = vmatpush1.msra.mxu0 0.0
        %6910 = vmatprep.subr.mxu0 0.0
        %6911 = vmatpush1.msra.mxu0 0.0
        %6912 = vmatprep.subr.mxu0 0.0
        %6913 = vmatpush1.msra.mxu0 0.0
        %6914 = vmatprep.subr.mxu0 0.0
        %6915 = vmatpush1.msra.mxu0 0.0
        %6916 = vmatprep.subr.mxu0 0.0
        %6917 = vmatpush1.msra.mxu0 0.0
        %6918 = vmatprep.subr.mxu0 0.0
        %6919 = vmatpush1.msra.mxu0 0.0
        %6920 = vmatprep.subr.mxu0 0.0
        %6921 = vmatpush1.msra.mxu0 0.0
        %6922 = vmatprep.subr.mxu0 0.0
        %6923 = vmatpush1.msra.mxu0 0.0
        %6924 = vmatprep.subr.mxu0 0.0
        %6925 = vmatpush1.msra.mxu0 0.0
        %6926 = vmatprep.subr.mxu0 0.0
        %6927 = vmatpush1.msra.mxu0 0.0
        %6928 = vmatprep.subr.mxu0 0.0
        %6929 = vmatpush1.msra.mxu0 0.0
        %6930 = vmatprep.subr.mxu0 0.0
        %6931 = vmatpush1.msra.mxu0 0.0
        %6932 = vmatprep.subr.mxu0 0.0
        %6933 = vmatpush1.msra.mxu0 0.0
        %6934 = vmatprep.subr.mxu0 0.0
        %6935 = vmatpush1.msra.mxu0 0.0
        %6936 = vmatprep.subr.mxu0 0.0
        %6937 = vmatpush1.msra.mxu0 0.0
        %6938 = vmatprep.mubr.f32.mxu0 0.0
        %6939 = vmatmul.mubr.f32.gmra.mrb[0].mxu0 %v2260
        %v6940 = vpop.f32.mrb[0].mxu0
        %v6941 = vadd.f32 %v2256, %v6940
        %v6942 = vpop.f32.mrb[0].mxu0
        %6943 = vdwg.mxu0
        %v6944 = vld [vmem:[%s292 + $0x30] sm:$0xc0]
        %v6946 = vrot.slane %v6192, 6
        %v6948 = vsub.f32 %v6944, %v6946
        %v6950 = vrot.slane %v6948, 6
        %v6952 = vmul.f32 %v6941, %v6950
        %v6953 = vsel %vm822, %v6952, 0.0
        %v6954 = vrot.slane %v6953, 4
        %v6955 = vadd.f32 %v6953, %v6954
        %v6956 = vrot.slane %v6955, 2
        %v6957 = vadd.f32 %v6955, %v6956
        %v6958 = vrot.slane %v6957, 1
        %v6959 = vadd.f32 %v6957, %v6958
        %v6960 = vadd.f32 %v6208, %v6959
        %6961 = vst [vmem:[%s336 + $0x17] sm:$0x1] %v6960
        %v6962 = vld [vmem:[#allocation2 + $0x318] sm:$0xff]
        %v6963 = vld [vmem:[#allocation2 + $0x338] sm:$0xff]
        %v6964 = vld [vmem:[#allocation2 + $0x358] sm:$0xff]
        %v6965 = vld [vmem:[#allocation2 + $0x378] sm:$0xff]
        %v6967 = vsel %vm822, %v6377, 0
        %6969 = vmatprep.subr.mxu0 0.0
        %6970 = vmatpush1.msra.mxu0 %v6967
        %6971 = vmatprep.subr.mxu0 0.0
        %6972 = vmatpush1.msra.mxu0 0.0
        %6973 = vmatprep.subr.mxu0 0.0
        %6974 = vmatpush1.msra.mxu0 0.0
        %6975 = vmatprep.subr.mxu0 0.0
        %6976 = vmatpush1.msra.mxu0 0.0
        %6977 = vmatprep.subr.mxu0 0.0
        %6978 = vmatpush1.msra.mxu0 0.0
        %6979 = vmatprep.subr.mxu0 0.0
        %6980 = vmatpush1.msra.mxu0 0.0
        %6981 = vmatprep.subr.mxu0 0.0
        %6982 = vmatpush1.msra.mxu0 0.0
        %6983 = vmatprep.subr.mxu0 0.0
        %6984 = vmatpush1.msra.mxu0 0.0
        %6985 = vmatprep.subr.mxu0 0.0
        %6986 = vmatpush1.msra.mxu0 0.0
        %6987 = vmatprep.subr.mxu0 0.0
        %6988 = vmatpush1.msra.mxu0 0.0
        %6989 = vmatprep.subr.mxu0 0.0
        %6990 = vmatpush1.msra.mxu0 0.0
        %6991 = vmatprep.subr.mxu0 0.0
        %6992 = vmatpush1.msra.mxu0 0.0
        %6993 = vmatprep.subr.mxu0 0.0
        %6994 = vmatpush1.msra.mxu0 0.0
        %6995 = vmatprep.subr.mxu0 0.0
        %6996 = vmatpush1.msra.mxu0 0.0
        %6997 = vmatprep.subr.mxu0 0.0
        %6998 = vmatpush1.msra.mxu0 0.0
        %6999 = vmatprep.subr.mxu0 0.0
        %7000 = vmatpush1.msra.mxu0 0.0
        %7001 = vmatprep.subr.mxu0 0.0
        %7002 = vmatpush1.msra.mxu0 0.0
        %7003 = vmatprep.subr.mxu0 0.0
        %7004 = vmatpush1.msra.mxu0 0.0
        %7005 = vmatprep.subr.mxu0 0.0
        %7006 = vmatpush1.msra.mxu0 0.0
        %7007 = vmatprep.subr.mxu0 0.0
        %7008 = vmatpush1.msra.mxu0 0.0
        %7009 = vmatprep.subr.mxu0 0.0
        %7010 = vmatpush1.msra.mxu0 0.0
        %7011 = vmatprep.subr.mxu0 0.0
        %7012 = vmatpush1.msra.mxu0 0.0
        %7013 = vmatprep.subr.mxu0 0.0
        %7014 = vmatpush1.msra.mxu0 0.0
        %7015 = vmatprep.subr.mxu0 0.0
        %7016 = vmatpush1.msra.mxu0 0.0
        %7017 = vmatprep.subr.mxu0 0.0
        %7018 = vmatpush1.msra.mxu0 0.0
        %7019 = vmatprep.subr.mxu0 0.0
        %7020 = vmatpush1.msra.mxu0 0.0
        %7021 = vmatprep.subr.mxu0 0.0
        %7022 = vmatpush1.msra.mxu0 0.0
        %7023 = vmatprep.subr.mxu0 0.0
        %7024 = vmatpush1.msra.mxu0 0.0
        %7025 = vmatprep.subr.mxu0 0.0
        %7026 = vmatpush1.msra.mxu0 0.0
        %7027 = vmatprep.subr.mxu0 0.0
        %7028 = vmatpush1.msra.mxu0 0.0
        %7029 = vmatprep.subr.mxu0 0.0
        %7030 = vmatpush1.msra.mxu0 0.0
        %7031 = vmatprep.subr.mxu0 0.0
        %7032 = vmatpush1.msra.mxu0 0.0
        %7033 = vmatprep.mubr.f32.mxu0 0.0
        %7034 = vmatmul.mubr.f32.gmra.mrb[0].mxu0 %v2146
        %v7035 = vpop.f32.mrb[0].mxu0
        %v7036 = vadd.f32 0.0, %v7035
        %v7037 = vpop.f32.mrb[0].mxu0
        %7038 = vmatprep.mubr.f32.mxu0 0.0
        %7039 = vmatmul.mubr.f32.gmra.mrb[0].mxu0 %v2149
        %v7040 = vpop.f32.mrb[0].mxu0
        %v7041 = vadd.f32 0.0, %v7040
        %v7042 = vpop.f32.mrb[0].mxu0
        %7043 = vmatprep.mubr.f32.mxu0 0.0
        %7044 = vmatmul.mubr.f32.gmra.mrb[0].mxu0 %v2152
        %v7045 = vpop.f32.mrb[0].mxu0
        %v7046 = vadd.f32 0.0, %v7045
        %v7047 = vpop.f32.mrb[0].mxu0
        %7048 = vmatprep.mubr.f32.mxu0 0.0
        %7049 = vmatmul.mubr.f32.gmra.mrb[0].mxu0 %v2155
        %v7050 = vpop.f32.mrb[0].mxu0
        %v7051 = vadd.f32 0.0, %v7050
        %v7052 = vpop.f32.mrb[0].mxu0
        %7053 = vdwg.mxu0
        %v7054 = vadd.f32 %v6962, %v7036
        %v7055 = vadd.f32 %v6963, %v7041
        %v7056 = vadd.f32 %v6964, %v7046
        %v7057 = vadd.f32 %v6965, %v7051
        %v7058 = vmax.f32 %v7054, 0.0
        %v7059 = vmax.f32 %v7055, 0.0
        %v7060 = vmax.f32 %v7056, 0.0
        %v7061 = vmax.f32 %v7057, 0.0
        %7062 = vmatprep.subr.mxu0 0.0
        %7063 = vmatpush1.msra.mxu0 %v7058
        %7064 = vmatprep.subr.mxu0 0.0
        %7065 = vmatpush1.msra.mxu0 %v7059
        %7066 = vmatprep.subr.mxu0 0.0
        %7067 = vmatpush1.msra.mxu0 %v7060
        %7068 = vmatprep.subr.mxu0 0.0
        %7069 = vmatpush1.msra.mxu0 %v7061
        %7070 = vmatprep.subr.mxu0 0.0
        %7071 = vmatpush1.msra.mxu0 0.0
        %7072 = vmatprep.subr.mxu0 0.0
        %7073 = vmatpush1.msra.mxu0 0.0
        %7074 = vmatprep.subr.mxu0 0.0
        %7075 = vmatpush1.msra.mxu0 0.0
        %7076 = vmatprep.subr.mxu0 0.0
        %7077 = vmatpush1.msra.mxu0 0.0
        %7078 = vmatprep.subr.mxu0 0.0
        %7079 = vmatpush1.msra.mxu0 0.0
        %7080 = vmatprep.subr.mxu0 0.0
        %7081 = vmatpush1.msra.mxu0 0.0
        %7082 = vmatprep.subr.mxu0 0.0
        %7083 = vmatpush1.msra.mxu0 0.0
        %7084 = vmatprep.subr.mxu0 0.0
        %7085 = vmatpush1.msra.mxu0 0.0
        %7086 = vmatprep.subr.mxu0 0.0
        %7087 = vmatpush1.msra.mxu0 0.0
        %7088 = vmatprep.subr.mxu0 0.0
        %7089 = vmatpush1.msra.mxu0 0.0
        %7090 = vmatprep.subr.mxu0 0.0
        %7091 = vmatpush1.msra.mxu0 0.0
        %7092 = vmatprep.subr.mxu0 0.0
        %7093 = vmatpush1.msra.mxu0 0.0
        %7094 = vmatprep.subr.mxu0 0.0
        %7095 = vmatpush1.msra.mxu0 0.0
        %7096 = vmatprep.subr.mxu0 0.0
        %7097 = vmatpush1.msra.mxu0 0.0
        %7098 = vmatprep.subr.mxu0 0.0
        %7099 = vmatpush1.msra.mxu0 0.0
        %7100 = vmatprep.subr.mxu0 0.0
        %7101 = vmatpush1.msra.mxu0 0.0
        %7102 = vmatprep.subr.mxu0 0.0
        %7103 = vmatpush1.msra.mxu0 0.0
        %7104 = vmatprep.subr.mxu0 0.0
        %7105 = vmatpush1.msra.mxu0 0.0
        %7106 = vmatprep.subr.mxu0 0.0
        %7107 = vmatpush1.msra.mxu0 0.0
        %7108 = vmatprep.subr.mxu0 0.0
        %7109 = vmatpush1.msra.mxu0 0.0
        %7110 = vmatprep.subr.mxu0 0.0
        %7111 = vmatpush1.msra.mxu0 0.0
        %7112 = vmatprep.subr.mxu0 0.0
        %7113 = vmatpush1.msra.mxu0 0.0
        %7114 = vmatprep.subr.mxu0 0.0
        %7115 = vmatpush1.msra.mxu0 0.0
        %7116 = vmatprep.subr.mxu0 0.0
        %7117 = vmatpush1.msra.mxu0 0.0
        %7118 = vmatprep.subr.mxu0 0.0
        %7119 = vmatpush1.msra.mxu0 0.0
        %7120 = vmatprep.subr.mxu0 0.0
        %7121 = vmatpush1.msra.mxu0 0.0
        %7122 = vmatprep.subr.mxu0 0.0
        %7123 = vmatpush1.msra.mxu0 0.0
        %7124 = vmatprep.subr.mxu0 0.0
        %7125 = vmatpush1.msra.mxu0 0.0
        %7126 = vmatprep.mubr.f32.mxu0 0.0
        %7127 = vmatmul.mubr.f32.gmra.mrb[0].mxu0 %v2260
        %v7128 = vpop.f32.mrb[0].mxu0
        %v7129 = vadd.f32 %v2256, %v7128
        %v7130 = vpop.f32.mrb[0].mxu0
        %7131 = vdwg.mxu0
        %v7132 = vld [vmem:[%s292 + $0x38] sm:$0xc0]
        %v7134 = vrot.slane %v6380, 6
        %v7136 = vsub.f32 %v7132, %v7134
        %v7138 = vrot.slane %v7136, 6
        %v7140 = vmul.f32 %v7129, %v7138
        %v7141 = vsel %vm822, %v7140, 0.0
        %v7142 = vrot.slane %v7141, 4
        %v7143 = vadd.f32 %v7141, %v7142
        %v7144 = vrot.slane %v7143, 2
        %v7145 = vadd.f32 %v7143, %v7144
        %v7146 = vrot.slane %v7145, 1
        %v7147 = vadd.f32 %v7145, %v7146
        %v7148 = vadd.f32 %v6396, %v7147
        %7149 = vst [vmem:[%s336 + $0x1f] sm:$0x1] %v7148
        %v7150 = vld [vmem:[#allocation2 + $0x380] sm:$0xff]
        %v7151 = vld [vmem:[#allocation2 + $0x3a0] sm:$0xff]
        %v7152 = vld [vmem:[#allocation2 + $0x3c0] sm:$0xff]
        %v7153 = vld [vmem:[#allocation2 + $0x3e0] sm:$0xff]
        %v7155 = vsel %vm822, %v6565, 0
        %7157 = vmatprep.subr.mxu0 0.0
        %7158 = vmatpush1.msra.mxu0 %v7155
        %7159 = vmatprep.subr.mxu0 0.0
        %7160 = vmatpush1.msra.mxu0 0.0
        %7161 = vmatprep.subr.mxu0 0.0
        %7162 = vmatpush1.msra.mxu0 0.0
        %7163 = vmatprep.subr.mxu0 0.0
        %7164 = vmatpush1.msra.mxu0 0.0
        %7165 = vmatprep.subr.mxu0 0.0
        %7166 = vmatpush1.msra.mxu0 0.0
        %7167 = vmatprep.subr.mxu0 0.0
        %7168 = vmatpush1.msra.mxu0 0.0
        %7169 = vmatprep.subr.mxu0 0.0
        %7170 = vmatpush1.msra.mxu0 0.0
        %7171 = vmatprep.subr.mxu0 0.0
        %7172 = vmatpush1.msra.mxu0 0.0
        %7173 = vmatprep.subr.mxu0 0.0
        %7174 = vmatpush1.msra.mxu0 0.0
        %7175 = vmatprep.subr.mxu0 0.0
        %7176 = vmatpush1.msra.mxu0 0.0
        %7177 = vmatprep.subr.mxu0 0.0
        %7178 = vmatpush1.msra.mxu0 0.0
        %7179 = vmatprep.subr.mxu0 0.0
        %7180 = vmatpush1.msra.mxu0 0.0
        %7181 = vmatprep.subr.mxu0 0.0
        %7182 = vmatpush1.msra.mxu0 0.0
        %7183 = vmatprep.subr.mxu0 0.0
        %7184 = vmatpush1.msra.mxu0 0.0
        %7185 = vmatprep.subr.mxu0 0.0
        %7186 = vmatpush1.msra.mxu0 0.0
        %7187 = vmatprep.subr.mxu0 0.0
        %7188 = vmatpush1.msra.mxu0 0.0
        %7189 = vmatprep.subr.mxu0 0.0
        %7190 = vmatpush1.msra.mxu0 0.0
        %7191 = vmatprep.subr.mxu0 0.0
        %7192 = vmatpush1.msra.mxu0 0.0
        %7193 = vmatprep.subr.mxu0 0.0
        %7194 = vmatpush1.msra.mxu0 0.0
        %7195 = vmatprep.subr.mxu0 0.0
        %7196 = vmatpush1.msra.mxu0 0.0
        %7197 = vmatprep.subr.mxu0 0.0
        %7198 = vmatpush1.msra.mxu0 0.0
        %7199 = vmatprep.subr.mxu0 0.0
        %7200 = vmatpush1.msra.mxu0 0.0
        %7201 = vmatprep.subr.mxu0 0.0
        %7202 = vmatpush1.msra.mxu0 0.0
        %7203 = vmatprep.subr.mxu0 0.0
        %7204 = vmatpush1.msra.mxu0 0.0
        %7205 = vmatprep.subr.mxu0 0.0
        %7206 = vmatpush1.msra.mxu0 0.0
        %7207 = vmatprep.subr.mxu0 0.0
        %7208 = vmatpush1.msra.mxu0 0.0
        %7209 = vmatprep.subr.mxu0 0.0
        %7210 = vmatpush1.msra.mxu0 0.0
        %7211 = vmatprep.subr.mxu0 0.0
        %7212 = vmatpush1.msra.mxu0 0.0
        %7213 = vmatprep.subr.mxu0 0.0
        %7214 = vmatpush1.msra.mxu0 0.0
        %7215 = vmatprep.subr.mxu0 0.0
        %7216 = vmatpush1.msra.mxu0 0.0
        %7217 = vmatprep.subr.mxu0 0.0
        %7218 = vmatpush1.msra.mxu0 0.0
        %7219 = vmatprep.subr.mxu0 0.0
        %7220 = vmatpush1.msra.mxu0 0.0
        %7221 = vmatprep.mubr.f32.mxu0 0.0
        %7222 = vmatmul.mubr.f32.gmra.mrb[0].mxu0 %v2146
        %v7223 = vpop.f32.mrb[0].mxu0
        %v7224 = vadd.f32 0.0, %v7223
        %v7225 = vpop.f32.mrb[0].mxu0
        %7226 = vmatprep.mubr.f32.mxu0 0.0
        %7227 = vmatmul.mubr.f32.gmra.mrb[0].mxu0 %v2149
        %v7228 = vpop.f32.mrb[0].mxu0
        %v7229 = vadd.f32 0.0, %v7228
        %v7230 = vpop.f32.mrb[0].mxu0
        %7231 = vmatprep.mubr.f32.mxu0 0.0
        %7232 = vmatmul.mubr.f32.gmra.mrb[0].mxu0 %v2152
        %v7233 = vpop.f32.mrb[0].mxu0
        %v7234 = vadd.f32 0.0, %v7233
        %v7235 = vpop.f32.mrb[0].mxu0
        %7236 = vmatprep.mubr.f32.mxu0 0.0
        %7237 = vmatmul.mubr.f32.gmra.mrb[0].mxu0 %v2155
        %v7238 = vpop.f32.mrb[0].mxu0
        %v7239 = vadd.f32 0.0, %v7238
        %v7240 = vpop.f32.mrb[0].mxu0
        %7241 = vdwg.mxu0
        %v7242 = vadd.f32 %v7150, %v7224
        %v7243 = vadd.f32 %v7151, %v7229
        %v7244 = vadd.f32 %v7152, %v7234
        %v7245 = vadd.f32 %v7153, %v7239
        %v7246 = vmax.f32 %v7242, 0.0
        %v7247 = vmax.f32 %v7243, 0.0
        %v7248 = vmax.f32 %v7244, 0.0
        %v7249 = vmax.f32 %v7245, 0.0
        %7250 = vmatprep.subr.mxu0 0.0
        %7251 = vmatpush1.msra.mxu0 %v7246
        %7252 = vmatprep.subr.mxu0 0.0
        %7253 = vmatpush1.msra.mxu0 %v7247
        %7254 = vmatprep.subr.mxu0 0.0
        %7255 = vmatpush1.msra.mxu0 %v7248
        %7256 = vmatprep.subr.mxu0 0.0
        %7257 = vmatpush1.msra.mxu0 %v7249
        %7258 = vmatprep.subr.mxu0 0.0
        %7259 = vmatpush1.msra.mxu0 0.0
        %7260 = vmatprep.subr.mxu0 0.0
        %7261 = vmatpush1.msra.mxu0 0.0
        %7262 = vmatprep.subr.mxu0 0.0
        %7263 = vmatpush1.msra.mxu0 0.0
        %7264 = vmatprep.subr.mxu0 0.0
        %7265 = vmatpush1.msra.mxu0 0.0
        %7266 = vmatprep.subr.mxu0 0.0
        %7267 = vmatpush1.msra.mxu0 0.0
        %7268 = vmatprep.subr.mxu0 0.0
        %7269 = vmatpush1.msra.mxu0 0.0
        %7270 = vmatprep.subr.mxu0 0.0
        %7271 = vmatpush1.msra.mxu0 0.0
        %7272 = vmatprep.subr.mxu0 0.0
        %7273 = vmatpush1.msra.mxu0 0.0
        %7274 = vmatprep.subr.mxu0 0.0
        %7275 = vmatpush1.msra.mxu0 0.0
        %7276 = vmatprep.subr.mxu0 0.0
        %7277 = vmatpush1.msra.mxu0 0.0
        %7278 = vmatprep.subr.mxu0 0.0
        %7279 = vmatpush1.msra.mxu0 0.0
        %7280 = vmatprep.subr.mxu0 0.0
        %7281 = vmatpush1.msra.mxu0 0.0
        %7282 = vmatprep.subr.mxu0 0.0
        %7283 = vmatpush1.msra.mxu0 0.0
        %7284 = vmatprep.subr.mxu0 0.0
        %7285 = vmatpush1.msra.mxu0 0.0
        %7286 = vmatprep.subr.mxu0 0.0
        %7287 = vmatpush1.msra.mxu0 0.0
        %7288 = vmatprep.subr.mxu0 0.0
        %7289 = vmatpush1.msra.mxu0 0.0
        %7290 = vmatprep.subr.mxu0 0.0
        %7291 = vmatpush1.msra.mxu0 0.0
        %7292 = vmatprep.subr.mxu0 0.0
        %7293 = vmatpush1.msra.mxu0 0.0
        %7294 = vmatprep.subr.mxu0 0.0
        %7295 = vmatpush1.msra.mxu0 0.0
        %7296 = vmatprep.subr.mxu0 0.0
        %7297 = vmatpush1.msra.mxu0 0.0
        %7298 = vmatprep.subr.mxu0 0.0
        %7299 = vmatpush1.msra.mxu0 0.0
        %7300 = vmatprep.subr.mxu0 0.0
        %7301 = vmatpush1.msra.mxu0 0.0
        %7302 = vmatprep.subr.mxu0 0.0
        %7303 = vmatpush1.msra.mxu0 0.0
        %7304 = vmatprep.subr.mxu0 0.0
        %7305 = vmatpush1.msra.mxu0 0.0
        %7306 = vmatprep.subr.mxu0 0.0
        %7307 = vmatpush1.msra.mxu0 0.0
        %7308 = vmatprep.subr.mxu0 0.0
        %7309 = vmatpush1.msra.mxu0 0.0
        %7310 = vmatprep.subr.mxu0 0.0
        %7311 = vmatpush1.msra.mxu0 0.0
        %7312 = vmatprep.subr.mxu0 0.0
        %7313 = vmatpush1.msra.mxu0 0.0
        %7314 = vmatprep.mubr.f32.mxu0 0.0
        %7315 = vmatmul.mubr.f32.gmra.mrb[0].mxu0 %v2260
        %v7316 = vpop.f32.mrb[0].mxu0
        %v7317 = vadd.f32 %v2256, %v7316
        %v7318 = vpop.f32.mrb[0].mxu0
        %7319 = vdwg.mxu0
        %v7320 = vld [vmem:[%s292 + $0x40] sm:$0x3]
        %v7322 = vrot.slane %v6568, 6
        %v7324 = vsub.f32 %v7320, %v7322
        %v7325 = vmul.f32 %v7317, %v7324
        %v7326 = vsel %vm822, %v7325, 0.0
        %v7327 = vrot.slane %v7326, 4
        %v7328 = vadd.f32 %v7326, %v7327
        %v7329 = vrot.slane %v7328, 2
        %v7330 = vadd.f32 %v7328, %v7329
        %v7331 = vrot.slane %v7330, 1
        %v7332 = vadd.f32 %v7330, %v7331
        %v7333 = vadd.f32 %v6584, %v7332
        %7334 = vst [vmem:[%s336 + $0x20] sm:$0x1] %v7333
        %v7335 = vld [vmem:[#allocation2 + $0x388] sm:$0xff]
        %v7336 = vld [vmem:[#allocation2 + $0x3a8] sm:$0xff]
        %v7337 = vld [vmem:[#allocation2 + $0x3c8] sm:$0xff]
        %v7338 = vld [vmem:[#allocation2 + $0x3e8] sm:$0xff]
        %v7340 = vsel %vm822, %v6753, 0
        %7342 = vmatprep.subr.mxu0 0.0
        %7343 = vmatpush1.msra.mxu0 %v7340
        %7344 = vmatprep.subr.mxu0 0.0
        %7345 = vmatpush1.msra.mxu0 0.0
        %7346 = vmatprep.subr.mxu0 0.0
        %7347 = vmatpush1.msra.mxu0 0.0
        %7348 = vmatprep.subr.mxu0 0.0
        %7349 = vmatpush1.msra.mxu0 0.0
        %7350 = vmatprep.subr.mxu0 0.0
        %7351 = vmatpush1.msra.mxu0 0.0
        %7352 = vmatprep.subr.mxu0 0.0
        %7353 = vmatpush1.msra.mxu0 0.0
        %7354 = vmatprep.subr.mxu0 0.0
        %7355 = vmatpush1.msra.mxu0 0.0
        %7356 = vmatprep.subr.mxu0 0.0
        %7357 = vmatpush1.msra.mxu0 0.0
        %7358 = vmatprep.subr.mxu0 0.0
        %7359 = vmatpush1.msra.mxu0 0.0
        %7360 = vmatprep.subr.mxu0 0.0
        %7361 = vmatpush1.msra.mxu0 0.0
        %7362 = vmatprep.subr.mxu0 0.0
        %7363 = vmatpush1.msra.mxu0 0.0
        %7364 = vmatprep.subr.mxu0 0.0
        %7365 = vmatpush1.msra.mxu0 0.0
        %7366 = vmatprep.subr.mxu0 0.0
        %7367 = vmatpush1.msra.mxu0 0.0
        %7368 = vmatprep.subr.mxu0 0.0
        %7369 = vmatpush1.msra.mxu0 0.0
        %7370 = vmatprep.subr.mxu0 0.0
        %7371 = vmatpush1.msra.mxu0 0.0
        %7372 = vmatprep.subr.mxu0 0.0
        %7373 = vmatpush1.msra.mxu0 0.0
        %7374 = vmatprep.subr.mxu0 0.0
        %7375 = vmatpush1.msra.mxu0 0.0
        %7376 = vmatprep.subr.mxu0 0.0
        %7377 = vmatpush1.msra.mxu0 0.0
        %7378 = vmatprep.subr.mxu0 0.0
        %7379 = vmatpush1.msra.mxu0 0.0
        %7380 = vmatprep.subr.mxu0 0.0
        %7381 = vmatpush1.msra.mxu0 0.0
        %7382 = vmatprep.subr.mxu0 0.0
        %7383 = vmatpush1.msra.mxu0 0.0
        %7384 = vmatprep.subr.mxu0 0.0
        %7385 = vmatpush1.msra.mxu0 0.0
        %7386 = vmatprep.subr.mxu0 0.0
        %7387 = vmatpush1.msra.mxu0 0.0
        %7388 = vmatprep.subr.mxu0 0.0
        %7389 = vmatpush1.msra.mxu0 0.0
        %7390 = vmatprep.subr.mxu0 0.0
        %7391 = vmatpush1.msra.mxu0 0.0
        %7392 = vmatprep.subr.mxu0 0.0
        %7393 = vmatpush1.msra.mxu0 0.0
        %7394 = vmatprep.subr.mxu0 0.0
        %7395 = vmatpush1.msra.mxu0 0.0
        %7396 = vmatprep.subr.mxu0 0.0
        %7397 = vmatpush1.msra.mxu0 0.0
        %7398 = vmatprep.subr.mxu0 0.0
        %7399 = vmatpush1.msra.mxu0 0.0
        %7400 = vmatprep.subr.mxu0 0.0
        %7401 = vmatpush1.msra.mxu0 0.0
        %7402 = vmatprep.subr.mxu0 0.0
        %7403 = vmatpush1.msra.mxu0 0.0
        %7404 = vmatprep.subr.mxu0 0.0
        %7405 = vmatpush1.msra.mxu0 0.0
        %7406 = vmatprep.mubr.f32.mxu0 0.0
        %7407 = vmatmul.mubr.f32.gmra.mrb[0].mxu0 %v2146
        %v7408 = vpop.f32.mrb[0].mxu0
        %v7409 = vadd.f32 0.0, %v7408
        %v7410 = vpop.f32.mrb[0].mxu0
        %7411 = vmatprep.mubr.f32.mxu0 0.0
        %7412 = vmatmul.mubr.f32.gmra.mrb[0].mxu0 %v2149
        %v7413 = vpop.f32.mrb[0].mxu0
        %v7414 = vadd.f32 0.0, %v7413
        %v7415 = vpop.f32.mrb[0].mxu0
        %7416 = vmatprep.mubr.f32.mxu0 0.0
        %7417 = vmatmul.mubr.f32.gmra.mrb[0].mxu0 %v2152
        %v7418 = vpop.f32.mrb[0].mxu0
        %v7419 = vadd.f32 0.0, %v7418
        %v7420 = vpop.f32.mrb[0].mxu0
        %7421 = vmatprep.mubr.f32.mxu0 0.0
        %7422 = vmatmul.mubr.f32.gmra.mrb[0].mxu0 %v2155
        %v7423 = vpop.f32.mrb[0].mxu0
        %v7424 = vadd.f32 0.0, %v7423
        %v7425 = vpop.f32.mrb[0].mxu0
        %7426 = vdwg.mxu0
        %v7427 = vadd.f32 %v7335, %v7409
        %v7428 = vadd.f32 %v7336, %v7414
        %v7429 = vadd.f32 %v7337, %v7419
        %v7430 = vadd.f32 %v7338, %v7424
        %v7431 = vmax.f32 %v7427, 0.0
        %v7432 = vmax.f32 %v7428, 0.0
        %v7433 = vmax.f32 %v7429, 0.0
        %v7434 = vmax.f32 %v7430, 0.0
        %7435 = vmatprep.subr.mxu0 0.0
        %7436 = vmatpush1.msra.mxu0 %v7431
        %7437 = vmatprep.subr.mxu0 0.0
        %7438 = vmatpush1.msra.mxu0 %v7432
        %7439 = vmatprep.subr.mxu0 0.0
        %7440 = vmatpush1.msra.mxu0 %v7433
        %7441 = vmatprep.subr.mxu0 0.0
        %7442 = vmatpush1.msra.mxu0 %v7434
        %7443 = vmatprep.subr.mxu0 0.0
        %7444 = vmatpush1.msra.mxu0 0.0
        %7445 = vmatprep.subr.mxu0 0.0
        %7446 = vmatpush1.msra.mxu0 0.0
        %7447 = vmatprep.subr.mxu0 0.0
        %7448 = vmatpush1.msra.mxu0 0.0
        %7449 = vmatprep.subr.mxu0 0.0
        %7450 = vmatpush1.msra.mxu0 0.0
        %7451 = vmatprep.subr.mxu0 0.0
        %7452 = vmatpush1.msra.mxu0 0.0
        %7453 = vmatprep.subr.mxu0 0.0
        %7454 = vmatpush1.msra.mxu0 0.0
        %7455 = vmatprep.subr.mxu0 0.0
        %7456 = vmatpush1.msra.mxu0 0.0
        %7457 = vmatprep.subr.mxu0 0.0
        %7458 = vmatpush1.msra.mxu0 0.0
        %7459 = vmatprep.subr.mxu0 0.0
        %7460 = vmatpush1.msra.mxu0 0.0
        %7461 = vmatprep.subr.mxu0 0.0
        %7462 = vmatpush1.msra.mxu0 0.0
        %7463 = vmatprep.subr.mxu0 0.0
        %7464 = vmatpush1.msra.mxu0 0.0
        %7465 = vmatprep.subr.mxu0 0.0
        %7466 = vmatpush1.msra.mxu0 0.0
        %7467 = vmatprep.subr.mxu0 0.0
        %7468 = vmatpush1.msra.mxu0 0.0
        %7469 = vmatprep.subr.mxu0 0.0
        %7470 = vmatpush1.msra.mxu0 0.0
        %7471 = vmatprep.subr.mxu0 0.0
        %7472 = vmatpush1.msra.mxu0 0.0
        %7473 = vmatprep.subr.mxu0 0.0
        %7474 = vmatpush1.msra.mxu0 0.0
        %7475 = vmatprep.subr.mxu0 0.0
        %7476 = vmatpush1.msra.mxu0 0.0
        %7477 = vmatprep.subr.mxu0 0.0
        %7478 = vmatpush1.msra.mxu0 0.0
        %7479 = vmatprep.subr.mxu0 0.0
        %7480 = vmatpush1.msra.mxu0 0.0
        %7481 = vmatprep.subr.mxu0 0.0
        %7482 = vmatpush1.msra.mxu0 0.0
        %7483 = vmatprep.subr.mxu0 0.0
        %7484 = vmatpush1.msra.mxu0 0.0
        %7485 = vmatprep.subr.mxu0 0.0
        %7486 = vmatpush1.msra.mxu0 0.0
        %7487 = vmatprep.subr.mxu0 0.0
        %7488 = vmatpush1.msra.mxu0 0.0
        %7489 = vmatprep.subr.mxu0 0.0
        %7490 = vmatpush1.msra.mxu0 0.0
        %7491 = vmatprep.subr.mxu0 0.0
        %7492 = vmatpush1.msra.mxu0 0.0
        %7493 = vmatprep.subr.mxu0 0.0
        %7494 = vmatpush1.msra.mxu0 0.0
        %7495 = vmatprep.subr.mxu0 0.0
        %7496 = vmatpush1.msra.mxu0 0.0
        %7497 = vmatprep.subr.mxu0 0.0
        %7498 = vmatpush1.msra.mxu0 0.0
        %7499 = vmatprep.mubr.f32.mxu0 0.0
        %7500 = vmatmul.mubr.f32.gmra.mrb[0].mxu0 %v2260
        %v7501 = vpop.f32.mrb[0].mxu0
        %v7502 = vadd.f32 %v2256, %v7501
        %v7503 = vpop.f32.mrb[0].mxu0
        %7504 = vdwg.mxu0
        %v7505 = vld [vmem:[%s292 + $0x48] sm:$0x3]
        %v7507 = vrot.slane %v6756, 6
        %v7509 = vsub.f32 %v7505, %v7507
        %v7510 = vmul.f32 %v7502, %v7509
        %v7511 = vsel %vm822, %v7510, 0.0
        %v7512 = vrot.slane %v7511, 4
        %v7513 = vadd.f32 %v7511, %v7512
        %v7514 = vrot.slane %v7513, 2
        %v7515 = vadd.f32 %v7513, %v7514
        %v7516 = vrot.slane %v7515, 1
        %v7517 = vadd.f32 %v7515, %v7516
        %v7518 = vadd.f32 %v6772, %v7517
        %7519 = vst [vmem:[%s336 + $0x28] sm:$0x1] %v7518
        %v7520 = vld [vmem:[#allocation2 + $0x390] sm:$0xff]
        %v7521 = vld [vmem:[#allocation2 + $0x3b0] sm:$0xff]
        %v7522 = vld [vmem:[#allocation2 + $0x3d0] sm:$0xff]
        %v7523 = vld [vmem:[#allocation2 + $0x3f0] sm:$0xff]
        %v7525 = vsel %vm822, %v6941, 0
        %7527 = vmatprep.subr.mxu0 0.0
        %7528 = vmatpush1.msra.mxu0 %v7525
        %7529 = vmatprep.subr.mxu0 0.0
        %7530 = vmatpush1.msra.mxu0 0.0
        %7531 = vmatprep.subr.mxu0 0.0
        %7532 = vmatpush1.msra.mxu0 0.0
        %7533 = vmatprep.subr.mxu0 0.0
        %7534 = vmatpush1.msra.mxu0 0.0
        %7535 = vmatprep.subr.mxu0 0.0
        %7536 = vmatpush1.msra.mxu0 0.0
        %7537 = vmatprep.subr.mxu0 0.0
        %7538 = vmatpush1.msra.mxu0 0.0
        %7539 = vmatprep.subr.mxu0 0.0
        %7540 = vmatpush1.msra.mxu0 0.0
        %7541 = vmatprep.subr.mxu0 0.0
        %7542 = vmatpush1.msra.mxu0 0.0
        %7543 = vmatprep.subr.mxu0 0.0
        %7544 = vmatpush1.msra.mxu0 0.0
        %7545 = vmatprep.subr.mxu0 0.0
        %7546 = vmatpush1.msra.mxu0 0.0
        %7547 = vmatprep.subr.mxu0 0.0
        %7548 = vmatpush1.msra.mxu0 0.0
        %7549 = vmatprep.subr.mxu0 0.0
        %7550 = vmatpush1.msra.mxu0 0.0
        %7551 = vmatprep.subr.mxu0 0.0
        %7552 = vmatpush1.msra.mxu0 0.0
        %7553 = vmatprep.subr.mxu0 0.0
        %7554 = vmatpush1.msra.mxu0 0.0
        %7555 = vmatprep.subr.mxu0 0.0
        %7556 = vmatpush1.msra.mxu0 0.0
        %7557 = vmatprep.subr.mxu0 0.0
        %7558 = vmatpush1.msra.mxu0 0.0
        %7559 = vmatprep.subr.mxu0 0.0
        %7560 = vmatpush1.msra.mxu0 0.0
        %7561 = vmatprep.subr.mxu0 0.0
        %7562 = vmatpush1.msra.mxu0 0.0
        %7563 = vmatprep.subr.mxu0 0.0
        %7564 = vmatpush1.msra.mxu0 0.0
        %7565 = vmatprep.subr.mxu0 0.0
        %7566 = vmatpush1.msra.mxu0 0.0
        %7567 = vmatprep.subr.mxu0 0.0
        %7568 = vmatpush1.msra.mxu0 0.0
        %7569 = vmatprep.subr.mxu0 0.0
        %7570 = vmatpush1.msra.mxu0 0.0
        %7571 = vmatprep.subr.mxu0 0.0
        %7572 = vmatpush1.msra.mxu0 0.0
        %7573 = vmatprep.subr.mxu0 0.0
        %7574 = vmatpush1.msra.mxu0 0.0
        %7575 = vmatprep.subr.mxu0 0.0
        %7576 = vmatpush1.msra.mxu0 0.0
        %7577 = vmatprep.subr.mxu0 0.0
        %7578 = vmatpush1.msra.mxu0 0.0
        %7579 = vmatprep.subr.mxu0 0.0
        %7580 = vmatpush1.msra.mxu0 0.0
        %7581 = vmatprep.subr.mxu0 0.0
        %7582 = vmatpush1.msra.mxu0 0.0
        %7583 = vmatprep.subr.mxu0 0.0
        %7584 = vmatpush1.msra.mxu0 0.0
        %7585 = vmatprep.subr.mxu0 0.0
        %7586 = vmatpush1.msra.mxu0 0.0
        %7587 = vmatprep.subr.mxu0 0.0
        %7588 = vmatpush1.msra.mxu0 0.0
        %7589 = vmatprep.subr.mxu0 0.0
        %7590 = vmatpush1.msra.mxu0 0.0
        %7591 = vmatprep.mubr.f32.mxu0 0.0
        %7592 = vmatmul.mubr.f32.gmra.mrb[0].mxu0 %v2146
        %v7593 = vpop.f32.mrb[0].mxu0
        %v7594 = vadd.f32 0.0, %v7593
        %v7595 = vpop.f32.mrb[0].mxu0
        %7596 = vmatprep.mubr.f32.mxu0 0.0
        %7597 = vmatmul.mubr.f32.gmra.mrb[0].mxu0 %v2149
        %v7598 = vpop.f32.mrb[0].mxu0
        %v7599 = vadd.f32 0.0, %v7598
        %v7600 = vpop.f32.mrb[0].mxu0
        %7601 = vmatprep.mubr.f32.mxu0 0.0
        %7602 = vmatmul.mubr.f32.gmra.mrb[0].mxu0 %v2152
        %v7603 = vpop.f32.mrb[0].mxu0
        %v7604 = vadd.f32 0.0, %v7603
        %v7605 = vpop.f32.mrb[0].mxu0
        %7606 = vmatprep.mubr.f32.mxu0 0.0
        %7607 = vmatmul.mubr.f32.gmra.mrb[0].mxu0 %v2155
        %v7608 = vpop.f32.mrb[0].mxu0
        %v7609 = vadd.f32 0.0, %v7608
        %v7610 = vpop.f32.mrb[0].mxu0
        %7611 = vdwg.mxu0
        %v7612 = vadd.f32 %v7520, %v7594
        %v7613 = vadd.f32 %v7521, %v7599
        %v7614 = vadd.f32 %v7522, %v7604
        %v7615 = vadd.f32 %v7523, %v7609
        %v7616 = vmax.f32 %v7612, 0.0
        %v7617 = vmax.f32 %v7613, 0.0
        %v7618 = vmax.f32 %v7614, 0.0
        %v7619 = vmax.f32 %v7615, 0.0
        %7620 = vmatprep.subr.mxu0 0.0
        %7621 = vmatpush1.msra.mxu0 %v7616
        %7622 = vmatprep.subr.mxu0 0.0
        %7623 = vmatpush1.msra.mxu0 %v7617
        %7624 = vmatprep.subr.mxu0 0.0
        %7625 = vmatpush1.msra.mxu0 %v7618
        %7626 = vmatprep.subr.mxu0 0.0
        %7627 = vmatpush1.msra.mxu0 %v7619
        %7628 = vmatprep.subr.mxu0 0.0
        %7629 = vmatpush1.msra.mxu0 0.0
        %7630 = vmatprep.subr.mxu0 0.0
        %7631 = vmatpush1.msra.mxu0 0.0
        %7632 = vmatprep.subr.mxu0 0.0
        %7633 = vmatpush1.msra.mxu0 0.0
        %7634 = vmatprep.subr.mxu0 0.0
        %7635 = vmatpush1.msra.mxu0 0.0
        %7636 = vmatprep.subr.mxu0 0.0
        %7637 = vmatpush1.msra.mxu0 0.0
        %7638 = vmatprep.subr.mxu0 0.0
        %7639 = vmatpush1.msra.mxu0 0.0
        %7640 = vmatprep.subr.mxu0 0.0
        %7641 = vmatpush1.msra.mxu0 0.0
        %7642 = vmatprep.subr.mxu0 0.0
        %7643 = vmatpush1.msra.mxu0 0.0
        %7644 = vmatprep.subr.mxu0 0.0
        %7645 = vmatpush1.msra.mxu0 0.0
        %7646 = vmatprep.subr.mxu0 0.0
        %7647 = vmatpush1.msra.mxu0 0.0
        %7648 = vmatprep.subr.mxu0 0.0
        %7649 = vmatpush1.msra.mxu0 0.0
        %7650 = vmatprep.subr.mxu0 0.0
        %7651 = vmatpush1.msra.mxu0 0.0
        %7652 = vmatprep.subr.mxu0 0.0
        %7653 = vmatpush1.msra.mxu0 0.0
        %7654 = vmatprep.subr.mxu0 0.0
        %7655 = vmatpush1.msra.mxu0 0.0
        %7656 = vmatprep.subr.mxu0 0.0
        %7657 = vmatpush1.msra.mxu0 0.0
        %7658 = vmatprep.subr.mxu0 0.0
        %7659 = vmatpush1.msra.mxu0 0.0
        %7660 = vmatprep.subr.mxu0 0.0
        %7661 = vmatpush1.msra.mxu0 0.0
        %7662 = vmatprep.subr.mxu0 0.0
        %7663 = vmatpush1.msra.mxu0 0.0
        %7664 = vmatprep.subr.mxu0 0.0
        %7665 = vmatpush1.msra.mxu0 0.0
        %7666 = vmatprep.subr.mxu0 0.0
        %7667 = vmatpush1.msra.mxu0 0.0
        %7668 = vmatprep.subr.mxu0 0.0
        %7669 = vmatpush1.msra.mxu0 0.0
        %7670 = vmatprep.subr.mxu0 0.0
        %7671 = vmatpush1.msra.mxu0 0.0
        %7672 = vmatprep.subr.mxu0 0.0
        %7673 = vmatpush1.msra.mxu0 0.0
        %7674 = vmatprep.subr.mxu0 0.0
        %7675 = vmatpush1.msra.mxu0 0.0
        %7676 = vmatprep.subr.mxu0 0.0
        %7677 = vmatpush1.msra.mxu0 0.0
        %7678 = vmatprep.subr.mxu0 0.0
        %7679 = vmatpush1.msra.mxu0 0.0
        %7680 = vmatprep.subr.mxu0 0.0
        %7681 = vmatpush1.msra.mxu0 0.0
        %7682 = vmatprep.subr.mxu0 0.0
        %7683 = vmatpush1.msra.mxu0 0.0
        %7684 = vmatprep.mubr.f32.mxu0 0.0
        %7685 = vmatmul.mubr.f32.gmra.mrb[0].mxu0 %v2260
        %v7686 = vpop.f32.mrb[0].mxu0
        %v7687 = vadd.f32 %v2256, %v7686
        %v7688 = vpop.f32.mrb[0].mxu0
        %7689 = vdwg.mxu0
        %v7690 = vld [vmem:[%s292 + $0x50] sm:$0x3]
        %v7692 = vrot.slane %v6944, 6
        %v7694 = vsub.f32 %v7690, %v7692
        %v7695 = vmul.f32 %v7687, %v7694
        %v7696 = vsel %vm822, %v7695, 0.0
        %v7697 = vrot.slane %v7696, 4
        %v7698 = vadd.f32 %v7696, %v7697
        %v7699 = vrot.slane %v7698, 2
        %v7700 = vadd.f32 %v7698, %v7699
        %v7701 = vrot.slane %v7700, 1
        %v7702 = vadd.f32 %v7700, %v7701
        %v7703 = vadd.f32 %v6960, %v7702
        %7704 = vst [vmem:[%s336 + $0x30] sm:$0x1] %v7703
        %v7705 = vld [vmem:[#allocation2 + $0x398] sm:$0xff]
        %v7706 = vld [vmem:[#allocation2 + $0x3b8] sm:$0xff]
        %v7707 = vld [vmem:[#allocation2 + $0x3d8] sm:$0xff]
        %v7708 = vld [vmem:[#allocation2 + $0x3f8] sm:$0xff]
        %v7710 = vsel %vm822, %v7129, 0
        %7712 = vmatprep.subr.mxu0 0.0
        %7713 = vmatpush1.msra.mxu0 %v7710
        %7714 = vmatprep.subr.mxu0 0.0
        %7715 = vmatpush1.msra.mxu0 0.0
        %7716 = vmatprep.subr.mxu0 0.0
        %7717 = vmatpush1.msra.mxu0 0.0
        %7718 = vmatprep.subr.mxu0 0.0
        %7719 = vmatpush1.msra.mxu0 0.0
        %7720 = vmatprep.subr.mxu0 0.0
        %7721 = vmatpush1.msra.mxu0 0.0
        %7722 = vmatprep.subr.mxu0 0.0
        %7723 = vmatpush1.msra.mxu0 0.0
        %7724 = vmatprep.subr.mxu0 0.0
        %7725 = vmatpush1.msra.mxu0 0.0
        %7726 = vmatprep.subr.mxu0 0.0
        %7727 = vmatpush1.msra.mxu0 0.0
        %7728 = vmatprep.subr.mxu0 0.0
        %7729 = vmatpush1.msra.mxu0 0.0
        %7730 = vmatprep.subr.mxu0 0.0
        %7731 = vmatpush1.msra.mxu0 0.0
        %7732 = vmatprep.subr.mxu0 0.0
        %7733 = vmatpush1.msra.mxu0 0.0
        %7734 = vmatprep.subr.mxu0 0.0
        %7735 = vmatpush1.msra.mxu0 0.0
        %7736 = vmatprep.subr.mxu0 0.0
        %7737 = vmatpush1.msra.mxu0 0.0
        %7738 = vmatprep.subr.mxu0 0.0
        %7739 = vmatpush1.msra.mxu0 0.0
        %7740 = vmatprep.subr.mxu0 0.0
        %7741 = vmatpush1.msra.mxu0 0.0
        %7742 = vmatprep.subr.mxu0 0.0
        %7743 = vmatpush1.msra.mxu0 0.0
        %7744 = vmatprep.subr.mxu0 0.0
        %7745 = vmatpush1.msra.mxu0 0.0
        %7746 = vmatprep.subr.mxu0 0.0
        %7747 = vmatpush1.msra.mxu0 0.0
        %7748 = vmatprep.subr.mxu0 0.0
        %7749 = vmatpush1.msra.mxu0 0.0
        %7750 = vmatprep.subr.mxu0 0.0
        %7751 = vmatpush1.msra.mxu0 0.0
        %7752 = vmatprep.subr.mxu0 0.0
        %7753 = vmatpush1.msra.mxu0 0.0
        %7754 = vmatprep.subr.mxu0 0.0
        %7755 = vmatpush1.msra.mxu0 0.0
        %7756 = vmatprep.subr.mxu0 0.0
        %7757 = vmatpush1.msra.mxu0 0.0
        %7758 = vmatprep.subr.mxu0 0.0
        %7759 = vmatpush1.msra.mxu0 0.0
        %7760 = vmatprep.subr.mxu0 0.0
        %7761 = vmatpush1.msra.mxu0 0.0
        %7762 = vmatprep.subr.mxu0 0.0
        %7763 = vmatpush1.msra.mxu0 0.0
        %7764 = vmatprep.subr.mxu0 0.0
        %7765 = vmatpush1.msra.mxu0 0.0
        %7766 = vmatprep.subr.mxu0 0.0
        %7767 = vmatpush1.msra.mxu0 0.0
        %7768 = vmatprep.subr.mxu0 0.0
        %7769 = vmatpush1.msra.mxu0 0.0
        %7770 = vmatprep.subr.mxu0 0.0
        %7771 = vmatpush1.msra.mxu0 0.0
        %7772 = vmatprep.subr.mxu0 0.0
        %7773 = vmatpush1.msra.mxu0 0.0
        %7774 = vmatprep.subr.mxu0 0.0
        %7775 = vmatpush1.msra.mxu0 0.0
        %7776 = vmatprep.mubr.f32.mxu0 0.0
        %7777 = vmatmul.mubr.f32.gmra.mrb[0].mxu0 %v2146
        %v7778 = vpop.f32.mrb[0].mxu0
        %v7779 = vadd.f32 0.0, %v7778
        %v7780 = vpop.f32.mrb[0].mxu0
        %7781 = vmatprep.mubr.f32.mxu0 0.0
        %7782 = vmatmul.mubr.f32.gmra.mrb[0].mxu0 %v2149
        %v7783 = vpop.f32.mrb[0].mxu0
        %v7784 = vadd.f32 0.0, %v7783
        %v7785 = vpop.f32.mrb[0].mxu0
        %7786 = vmatprep.mubr.f32.mxu0 0.0
        %7787 = vmatmul.mubr.f32.gmra.mrb[0].mxu0 %v2152
        %v7788 = vpop.f32.mrb[0].mxu0
        %v7789 = vadd.f32 0.0, %v7788
        %v7790 = vpop.f32.mrb[0].mxu0
        %7791 = vmatprep.mubr.f32.mxu0 0.0
        %7792 = vmatmul.mubr.f32.gmra.mrb[0].mxu0 %v2155
        %v7793 = vpop.f32.mrb[0].mxu0
        %v7794 = vadd.f32 0.0, %v7793
        %v7795 = vpop.f32.mrb[0].mxu0
        %7796 = vdwg.mxu0
        %v7797 = vadd.f32 %v7705, %v7779
        %v7798 = vadd.f32 %v7706, %v7784
        %v7799 = vadd.f32 %v7707, %v7789
        %v7800 = vadd.f32 %v7708, %v7794
        %v7801 = vmax.f32 %v7797, 0.0
        %v7802 = vmax.f32 %v7798, 0.0
        %v7803 = vmax.f32 %v7799, 0.0
        %v7804 = vmax.f32 %v7800, 0.0
        %7805 = vmatprep.subr.mxu0 0.0
        %7806 = vmatpush1.msra.mxu0 %v7801
        %7807 = vmatprep.subr.mxu0 0.0
        %7808 = vmatpush1.msra.mxu0 %v7802
        %7809 = vmatprep.subr.mxu0 0.0
        %7810 = vmatpush1.msra.mxu0 %v7803
        %7811 = vmatprep.subr.mxu0 0.0
        %7812 = vmatpush1.msra.mxu0 %v7804
        %7813 = vmatprep.subr.mxu0 0.0
        %7814 = vmatpush1.msra.mxu0 0.0
        %7815 = vmatprep.subr.mxu0 0.0
        %7816 = vmatpush1.msra.mxu0 0.0
        %7817 = vmatprep.subr.mxu0 0.0
        %7818 = vmatpush1.msra.mxu0 0.0
        %7819 = vmatprep.subr.mxu0 0.0
        %7820 = vmatpush1.msra.mxu0 0.0
        %7821 = vmatprep.subr.mxu0 0.0
        %7822 = vmatpush1.msra.mxu0 0.0
        %7823 = vmatprep.subr.mxu0 0.0
        %7824 = vmatpush1.msra.mxu0 0.0
        %7825 = vmatprep.subr.mxu0 0.0
        %7826 = vmatpush1.msra.mxu0 0.0
        %7827 = vmatprep.subr.mxu0 0.0
        %7828 = vmatpush1.msra.mxu0 0.0
        %7829 = vmatprep.subr.mxu0 0.0
        %7830 = vmatpush1.msra.mxu0 0.0
        %7831 = vmatprep.subr.mxu0 0.0
        %7832 = vmatpush1.msra.mxu0 0.0
        %7833 = vmatprep.subr.mxu0 0.0
        %7834 = vmatpush1.msra.mxu0 0.0
        %7835 = vmatprep.subr.mxu0 0.0
        %7836 = vmatpush1.msra.mxu0 0.0
        %7837 = vmatprep.subr.mxu0 0.0
        %7838 = vmatpush1.msra.mxu0 0.0
        %7839 = vmatprep.subr.mxu0 0.0
        %7840 = vmatpush1.msra.mxu0 0.0
        %7841 = vmatprep.subr.mxu0 0.0
        %7842 = vmatpush1.msra.mxu0 0.0
        %7843 = vmatprep.subr.mxu0 0.0
        %7844 = vmatpush1.msra.mxu0 0.0
        %7845 = vmatprep.subr.mxu0 0.0
        %7846 = vmatpush1.msra.mxu0 0.0
        %7847 = vmatprep.subr.mxu0 0.0
        %7848 = vmatpush1.msra.mxu0 0.0
        %7849 = vmatprep.subr.mxu0 0.0
        %7850 = vmatpush1.msra.mxu0 0.0
        %7851 = vmatprep.subr.mxu0 0.0
        %7852 = vmatpush1.msra.mxu0 0.0
        %7853 = vmatprep.subr.mxu0 0.0
        %7854 = vmatpush1.msra.mxu0 0.0
        %7855 = vmatprep.subr.mxu0 0.0
        %7856 = vmatpush1.msra.mxu0 0.0
        %7857 = vmatprep.subr.mxu0 0.0
        %7858 = vmatpush1.msra.mxu0 0.0
        %7859 = vmatprep.subr.mxu0 0.0
        %7860 = vmatpush1.msra.mxu0 0.0
        %7861 = vmatprep.subr.mxu0 0.0
        %7862 = vmatpush1.msra.mxu0 0.0
        %7863 = vmatprep.subr.mxu0 0.0
        %7864 = vmatpush1.msra.mxu0 0.0
        %7865 = vmatprep.subr.mxu0 0.0
        %7866 = vmatpush1.msra.mxu0 0.0
        %7867 = vmatprep.subr.mxu0 0.0
        %7868 = vmatpush1.msra.mxu0 0.0
        %7869 = vmatprep.mubr.f32.mxu0 0.0
        %7870 = vmatmul.mubr.f32.gmra.mrb[0].mxu0 %v2260
        %v7871 = vpop.f32.mrb[0].mxu0
        %v7872 = vadd.f32 %v2256, %v7871
        %v7873 = vpop.f32.mrb[0].mxu0
        %7874 = vdwg.mxu0
        %v7875 = vld [vmem:[%s292 + $0x58] sm:$0x3]
        %v7877 = vrot.slane %v7132, 6
        %v7879 = vsub.f32 %v7875, %v7877
        %v7880 = vmul.f32 %v7872, %v7879
        %v7881 = vsel %vm822, %v7880, 0.0
        %v7882 = vrot.slane %v7881, 4
        %v7883 = vadd.f32 %v7881, %v7882
        %v7884 = vrot.slane %v7883, 2
        %v7885 = vadd.f32 %v7883, %v7884
        %v7886 = vrot.slane %v7885, 1
        %v7887 = vadd.f32 %v7885, %v7886
        %v7888 = vadd.f32 %v7148, %v7887
        %7889 = vst [vmem:[%s336 + $0x38] sm:$0x1] %v7888
        %s7890 = sand.u32 %s192, 1
        %s7891 = scalar_lea.sflag [#allocation5], %s7890
        %s7892 = sand.u32 %s192, 1
        %s7893 = smul.addr %s7892, 64
        %s7894 = scalar_lea.vmem [#allocation8], %s7893
        // Predicated region
        $region57: #{tpu_custom_call.1} parent=47 // pred_check
          %p7895 = pneg %p202
        $region58: #{tpu_custom_call.1} parent=47 // pred_check_branch
          %7897 = sbr.rel (%p7895) target = $region60
        $region59: #{tpu_custom_call.1} parent=47 // pred_region
          %s7898 = smul.u32 4, %s27
          %s7900 = ssub.s32 1024, 1024
          %7901 = vsyncadd %s7891, %s7900
          %s7902 = smul.addr %s7898, 128
          %s7903 = scalar_lea.hbm %s7, %s7902
          %s7904 = sshll.u32 %s7894, 4
          %s7905 = int_to_ptr.vmem [resolvable:$true] %s7904
          %7910 = dma.vmem_to_hbm [thread:$0]  %s7905, 1024, %s7903, %s7891, 512, 1024, 32
        $region60: #{tpu_custom_call.1} parent=47 // pred_fallthru
          _
      $region48: #{tpu_custom_call.1} parent=5 // pred_fallthru
        _
      %p7911 = scmp.le.s32.totalorder 2, %s22
      // Predicated region
      $region61: #{tpu_custom_call.1} parent=5 // pred_check
        %p7912 = pneg %p7911
      $region62: #{tpu_custom_call.1} parent=5 // pred_check_branch
        %7914 = sbr.rel (%p7912) target = $region64
      $region63: #{tpu_custom_call.1} parent=5 // pred_region
        %s7915 = ssub.s32 %s22, 2
        // Predicated region
        $region65: #{tpu_custom_call.1} parent=63 // pred_check
          %p7916 = pneg %p208
        $region66: #{tpu_custom_call.1} parent=63 // pred_check_branch
          %7918 = sbr.rel (%p7916) target = $region68
        $region67: #{tpu_custom_call.1} parent=63 // pred_region
          %s7919 = sand.u32 %s193, 1
          %s7920 = scalar_lea.sflag [#allocation5], %s7919
          %s7921 = sand.u32 %s193, 1
          %s7922 = smul.addr %s7921, 64
          %s7923 = scalar_lea.vmem [#allocation8], %s7922
          %7924 = dma.done %s7920, 1024
        $region68: #{tpu_custom_call.1} parent=63 // pred_fallthru
          _
      $region64: #{tpu_custom_call.1} parent=5 // pred_fallthru
        _
    $region6: #{tpu_custom_call.1} parent=1 // loop_footer
      %s26 = sadd.s32 1, %s22
    $region7: #{tpu_custom_call.1} parent=1 // loop_footer_branch
      %21 = sbr.rel target = $region3
    $region8: #{tpu_custom_call.1} parent=1 // loop_exit
      _
    %7925 = vsyncpa [#allocation4], 1
    %s7926 = scalar_lea.sflag [#allocation4], 1
    %7927 = vsyncpa %s7926, 1
    %7928 = vsyncpa [#allocation7], 1
    %s7929 = scalar_lea.sflag [#allocation7], 1
    %7930 = vsyncpa %s7929, 1
    %7931 = vsyncpa [#allocation5], 1
    %s7932 = scalar_lea.sflag [#allocation5], 1
    %7933 = vsyncpa %s7932, 1

</llo_original>
